<compile_context>
chip_gen: v7x
topology: tpu7x:2x2x1
jax: 0.10.0
libtpu: 0.0.40
codegen_flags: <defaults>
</compile_context>

<pallas_src>
import jax
import jax.numpy as jnp
import numpy as np
from jax.experimental import pallas as pl
from jax.experimental.pallas import tpu as pltpu

# ----- static model configuration -----
B = 2              # batch
T = 16             # time samples
C = 8              # EEG electrodes
NUM_CLASSES = 4

KT = T // 4                      # temporal kernel width      = 4
PAD_T = T // 8                   # temporal padding           = 2
PAD_C = C // 2                   # spatial (height) padding   = 4
T_PAD = T + 2 * PAD_T            # 20
T_OUT = T_PAD - KT + 1           # 17
C_PAD = C + 2 * PAD_C            # 16
H_OUT = C_PAD - C + 1            # 9
W_POOL = T_OUT // 4              # 4  (AvgPool2d((1,4)), floor mode)
FEAT = 32 * H_OUT * W_POOL       # 1152 == self._to_linear

# packed-parameter column layout (one (32, P_COLS) operand)
_WT0 = 0                         # cols [0:4)   temporal weights (dup x2 per group)
_WS0 = _WT0 + KT                 # cols [4:12)  depthwise spatial weights
_BT = _WS0 + C                   # col  12      temporal bias (dup x2)
_BS = _BT + 1                    # col  13      spatial bias
_BFC = _BS + 1                   # col  14      FC bias (rows 0..NUM_CLASSES-1)
P_COLS = _BFC + 1                # 15


# ----- fused Pallas kernel -----
def fused_eeg_kernel(x_ref, p_ref, wfct_ref, o_ref):
    # x_ref    : (B, C, T)                         input
    # p_ref    : (32, P_COLS)                      packed conv weights / biases / fc bias
    # wfct_ref : (NUM_CLASSES, 32, H_OUT, T_OUT)   FC weight with AvgPool folded in
    # o_ref    : (B, NUM_CLASSES)                  log-probabilities
    p = p_ref[...]
    wt = p[:, _WT0:_WT0 + KT]            # (32, KT)
    ws = p[:, _WS0:_WS0 + C]             # (32, C)
    bt = p[:, _BT:_BT + 1]               # (32, 1)
    bs = p[:, _BS:_BS + 1]               # (32, 1)

    # Zero-pad the time axis in registers (no scratch, no HBM round-trip).
    zt = jnp.zeros((B, C, PAD_T), jnp.float32)
    xpad = jnp.concatenate([zt, x_ref[...], zt], axis=-1)        # (B, C, T_PAD)

    # Zero rows for electrode-axis padding of the temporal-conv output.
    hz = jnp.zeros((32, PAD_C, T_OUT), jnp.float32)

    zs = []
    for b in range(B):                   # B=2, fully unrolled in one invocation
        # --- temporal conv: Conv2d(1, 16, (1, KT)), channels duplicated to 32 ---
        xp = xpad[b]                     # (C, T_PAD)
        acc1 = jnp.zeros((32, C, T_OUT), jnp.float32)
        for j in range(KT):              # unrolled FMA over kernel taps (VPU)
            acc1 = acc1 + wt[:, j:j + 1, None] * xp[None, :, j:j + T_OUT]
        y1 = acc1 + bt[:, :, None]       # (32, C, T_OUT)

        # --- spatial depthwise conv: Conv2d(16, 32, (C, 1), groups=16) ---
        y1pad = jnp.concatenate([hz, y1, hz], axis=1)            # (32, C_PAD, T_OUT)
        acc2 = jnp.zeros((32, H_OUT, T_OUT), jnp.float32)
        for r in range(C):               # unrolled FMA over spatial taps
            acc2 = acc2 + ws[:, r:r + 1, None] * y1pad[:, r:r + H_OUT, :]
        zs.append(acc2 + bs[:, :, None])                         # (32, H_OUT, T_OUT)

    # Dropout(0.5): eval-mode identity.

    # --- AvgPool2d((1,4)) + Linear(FEAT, NUM_CLASSES), pooling folded into the
    #     FC weight host-side: logits[b,n] = sum_{c,h,t} z[b,c,h,t] * wfct[n,c,h,t] + b_fc[n]
    cols = []
    for n in range(NUM_CLASSES):
        wn = wfct_ref[n]                                         # (32, H_OUT, T_OUT)
        ents = []
        for b in range(B):
            prod = zs[b] * wn                                    # (32, H_OUT, T_OUT)
            s = jnp.sum(prod, axis=2, keepdims=True)             # lane reduce
            s = jnp.sum(s, axis=1, keepdims=True)                # sublane reduce
            s = jnp.sum(s, axis=0, keepdims=True)                # channel reduce -> (1,1,1)
            ents.append(s.reshape(1, 1))
        col = jnp.concatenate(ents, axis=0) + p[n:n + 1, _BFC:_BFC + 1]   # (B, 1)
        cols.append(col)
    logits = jnp.concatenate(cols, axis=1)                       # (B, NUM_CLASSES)

    # --- numerically stable log_softmax ---
    m = jnp.max(logits, axis=-1, keepdims=True)
    sh = logits - m
    lse = jnp.log(jnp.sum(jnp.exp(sh), axis=-1, keepdims=True))
    o_ref[...] = sh - lse


# ----- pallas_call wrapper (single fused call, whole batch in one block) -----
def simple_eeg_forward(x, packed, wfct):
    if x.shape[1] != 1:
        x = jnp.transpose(x, (0, 3, 2, 1))   # (B, 1, C, T)  NCHW
    xb = x[:, 0, :, :]                       # (B, C, T)
    vmem = pltpu.MemorySpace.VMEM
    return pl.pallas_call(
        fused_eeg_kernel,
        out_shape=jax.ShapeDtypeStruct((B, NUM_CLASSES), jnp.float32),
        in_specs=[
            pl.BlockSpec(memory_space=vmem),   # x      (B, C, T)
            pl.BlockSpec(memory_space=vmem),   # packed (32, P_COLS)
            pl.BlockSpec(memory_space=vmem),   # wfct   (4, 32, 9, 17)
        ],
        out_specs=pl.BlockSpec(memory_space=vmem),
    )(xb, packed, wfct)


# ----- host-side (one-time) parameter repack -----
def pack_params(w_temporal, b_temporal, w_spatial, b_spatial, w_fc, b_fc):
    # groups=16, 2 out-channels per group -> duplicate temporal channels x2.
    wt32 = jnp.repeat(w_temporal.reshape(16, KT), 2, axis=0)      # (32, KT)
    bt32 = jnp.repeat(b_temporal, 2)[:, None]                     # (32, 1)
    ws32 = w_spatial.reshape(32, C)                               # (32, C)
    bs32 = b_spatial[:, None]                                     # (32, 1)
    bfc_col = jnp.zeros((32, 1), jnp.float32).at[:NUM_CLASSES, 0].set(b_fc)
    packed = jnp.concatenate([wt32, ws32, bt32, bs32, bfc_col],
                             axis=1).astype(jnp.float32)          # (32, P_COLS)
    # PyTorch flatten order of (B, 32, H_OUT, W_POOL) is (c, h, w)-major.
    wfc4 = w_fc.reshape(NUM_CLASSES, 32, H_OUT, W_POOL).astype(jnp.float32)
    # Fold AvgPool2d((1,4)) (floor mode) into the FC weight:
    #   wfct[n,c,h,t] = 0.25 * wfc4[n,c,h,t//4]  for t < 4*W_POOL, else 0.
    wfct = jnp.concatenate(
        [jnp.repeat(wfc4, 4, axis=-1) * 0.25,
         jnp.zeros((NUM_CLASSES, 32, H_OUT, T_OUT - 4 * W_POOL), jnp.float32)],
        axis=-1)                                                  # (4, 32, H_OUT, T_OUT)
    return packed, wfct


# ----- pure-JAX reference (independent path via lax conv) -----
def reference_forward(x, w_t, b_t, w_s, b_s, w_fc, b_fc):
    if x.shape[1] != 1:
        x = jnp.transpose(x, (0, 3, 2, 1))
    dn = ('NCHW', 'OIHW', 'NCHW')
    y1 = jax.lax.conv_general_dilated(
        x, w_t, (1, 1), ((0, 0), (PAD_T, PAD_T)),
        dimension_numbers=dn) + b_t.reshape(1, 16, 1, 1)
    y2 = jax.lax.conv_general_dilated(
        y1, w_s, (1, 1), ((PAD_C, PAD_C), (0, 0)),
        dimension_numbers=dn, feature_group_count=16) + b_s.reshape(1, 32, 1, 1)
    y3 = y2[:, :, :, :W_POOL * 4].reshape(x.shape[0], 32, H_OUT, W_POOL, 4).mean(-1)
    flat = y3.reshape(x.shape[0], FEAT)
    logits = flat @ w_fc.T + b_fc[None, :]
    return jax.nn.log_softmax(logits, axis=1)


if __name__ == "__main__":
    key = jax.random.PRNGKey(0)
    ks = jax.random.split(key, 7)

    # Deterministic synthetic parameters (PyTorch nn.Module shapes).
    w_temporal = 0.1 * jax.random.normal(ks[0], (16, 1, 1, KT), jnp.float32)
    b_temporal = 0.1 * jax.random.normal(ks[1], (16,), jnp.float32)
    w_spatial = 0.1 * jax.random.normal(ks[2], (32, 1, C, 1), jnp.float32)
    b_spatial = 0.1 * jax.random.normal(ks[3], (32,), jnp.float32)
    w_fc = 0.1 * jax.random.normal(ks[4], (NUM_CLASSES, FEAT), jnp.float32)
    b_fc = 0.1 * jax.random.normal(ks[5], (NUM_CLASSES,), jnp.float32)
    x = jax.random.normal(ks[6], (B, T, C, 1), jnp.float32)   # (batch, T, C, 1)

    packed, wfct = pack_params(w_temporal, b_temporal, w_spatial, b_spatial,
                               w_fc, b_fc)

    out = jax.jit(simple_eeg_forward)(x, packed, wfct)
    out = jax.block_until_ready(out)

    ref = reference_forward(x, w_temporal, b_temporal, w_spatial, b_spatial,
                            w_fc, b_fc)
    np.testing.assert_allclose(np.asarray(out), np.asarray(ref),
                               rtol=1e-3, atol=1e-3)

    print("KERNEL_OK")
</pallas_src>

<mosaic_0001>
module attributes {stable_mosaic.version = 11 : i64} {
  func.func @fused_eeg_kernel(%arg0: memref<2x8x16xf32, #tpu.memory_space<vmem>>, %arg1: memref<32x15xf32, #tpu.memory_space<vmem>>, %arg2: memref<4x32x9x17xf32, #tpu.memory_space<vmem>>, %arg3: memref<2x4xf32, #tpu.memory_space<vmem>>) attributes {dimension_semantics = [], scalar_prefetch = 0 : i64, scratch_operands = 0 : i64, tpu.core_type = #tpu.core_type<tc>} {
    %c0 = arith.constant 0 : index
    %c0_0 = arith.constant 0 : index
    %0 = vector.load %arg1[%c0, %c0_0] : memref<32x15xf32, #tpu.memory_space<vmem>>, vector<32x15xf32>
    %1 = vector.extract_strided_slice %0 {offsets = [0, 0], sizes = [32, 4], strides = [1, 1]} : vector<32x15xf32> to vector<32x4xf32>
    %2 = vector.extract_strided_slice %0 {offsets = [0, 4], sizes = [32, 8], strides = [1, 1]} : vector<32x15xf32> to vector<32x8xf32>
    %3 = vector.extract_strided_slice %0 {offsets = [0, 12], sizes = [32, 1], strides = [1, 1]} : vector<32x15xf32> to vector<32x1xf32>
    %4 = vector.extract_strided_slice %0 {offsets = [0, 13], sizes = [32, 1], strides = [1, 1]} : vector<32x15xf32> to vector<32x1xf32>
    %cst = arith.constant 0.000000e+00 : f32
    %5 = vector.broadcast %cst : f32 to vector<2x8x2xf32>
    %c0_1 = arith.constant 0 : index
    %c0_2 = arith.constant 0 : index
    %c0_3 = arith.constant 0 : index
    %6 = vector.load %arg0[%c0_1, %c0_2, %c0_3] : memref<2x8x16xf32, #tpu.memory_space<vmem>>, vector<2x8x16xf32>
    %7 = tpu.concatenate %5, %6, %5 in 2 : vector<2x8x2xf32>, vector<2x8x16xf32>, vector<2x8x2xf32> -> vector<2x8x20xf32>
    %cst_4 = arith.constant 0.000000e+00 : f32
    %8 = vector.broadcast %cst_4 : f32 to vector<32x4x17xf32>
    %9 = vector.extract_strided_slice %7 {offsets = [0, 0, 0], sizes = [1, 8, 20], strides = [1, 1, 1]} : vector<2x8x20xf32> to vector<1x8x20xf32>
    %10 = vector.shape_cast %9 : vector<1x8x20xf32> to vector<8x20xf32>
    %cst_5 = arith.constant 0.000000e+00 : f32
    %11 = vector.broadcast %cst_5 : f32 to vector<32x8x17xf32>
    %12 = vector.extract_strided_slice %1 {offsets = [0, 0], sizes = [32, 1], strides = [1, 1]} : vector<32x4xf32> to vector<32x1xf32>
    %13 = vector.shape_cast %12 : vector<32x1xf32> to vector<32x1x1xf32>
    %14 = vector.extract_strided_slice %10 {offsets = [0, 0], sizes = [8, 17], strides = [1, 1]} : vector<8x20xf32> to vector<8x17xf32>
    %15 = vector.shape_cast %14 : vector<8x17xf32> to vector<1x8x17xf32>
    %16 = vector.broadcast %13 : vector<32x1x1xf32> to vector<32x8x17xf32>
    %17 = vector.broadcast %15 : vector<1x8x17xf32> to vector<32x8x17xf32>
    %18 = arith.mulf %16, %17 : vector<32x8x17xf32>
    %19 = arith.addf %11, %18 : vector<32x8x17xf32>
    %20 = vector.extract_strided_slice %1 {offsets = [0, 1], sizes = [32, 1], strides = [1, 1]} : vector<32x4xf32> to vector<32x1xf32>
    %21 = vector.shape_cast %20 : vector<32x1xf32> to vector<32x1x1xf32>
    %22 = vector.extract_strided_slice %10 {offsets = [0, 1], sizes = [8, 17], strides = [1, 1]} : vector<8x20xf32> to vector<8x17xf32>
    %23 = vector.shape_cast %22 : vector<8x17xf32> to vector<1x8x17xf32>
    %24 = vector.broadcast %21 : vector<32x1x1xf32> to vector<32x8x17xf32>
    %25 = vector.broadcast %23 : vector<1x8x17xf32> to vector<32x8x17xf32>
    %26 = arith.mulf %24, %25 : vector<32x8x17xf32>
    %27 = arith.addf %19, %26 : vector<32x8x17xf32>
    %28 = vector.extract_strided_slice %1 {offsets = [0, 2], sizes = [32, 1], strides = [1, 1]} : vector<32x4xf32> to vector<32x1xf32>
    %29 = vector.shape_cast %28 : vector<32x1xf32> to vector<32x1x1xf32>
    %30 = vector.extract_strided_slice %10 {offsets = [0, 2], sizes = [8, 17], strides = [1, 1]} : vector<8x20xf32> to vector<8x17xf32>
    %31 = vector.shape_cast %30 : vector<8x17xf32> to vector<1x8x17xf32>
    %32 = vector.broadcast %29 : vector<32x1x1xf32> to vector<32x8x17xf32>
    %33 = vector.broadcast %31 : vector<1x8x17xf32> to vector<32x8x17xf32>
    %34 = arith.mulf %32, %33 : vector<32x8x17xf32>
    %35 = arith.addf %27, %34 : vector<32x8x17xf32>
    %36 = vector.extract_strided_slice %1 {offsets = [0, 3], sizes = [32, 1], strides = [1, 1]} : vector<32x4xf32> to vector<32x1xf32>
    %37 = vector.shape_cast %36 : vector<32x1xf32> to vector<32x1x1xf32>
    %38 = vector.extract_strided_slice %10 {offsets = [0, 3], sizes = [8, 17], strides = [1, 1]} : vector<8x20xf32> to vector<8x17xf32>
    %39 = vector.shape_cast %38 : vector<8x17xf32> to vector<1x8x17xf32>
    %40 = vector.broadcast %37 : vector<32x1x1xf32> to vector<32x8x17xf32>
    %41 = vector.broadcast %39 : vector<1x8x17xf32> to vector<32x8x17xf32>
    %42 = arith.mulf %40, %41 : vector<32x8x17xf32>
    %43 = arith.addf %35, %42 : vector<32x8x17xf32>
    %44 = vector.shape_cast %3 : vector<32x1xf32> to vector<32x1x1xf32>
    %45 = vector.broadcast %44 : vector<32x1x1xf32> to vector<32x8x17xf32>
    %46 = arith.addf %43, %45 : vector<32x8x17xf32>
    %47 = tpu.concatenate %8, %46, %8 in 1 : vector<32x4x17xf32>, vector<32x8x17xf32>, vector<32x4x17xf32> -> vector<32x16x17xf32>
    %cst_6 = arith.constant 0.000000e+00 : f32
    %48 = vector.broadcast %cst_6 : f32 to vector<32x9x17xf32>
    %49 = vector.extract_strided_slice %2 {offsets = [0, 0], sizes = [32, 1], strides = [1, 1]} : vector<32x8xf32> to vector<32x1xf32>
    %50 = vector.shape_cast %49 : vector<32x1xf32> to vector<32x1x1xf32>
    %51 = vector.extract_strided_slice %47 {offsets = [0, 0, 0], sizes = [32, 9, 17], strides = [1, 1, 1]} : vector<32x16x17xf32> to vector<32x9x17xf32>
    %52 = vector.broadcast %50 : vector<32x1x1xf32> to vector<32x9x17xf32>
    %53 = arith.mulf %52, %51 : vector<32x9x17xf32>
    %54 = arith.addf %48, %53 : vector<32x9x17xf32>
    %55 = vector.extract_strided_slice %2 {offsets = [0, 1], sizes = [32, 1], strides = [1, 1]} : vector<32x8xf32> to vector<32x1xf32>
    %56 = vector.shape_cast %55 : vector<32x1xf32> to vector<32x1x1xf32>
    %57 = vector.extract_strided_slice %47 {offsets = [0, 1, 0], sizes = [32, 9, 17], strides = [1, 1, 1]} : vector<32x16x17xf32> to vector<32x9x17xf32>
    %58 = vector.broadcast %56 : vector<32x1x1xf32> to vector<32x9x17xf32>
    %59 = arith.mulf %58, %57 : vector<32x9x17xf32>
    %60 = arith.addf %54, %59 : vector<32x9x17xf32>
    %61 = vector.extract_strided_slice %2 {offsets = [0, 2], sizes = [32, 1], strides = [1, 1]} : vector<32x8xf32> to vector<32x1xf32>
    %62 = vector.shape_cast %61 : vector<32x1xf32> to vector<32x1x1xf32>
    %63 = vector.extract_strided_slice %47 {offsets = [0, 2, 0], sizes = [32, 9, 17], strides = [1, 1, 1]} : vector<32x16x17xf32> to vector<32x9x17xf32>
    %64 = vector.broadcast %62 : vector<32x1x1xf32> to vector<32x9x17xf32>
    %65 = arith.mulf %64, %63 : vector<32x9x17xf32>
    %66 = arith.addf %60, %65 : vector<32x9x17xf32>
    %67 = vector.extract_strided_slice %2 {offsets = [0, 3], sizes = [32, 1], strides = [1, 1]} : vector<32x8xf32> to vector<32x1xf32>
    %68 = vector.shape_cast %67 : vector<32x1xf32> to vector<32x1x1xf32>
    %69 = vector.extract_strided_slice %47 {offsets = [0, 3, 0], sizes = [32, 9, 17], strides = [1, 1, 1]} : vector<32x16x17xf32> to vector<32x9x17xf32>
    %70 = vector.broadcast %68 : vector<32x1x1xf32> to vector<32x9x17xf32>
    %71 = arith.mulf %70, %69 : vector<32x9x17xf32>
    %72 = arith.addf %66, %71 : vector<32x9x17xf32>
    %73 = vector.extract_strided_slice %2 {offsets = [0, 4], sizes = [32, 1], strides = [1, 1]} : vector<32x8xf32> to vector<32x1xf32>
    %74 = vector.shape_cast %73 : vector<32x1xf32> to vector<32x1x1xf32>
    %75 = vector.extract_strided_slice %47 {offsets = [0, 4, 0], sizes = [32, 9, 17], strides = [1, 1, 1]} : vector<32x16x17xf32> to vector<32x9x17xf32>
    %76 = vector.broadcast %74 : vector<32x1x1xf32> to vector<32x9x17xf32>
    %77 = arith.mulf %76, %75 : vector<32x9x17xf32>
    %78 = arith.addf %72, %77 : vector<32x9x17xf32>
    %79 = vector.extract_strided_slice %2 {offsets = [0, 5], sizes = [32, 1], strides = [1, 1]} : vector<32x8xf32> to vector<32x1xf32>
    %80 = vector.shape_cast %79 : vector<32x1xf32> to vector<32x1x1xf32>
    %81 = vector.extract_strided_slice %47 {offsets = [0, 5, 0], sizes = [32, 9, 17], strides = [1, 1, 1]} : vector<32x16x17xf32> to vector<32x9x17xf32>
    %82 = vector.broadcast %80 : vector<32x1x1xf32> to vector<32x9x17xf32>
    %83 = arith.mulf %82, %81 : vector<32x9x17xf32>
    %84 = arith.addf %78, %83 : vector<32x9x17xf32>
    %85 = vector.extract_strided_slice %2 {offsets = [0, 6], sizes = [32, 1], strides = [1, 1]} : vector<32x8xf32> to vector<32x1xf32>
    %86 = vector.shape_cast %85 : vector<32x1xf32> to vector<32x1x1xf32>
    %87 = vector.extract_strided_slice %47 {offsets = [0, 6, 0], sizes = [32, 9, 17], strides = [1, 1, 1]} : vector<32x16x17xf32> to vector<32x9x17xf32>
    %88 = vector.broadcast %86 : vector<32x1x1xf32> to vector<32x9x17xf32>
    %89 = arith.mulf %88, %87 : vector<32x9x17xf32>
    %90 = arith.addf %84, %89 : vector<32x9x17xf32>
    %91 = vector.extract_strided_slice %2 {offsets = [0, 7], sizes = [32, 1], strides = [1, 1]} : vector<32x8xf32> to vector<32x1xf32>
    %92 = vector.shape_cast %91 : vector<32x1xf32> to vector<32x1x1xf32>
    %93 = vector.extract_strided_slice %47 {offsets = [0, 7, 0], sizes = [32, 9, 17], strides = [1, 1, 1]} : vector<32x16x17xf32> to vector<32x9x17xf32>
    %94 = vector.broadcast %92 : vector<32x1x1xf32> to vector<32x9x17xf32>
    %95 = arith.mulf %94, %93 : vector<32x9x17xf32>
    %96 = arith.addf %90, %95 : vector<32x9x17xf32>
    %97 = vector.shape_cast %4 : vector<32x1xf32> to vector<32x1x1xf32>
    %98 = vector.broadcast %97 : vector<32x1x1xf32> to vector<32x9x17xf32>
    %99 = arith.addf %96, %98 : vector<32x9x17xf32>
    %100 = vector.extract_strided_slice %7 {offsets = [1, 0, 0], sizes = [1, 8, 20], strides = [1, 1, 1]} : vector<2x8x20xf32> to vector<1x8x20xf32>
    %101 = vector.shape_cast %100 : vector<1x8x20xf32> to vector<8x20xf32>
    %cst_7 = arith.constant 0.000000e+00 : f32
    %102 = vector.broadcast %cst_7 : f32 to vector<32x8x17xf32>
    %103 = vector.extract_strided_slice %1 {offsets = [0, 0], sizes = [32, 1], strides = [1, 1]} : vector<32x4xf32> to vector<32x1xf32>
    %104 = vector.shape_cast %103 : vector<32x1xf32> to vector<32x1x1xf32>
    %105 = vector.extract_strided_slice %101 {offsets = [0, 0], sizes = [8, 17], strides = [1, 1]} : vector<8x20xf32> to vector<8x17xf32>
    %106 = vector.shape_cast %105 : vector<8x17xf32> to vector<1x8x17xf32>
    %107 = vector.broadcast %104 : vector<32x1x1xf32> to vector<32x8x17xf32>
    %108 = vector.broadcast %106 : vector<1x8x17xf32> to vector<32x8x17xf32>
    %109 = arith.mulf %107, %108 : vector<32x8x17xf32>
    %110 = arith.addf %102, %109 : vector<32x8x17xf32>
    %111 = vector.extract_strided_slice %1 {offsets = [0, 1], sizes = [32, 1], strides = [1, 1]} : vector<32x4xf32> to vector<32x1xf32>
    %112 = vector.shape_cast %111 : vector<32x1xf32> to vector<32x1x1xf32>
    %113 = vector.extract_strided_slice %101 {offsets = [0, 1], sizes = [8, 17], strides = [1, 1]} : vector<8x20xf32> to vector<8x17xf32>
    %114 = vector.shape_cast %113 : vector<8x17xf32> to vector<1x8x17xf32>
    %115 = vector.broadcast %112 : vector<32x1x1xf32> to vector<32x8x17xf32>
    %116 = vector.broadcast %114 : vector<1x8x17xf32> to vector<32x8x17xf32>
    %117 = arith.mulf %115, %116 : vector<32x8x17xf32>
    %118 = arith.addf %110, %117 : vector<32x8x17xf32>
    %119 = vector.extract_strided_slice %1 {offsets = [0, 2], sizes = [32, 1], strides = [1, 1]} : vector<32x4xf32> to vector<32x1xf32>
    %120 = vector.shape_cast %119 : vector<32x1xf32> to vector<32x1x1xf32>
    %121 = vector.extract_strided_slice %101 {offsets = [0, 2], sizes = [8, 17], strides = [1, 1]} : vector<8x20xf32> to vector<8x17xf32>
    %122 = vector.shape_cast %121 : vector<8x17xf32> to vector<1x8x17xf32>
    %123 = vector.broadcast %120 : vector<32x1x1xf32> to vector<32x8x17xf32>
    %124 = vector.broadcast %122 : vector<1x8x17xf32> to vector<32x8x17xf32>
    %125 = arith.mulf %123, %124 : vector<32x8x17xf32>
    %126 = arith.addf %118, %125 : vector<32x8x17xf32>
    %127 = vector.extract_strided_slice %1 {offsets = [0, 3], sizes = [32, 1], strides = [1, 1]} : vector<32x4xf32> to vector<32x1xf32>
    %128 = vector.shape_cast %127 : vector<32x1xf32> to vector<32x1x1xf32>
    %129 = vector.extract_strided_slice %101 {offsets = [0, 3], sizes = [8, 17], strides = [1, 1]} : vector<8x20xf32> to vector<8x17xf32>
    %130 = vector.shape_cast %129 : vector<8x17xf32> to vector<1x8x17xf32>
    %131 = vector.broadcast %128 : vector<32x1x1xf32> to vector<32x8x17xf32>
    %132 = vector.broadcast %130 : vector<1x8x17xf32> to vector<32x8x17xf32>
    %133 = arith.mulf %131, %132 : vector<32x8x17xf32>
    %134 = arith.addf %126, %133 : vector<32x8x17xf32>
    %135 = vector.shape_cast %3 : vector<32x1xf32> to vector<32x1x1xf32>
    %136 = vector.broadcast %135 : vector<32x1x1xf32> to vector<32x8x17xf32>
    %137 = arith.addf %134, %136 : vector<32x8x17xf32>
    %138 = tpu.concatenate %8, %137, %8 in 1 : vector<32x4x17xf32>, vector<32x8x17xf32>, vector<32x4x17xf32> -> vector<32x16x17xf32>
    %cst_8 = arith.constant 0.000000e+00 : f32
    %139 = vector.broadcast %cst_8 : f32 to vector<32x9x17xf32>
    %140 = vector.extract_strided_slice %2 {offsets = [0, 0], sizes = [32, 1], strides = [1, 1]} : vector<32x8xf32> to vector<32x1xf32>
    %141 = vector.shape_cast %140 : vector<32x1xf32> to vector<32x1x1xf32>
    %142 = vector.extract_strided_slice %138 {offsets = [0, 0, 0], sizes = [32, 9, 17], strides = [1, 1, 1]} : vector<32x16x17xf32> to vector<32x9x17xf32>
    %143 = vector.broadcast %141 : vector<32x1x1xf32> to vector<32x9x17xf32>
    %144 = arith.mulf %143, %142 : vector<32x9x17xf32>
    %145 = arith.addf %139, %144 : vector<32x9x17xf32>
    %146 = vector.extract_strided_slice %2 {offsets = [0, 1], sizes = [32, 1], strides = [1, 1]} : vector<32x8xf32> to vector<32x1xf32>
    %147 = vector.shape_cast %146 : vector<32x1xf32> to vector<32x1x1xf32>
    %148 = vector.extract_strided_slice %138 {offsets = [0, 1, 0], sizes = [32, 9, 17], strides = [1, 1, 1]} : vector<32x16x17xf32> to vector<32x9x17xf32>
    %149 = vector.broadcast %147 : vector<32x1x1xf32> to vector<32x9x17xf32>
    %150 = arith.mulf %149, %148 : vector<32x9x17xf32>
    %151 = arith.addf %145, %150 : vector<32x9x17xf32>
    %152 = vector.extract_strided_slice %2 {offsets = [0, 2], sizes = [32, 1], strides = [1, 1]} : vector<32x8xf32> to vector<32x1xf32>
    %153 = vector.shape_cast %152 : vector<32x1xf32> to vector<32x1x1xf32>
    %154 = vector.extract_strided_slice %138 {offsets = [0, 2, 0], sizes = [32, 9, 17], strides = [1, 1, 1]} : vector<32x16x17xf32> to vector<32x9x17xf32>
    %155 = vector.broadcast %153 : vector<32x1x1xf32> to vector<32x9x17xf32>
    %156 = arith.mulf %155, %154 : vector<32x9x17xf32>
    %157 = arith.addf %151, %156 : vector<32x9x17xf32>
    %158 = vector.extract_strided_slice %2 {offsets = [0, 3], sizes = [32, 1], strides = [1, 1]} : vector<32x8xf32> to vector<32x1xf32>
    %159 = vector.shape_cast %158 : vector<32x1xf32> to vector<32x1x1xf32>
    %160 = vector.extract_strided_slice %138 {offsets = [0, 3, 0], sizes = [32, 9, 17], strides = [1, 1, 1]} : vector<32x16x17xf32> to vector<32x9x17xf32>
    %161 = vector.broadcast %159 : vector<32x1x1xf32> to vector<32x9x17xf32>
    %162 = arith.mulf %161, %160 : vector<32x9x17xf32>
    %163 = arith.addf %157, %162 : vector<32x9x17xf32>
    %164 = vector.extract_strided_slice %2 {offsets = [0, 4], sizes = [32, 1], strides = [1, 1]} : vector<32x8xf32> to vector<32x1xf32>
    %165 = vector.shape_cast %164 : vector<32x1xf32> to vector<32x1x1xf32>
    %166 = vector.extract_strided_slice %138 {offsets = [0, 4, 0], sizes = [32, 9, 17], strides = [1, 1, 1]} : vector<32x16x17xf32> to vector<32x9x17xf32>
    %167 = vector.broadcast %165 : vector<32x1x1xf32> to vector<32x9x17xf32>
    %168 = arith.mulf %167, %166 : vector<32x9x17xf32>
    %169 = arith.addf %163, %168 : vector<32x9x17xf32>
    %170 = vector.extract_strided_slice %2 {offsets = [0, 5], sizes = [32, 1], strides = [1, 1]} : vector<32x8xf32> to vector<32x1xf32>
    %171 = vector.shape_cast %170 : vector<32x1xf32> to vector<32x1x1xf32>
    %172 = vector.extract_strided_slice %138 {offsets = [0, 5, 0], sizes = [32, 9, 17], strides = [1, 1, 1]} : vector<32x16x17xf32> to vector<32x9x17xf32>
    %173 = vector.broadcast %171 : vector<32x1x1xf32> to vector<32x9x17xf32>
    %174 = arith.mulf %173, %172 : vector<32x9x17xf32>
    %175 = arith.addf %169, %174 : vector<32x9x17xf32>
    %176 = vector.extract_strided_slice %2 {offsets = [0, 6], sizes = [32, 1], strides = [1, 1]} : vector<32x8xf32> to vector<32x1xf32>
    %177 = vector.shape_cast %176 : vector<32x1xf32> to vector<32x1x1xf32>
    %178 = vector.extract_strided_slice %138 {offsets = [0, 6, 0], sizes = [32, 9, 17], strides = [1, 1, 1]} : vector<32x16x17xf32> to vector<32x9x17xf32>
    %179 = vector.broadcast %177 : vector<32x1x1xf32> to vector<32x9x17xf32>
    %180 = arith.mulf %179, %178 : vector<32x9x17xf32>
    %181 = arith.addf %175, %180 : vector<32x9x17xf32>
    %182 = vector.extract_strided_slice %2 {offsets = [0, 7], sizes = [32, 1], strides = [1, 1]} : vector<32x8xf32> to vector<32x1xf32>
    %183 = vector.shape_cast %182 : vector<32x1xf32> to vector<32x1x1xf32>
    %184 = vector.extract_strided_slice %138 {offsets = [0, 7, 0], sizes = [32, 9, 17], strides = [1, 1, 1]} : vector<32x16x17xf32> to vector<32x9x17xf32>
    %185 = vector.broadcast %183 : vector<32x1x1xf32> to vector<32x9x17xf32>
    %186 = arith.mulf %185, %184 : vector<32x9x17xf32>
    %187 = arith.addf %181, %186 : vector<32x9x17xf32>
    %188 = vector.shape_cast %4 : vector<32x1xf32> to vector<32x1x1xf32>
    %189 = vector.broadcast %188 : vector<32x1x1xf32> to vector<32x9x17xf32>
    %190 = arith.addf %187, %189 : vector<32x9x17xf32>
    %c0_9 = arith.constant 0 : index
    %c0_10 = arith.constant 0 : index
    %c0_11 = arith.constant 0 : index
    %c0_12 = arith.constant 0 : index
    %191 = vector.load %arg2[%c0_9, %c0_10, %c0_11, %c0_12] : memref<4x32x9x17xf32, #tpu.memory_space<vmem>>, vector<1x32x9x17xf32>
    %192 = vector.shape_cast %191 : vector<1x32x9x17xf32> to vector<32x9x17xf32>
    %193 = arith.mulf %99, %192 : vector<32x9x17xf32>
    %cst_13 = arith.constant dense<0.000000e+00> : vector<32x9xf32>
    %194 = vector.multi_reduction <add>, %193, %cst_13 [2] : vector<32x9x17xf32> to vector<32x9xf32>
    %195 = vector.shape_cast %194 : vector<32x9xf32> to vector<32x9x1xf32>
    %cst_14 = arith.constant dense<0.000000e+00> : vector<32x1xf32>
    %196 = vector.multi_reduction <add>, %195, %cst_14 [1] : vector<32x9x1xf32> to vector<32x1xf32>
    %197 = vector.shape_cast %196 : vector<32x1xf32> to vector<32x1x1xf32>
    %cst_15 = arith.constant dense<0.000000e+00> : vector<1x1xf32>
    %198 = vector.multi_reduction <add>, %197, %cst_15 [0] : vector<32x1x1xf32> to vector<1x1xf32>
    %199 = vector.shape_cast %198 : vector<1x1xf32> to vector<1x1x1xf32>
    %200 = vector.shape_cast %199 : vector<1x1x1xf32> to vector<1x1xf32>
    %201 = arith.mulf %190, %192 : vector<32x9x17xf32>
    %cst_16 = arith.constant dense<0.000000e+00> : vector<32x9xf32>
    %202 = vector.multi_reduction <add>, %201, %cst_16 [2] : vector<32x9x17xf32> to vector<32x9xf32>
    %203 = vector.shape_cast %202 : vector<32x9xf32> to vector<32x9x1xf32>
    %cst_17 = arith.constant dense<0.000000e+00> : vector<32x1xf32>
    %204 = vector.multi_reduction <add>, %203, %cst_17 [1] : vector<32x9x1xf32> to vector<32x1xf32>
    %205 = vector.shape_cast %204 : vector<32x1xf32> to vector<32x1x1xf32>
    %cst_18 = arith.constant dense<0.000000e+00> : vector<1x1xf32>
    %206 = vector.multi_reduction <add>, %205, %cst_18 [0] : vector<32x1x1xf32> to vector<1x1xf32>
    %207 = vector.shape_cast %206 : vector<1x1xf32> to vector<1x1x1xf32>
    %208 = vector.shape_cast %207 : vector<1x1x1xf32> to vector<1x1xf32>
    %209 = tpu.concatenate %200, %208 in 0 : vector<1x1xf32>, vector<1x1xf32> -> vector<2x1xf32>
    %210 = vector.extract_strided_slice %0 {offsets = [0, 14], sizes = [1, 1], strides = [1, 1]} : vector<32x15xf32> to vector<1x1xf32>
    %211 = vector.broadcast %210 : vector<1x1xf32> to vector<2x1xf32>
    %212 = arith.addf %209, %211 : vector<2x1xf32>
    %c1 = arith.constant 1 : index
    %c0_19 = arith.constant 0 : index
    %c0_20 = arith.constant 0 : index
    %c0_21 = arith.constant 0 : index
    %213 = vector.load %arg2[%c1, %c0_19, %c0_20, %c0_21] : memref<4x32x9x17xf32, #tpu.memory_space<vmem>>, vector<1x32x9x17xf32>
    %214 = vector.shape_cast %213 : vector<1x32x9x17xf32> to vector<32x9x17xf32>
    %215 = arith.mulf %99, %214 : vector<32x9x17xf32>
    %cst_22 = arith.constant dense<0.000000e+00> : vector<32x9xf32>
    %216 = vector.multi_reduction <add>, %215, %cst_22 [2] : vector<32x9x17xf32> to vector<32x9xf32>
    %217 = vector.shape_cast %216 : vector<32x9xf32> to vector<32x9x1xf32>
    %cst_23 = arith.constant dense<0.000000e+00> : vector<32x1xf32>
    %218 = vector.multi_reduction <add>, %217, %cst_23 [1] : vector<32x9x1xf32> to vector<32x1xf32>
    %219 = vector.shape_cast %218 : vector<32x1xf32> to vector<32x1x1xf32>
    %cst_24 = arith.constant dense<0.000000e+00> : vector<1x1xf32>
    %220 = vector.multi_reduction <add>, %219, %cst_24 [0] : vector<32x1x1xf32> to vector<1x1xf32>
    %221 = vector.shape_cast %220 : vector<1x1xf32> to vector<1x1x1xf32>
    %222 = vector.shape_cast %221 : vector<1x1x1xf32> to vector<1x1xf32>
    %223 = arith.mulf %190, %214 : vector<32x9x17xf32>
    %cst_25 = arith.constant dense<0.000000e+00> : vector<32x9xf32>
    %224 = vector.multi_reduction <add>, %223, %cst_25 [2] : vector<32x9x17xf32> to vector<32x9xf32>
    %225 = vector.shape_cast %224 : vector<32x9xf32> to vector<32x9x1xf32>
    %cst_26 = arith.constant dense<0.000000e+00> : vector<32x1xf32>
    %226 = vector.multi_reduction <add>, %225, %cst_26 [1] : vector<32x9x1xf32> to vector<32x1xf32>
    %227 = vector.shape_cast %226 : vector<32x1xf32> to vector<32x1x1xf32>
    %cst_27 = arith.constant dense<0.000000e+00> : vector<1x1xf32>
    %228 = vector.multi_reduction <add>, %227, %cst_27 [0] : vector<32x1x1xf32> to vector<1x1xf32>
    %229 = vector.shape_cast %228 : vector<1x1xf32> to vector<1x1x1xf32>
    %230 = vector.shape_cast %229 : vector<1x1x1xf32> to vector<1x1xf32>
    %231 = tpu.concatenate %222, %230 in 0 : vector<1x1xf32>, vector<1x1xf32> -> vector<2x1xf32>
    %232 = vector.extract_strided_slice %0 {offsets = [1, 14], sizes = [1, 1], strides = [1, 1]} : vector<32x15xf32> to vector<1x1xf32>
    %233 = vector.broadcast %232 : vector<1x1xf32> to vector<2x1xf32>
    %234 = arith.addf %231, %233 : vector<2x1xf32>
    %c2 = arith.constant 2 : index
    %c0_28 = arith.constant 0 : index
    %c0_29 = arith.constant 0 : index
    %c0_30 = arith.constant 0 : index
    %235 = vector.load %arg2[%c2, %c0_28, %c0_29, %c0_30] : memref<4x32x9x17xf32, #tpu.memory_space<vmem>>, vector<1x32x9x17xf32>
    %236 = vector.shape_cast %235 : vector<1x32x9x17xf32> to vector<32x9x17xf32>
    %237 = arith.mulf %99, %236 : vector<32x9x17xf32>
    %cst_31 = arith.constant dense<0.000000e+00> : vector<32x9xf32>
    %238 = vector.multi_reduction <add>, %237, %cst_31 [2] : vector<32x9x17xf32> to vector<32x9xf32>
    %239 = vector.shape_cast %238 : vector<32x9xf32> to vector<32x9x1xf32>
    %cst_32 = arith.constant dense<0.000000e+00> : vector<32x1xf32>
    %240 = vector.multi_reduction <add>, %239, %cst_32 [1] : vector<32x9x1xf32> to vector<32x1xf32>
    %241 = vector.shape_cast %240 : vector<32x1xf32> to vector<32x1x1xf32>
    %cst_33 = arith.constant dense<0.000000e+00> : vector<1x1xf32>
    %242 = vector.multi_reduction <add>, %241, %cst_33 [0] : vector<32x1x1xf32> to vector<1x1xf32>
    %243 = vector.shape_cast %242 : vector<1x1xf32> to vector<1x1x1xf32>
    %244 = vector.shape_cast %243 : vector<1x1x1xf32> to vector<1x1xf32>
    %245 = arith.mulf %190, %236 : vector<32x9x17xf32>
    %cst_34 = arith.constant dense<0.000000e+00> : vector<32x9xf32>
    %246 = vector.multi_reduction <add>, %245, %cst_34 [2] : vector<32x9x17xf32> to vector<32x9xf32>
    %247 = vector.shape_cast %246 : vector<32x9xf32> to vector<32x9x1xf32>
    %cst_35 = arith.constant dense<0.000000e+00> : vector<32x1xf32>
    %248 = vector.multi_reduction <add>, %247, %cst_35 [1] : vector<32x9x1xf32> to vector<32x1xf32>
    %249 = vector.shape_cast %248 : vector<32x1xf32> to vector<32x1x1xf32>
    %cst_36 = arith.constant dense<0.000000e+00> : vector<1x1xf32>
    %250 = vector.multi_reduction <add>, %249, %cst_36 [0] : vector<32x1x1xf32> to vector<1x1xf32>
    %251 = vector.shape_cast %250 : vector<1x1xf32> to vector<1x1x1xf32>
    %252 = vector.shape_cast %251 : vector<1x1x1xf32> to vector<1x1xf32>
    %253 = tpu.concatenate %244, %252 in 0 : vector<1x1xf32>, vector<1x1xf32> -> vector<2x1xf32>
    %254 = vector.extract_strided_slice %0 {offsets = [2, 14], sizes = [1, 1], strides = [1, 1]} : vector<32x15xf32> to vector<1x1xf32>
    %255 = vector.broadcast %254 : vector<1x1xf32> to vector<2x1xf32>
    %256 = arith.addf %253, %255 : vector<2x1xf32>
    %c3 = arith.constant 3 : index
    %c0_37 = arith.constant 0 : index
    %c0_38 = arith.constant 0 : index
    %c0_39 = arith.constant 0 : index
    %257 = vector.load %arg2[%c3, %c0_37, %c0_38, %c0_39] : memref<4x32x9x17xf32, #tpu.memory_space<vmem>>, vector<1x32x9x17xf32>
    %258 = vector.shape_cast %257 : vector<1x32x9x17xf32> to vector<32x9x17xf32>
    %259 = arith.mulf %99, %258 : vector<32x9x17xf32>
    %cst_40 = arith.constant dense<0.000000e+00> : vector<32x9xf32>
    %260 = vector.multi_reduction <add>, %259, %cst_40 [2] : vector<32x9x17xf32> to vector<32x9xf32>
    %261 = vector.shape_cast %260 : vector<32x9xf32> to vector<32x9x1xf32>
    %cst_41 = arith.constant dense<0.000000e+00> : vector<32x1xf32>
    %262 = vector.multi_reduction <add>, %261, %cst_41 [1] : vector<32x9x1xf32> to vector<32x1xf32>
    %263 = vector.shape_cast %262 : vector<32x1xf32> to vector<32x1x1xf32>
    %cst_42 = arith.constant dense<0.000000e+00> : vector<1x1xf32>
    %264 = vector.multi_reduction <add>, %263, %cst_42 [0] : vector<32x1x1xf32> to vector<1x1xf32>
    %265 = vector.shape_cast %264 : vector<1x1xf32> to vector<1x1x1xf32>
    %266 = vector.shape_cast %265 : vector<1x1x1xf32> to vector<1x1xf32>
    %267 = arith.mulf %190, %258 : vector<32x9x17xf32>
    %cst_43 = arith.constant dense<0.000000e+00> : vector<32x9xf32>
    %268 = vector.multi_reduction <add>, %267, %cst_43 [2] : vector<32x9x17xf32> to vector<32x9xf32>
    %269 = vector.shape_cast %268 : vector<32x9xf32> to vector<32x9x1xf32>
    %cst_44 = arith.constant dense<0.000000e+00> : vector<32x1xf32>
    %270 = vector.multi_reduction <add>, %269, %cst_44 [1] : vector<32x9x1xf32> to vector<32x1xf32>
    %271 = vector.shape_cast %270 : vector<32x1xf32> to vector<32x1x1xf32>
    %cst_45 = arith.constant dense<0.000000e+00> : vector<1x1xf32>
    %272 = vector.multi_reduction <add>, %271, %cst_45 [0] : vector<32x1x1xf32> to vector<1x1xf32>
    %273 = vector.shape_cast %272 : vector<1x1xf32> to vector<1x1x1xf32>
    %274 = vector.shape_cast %273 : vector<1x1x1xf32> to vector<1x1xf32>
    %275 = tpu.concatenate %266, %274 in 0 : vector<1x1xf32>, vector<1x1xf32> -> vector<2x1xf32>
    %276 = vector.extract_strided_slice %0 {offsets = [3, 14], sizes = [1, 1], strides = [1, 1]} : vector<32x15xf32> to vector<1x1xf32>
    %277 = vector.broadcast %276 : vector<1x1xf32> to vector<2x1xf32>
    %278 = arith.addf %275, %277 : vector<2x1xf32>
    %279 = tpu.concatenate %212, %234, %256, %278 in 1 : vector<2x1xf32>, vector<2x1xf32>, vector<2x1xf32>, vector<2x1xf32> -> vector<2x4xf32>
    %cst_46 = arith.constant dense<0xFF800000> : vector<2xf32>
    %280 = vector.multi_reduction <maximumf>, %279, %cst_46 [1] : vector<2x4xf32> to vector<2xf32>
    %281 = vector.shape_cast %280 : vector<2xf32> to vector<2x1xf32>
    %282 = vector.broadcast %281 : vector<2x1xf32> to vector<2x4xf32>
    %283 = arith.subf %279, %282 : vector<2x4xf32>
    %284 = math.exp %283 : vector<2x4xf32>
    %cst_47 = arith.constant dense<0.000000e+00> : vector<2xf32>
    %285 = vector.multi_reduction <add>, %284, %cst_47 [1] : vector<2x4xf32> to vector<2xf32>
    %286 = vector.shape_cast %285 : vector<2xf32> to vector<2x1xf32>
    %287 = math.log %286 : vector<2x1xf32>
    %288 = vector.broadcast %287 : vector<2x1xf32> to vector<2x4xf32>
    %289 = arith.subf %283, %288 : vector<2x4xf32>
    %c0_48 = arith.constant 0 : index
    %c0_49 = arith.constant 0 : index
    %290 = vector.load %arg3[%c0_48, %c0_49] : memref<2x4xf32, #tpu.memory_space<vmem>>, vector<2x4xf32>
    tpu.vector_store %arg3[%c0_48, %c0_49], %289 {strides = array<i32>} : memref<2x4xf32, #tpu.memory_space<vmem>>, vector<2x4xf32>,
    return
  }
}

</mosaic_0001>

<llo_original>
// kernel: simple_eeg_forward.1
$region0: #{simple_eeg_forward.1}
  #allocation0 [shape = 'u32[]', space=smem, size = 0x4, offset = 0x4, fixed_abs, tag = 'smem constant byte address 0x4 - core index']
  #allocation1 [shape = 'u32[144,128]{1,0:T(1,128)}', space=vmem, size = 0x12000, scoped, tag = 'internal scratch']
  %s0 = inlined_call_operand.vmem [shape: f32[2,8,16], index: 0, kind: input, shape index: {}]
  %s1 = inlined_call_operand.vmem [shape: f32[32,15], index: 1, kind: input, shape index: {}]
  %s2 = inlined_call_operand.vmem [shape: f32[4,32,9,17], index: 2, kind: input, shape index: {}]
  %s3 = inlined_call_operand.hbm [shape: f32[2,4], index: 3, kind: output, shape index: {}]
  %s4 = sld [smem:[#allocation0]]
  $region22: #{simple_eeg_forward.1} parent=0
    _
  %s6 = ssub.s32 1, %s4
  %s7 = scalar_select 0, %s6, %s4
  $region1: #{simple_eeg_forward.1} parent=0
    #allocation2 [shape = 'u8[1024]{0}', space=vmem, size = 0x400, scoped, tag = 'output window, operand 0, single buffered']
    #allocation3 [shape = 's32[1]{0}', space=sflag, size = 0x4, scoped, tag = 'scoped memory for simple_eeg_forward.1']
    %8 = vsyncpa [#allocation3], 0
    // Predicated region
    $region2: #{simple_eeg_forward.1} parent=1 // pred_check
      _
    $region3: #{simple_eeg_forward.1} parent=1 // pred_check_branch
      %10 = sbr.rel (0) target = $region5
    $region4: #{simple_eeg_forward.1} parent=1 // pred_region
      _
    $region5: #{simple_eeg_forward.1} parent=1 // pred_fallthru
      _
    // Predicated region
    $region6: #{simple_eeg_forward.1} parent=1 // pred_check
      _
    $region7: #{simple_eeg_forward.1} parent=1 // pred_check_branch
      %12 = sbr.rel (0) target = $region9
    $region8: #{simple_eeg_forward.1} parent=1 // pred_region
      _
    $region9: #{simple_eeg_forward.1} parent=1 // pred_fallthru
      _
    // Predicated region
    $region10: #{simple_eeg_forward.1} parent=1 // pred_check
      _
    $region11: #{simple_eeg_forward.1} parent=1 // pred_check_branch
      %14 = sbr.rel (0) target = $region13
    $region12: #{simple_eeg_forward.1} parent=1 // pred_region
      _
    $region13: #{simple_eeg_forward.1} parent=1 // pred_fallthru
      _
    %v15 = vld [vmem:[%s1] sm:$0xff]
    %v16 = vld [vmem:[%s1 + $0x8] sm:$0xff]
    %v17 = vld [vmem:[%s1 + $0x10] sm:$0xff]
    %v18 = vld [vmem:[%s1 + $0x18] sm:$0xff]
    %v19 = vld [vmem:[%s0] sm:$0xff]
    %v20 = vld [vmem:[%s0 + $0x8] sm:$0xff]
    %23 = vrot.lane.b32.xlu0 %v19, 2
    %v24 = vpop.permute.xlu0 %23
    %25 = vrot.lane.b32.xlu0 %v20, 2
    %v26 = vpop.permute.xlu0 %25
    %vm29 = vcmask 15360
    %v30 = vsel %vm29, 0.0, %v24
    %v31 = vsel %vm29, 0.0, %v26
    %vm32 = vcmask 146432
    %v33 = vsel %vm32, %v30, 0.0
    %v34 = vsel %vm32, %v31, 0.0
    %v39 = vcombine.high %v15, %v15
    %v41 = vunpack.c.l.s4 1966171168
    %v42 = vunpack.c.0.s8 %v41
    %v43 = vlaneseq
    %v44 = vshrl.u32 %v43, 7
    %v45 = vsub.s32 %v42, %v44
    %v46 = vrot.slane %v15, %v45
    %v48 = vunpack.c.l.s4 1966171168
    %v49 = vunpack.c.0.s8 %v48
    %v50 = vlaneseq
    %v51 = vshrl.u32 %v50, 7
    %v52 = vsub.s32 %v49, %v51
    %v53 = vrot.slane %v39, %v52
    %v54 = vcombine.high %v46, %v46
    %v55 = vcombine.high %v53, %v53
    %v57 = vunpack.c.l.s4 1966171168
    %v58 = vunpack.c.0.s8 %v57
    %v59 = vlaneseq
    %v60 = vshrl.u32 %v59, 7
    %v61 = vsub.s32 %v58, %v60
    %v62 = vrot.slane %v46, %v61
    %v64 = vunpack.c.l.s4 1966171168
    %v65 = vunpack.c.0.s8 %v64
    %v66 = vlaneseq
    %v67 = vshrl.u32 %v66, 7
    %v68 = vsub.s32 %v65, %v67
    %v69 = vrot.slane %v53, %v68
    %v71 = vunpack.c.l.s4 1966171168
    %v72 = vunpack.c.0.s8 %v71
    %v73 = vlaneseq
    %v74 = vshrl.u32 %v73, 7
    %v75 = vsub.s32 %v72, %v74
    %v76 = vrot.slane %v54, %v75
    %v78 = vunpack.c.l.s4 1966171168
    %v79 = vunpack.c.0.s8 %v78
    %v80 = vlaneseq
    %v81 = vshrl.u32 %v80, 7
    %v82 = vsub.s32 %v79, %v81
    %v83 = vrot.slane %v55, %v82
    %v84 = vcombine.high %v62, %v62
    %v85 = vcombine.high %v69, %v69
    %v86 = vcombine.high %v76, %v76
    %v87 = vcombine.high %v83, %v83
    %v88 = vcombine.high %v16, %v16
    %v90 = vunpack.c.l.s4 1966171168
    %v91 = vunpack.c.0.s8 %v90
    %v92 = vlaneseq
    %v93 = vshrl.u32 %v92, 7
    %v94 = vsub.s32 %v91, %v93
    %v95 = vrot.slane %v16, %v94
    %v97 = vunpack.c.l.s4 1966171168
    %v98 = vunpack.c.0.s8 %v97
    %v99 = vlaneseq
    %v100 = vshrl.u32 %v99, 7
    %v101 = vsub.s32 %v98, %v100
    %v102 = vrot.slane %v88, %v101
    %v103 = vcombine.high %v95, %v95
    %v104 = vcombine.high %v102, %v102
    %v106 = vunpack.c.l.s4 1966171168
    %v107 = vunpack.c.0.s8 %v106
    %v108 = vlaneseq
    %v109 = vshrl.u32 %v108, 7
    %v110 = vsub.s32 %v107, %v109
    %v111 = vrot.slane %v95, %v110
    %v113 = vunpack.c.l.s4 1966171168
    %v114 = vunpack.c.0.s8 %v113
    %v115 = vlaneseq
    %v116 = vshrl.u32 %v115, 7
    %v117 = vsub.s32 %v114, %v116
    %v118 = vrot.slane %v102, %v117
    %v120 = vunpack.c.l.s4 1966171168
    %v121 = vunpack.c.0.s8 %v120
    %v122 = vlaneseq
    %v123 = vshrl.u32 %v122, 7
    %v124 = vsub.s32 %v121, %v123
    %v125 = vrot.slane %v103, %v124
    %v127 = vunpack.c.l.s4 1966171168
    %v128 = vunpack.c.0.s8 %v127
    %v129 = vlaneseq
    %v130 = vshrl.u32 %v129, 7
    %v131 = vsub.s32 %v128, %v130
    %v132 = vrot.slane %v104, %v131
    %v133 = vcombine.high %v111, %v111
    %v134 = vcombine.high %v118, %v118
    %v135 = vcombine.high %v125, %v125
    %v136 = vcombine.high %v132, %v132
    %v137 = vcombine.high %v17, %v17
    %v139 = vunpack.c.l.s4 1966171168
    %v140 = vunpack.c.0.s8 %v139
    %v141 = vlaneseq
    %v142 = vshrl.u32 %v141, 7
    %v143 = vsub.s32 %v140, %v142
    %v144 = vrot.slane %v17, %v143
    %v146 = vunpack.c.l.s4 1966171168
    %v147 = vunpack.c.0.s8 %v146
    %v148 = vlaneseq
    %v149 = vshrl.u32 %v148, 7
    %v150 = vsub.s32 %v147, %v149
    %v151 = vrot.slane %v137, %v150
    %v152 = vcombine.high %v144, %v144
    %v153 = vcombine.high %v151, %v151
    %v155 = vunpack.c.l.s4 1966171168
    %v156 = vunpack.c.0.s8 %v155
    %v157 = vlaneseq
    %v158 = vshrl.u32 %v157, 7
    %v159 = vsub.s32 %v156, %v158
    %v160 = vrot.slane %v144, %v159
    %v162 = vunpack.c.l.s4 1966171168
    %v163 = vunpack.c.0.s8 %v162
    %v164 = vlaneseq
    %v165 = vshrl.u32 %v164, 7
    %v166 = vsub.s32 %v163, %v165
    %v167 = vrot.slane %v151, %v166
    %v169 = vunpack.c.l.s4 1966171168
    %v170 = vunpack.c.0.s8 %v169
    %v171 = vlaneseq
    %v172 = vshrl.u32 %v171, 7
    %v173 = vsub.s32 %v170, %v172
    %v174 = vrot.slane %v152, %v173
    %v176 = vunpack.c.l.s4 1966171168
    %v177 = vunpack.c.0.s8 %v176
    %v178 = vlaneseq
    %v179 = vshrl.u32 %v178, 7
    %v180 = vsub.s32 %v177, %v179
    %v181 = vrot.slane %v153, %v180
    %v182 = vcombine.high %v160, %v160
    %v183 = vcombine.high %v167, %v167
    %v184 = vcombine.high %v174, %v174
    %v185 = vcombine.high %v181, %v181
    %v186 = vcombine.high %v18, %v18
    %v188 = vunpack.c.l.s4 1966171168
    %v189 = vunpack.c.0.s8 %v188
    %v190 = vlaneseq
    %v191 = vshrl.u32 %v190, 7
    %v192 = vsub.s32 %v189, %v191
    %v193 = vrot.slane %v18, %v192
    %v195 = vunpack.c.l.s4 1966171168
    %v196 = vunpack.c.0.s8 %v195
    %v197 = vlaneseq
    %v198 = vshrl.u32 %v197, 7
    %v199 = vsub.s32 %v196, %v198
    %v200 = vrot.slane %v186, %v199
    %v201 = vcombine.high %v193, %v193
    %v202 = vcombine.high %v200, %v200
    %v204 = vunpack.c.l.s4 1966171168
    %v205 = vunpack.c.0.s8 %v204
    %v206 = vlaneseq
    %v207 = vshrl.u32 %v206, 7
    %v208 = vsub.s32 %v205, %v207
    %v209 = vrot.slane %v193, %v208
    %v211 = vunpack.c.l.s4 1966171168
    %v212 = vunpack.c.0.s8 %v211
    %v213 = vlaneseq
    %v214 = vshrl.u32 %v213, 7
    %v215 = vsub.s32 %v212, %v214
    %v216 = vrot.slane %v200, %v215
    %v218 = vunpack.c.l.s4 1966171168
    %v219 = vunpack.c.0.s8 %v218
    %v220 = vlaneseq
    %v221 = vshrl.u32 %v220, 7
    %v222 = vsub.s32 %v219, %v221
    %v223 = vrot.slane %v201, %v222
    %v225 = vunpack.c.l.s4 1966171168
    %v226 = vunpack.c.0.s8 %v225
    %v227 = vlaneseq
    %v228 = vshrl.u32 %v227, 7
    %v229 = vsub.s32 %v226, %v228
    %v230 = vrot.slane %v202, %v229
    %v231 = vcombine.high %v209, %v209
    %v232 = vcombine.high %v216, %v216
    %v233 = vcombine.high %v223, %v223
    %v234 = vcombine.high %v230, %v230
    %v235 = vlaneseq
    %v236 = vshrl.u32 %v235, 7
    %v237 = vsub.s32 0, %v236
    %v238 = vrot.slane %v62, %v237
    %v239 = vlaneseq
    %v240 = vshrl.u32 %v239, 7
    %v241 = vsub.s32 0, %v240
    %v242 = vrot.slane %v76, %v241
    %v243 = vlaneseq
    %v244 = vshrl.u32 %v243, 7
    %v245 = vsub.s32 0, %v244
    %v246 = vrot.slane %v84, %v245
    %v247 = vlaneseq
    %v248 = vshrl.u32 %v247, 7
    %v249 = vsub.s32 0, %v248
    %v250 = vrot.slane %v86, %v249
    %v251 = vlaneseq
    %v252 = vshrl.u32 %v251, 7
    %v253 = vsub.s32 0, %v252
    %v254 = vrot.slane %v69, %v253
    %v255 = vlaneseq
    %v256 = vshrl.u32 %v255, 7
    %v257 = vsub.s32 0, %v256
    %v258 = vrot.slane %v83, %v257
    %v259 = vlaneseq
    %v260 = vshrl.u32 %v259, 7
    %v261 = vsub.s32 0, %v260
    %v262 = vrot.slane %v85, %v261
    %v263 = vlaneseq
    %v264 = vshrl.u32 %v263, 7
    %v265 = vsub.s32 0, %v264
    %v266 = vrot.slane %v87, %v265
    %v267 = vlaneseq
    %v268 = vshrl.u32 %v267, 7
    %v269 = vsub.s32 0, %v268
    %v270 = vrot.slane %v111, %v269
    %v271 = vlaneseq
    %v272 = vshrl.u32 %v271, 7
    %v273 = vsub.s32 0, %v272
    %v274 = vrot.slane %v125, %v273
    %v275 = vlaneseq
    %v276 = vshrl.u32 %v275, 7
    %v277 = vsub.s32 0, %v276
    %v278 = vrot.slane %v133, %v277
    %v279 = vlaneseq
    %v280 = vshrl.u32 %v279, 7
    %v281 = vsub.s32 0, %v280
    %v282 = vrot.slane %v135, %v281
    %v283 = vlaneseq
    %v284 = vshrl.u32 %v283, 7
    %v285 = vsub.s32 0, %v284
    %v286 = vrot.slane %v118, %v285
    %v287 = vlaneseq
    %v288 = vshrl.u32 %v287, 7
    %v289 = vsub.s32 0, %v288
    %v290 = vrot.slane %v132, %v289
    %v291 = vlaneseq
    %v292 = vshrl.u32 %v291, 7
    %v293 = vsub.s32 0, %v292
    %v294 = vrot.slane %v134, %v293
    %v295 = vlaneseq
    %v296 = vshrl.u32 %v295, 7
    %v297 = vsub.s32 0, %v296
    %v298 = vrot.slane %v136, %v297
    %v299 = vlaneseq
    %v300 = vshrl.u32 %v299, 7
    %v301 = vsub.s32 0, %v300
    %v302 = vrot.slane %v160, %v301
    %v303 = vlaneseq
    %v304 = vshrl.u32 %v303, 7
    %v305 = vsub.s32 0, %v304
    %v306 = vrot.slane %v174, %v305
    %v307 = vlaneseq
    %v308 = vshrl.u32 %v307, 7
    %v309 = vsub.s32 0, %v308
    %v310 = vrot.slane %v182, %v309
    %v311 = vlaneseq
    %v312 = vshrl.u32 %v311, 7
    %v313 = vsub.s32 0, %v312
    %v314 = vrot.slane %v184, %v313
    %v315 = vlaneseq
    %v316 = vshrl.u32 %v315, 7
    %v317 = vsub.s32 0, %v316
    %v318 = vrot.slane %v167, %v317
    %v319 = vlaneseq
    %v320 = vshrl.u32 %v319, 7
    %v321 = vsub.s32 0, %v320
    %v322 = vrot.slane %v181, %v321
    %v323 = vlaneseq
    %v324 = vshrl.u32 %v323, 7
    %v325 = vsub.s32 0, %v324
    %v326 = vrot.slane %v183, %v325
    %v327 = vlaneseq
    %v328 = vshrl.u32 %v327, 7
    %v329 = vsub.s32 0, %v328
    %v330 = vrot.slane %v185, %v329
    %v331 = vlaneseq
    %v332 = vshrl.u32 %v331, 7
    %v333 = vsub.s32 0, %v332
    %v334 = vrot.slane %v209, %v333
    %v335 = vlaneseq
    %v336 = vshrl.u32 %v335, 7
    %v337 = vsub.s32 0, %v336
    %v338 = vrot.slane %v223, %v337
    %v339 = vlaneseq
    %v340 = vshrl.u32 %v339, 7
    %v341 = vsub.s32 0, %v340
    %v342 = vrot.slane %v231, %v341
    %v343 = vlaneseq
    %v344 = vshrl.u32 %v343, 7
    %v345 = vsub.s32 0, %v344
    %v346 = vrot.slane %v233, %v345
    %v347 = vlaneseq
    %v348 = vshrl.u32 %v347, 7
    %v349 = vsub.s32 0, %v348
    %v350 = vrot.slane %v216, %v349
    %v351 = vlaneseq
    %v352 = vshrl.u32 %v351, 7
    %v353 = vsub.s32 0, %v352
    %v354 = vrot.slane %v230, %v353
    %v355 = vlaneseq
    %v356 = vshrl.u32 %v355, 7
    %v357 = vsub.s32 0, %v356
    %v358 = vrot.slane %v232, %v357
    %v359 = vlaneseq
    %v360 = vshrl.u32 %v359, 7
    %v361 = vsub.s32 0, %v360
    %v362 = vrot.slane %v234, %v361
    %363 = vset.pattern.permute.xlu0 0
    %364 = vperm.xlu0 %363, %v238
    %v365 = vpop.permute.xlu0 %364
    %367 = vset.pattern.permute.xlu0 0
    %368 = vperm.xlu0 %367, %v242
    %v369 = vpop.permute.xlu0 %368
    %371 = vset.pattern.permute.xlu0 0
    %372 = vperm.xlu0 %371, %v246
    %v373 = vpop.permute.xlu0 %372
    %375 = vset.pattern.permute.xlu0 0
    %376 = vperm.xlu0 %375, %v250
    %v377 = vpop.permute.xlu0 %376
    %379 = vset.pattern.permute.xlu0 0
    %380 = vperm.xlu0 %379, %v254
    %v381 = vpop.permute.xlu0 %380
    %383 = vset.pattern.permute.xlu0 0
    %384 = vperm.xlu0 %383, %v258
    %v385 = vpop.permute.xlu0 %384
    %387 = vset.pattern.permute.xlu0 0
    %388 = vperm.xlu0 %387, %v262
    %v389 = vpop.permute.xlu0 %388
    %391 = vset.pattern.permute.xlu0 0
    %392 = vperm.xlu0 %391, %v266
    %v393 = vpop.permute.xlu0 %392
    %395 = vset.pattern.permute.xlu0 0
    %396 = vperm.xlu0 %395, %v270
    %v397 = vpop.permute.xlu0 %396
    %399 = vset.pattern.permute.xlu0 0
    %400 = vperm.xlu0 %399, %v274
    %v401 = vpop.permute.xlu0 %400
    %403 = vset.pattern.permute.xlu0 0
    %404 = vperm.xlu0 %403, %v278
    %v405 = vpop.permute.xlu0 %404
    %407 = vset.pattern.permute.xlu0 0
    %408 = vperm.xlu0 %407, %v282
    %v409 = vpop.permute.xlu0 %408
    %411 = vset.pattern.permute.xlu0 0
    %412 = vperm.xlu0 %411, %v286
    %v413 = vpop.permute.xlu0 %412
    %415 = vset.pattern.permute.xlu0 0
    %416 = vperm.xlu0 %415, %v290
    %v417 = vpop.permute.xlu0 %416
    %419 = vset.pattern.permute.xlu0 0
    %420 = vperm.xlu0 %419, %v294
    %v421 = vpop.permute.xlu0 %420
    %423 = vset.pattern.permute.xlu0 0
    %424 = vperm.xlu0 %423, %v298
    %v425 = vpop.permute.xlu0 %424
    %427 = vset.pattern.permute.xlu0 0
    %428 = vperm.xlu0 %427, %v302
    %v429 = vpop.permute.xlu0 %428
    %431 = vset.pattern.permute.xlu0 0
    %432 = vperm.xlu0 %431, %v306
    %v433 = vpop.permute.xlu0 %432
    %435 = vset.pattern.permute.xlu0 0
    %436 = vperm.xlu0 %435, %v310
    %v437 = vpop.permute.xlu0 %436
    %439 = vset.pattern.permute.xlu0 0
    %440 = vperm.xlu0 %439, %v314
    %v441 = vpop.permute.xlu0 %440
    %443 = vset.pattern.permute.xlu0 0
    %444 = vperm.xlu0 %443, %v318
    %v445 = vpop.permute.xlu0 %444
    %447 = vset.pattern.permute.xlu0 0
    %448 = vperm.xlu0 %447, %v322
    %v449 = vpop.permute.xlu0 %448
    %451 = vset.pattern.permute.xlu0 0
    %452 = vperm.xlu0 %451, %v326
    %v453 = vpop.permute.xlu0 %452
    %455 = vset.pattern.permute.xlu0 0
    %456 = vperm.xlu0 %455, %v330
    %v457 = vpop.permute.xlu0 %456
    %459 = vset.pattern.permute.xlu0 0
    %460 = vperm.xlu0 %459, %v334
    %v461 = vpop.permute.xlu0 %460
    %463 = vset.pattern.permute.xlu0 0
    %464 = vperm.xlu0 %463, %v338
    %v465 = vpop.permute.xlu0 %464
    %467 = vset.pattern.permute.xlu0 0
    %468 = vperm.xlu0 %467, %v342
    %v469 = vpop.permute.xlu0 %468
    %471 = vset.pattern.permute.xlu0 0
    %472 = vperm.xlu0 %471, %v346
    %v473 = vpop.permute.xlu0 %472
    %475 = vset.pattern.permute.xlu0 0
    %476 = vperm.xlu0 %475, %v350
    %v477 = vpop.permute.xlu0 %476
    %479 = vset.pattern.permute.xlu0 0
    %480 = vperm.xlu0 %479, %v354
    %v481 = vpop.permute.xlu0 %480
    %483 = vset.pattern.permute.xlu0 0
    %484 = vperm.xlu0 %483, %v358
    %v485 = vpop.permute.xlu0 %484
    %487 = vset.pattern.permute.xlu0 0
    %488 = vperm.xlu0 %487, %v362
    %v489 = vpop.permute.xlu0 %488
    %v491 = vmul.f32 %v365, %v33
    %v492 = vmul.f32 %v369, %v33
    %v493 = vmul.f32 %v373, %v33
    %v494 = vmul.f32 %v377, %v33
    %v495 = vmul.f32 %v381, %v33
    %v496 = vmul.f32 %v385, %v33
    %v497 = vmul.f32 %v389, %v33
    %v498 = vmul.f32 %v393, %v33
    %v499 = vmul.f32 %v397, %v33
    %v500 = vmul.f32 %v401, %v33
    %v501 = vmul.f32 %v405, %v33
    %v502 = vmul.f32 %v409, %v33
    %v503 = vmul.f32 %v413, %v33
    %v504 = vmul.f32 %v417, %v33
    %v505 = vmul.f32 %v421, %v33
    %v506 = vmul.f32 %v425, %v33
    %v507 = vmul.f32 %v429, %v33
    %v508 = vmul.f32 %v433, %v33
    %v509 = vmul.f32 %v437, %v33
    %v510 = vmul.f32 %v441, %v33
    %v511 = vmul.f32 %v445, %v33
    %v512 = vmul.f32 %v449, %v33
    %v513 = vmul.f32 %v453, %v33
    %v514 = vmul.f32 %v457, %v33
    %v515 = vmul.f32 %v461, %v33
    %v516 = vmul.f32 %v465, %v33
    %v517 = vmul.f32 %v469, %v33
    %v518 = vmul.f32 %v473, %v33
    %v519 = vmul.f32 %v477, %v33
    %v520 = vmul.f32 %v481, %v33
    %v521 = vmul.f32 %v485, %v33
    %v522 = vmul.f32 %v489, %v33
    %v523 = vadd.f32 %v491, 0.0
    %v524 = vadd.f32 %v492, 0.0
    %v525 = vadd.f32 %v493, 0.0
    %v526 = vadd.f32 %v494, 0.0
    %v527 = vadd.f32 %v495, 0.0
    %v528 = vadd.f32 %v496, 0.0
    %v529 = vadd.f32 %v497, 0.0
    %v530 = vadd.f32 %v498, 0.0
    %v531 = vadd.f32 %v499, 0.0
    %v532 = vadd.f32 %v500, 0.0
    %v533 = vadd.f32 %v501, 0.0
    %v534 = vadd.f32 %v502, 0.0
    %v535 = vadd.f32 %v503, 0.0
    %v536 = vadd.f32 %v504, 0.0
    %v537 = vadd.f32 %v505, 0.0
    %v538 = vadd.f32 %v506, 0.0
    %v539 = vadd.f32 %v507, 0.0
    %v540 = vadd.f32 %v508, 0.0
    %v541 = vadd.f32 %v509, 0.0
    %v542 = vadd.f32 %v510, 0.0
    %v543 = vadd.f32 %v511, 0.0
    %v544 = vadd.f32 %v512, 0.0
    %v545 = vadd.f32 %v513, 0.0
    %v546 = vadd.f32 %v514, 0.0
    %v547 = vadd.f32 %v515, 0.0
    %v548 = vadd.f32 %v516, 0.0
    %v549 = vadd.f32 %v517, 0.0
    %v550 = vadd.f32 %v518, 0.0
    %v551 = vadd.f32 %v519, 0.0
    %v552 = vadd.f32 %v520, 0.0
    %v553 = vadd.f32 %v521, 0.0
    %v554 = vadd.f32 %v522, 0.0
    %555 = vset.pattern.permute.xlu0 1
    %556 = vperm.xlu0 %555, %v238
    %v557 = vpop.permute.xlu0 %556
    %559 = vset.pattern.permute.xlu0 1
    %560 = vperm.xlu0 %559, %v242
    %v561 = vpop.permute.xlu0 %560
    %563 = vset.pattern.permute.xlu0 1
    %564 = vperm.xlu0 %563, %v246
    %v565 = vpop.permute.xlu0 %564
    %567 = vset.pattern.permute.xlu0 1
    %568 = vperm.xlu0 %567, %v250
    %v569 = vpop.permute.xlu0 %568
    %571 = vset.pattern.permute.xlu0 1
    %572 = vperm.xlu0 %571, %v254
    %v573 = vpop.permute.xlu0 %572
    %575 = vset.pattern.permute.xlu0 1
    %576 = vperm.xlu0 %575, %v258
    %v577 = vpop.permute.xlu0 %576
    %579 = vset.pattern.permute.xlu0 1
    %580 = vperm.xlu0 %579, %v262
    %v581 = vpop.permute.xlu0 %580
    %583 = vset.pattern.permute.xlu0 1
    %584 = vperm.xlu0 %583, %v266
    %v585 = vpop.permute.xlu0 %584
    %587 = vset.pattern.permute.xlu0 1
    %588 = vperm.xlu0 %587, %v270
    %v589 = vpop.permute.xlu0 %588
    %591 = vset.pattern.permute.xlu0 1
    %592 = vperm.xlu0 %591, %v274
    %v593 = vpop.permute.xlu0 %592
    %595 = vset.pattern.permute.xlu0 1
    %596 = vperm.xlu0 %595, %v278
    %v597 = vpop.permute.xlu0 %596
    %599 = vset.pattern.permute.xlu0 1
    %600 = vperm.xlu0 %599, %v282
    %v601 = vpop.permute.xlu0 %600
    %603 = vset.pattern.permute.xlu0 1
    %604 = vperm.xlu0 %603, %v286
    %v605 = vpop.permute.xlu0 %604
    %607 = vset.pattern.permute.xlu0 1
    %608 = vperm.xlu0 %607, %v290
    %v609 = vpop.permute.xlu0 %608
    %611 = vset.pattern.permute.xlu0 1
    %612 = vperm.xlu0 %611, %v294
    %v613 = vpop.permute.xlu0 %612
    %615 = vset.pattern.permute.xlu0 1
    %616 = vperm.xlu0 %615, %v298
    %v617 = vpop.permute.xlu0 %616
    %619 = vset.pattern.permute.xlu0 1
    %620 = vperm.xlu0 %619, %v302
    %v621 = vpop.permute.xlu0 %620
    %623 = vset.pattern.permute.xlu0 1
    %624 = vperm.xlu0 %623, %v306
    %v625 = vpop.permute.xlu0 %624
    %627 = vset.pattern.permute.xlu0 1
    %628 = vperm.xlu0 %627, %v310
    %v629 = vpop.permute.xlu0 %628
    %631 = vset.pattern.permute.xlu0 1
    %632 = vperm.xlu0 %631, %v314
    %v633 = vpop.permute.xlu0 %632
    %635 = vset.pattern.permute.xlu0 1
    %636 = vperm.xlu0 %635, %v318
    %v637 = vpop.permute.xlu0 %636
    %639 = vset.pattern.permute.xlu0 1
    %640 = vperm.xlu0 %639, %v322
    %v641 = vpop.permute.xlu0 %640
    %643 = vset.pattern.permute.xlu0 1
    %644 = vperm.xlu0 %643, %v326
    %v645 = vpop.permute.xlu0 %644
    %647 = vset.pattern.permute.xlu0 1
    %648 = vperm.xlu0 %647, %v330
    %v649 = vpop.permute.xlu0 %648
    %651 = vset.pattern.permute.xlu0 1
    %652 = vperm.xlu0 %651, %v334
    %v653 = vpop.permute.xlu0 %652
    %655 = vset.pattern.permute.xlu0 1
    %656 = vperm.xlu0 %655, %v338
    %v657 = vpop.permute.xlu0 %656
    %659 = vset.pattern.permute.xlu0 1
    %660 = vperm.xlu0 %659, %v342
    %v661 = vpop.permute.xlu0 %660
    %663 = vset.pattern.permute.xlu0 1
    %664 = vperm.xlu0 %663, %v346
    %v665 = vpop.permute.xlu0 %664
    %667 = vset.pattern.permute.xlu0 1
    %668 = vperm.xlu0 %667, %v350
    %v669 = vpop.permute.xlu0 %668
    %671 = vset.pattern.permute.xlu0 1
    %672 = vperm.xlu0 %671, %v354
    %v673 = vpop.permute.xlu0 %672
    %675 = vset.pattern.permute.xlu0 1
    %676 = vperm.xlu0 %675, %v358
    %v677 = vpop.permute.xlu0 %676
    %679 = vset.pattern.permute.xlu0 1
    %680 = vperm.xlu0 %679, %v362
    %v681 = vpop.permute.xlu0 %680
    %v683 = vmul.f32 %v557, %v33
    %v684 = vmul.f32 %v561, %v33
    %v685 = vmul.f32 %v565, %v33
    %v686 = vmul.f32 %v569, %v33
    %v687 = vmul.f32 %v573, %v33
    %v688 = vmul.f32 %v577, %v33
    %v689 = vmul.f32 %v581, %v33
    %v690 = vmul.f32 %v585, %v33
    %v691 = vmul.f32 %v589, %v33
    %v692 = vmul.f32 %v593, %v33
    %v693 = vmul.f32 %v597, %v33
    %v694 = vmul.f32 %v601, %v33
    %v695 = vmul.f32 %v605, %v33
    %v696 = vmul.f32 %v609, %v33
    %v697 = vmul.f32 %v613, %v33
    %v698 = vmul.f32 %v617, %v33
    %v699 = vmul.f32 %v621, %v33
    %v700 = vmul.f32 %v625, %v33
    %v701 = vmul.f32 %v629, %v33
    %v702 = vmul.f32 %v633, %v33
    %v703 = vmul.f32 %v637, %v33
    %v704 = vmul.f32 %v641, %v33
    %v705 = vmul.f32 %v645, %v33
    %v706 = vmul.f32 %v649, %v33
    %v707 = vmul.f32 %v653, %v33
    %v708 = vmul.f32 %v657, %v33
    %v709 = vmul.f32 %v661, %v33
    %v710 = vmul.f32 %v665, %v33
    %v711 = vmul.f32 %v669, %v33
    %v712 = vmul.f32 %v673, %v33
    %v713 = vmul.f32 %v677, %v33
    %v714 = vmul.f32 %v681, %v33
    %747 = vrot.lane.b32.xlu0 %v683, 127
    %v748 = vpop.permute.xlu0 %747
    %749 = vrot.lane.b32.xlu0 %v684, 127
    %v750 = vpop.permute.xlu0 %749
    %751 = vrot.lane.b32.xlu0 %v685, 127
    %v752 = vpop.permute.xlu0 %751
    %753 = vrot.lane.b32.xlu0 %v686, 127
    %v754 = vpop.permute.xlu0 %753
    %755 = vrot.lane.b32.xlu0 %v687, 127
    %v756 = vpop.permute.xlu0 %755
    %757 = vrot.lane.b32.xlu0 %v688, 127
    %v758 = vpop.permute.xlu0 %757
    %759 = vrot.lane.b32.xlu0 %v689, 127
    %v760 = vpop.permute.xlu0 %759
    %761 = vrot.lane.b32.xlu0 %v690, 127
    %v762 = vpop.permute.xlu0 %761
    %763 = vrot.lane.b32.xlu0 %v691, 127
    %v764 = vpop.permute.xlu0 %763
    %765 = vrot.lane.b32.xlu0 %v692, 127
    %v766 = vpop.permute.xlu0 %765
    %767 = vrot.lane.b32.xlu0 %v693, 127
    %v768 = vpop.permute.xlu0 %767
    %769 = vrot.lane.b32.xlu0 %v694, 127
    %v770 = vpop.permute.xlu0 %769
    %771 = vrot.lane.b32.xlu0 %v695, 127
    %v772 = vpop.permute.xlu0 %771
    %773 = vrot.lane.b32.xlu0 %v696, 127
    %v774 = vpop.permute.xlu0 %773
    %775 = vrot.lane.b32.xlu0 %v697, 127
    %v776 = vpop.permute.xlu0 %775
    %777 = vrot.lane.b32.xlu0 %v698, 127
    %v778 = vpop.permute.xlu0 %777
    %779 = vrot.lane.b32.xlu0 %v699, 127
    %v780 = vpop.permute.xlu0 %779
    %781 = vrot.lane.b32.xlu0 %v700, 127
    %v782 = vpop.permute.xlu0 %781
    %783 = vrot.lane.b32.xlu0 %v701, 127
    %v784 = vpop.permute.xlu0 %783
    %785 = vrot.lane.b32.xlu0 %v702, 127
    %v786 = vpop.permute.xlu0 %785
    %787 = vrot.lane.b32.xlu0 %v703, 127
    %v788 = vpop.permute.xlu0 %787
    %789 = vrot.lane.b32.xlu0 %v704, 127
    %v790 = vpop.permute.xlu0 %789
    %791 = vrot.lane.b32.xlu0 %v705, 127
    %v792 = vpop.permute.xlu0 %791
    %793 = vrot.lane.b32.xlu0 %v706, 127
    %v794 = vpop.permute.xlu0 %793
    %795 = vrot.lane.b32.xlu0 %v707, 127
    %v796 = vpop.permute.xlu0 %795
    %797 = vrot.lane.b32.xlu0 %v708, 127
    %v798 = vpop.permute.xlu0 %797
    %799 = vrot.lane.b32.xlu0 %v709, 127
    %v800 = vpop.permute.xlu0 %799
    %801 = vrot.lane.b32.xlu0 %v710, 127
    %v802 = vpop.permute.xlu0 %801
    %803 = vrot.lane.b32.xlu0 %v711, 127
    %v804 = vpop.permute.xlu0 %803
    %805 = vrot.lane.b32.xlu0 %v712, 127
    %v806 = vpop.permute.xlu0 %805
    %807 = vrot.lane.b32.xlu0 %v713, 127
    %v808 = vpop.permute.xlu0 %807
    %809 = vrot.lane.b32.xlu0 %v714, 127
    %v810 = vpop.permute.xlu0 %809
    %v843 = vadd.f32 %v523, %v748
    %v844 = vadd.f32 %v524, %v750
    %v845 = vadd.f32 %v525, %v752
    %v846 = vadd.f32 %v526, %v754
    %v847 = vadd.f32 %v527, %v756
    %v848 = vadd.f32 %v528, %v758
    %v849 = vadd.f32 %v529, %v760
    %v850 = vadd.f32 %v530, %v762
    %v851 = vadd.f32 %v531, %v764
    %v852 = vadd.f32 %v532, %v766
    %v853 = vadd.f32 %v533, %v768
    %v854 = vadd.f32 %v534, %v770
    %v855 = vadd.f32 %v535, %v772
    %v856 = vadd.f32 %v536, %v774
    %v857 = vadd.f32 %v537, %v776
    %v858 = vadd.f32 %v538, %v778
    %v859 = vadd.f32 %v539, %v780
    %v860 = vadd.f32 %v540, %v782
    %v861 = vadd.f32 %v541, %v784
    %v862 = vadd.f32 %v542, %v786
    %v863 = vadd.f32 %v543, %v788
    %v864 = vadd.f32 %v544, %v790
    %v865 = vadd.f32 %v545, %v792
    %v866 = vadd.f32 %v546, %v794
    %v867 = vadd.f32 %v547, %v796
    %v868 = vadd.f32 %v548, %v798
    %v869 = vadd.f32 %v549, %v800
    %v870 = vadd.f32 %v550, %v802
    %v871 = vadd.f32 %v551, %v804
    %v872 = vadd.f32 %v552, %v806
    %v873 = vadd.f32 %v553, %v808
    %v874 = vadd.f32 %v554, %v810
    %875 = vset.pattern.permute.xlu0 2
    %876 = vperm.xlu0 %875, %v238
    %v877 = vpop.permute.xlu0 %876
    %879 = vset.pattern.permute.xlu0 2
    %880 = vperm.xlu0 %879, %v242
    %v881 = vpop.permute.xlu0 %880
    %883 = vset.pattern.permute.xlu0 2
    %884 = vperm.xlu0 %883, %v246
    %v885 = vpop.permute.xlu0 %884
    %887 = vset.pattern.permute.xlu0 2
    %888 = vperm.xlu0 %887, %v250
    %v889 = vpop.permute.xlu0 %888
    %891 = vset.pattern.permute.xlu0 2
    %892 = vperm.xlu0 %891, %v254
    %v893 = vpop.permute.xlu0 %892
    %895 = vset.pattern.permute.xlu0 2
    %896 = vperm.xlu0 %895, %v258
    %v897 = vpop.permute.xlu0 %896
    %899 = vset.pattern.permute.xlu0 2
    %900 = vperm.xlu0 %899, %v262
    %v901 = vpop.permute.xlu0 %900
    %903 = vset.pattern.permute.xlu0 2
    %904 = vperm.xlu0 %903, %v266
    %v905 = vpop.permute.xlu0 %904
    %907 = vset.pattern.permute.xlu0 2
    %908 = vperm.xlu0 %907, %v270
    %v909 = vpop.permute.xlu0 %908
    %911 = vset.pattern.permute.xlu0 2
    %912 = vperm.xlu0 %911, %v274
    %v913 = vpop.permute.xlu0 %912
    %915 = vset.pattern.permute.xlu0 2
    %916 = vperm.xlu0 %915, %v278
    %v917 = vpop.permute.xlu0 %916
    %919 = vset.pattern.permute.xlu0 2
    %920 = vperm.xlu0 %919, %v282
    %v921 = vpop.permute.xlu0 %920
    %923 = vset.pattern.permute.xlu0 2
    %924 = vperm.xlu0 %923, %v286
    %v925 = vpop.permute.xlu0 %924
    %927 = vset.pattern.permute.xlu0 2
    %928 = vperm.xlu0 %927, %v290
    %v929 = vpop.permute.xlu0 %928
    %931 = vset.pattern.permute.xlu0 2
    %932 = vperm.xlu0 %931, %v294
    %v933 = vpop.permute.xlu0 %932
    %935 = vset.pattern.permute.xlu0 2
    %936 = vperm.xlu0 %935, %v298
    %v937 = vpop.permute.xlu0 %936
    %939 = vset.pattern.permute.xlu0 2
    %940 = vperm.xlu0 %939, %v302
    %v941 = vpop.permute.xlu0 %940
    %943 = vset.pattern.permute.xlu0 2
    %944 = vperm.xlu0 %943, %v306
    %v945 = vpop.permute.xlu0 %944
    %947 = vset.pattern.permute.xlu0 2
    %948 = vperm.xlu0 %947, %v310
    %v949 = vpop.permute.xlu0 %948
    %951 = vset.pattern.permute.xlu0 2
    %952 = vperm.xlu0 %951, %v314
    %v953 = vpop.permute.xlu0 %952
    %955 = vset.pattern.permute.xlu0 2
    %956 = vperm.xlu0 %955, %v318
    %v957 = vpop.permute.xlu0 %956
    %959 = vset.pattern.permute.xlu0 2
    %960 = vperm.xlu0 %959, %v322
    %v961 = vpop.permute.xlu0 %960
    %963 = vset.pattern.permute.xlu0 2
    %964 = vperm.xlu0 %963, %v326
    %v965 = vpop.permute.xlu0 %964
    %967 = vset.pattern.permute.xlu0 2
    %968 = vperm.xlu0 %967, %v330
    %v969 = vpop.permute.xlu0 %968
    %971 = vset.pattern.permute.xlu0 2
    %972 = vperm.xlu0 %971, %v334
    %v973 = vpop.permute.xlu0 %972
    %975 = vset.pattern.permute.xlu0 2
    %976 = vperm.xlu0 %975, %v338
    %v977 = vpop.permute.xlu0 %976
    %979 = vset.pattern.permute.xlu0 2
    %980 = vperm.xlu0 %979, %v342
    %v981 = vpop.permute.xlu0 %980
    %983 = vset.pattern.permute.xlu0 2
    %984 = vperm.xlu0 %983, %v346
    %v985 = vpop.permute.xlu0 %984
    %987 = vset.pattern.permute.xlu0 2
    %988 = vperm.xlu0 %987, %v350
    %v989 = vpop.permute.xlu0 %988
    %991 = vset.pattern.permute.xlu0 2
    %992 = vperm.xlu0 %991, %v354
    %v993 = vpop.permute.xlu0 %992
    %995 = vset.pattern.permute.xlu0 2
    %996 = vperm.xlu0 %995, %v358
    %v997 = vpop.permute.xlu0 %996
    %999 = vset.pattern.permute.xlu0 2
    %1000 = vperm.xlu0 %999, %v362
    %v1001 = vpop.permute.xlu0 %1000
    %v1003 = vmul.f32 %v877, %v33
    %v1004 = vmul.f32 %v881, %v33
    %v1005 = vmul.f32 %v885, %v33
    %v1006 = vmul.f32 %v889, %v33
    %v1007 = vmul.f32 %v893, %v33
    %v1008 = vmul.f32 %v897, %v33
    %v1009 = vmul.f32 %v901, %v33
    %v1010 = vmul.f32 %v905, %v33
    %v1011 = vmul.f32 %v909, %v33
    %v1012 = vmul.f32 %v913, %v33
    %v1013 = vmul.f32 %v917, %v33
    %v1014 = vmul.f32 %v921, %v33
    %v1015 = vmul.f32 %v925, %v33
    %v1016 = vmul.f32 %v929, %v33
    %v1017 = vmul.f32 %v933, %v33
    %v1018 = vmul.f32 %v937, %v33
    %v1019 = vmul.f32 %v941, %v33
    %v1020 = vmul.f32 %v945, %v33
    %v1021 = vmul.f32 %v949, %v33
    %v1022 = vmul.f32 %v953, %v33
    %v1023 = vmul.f32 %v957, %v33
    %v1024 = vmul.f32 %v961, %v33
    %v1025 = vmul.f32 %v965, %v33
    %v1026 = vmul.f32 %v969, %v33
    %v1027 = vmul.f32 %v973, %v33
    %v1028 = vmul.f32 %v977, %v33
    %v1029 = vmul.f32 %v981, %v33
    %v1030 = vmul.f32 %v985, %v33
    %v1031 = vmul.f32 %v989, %v33
    %v1032 = vmul.f32 %v993, %v33
    %v1033 = vmul.f32 %v997, %v33
    %v1034 = vmul.f32 %v1001, %v33
    %1067 = vrot.lane.b32.xlu0 %v1003, 126
    %v1068 = vpop.permute.xlu0 %1067
    %1069 = vrot.lane.b32.xlu0 %v1004, 126
    %v1070 = vpop.permute.xlu0 %1069
    %1071 = vrot.lane.b32.xlu0 %v1005, 126
    %v1072 = vpop.permute.xlu0 %1071
    %1073 = vrot.lane.b32.xlu0 %v1006, 126
    %v1074 = vpop.permute.xlu0 %1073
    %1075 = vrot.lane.b32.xlu0 %v1007, 126
    %v1076 = vpop.permute.xlu0 %1075
    %1077 = vrot.lane.b32.xlu0 %v1008, 126
    %v1078 = vpop.permute.xlu0 %1077
    %1079 = vrot.lane.b32.xlu0 %v1009, 126
    %v1080 = vpop.permute.xlu0 %1079
    %1081 = vrot.lane.b32.xlu0 %v1010, 126
    %v1082 = vpop.permute.xlu0 %1081
    %1083 = vrot.lane.b32.xlu0 %v1011, 126
    %v1084 = vpop.permute.xlu0 %1083
    %1085 = vrot.lane.b32.xlu0 %v1012, 126
    %v1086 = vpop.permute.xlu0 %1085
    %1087 = vrot.lane.b32.xlu0 %v1013, 126
    %v1088 = vpop.permute.xlu0 %1087
    %1089 = vrot.lane.b32.xlu0 %v1014, 126
    %v1090 = vpop.permute.xlu0 %1089
    %1091 = vrot.lane.b32.xlu0 %v1015, 126
    %v1092 = vpop.permute.xlu0 %1091
    %1093 = vrot.lane.b32.xlu0 %v1016, 126
    %v1094 = vpop.permute.xlu0 %1093
    %1095 = vrot.lane.b32.xlu0 %v1017, 126
    %v1096 = vpop.permute.xlu0 %1095
    %1097 = vrot.lane.b32.xlu0 %v1018, 126
    %v1098 = vpop.permute.xlu0 %1097
    %1099 = vrot.lane.b32.xlu0 %v1019, 126
    %v1100 = vpop.permute.xlu0 %1099
    %1101 = vrot.lane.b32.xlu0 %v1020, 126
    %v1102 = vpop.permute.xlu0 %1101
    %1103 = vrot.lane.b32.xlu0 %v1021, 126
    %v1104 = vpop.permute.xlu0 %1103
    %1105 = vrot.lane.b32.xlu0 %v1022, 126
    %v1106 = vpop.permute.xlu0 %1105
    %1107 = vrot.lane.b32.xlu0 %v1023, 126
    %v1108 = vpop.permute.xlu0 %1107
    %1109 = vrot.lane.b32.xlu0 %v1024, 126
    %v1110 = vpop.permute.xlu0 %1109
    %1111 = vrot.lane.b32.xlu0 %v1025, 126
    %v1112 = vpop.permute.xlu0 %1111
    %1113 = vrot.lane.b32.xlu0 %v1026, 126
    %v1114 = vpop.permute.xlu0 %1113
    %1115 = vrot.lane.b32.xlu0 %v1027, 126
    %v1116 = vpop.permute.xlu0 %1115
    %1117 = vrot.lane.b32.xlu0 %v1028, 126
    %v1118 = vpop.permute.xlu0 %1117
    %1119 = vrot.lane.b32.xlu0 %v1029, 126
    %v1120 = vpop.permute.xlu0 %1119
    %1121 = vrot.lane.b32.xlu0 %v1030, 126
    %v1122 = vpop.permute.xlu0 %1121
    %1123 = vrot.lane.b32.xlu0 %v1031, 126
    %v1124 = vpop.permute.xlu0 %1123
    %1125 = vrot.lane.b32.xlu0 %v1032, 126
    %v1126 = vpop.permute.xlu0 %1125
    %1127 = vrot.lane.b32.xlu0 %v1033, 126
    %v1128 = vpop.permute.xlu0 %1127
    %1129 = vrot.lane.b32.xlu0 %v1034, 126
    %v1130 = vpop.permute.xlu0 %1129
    %v1163 = vadd.f32 %v843, %v1068
    %v1164 = vadd.f32 %v844, %v1070
    %v1165 = vadd.f32 %v845, %v1072
    %v1166 = vadd.f32 %v846, %v1074
    %v1167 = vadd.f32 %v847, %v1076
    %v1168 = vadd.f32 %v848, %v1078
    %v1169 = vadd.f32 %v849, %v1080
    %v1170 = vadd.f32 %v850, %v1082
    %v1171 = vadd.f32 %v851, %v1084
    %v1172 = vadd.f32 %v852, %v1086
    %v1173 = vadd.f32 %v853, %v1088
    %v1174 = vadd.f32 %v854, %v1090
    %v1175 = vadd.f32 %v855, %v1092
    %v1176 = vadd.f32 %v856, %v1094
    %v1177 = vadd.f32 %v857, %v1096
    %v1178 = vadd.f32 %v858, %v1098
    %v1179 = vadd.f32 %v859, %v1100
    %v1180 = vadd.f32 %v860, %v1102
    %v1181 = vadd.f32 %v861, %v1104
    %v1182 = vadd.f32 %v862, %v1106
    %v1183 = vadd.f32 %v863, %v1108
    %v1184 = vadd.f32 %v864, %v1110
    %v1185 = vadd.f32 %v865, %v1112
    %v1186 = vadd.f32 %v866, %v1114
    %v1187 = vadd.f32 %v867, %v1116
    %v1188 = vadd.f32 %v868, %v1118
    %v1189 = vadd.f32 %v869, %v1120
    %v1190 = vadd.f32 %v870, %v1122
    %v1191 = vadd.f32 %v871, %v1124
    %v1192 = vadd.f32 %v872, %v1126
    %v1193 = vadd.f32 %v873, %v1128
    %v1194 = vadd.f32 %v874, %v1130
    %1195 = vset.pattern.permute.xlu0 3
    %1196 = vperm.xlu0 %1195, %v238
    %v1197 = vpop.permute.xlu0 %1196
    %1199 = vset.pattern.permute.xlu0 3
    %1200 = vperm.xlu0 %1199, %v242
    %v1201 = vpop.permute.xlu0 %1200
    %1203 = vset.pattern.permute.xlu0 3
    %1204 = vperm.xlu0 %1203, %v246
    %v1205 = vpop.permute.xlu0 %1204
    %1207 = vset.pattern.permute.xlu0 3
    %1208 = vperm.xlu0 %1207, %v250
    %v1209 = vpop.permute.xlu0 %1208
    %1211 = vset.pattern.permute.xlu0 3
    %1212 = vperm.xlu0 %1211, %v254
    %v1213 = vpop.permute.xlu0 %1212
    %1215 = vset.pattern.permute.xlu0 3
    %1216 = vperm.xlu0 %1215, %v258
    %v1217 = vpop.permute.xlu0 %1216
    %1219 = vset.pattern.permute.xlu0 3
    %1220 = vperm.xlu0 %1219, %v262
    %v1221 = vpop.permute.xlu0 %1220
    %1223 = vset.pattern.permute.xlu0 3
    %1224 = vperm.xlu0 %1223, %v266
    %v1225 = vpop.permute.xlu0 %1224
    %1227 = vset.pattern.permute.xlu0 3
    %1228 = vperm.xlu0 %1227, %v270
    %v1229 = vpop.permute.xlu0 %1228
    %1231 = vset.pattern.permute.xlu0 3
    %1232 = vperm.xlu0 %1231, %v274
    %v1233 = vpop.permute.xlu0 %1232
    %1235 = vset.pattern.permute.xlu0 3
    %1236 = vperm.xlu0 %1235, %v278
    %v1237 = vpop.permute.xlu0 %1236
    %1239 = vset.pattern.permute.xlu0 3
    %1240 = vperm.xlu0 %1239, %v282
    %v1241 = vpop.permute.xlu0 %1240
    %1243 = vset.pattern.permute.xlu0 3
    %1244 = vperm.xlu0 %1243, %v286
    %v1245 = vpop.permute.xlu0 %1244
    %1247 = vset.pattern.permute.xlu0 3
    %1248 = vperm.xlu0 %1247, %v290
    %v1249 = vpop.permute.xlu0 %1248
    %1251 = vset.pattern.permute.xlu0 3
    %1252 = vperm.xlu0 %1251, %v294
    %v1253 = vpop.permute.xlu0 %1252
    %1255 = vset.pattern.permute.xlu0 3
    %1256 = vperm.xlu0 %1255, %v298
    %v1257 = vpop.permute.xlu0 %1256
    %1259 = vset.pattern.permute.xlu0 3
    %1260 = vperm.xlu0 %1259, %v302
    %v1261 = vpop.permute.xlu0 %1260
    %1263 = vset.pattern.permute.xlu0 3
    %1264 = vperm.xlu0 %1263, %v306
    %v1265 = vpop.permute.xlu0 %1264
    %1267 = vset.pattern.permute.xlu0 3
    %1268 = vperm.xlu0 %1267, %v310
    %v1269 = vpop.permute.xlu0 %1268
    %1271 = vset.pattern.permute.xlu0 3
    %1272 = vperm.xlu0 %1271, %v314
    %v1273 = vpop.permute.xlu0 %1272
    %1275 = vset.pattern.permute.xlu0 3
    %1276 = vperm.xlu0 %1275, %v318
    %v1277 = vpop.permute.xlu0 %1276
    %1279 = vset.pattern.permute.xlu0 3
    %1280 = vperm.xlu0 %1279, %v322
    %v1281 = vpop.permute.xlu0 %1280
    %1283 = vset.pattern.permute.xlu0 3
    %1284 = vperm.xlu0 %1283, %v326
    %v1285 = vpop.permute.xlu0 %1284
    %1287 = vset.pattern.permute.xlu0 3
    %1288 = vperm.xlu0 %1287, %v330
    %v1289 = vpop.permute.xlu0 %1288
    %1291 = vset.pattern.permute.xlu0 3
    %1292 = vperm.xlu0 %1291, %v334
    %v1293 = vpop.permute.xlu0 %1292
    %1295 = vset.pattern.permute.xlu0 3
    %1296 = vperm.xlu0 %1295, %v338
    %v1297 = vpop.permute.xlu0 %1296
    %1299 = vset.pattern.permute.xlu0 3
    %1300 = vperm.xlu0 %1299, %v342
    %v1301 = vpop.permute.xlu0 %1300
    %1303 = vset.pattern.permute.xlu0 3
    %1304 = vperm.xlu0 %1303, %v346
    %v1305 = vpop.permute.xlu0 %1304
    %1307 = vset.pattern.permute.xlu0 3
    %1308 = vperm.xlu0 %1307, %v350
    %v1309 = vpop.permute.xlu0 %1308
    %1311 = vset.pattern.permute.xlu0 3
    %1312 = vperm.xlu0 %1311, %v354
    %v1313 = vpop.permute.xlu0 %1312
    %1315 = vset.pattern.permute.xlu0 3
    %1316 = vperm.xlu0 %1315, %v358
    %v1317 = vpop.permute.xlu0 %1316
    %1319 = vset.pattern.permute.xlu0 3
    %1320 = vperm.xlu0 %1319, %v362
    %v1321 = vpop.permute.xlu0 %1320
    %v1323 = vmul.f32 %v1197, %v33
    %v1324 = vmul.f32 %v1201, %v33
    %v1325 = vmul.f32 %v1205, %v33
    %v1326 = vmul.f32 %v1209, %v33
    %v1327 = vmul.f32 %v1213, %v33
    %v1328 = vmul.f32 %v1217, %v33
    %v1329 = vmul.f32 %v1221, %v33
    %v1330 = vmul.f32 %v1225, %v33
    %v1331 = vmul.f32 %v1229, %v33
    %v1332 = vmul.f32 %v1233, %v33
    %v1333 = vmul.f32 %v1237, %v33
    %v1334 = vmul.f32 %v1241, %v33
    %v1335 = vmul.f32 %v1245, %v33
    %v1336 = vmul.f32 %v1249, %v33
    %v1337 = vmul.f32 %v1253, %v33
    %v1338 = vmul.f32 %v1257, %v33
    %v1339 = vmul.f32 %v1261, %v33
    %v1340 = vmul.f32 %v1265, %v33
    %v1341 = vmul.f32 %v1269, %v33
    %v1342 = vmul.f32 %v1273, %v33
    %v1343 = vmul.f32 %v1277, %v33
    %v1344 = vmul.f32 %v1281, %v33
    %v1345 = vmul.f32 %v1285, %v33
    %v1346 = vmul.f32 %v1289, %v33
    %v1347 = vmul.f32 %v1293, %v33
    %v1348 = vmul.f32 %v1297, %v33
    %v1349 = vmul.f32 %v1301, %v33
    %v1350 = vmul.f32 %v1305, %v33
    %v1351 = vmul.f32 %v1309, %v33
    %v1352 = vmul.f32 %v1313, %v33
    %v1353 = vmul.f32 %v1317, %v33
    %v1354 = vmul.f32 %v1321, %v33
    %1387 = vrot.lane.b32.xlu0 %v1323, 125
    %v1388 = vpop.permute.xlu0 %1387
    %1389 = vrot.lane.b32.xlu0 %v1324, 125
    %v1390 = vpop.permute.xlu0 %1389
    %1391 = vrot.lane.b32.xlu0 %v1325, 125
    %v1392 = vpop.permute.xlu0 %1391
    %1393 = vrot.lane.b32.xlu0 %v1326, 125
    %v1394 = vpop.permute.xlu0 %1393
    %1395 = vrot.lane.b32.xlu0 %v1327, 125
    %v1396 = vpop.permute.xlu0 %1395
    %1397 = vrot.lane.b32.xlu0 %v1328, 125
    %v1398 = vpop.permute.xlu0 %1397
    %1399 = vrot.lane.b32.xlu0 %v1329, 125
    %v1400 = vpop.permute.xlu0 %1399
    %1401 = vrot.lane.b32.xlu0 %v1330, 125
    %v1402 = vpop.permute.xlu0 %1401
    %1403 = vrot.lane.b32.xlu0 %v1331, 125
    %v1404 = vpop.permute.xlu0 %1403
    %1405 = vrot.lane.b32.xlu0 %v1332, 125
    %v1406 = vpop.permute.xlu0 %1405
    %1407 = vrot.lane.b32.xlu0 %v1333, 125
    %v1408 = vpop.permute.xlu0 %1407
    %1409 = vrot.lane.b32.xlu0 %v1334, 125
    %v1410 = vpop.permute.xlu0 %1409
    %1411 = vrot.lane.b32.xlu0 %v1335, 125
    %v1412 = vpop.permute.xlu0 %1411
    %1413 = vrot.lane.b32.xlu0 %v1336, 125
    %v1414 = vpop.permute.xlu0 %1413
    %1415 = vrot.lane.b32.xlu0 %v1337, 125
    %v1416 = vpop.permute.xlu0 %1415
    %1417 = vrot.lane.b32.xlu0 %v1338, 125
    %v1418 = vpop.permute.xlu0 %1417
    %1419 = vrot.lane.b32.xlu0 %v1339, 125
    %v1420 = vpop.permute.xlu0 %1419
    %1421 = vrot.lane.b32.xlu0 %v1340, 125
    %v1422 = vpop.permute.xlu0 %1421
    %1423 = vrot.lane.b32.xlu0 %v1341, 125
    %v1424 = vpop.permute.xlu0 %1423
    %1425 = vrot.lane.b32.xlu0 %v1342, 125
    %v1426 = vpop.permute.xlu0 %1425
    %1427 = vrot.lane.b32.xlu0 %v1343, 125
    %v1428 = vpop.permute.xlu0 %1427
    %1429 = vrot.lane.b32.xlu0 %v1344, 125
    %v1430 = vpop.permute.xlu0 %1429
    %1431 = vrot.lane.b32.xlu0 %v1345, 125
    %v1432 = vpop.permute.xlu0 %1431
    %1433 = vrot.lane.b32.xlu0 %v1346, 125
    %v1434 = vpop.permute.xlu0 %1433
    %1435 = vrot.lane.b32.xlu0 %v1347, 125
    %v1436 = vpop.permute.xlu0 %1435
    %1437 = vrot.lane.b32.xlu0 %v1348, 125
    %v1438 = vpop.permute.xlu0 %1437
    %1439 = vrot.lane.b32.xlu0 %v1349, 125
    %v1440 = vpop.permute.xlu0 %1439
    %1441 = vrot.lane.b32.xlu0 %v1350, 125
    %v1442 = vpop.permute.xlu0 %1441
    %1443 = vrot.lane.b32.xlu0 %v1351, 125
    %v1444 = vpop.permute.xlu0 %1443
    %1445 = vrot.lane.b32.xlu0 %v1352, 125
    %v1446 = vpop.permute.xlu0 %1445
    %1447 = vrot.lane.b32.xlu0 %v1353, 125
    %v1448 = vpop.permute.xlu0 %1447
    %1449 = vrot.lane.b32.xlu0 %v1354, 125
    %v1450 = vpop.permute.xlu0 %1449
    %v1483 = vadd.f32 %v1163, %v1388
    %v1484 = vadd.f32 %v1164, %v1390
    %v1485 = vadd.f32 %v1165, %v1392
    %v1486 = vadd.f32 %v1166, %v1394
    %v1487 = vadd.f32 %v1167, %v1396
    %v1488 = vadd.f32 %v1168, %v1398
    %v1489 = vadd.f32 %v1169, %v1400
    %v1490 = vadd.f32 %v1170, %v1402
    %v1491 = vadd.f32 %v1171, %v1404
    %v1492 = vadd.f32 %v1172, %v1406
    %v1493 = vadd.f32 %v1173, %v1408
    %v1494 = vadd.f32 %v1174, %v1410
    %v1495 = vadd.f32 %v1175, %v1412
    %v1496 = vadd.f32 %v1176, %v1414
    %v1497 = vadd.f32 %v1177, %v1416
    %v1498 = vadd.f32 %v1178, %v1418
    %v1499 = vadd.f32 %v1179, %v1420
    %v1500 = vadd.f32 %v1180, %v1422
    %v1501 = vadd.f32 %v1181, %v1424
    %v1502 = vadd.f32 %v1182, %v1426
    %v1503 = vadd.f32 %v1183, %v1428
    %v1504 = vadd.f32 %v1184, %v1430
    %v1505 = vadd.f32 %v1185, %v1432
    %v1506 = vadd.f32 %v1186, %v1434
    %v1507 = vadd.f32 %v1187, %v1436
    %v1508 = vadd.f32 %v1188, %v1438
    %v1509 = vadd.f32 %v1189, %v1440
    %v1510 = vadd.f32 %v1190, %v1442
    %v1511 = vadd.f32 %v1191, %v1444
    %v1512 = vadd.f32 %v1192, %v1446
    %v1513 = vadd.f32 %v1193, %v1448
    %v1514 = vadd.f32 %v1194, %v1450
    %1515 = vset.pattern.permute.xlu0 12
    %1516 = vperm.xlu0 %1515, %v238
    %v1517 = vpop.permute.xlu0 %1516
    %1519 = vset.pattern.permute.xlu0 12
    %1520 = vperm.xlu0 %1519, %v242
    %v1521 = vpop.permute.xlu0 %1520
    %1523 = vset.pattern.permute.xlu0 12
    %1524 = vperm.xlu0 %1523, %v246
    %v1525 = vpop.permute.xlu0 %1524
    %1527 = vset.pattern.permute.xlu0 12
    %1528 = vperm.xlu0 %1527, %v250
    %v1529 = vpop.permute.xlu0 %1528
    %1531 = vset.pattern.permute.xlu0 12
    %1532 = vperm.xlu0 %1531, %v254
    %v1533 = vpop.permute.xlu0 %1532
    %1535 = vset.pattern.permute.xlu0 12
    %1536 = vperm.xlu0 %1535, %v258
    %v1537 = vpop.permute.xlu0 %1536
    %1539 = vset.pattern.permute.xlu0 12
    %1540 = vperm.xlu0 %1539, %v262
    %v1541 = vpop.permute.xlu0 %1540
    %1543 = vset.pattern.permute.xlu0 12
    %1544 = vperm.xlu0 %1543, %v266
    %v1545 = vpop.permute.xlu0 %1544
    %1547 = vset.pattern.permute.xlu0 12
    %1548 = vperm.xlu0 %1547, %v270
    %v1549 = vpop.permute.xlu0 %1548
    %1551 = vset.pattern.permute.xlu0 12
    %1552 = vperm.xlu0 %1551, %v274
    %v1553 = vpop.permute.xlu0 %1552
    %1555 = vset.pattern.permute.xlu0 12
    %1556 = vperm.xlu0 %1555, %v278
    %v1557 = vpop.permute.xlu0 %1556
    %1559 = vset.pattern.permute.xlu0 12
    %1560 = vperm.xlu0 %1559, %v282
    %v1561 = vpop.permute.xlu0 %1560
    %1563 = vset.pattern.permute.xlu0 12
    %1564 = vperm.xlu0 %1563, %v286
    %v1565 = vpop.permute.xlu0 %1564
    %1567 = vset.pattern.permute.xlu0 12
    %1568 = vperm.xlu0 %1567, %v290
    %v1569 = vpop.permute.xlu0 %1568
    %1571 = vset.pattern.permute.xlu0 12
    %1572 = vperm.xlu0 %1571, %v294
    %v1573 = vpop.permute.xlu0 %1572
    %1575 = vset.pattern.permute.xlu0 12
    %1576 = vperm.xlu0 %1575, %v298
    %v1577 = vpop.permute.xlu0 %1576
    %1579 = vset.pattern.permute.xlu0 12
    %1580 = vperm.xlu0 %1579, %v302
    %v1581 = vpop.permute.xlu0 %1580
    %1583 = vset.pattern.permute.xlu0 12
    %1584 = vperm.xlu0 %1583, %v306
    %v1585 = vpop.permute.xlu0 %1584
    %1587 = vset.pattern.permute.xlu0 12
    %1588 = vperm.xlu0 %1587, %v310
    %v1589 = vpop.permute.xlu0 %1588
    %1591 = vset.pattern.permute.xlu0 12
    %1592 = vperm.xlu0 %1591, %v314
    %v1593 = vpop.permute.xlu0 %1592
    %1595 = vset.pattern.permute.xlu0 12
    %1596 = vperm.xlu0 %1595, %v318
    %v1597 = vpop.permute.xlu0 %1596
    %1599 = vset.pattern.permute.xlu0 12
    %1600 = vperm.xlu0 %1599, %v322
    %v1601 = vpop.permute.xlu0 %1600
    %1603 = vset.pattern.permute.xlu0 12
    %1604 = vperm.xlu0 %1603, %v326
    %v1605 = vpop.permute.xlu0 %1604
    %1607 = vset.pattern.permute.xlu0 12
    %1608 = vperm.xlu0 %1607, %v330
    %v1609 = vpop.permute.xlu0 %1608
    %1611 = vset.pattern.permute.xlu0 12
    %1612 = vperm.xlu0 %1611, %v334
    %v1613 = vpop.permute.xlu0 %1612
    %1615 = vset.pattern.permute.xlu0 12
    %1616 = vperm.xlu0 %1615, %v338
    %v1617 = vpop.permute.xlu0 %1616
    %1619 = vset.pattern.permute.xlu0 12
    %1620 = vperm.xlu0 %1619, %v342
    %v1621 = vpop.permute.xlu0 %1620
    %1623 = vset.pattern.permute.xlu0 12
    %1624 = vperm.xlu0 %1623, %v346
    %v1625 = vpop.permute.xlu0 %1624
    %1627 = vset.pattern.permute.xlu0 12
    %1628 = vperm.xlu0 %1627, %v350
    %v1629 = vpop.permute.xlu0 %1628
    %1631 = vset.pattern.permute.xlu0 12
    %1632 = vperm.xlu0 %1631, %v354
    %v1633 = vpop.permute.xlu0 %1632
    %1635 = vset.pattern.permute.xlu0 12
    %1636 = vperm.xlu0 %1635, %v358
    %v1637 = vpop.permute.xlu0 %1636
    %1639 = vset.pattern.permute.xlu0 12
    %1640 = vperm.xlu0 %1639, %v362
    %v1641 = vpop.permute.xlu0 %1640
    %v1643 = vadd.f32 %v1483, %v1517
    %v1644 = vadd.f32 %v1484, %v1521
    %v1645 = vadd.f32 %v1485, %v1525
    %v1646 = vadd.f32 %v1486, %v1529
    %v1647 = vadd.f32 %v1487, %v1533
    %v1648 = vadd.f32 %v1488, %v1537
    %v1649 = vadd.f32 %v1489, %v1541
    %v1650 = vadd.f32 %v1490, %v1545
    %v1651 = vadd.f32 %v1491, %v1549
    %v1652 = vadd.f32 %v1492, %v1553
    %v1653 = vadd.f32 %v1493, %v1557
    %v1654 = vadd.f32 %v1494, %v1561
    %v1655 = vadd.f32 %v1495, %v1565
    %v1656 = vadd.f32 %v1496, %v1569
    %v1657 = vadd.f32 %v1497, %v1573
    %v1658 = vadd.f32 %v1498, %v1577
    %v1659 = vadd.f32 %v1499, %v1581
    %v1660 = vadd.f32 %v1500, %v1585
    %v1661 = vadd.f32 %v1501, %v1589
    %v1662 = vadd.f32 %v1502, %v1593
    %v1663 = vadd.f32 %v1503, %v1597
    %v1664 = vadd.f32 %v1504, %v1601
    %v1665 = vadd.f32 %v1505, %v1605
    %v1666 = vadd.f32 %v1506, %v1609
    %v1667 = vadd.f32 %v1507, %v1613
    %v1668 = vadd.f32 %v1508, %v1617
    %v1669 = vadd.f32 %v1509, %v1621
    %v1670 = vadd.f32 %v1510, %v1625
    %v1671 = vadd.f32 %v1511, %v1629
    %v1672 = vadd.f32 %v1512, %v1633
    %v1673 = vadd.f32 %v1513, %v1637
    %v1674 = vadd.f32 %v1514, %v1641
    %v1707 = vrot.slane %v1643, 4
    %v1708 = vrot.slane %v1644, 4
    %v1709 = vrot.slane %v1645, 4
    %v1710 = vrot.slane %v1646, 4
    %v1711 = vrot.slane %v1647, 4
    %v1712 = vrot.slane %v1648, 4
    %v1713 = vrot.slane %v1649, 4
    %v1714 = vrot.slane %v1650, 4
    %v1715 = vrot.slane %v1651, 4
    %v1716 = vrot.slane %v1652, 4
    %v1717 = vrot.slane %v1653, 4
    %v1718 = vrot.slane %v1654, 4
    %v1719 = vrot.slane %v1655, 4
    %v1720 = vrot.slane %v1656, 4
    %v1721 = vrot.slane %v1657, 4
    %v1722 = vrot.slane %v1658, 4
    %v1723 = vrot.slane %v1659, 4
    %v1724 = vrot.slane %v1660, 4
    %v1725 = vrot.slane %v1661, 4
    %v1726 = vrot.slane %v1662, 4
    %v1727 = vrot.slane %v1663, 4
    %v1728 = vrot.slane %v1664, 4
    %v1729 = vrot.slane %v1665, 4
    %v1730 = vrot.slane %v1666, 4
    %v1731 = vrot.slane %v1667, 4
    %v1732 = vrot.slane %v1668, 4
    %v1733 = vrot.slane %v1669, 4
    %v1734 = vrot.slane %v1670, 4
    %v1735 = vrot.slane %v1671, 4
    %v1736 = vrot.slane %v1672, 4
    %v1737 = vrot.slane %v1673, 4
    %v1738 = vrot.slane %v1674, 4
    %vm1771 = vcmask 1043456
    %v1772 = vsel %vm1771, 0.0, %v1707
    %v1773 = vsel %vm1771, 0.0, %v1708
    %v1774 = vsel %vm1771, 0.0, %v1709
    %v1775 = vsel %vm1771, 0.0, %v1710
    %v1776 = vsel %vm1771, 0.0, %v1711
    %v1777 = vsel %vm1771, 0.0, %v1712
    %v1778 = vsel %vm1771, 0.0, %v1713
    %v1779 = vsel %vm1771, 0.0, %v1714
    %v1780 = vsel %vm1771, 0.0, %v1715
    %v1781 = vsel %vm1771, 0.0, %v1716
    %v1782 = vsel %vm1771, 0.0, %v1717
    %v1783 = vsel %vm1771, 0.0, %v1718
    %v1784 = vsel %vm1771, 0.0, %v1719
    %v1785 = vsel %vm1771, 0.0, %v1720
    %v1786 = vsel %vm1771, 0.0, %v1721
    %v1787 = vsel %vm1771, 0.0, %v1722
    %v1788 = vsel %vm1771, 0.0, %v1723
    %v1789 = vsel %vm1771, 0.0, %v1724
    %v1790 = vsel %vm1771, 0.0, %v1725
    %v1791 = vsel %vm1771, 0.0, %v1726
    %v1792 = vsel %vm1771, 0.0, %v1727
    %v1793 = vsel %vm1771, 0.0, %v1728
    %v1794 = vsel %vm1771, 0.0, %v1729
    %v1795 = vsel %vm1771, 0.0, %v1730
    %v1796 = vsel %vm1771, 0.0, %v1731
    %v1797 = vsel %vm1771, 0.0, %v1732
    %v1798 = vsel %vm1771, 0.0, %v1733
    %v1799 = vsel %vm1771, 0.0, %v1734
    %v1800 = vsel %vm1771, 0.0, %v1735
    %v1801 = vsel %vm1771, 0.0, %v1736
    %v1802 = vsel %vm1771, 0.0, %v1737
    %v1803 = vsel %vm1771, 0.0, %v1738
    %v1804 = vsel %vm1771, %v1707, 0.0
    %v1805 = vsel %vm1771, %v1708, 0.0
    %v1806 = vsel %vm1771, %v1709, 0.0
    %v1807 = vsel %vm1771, %v1710, 0.0
    %v1808 = vsel %vm1771, %v1711, 0.0
    %v1809 = vsel %vm1771, %v1712, 0.0
    %v1810 = vsel %vm1771, %v1713, 0.0
    %v1811 = vsel %vm1771, %v1714, 0.0
    %v1812 = vsel %vm1771, %v1715, 0.0
    %v1813 = vsel %vm1771, %v1716, 0.0
    %v1814 = vsel %vm1771, %v1717, 0.0
    %v1815 = vsel %vm1771, %v1718, 0.0
    %v1816 = vsel %vm1771, %v1719, 0.0
    %v1817 = vsel %vm1771, %v1720, 0.0
    %v1818 = vsel %vm1771, %v1721, 0.0
    %v1819 = vsel %vm1771, %v1722, 0.0
    %v1820 = vsel %vm1771, %v1723, 0.0
    %v1821 = vsel %vm1771, %v1724, 0.0
    %v1822 = vsel %vm1771, %v1725, 0.0
    %v1823 = vsel %vm1771, %v1726, 0.0
    %v1824 = vsel %vm1771, %v1727, 0.0
    %v1825 = vsel %vm1771, %v1728, 0.0
    %v1826 = vsel %vm1771, %v1729, 0.0
    %v1827 = vsel %vm1771, %v1730, 0.0
    %v1828 = vsel %vm1771, %v1731, 0.0
    %v1829 = vsel %vm1771, %v1732, 0.0
    %v1830 = vsel %vm1771, %v1733, 0.0
    %v1831 = vsel %vm1771, %v1734, 0.0
    %v1832 = vsel %vm1771, %v1735, 0.0
    %v1833 = vsel %vm1771, %v1736, 0.0
    %v1834 = vsel %vm1771, %v1737, 0.0
    %v1835 = vsel %vm1771, %v1738, 0.0
    %1836 = vset.pattern.permute.xlu0 4
    %1837 = vperm.xlu0 %1836, %v238
    %v1838 = vpop.permute.xlu0 %1837
    %1840 = vset.pattern.permute.xlu0 4
    %1841 = vperm.xlu0 %1840, %v242
    %v1842 = vpop.permute.xlu0 %1841
    %1844 = vset.pattern.permute.xlu0 4
    %1845 = vperm.xlu0 %1844, %v246
    %v1846 = vpop.permute.xlu0 %1845
    %1848 = vset.pattern.permute.xlu0 4
    %1849 = vperm.xlu0 %1848, %v250
    %v1850 = vpop.permute.xlu0 %1849
    %1852 = vset.pattern.permute.xlu0 4
    %1853 = vperm.xlu0 %1852, %v254
    %v1854 = vpop.permute.xlu0 %1853
    %1856 = vset.pattern.permute.xlu0 4
    %1857 = vperm.xlu0 %1856, %v258
    %v1858 = vpop.permute.xlu0 %1857
    %1860 = vset.pattern.permute.xlu0 4
    %1861 = vperm.xlu0 %1860, %v262
    %v1862 = vpop.permute.xlu0 %1861
    %1864 = vset.pattern.permute.xlu0 4
    %1865 = vperm.xlu0 %1864, %v266
    %v1866 = vpop.permute.xlu0 %1865
    %1868 = vset.pattern.permute.xlu0 4
    %1869 = vperm.xlu0 %1868, %v270
    %v1870 = vpop.permute.xlu0 %1869
    %1872 = vset.pattern.permute.xlu0 4
    %1873 = vperm.xlu0 %1872, %v274
    %v1874 = vpop.permute.xlu0 %1873
    %1876 = vset.pattern.permute.xlu0 4
    %1877 = vperm.xlu0 %1876, %v278
    %v1878 = vpop.permute.xlu0 %1877
    %1880 = vset.pattern.permute.xlu0 4
    %1881 = vperm.xlu0 %1880, %v282
    %v1882 = vpop.permute.xlu0 %1881
    %1884 = vset.pattern.permute.xlu0 4
    %1885 = vperm.xlu0 %1884, %v286
    %v1886 = vpop.permute.xlu0 %1885
    %1888 = vset.pattern.permute.xlu0 4
    %1889 = vperm.xlu0 %1888, %v290
    %v1890 = vpop.permute.xlu0 %1889
    %1892 = vset.pattern.permute.xlu0 4
    %1893 = vperm.xlu0 %1892, %v294
    %v1894 = vpop.permute.xlu0 %1893
    %1896 = vset.pattern.permute.xlu0 4
    %1897 = vperm.xlu0 %1896, %v298
    %v1898 = vpop.permute.xlu0 %1897
    %1900 = vset.pattern.permute.xlu0 4
    %1901 = vperm.xlu0 %1900, %v302
    %v1902 = vpop.permute.xlu0 %1901
    %1904 = vset.pattern.permute.xlu0 4
    %1905 = vperm.xlu0 %1904, %v306
    %v1906 = vpop.permute.xlu0 %1905
    %1908 = vset.pattern.permute.xlu0 4
    %1909 = vperm.xlu0 %1908, %v310
    %v1910 = vpop.permute.xlu0 %1909
    %1912 = vset.pattern.permute.xlu0 4
    %1913 = vperm.xlu0 %1912, %v314
    %v1914 = vpop.permute.xlu0 %1913
    %1916 = vset.pattern.permute.xlu0 4
    %1917 = vperm.xlu0 %1916, %v318
    %v1918 = vpop.permute.xlu0 %1917
    %1920 = vset.pattern.permute.xlu0 4
    %1921 = vperm.xlu0 %1920, %v322
    %v1922 = vpop.permute.xlu0 %1921
    %1924 = vset.pattern.permute.xlu0 4
    %1925 = vperm.xlu0 %1924, %v326
    %v1926 = vpop.permute.xlu0 %1925
    %1928 = vset.pattern.permute.xlu0 4
    %1929 = vperm.xlu0 %1928, %v330
    %v1930 = vpop.permute.xlu0 %1929
    %1932 = vset.pattern.permute.xlu0 4
    %1933 = vperm.xlu0 %1932, %v334
    %v1934 = vpop.permute.xlu0 %1933
    %1936 = vset.pattern.permute.xlu0 4
    %1937 = vperm.xlu0 %1936, %v338
    %v1938 = vpop.permute.xlu0 %1937
    %1940 = vset.pattern.permute.xlu0 4
    %1941 = vperm.xlu0 %1940, %v342
    %v1942 = vpop.permute.xlu0 %1941
    %1944 = vset.pattern.permute.xlu0 4
    %1945 = vperm.xlu0 %1944, %v346
    %v1946 = vpop.permute.xlu0 %1945
    %1948 = vset.pattern.permute.xlu0 4
    %1949 = vperm.xlu0 %1948, %v350
    %v1950 = vpop.permute.xlu0 %1949
    %1952 = vset.pattern.permute.xlu0 4
    %1953 = vperm.xlu0 %1952, %v354
    %v1954 = vpop.permute.xlu0 %1953
    %1956 = vset.pattern.permute.xlu0 4
    %1957 = vperm.xlu0 %1956, %v358
    %v1958 = vpop.permute.xlu0 %1957
    %1960 = vset.pattern.permute.xlu0 4
    %1961 = vperm.xlu0 %1960, %v362
    %v1962 = vpop.permute.xlu0 %1961
    %v1964 = vmul.f32 %v1838, %v1772
    %v1965 = vmul.f32 %v1838, %v1804
    %v1966 = vmul.f32 %v1842, %v1773
    %v1967 = vmul.f32 %v1842, %v1805
    %v1968 = vmul.f32 %v1846, %v1774
    %v1969 = vmul.f32 %v1846, %v1806
    %v1970 = vmul.f32 %v1850, %v1775
    %v1971 = vmul.f32 %v1850, %v1807
    %v1972 = vmul.f32 %v1854, %v1776
    %v1973 = vmul.f32 %v1854, %v1808
    %v1974 = vmul.f32 %v1858, %v1777
    %v1975 = vmul.f32 %v1858, %v1809
    %v1976 = vmul.f32 %v1862, %v1778
    %v1977 = vmul.f32 %v1862, %v1810
    %v1978 = vmul.f32 %v1866, %v1779
    %v1979 = vmul.f32 %v1866, %v1811
    %v1980 = vmul.f32 %v1870, %v1780
    %v1981 = vmul.f32 %v1870, %v1812
    %v1982 = vmul.f32 %v1874, %v1781
    %v1983 = vmul.f32 %v1874, %v1813
    %v1984 = vmul.f32 %v1878, %v1782
    %v1985 = vmul.f32 %v1878, %v1814
    %v1986 = vmul.f32 %v1882, %v1783
    %v1987 = vmul.f32 %v1882, %v1815
    %v1988 = vmul.f32 %v1886, %v1784
    %v1989 = vmul.f32 %v1886, %v1816
    %v1990 = vmul.f32 %v1890, %v1785
    %v1991 = vmul.f32 %v1890, %v1817
    %v1992 = vmul.f32 %v1894, %v1786
    %v1993 = vmul.f32 %v1894, %v1818
    %v1994 = vmul.f32 %v1898, %v1787
    %v1995 = vmul.f32 %v1898, %v1819
    %v1996 = vmul.f32 %v1902, %v1788
    %v1997 = vmul.f32 %v1902, %v1820
    %v1998 = vmul.f32 %v1906, %v1789
    %v1999 = vmul.f32 %v1906, %v1821
    %v2000 = vmul.f32 %v1910, %v1790
    %v2001 = vmul.f32 %v1910, %v1822
    %v2002 = vmul.f32 %v1914, %v1791
    %v2003 = vmul.f32 %v1914, %v1823
    %v2004 = vmul.f32 %v1918, %v1792
    %v2005 = vmul.f32 %v1918, %v1824
    %v2006 = vmul.f32 %v1922, %v1793
    %v2007 = vmul.f32 %v1922, %v1825
    %v2008 = vmul.f32 %v1926, %v1794
    %v2009 = vmul.f32 %v1926, %v1826
    %v2010 = vmul.f32 %v1930, %v1795
    %v2011 = vmul.f32 %v1930, %v1827
    %v2012 = vmul.f32 %v1934, %v1796
    %v2013 = vmul.f32 %v1934, %v1828
    %v2014 = vmul.f32 %v1938, %v1797
    %v2015 = vmul.f32 %v1938, %v1829
    %v2016 = vmul.f32 %v1942, %v1798
    %v2017 = vmul.f32 %v1942, %v1830
    %v2018 = vmul.f32 %v1946, %v1799
    %v2019 = vmul.f32 %v1946, %v1831
    %v2020 = vmul.f32 %v1950, %v1800
    %v2021 = vmul.f32 %v1950, %v1832
    %v2022 = vmul.f32 %v1954, %v1801
    %v2023 = vmul.f32 %v1954, %v1833
    %v2024 = vmul.f32 %v1958, %v1802
    %v2025 = vmul.f32 %v1958, %v1834
    %v2026 = vmul.f32 %v1962, %v1803
    %v2027 = vmul.f32 %v1962, %v1835
    %v2028 = vadd.f32 %v1964, 0.0
    %v2029 = vadd.f32 %v1965, 0.0
    %v2030 = vadd.f32 %v1966, 0.0
    %v2031 = vadd.f32 %v1967, 0.0
    %v2032 = vadd.f32 %v1968, 0.0
    %v2033 = vadd.f32 %v1969, 0.0
    %v2034 = vadd.f32 %v1970, 0.0
    %v2035 = vadd.f32 %v1971, 0.0
    %v2036 = vadd.f32 %v1972, 0.0
    %v2037 = vadd.f32 %v1973, 0.0
    %v2038 = vadd.f32 %v1974, 0.0
    %v2039 = vadd.f32 %v1975, 0.0
    %v2040 = vadd.f32 %v1976, 0.0
    %v2041 = vadd.f32 %v1977, 0.0
    %v2042 = vadd.f32 %v1978, 0.0
    %v2043 = vadd.f32 %v1979, 0.0
    %v2044 = vadd.f32 %v1980, 0.0
    %v2045 = vadd.f32 %v1981, 0.0
    %v2046 = vadd.f32 %v1982, 0.0
    %v2047 = vadd.f32 %v1983, 0.0
    %v2048 = vadd.f32 %v1984, 0.0
    %v2049 = vadd.f32 %v1985, 0.0
    %v2050 = vadd.f32 %v1986, 0.0
    %v2051 = vadd.f32 %v1987, 0.0
    %v2052 = vadd.f32 %v1988, 0.0
    %v2053 = vadd.f32 %v1989, 0.0
    %v2054 = vadd.f32 %v1990, 0.0
    %v2055 = vadd.f32 %v1991, 0.0
    %v2056 = vadd.f32 %v1992, 0.0
    %v2057 = vadd.f32 %v1993, 0.0
    %v2058 = vadd.f32 %v1994, 0.0
    %v2059 = vadd.f32 %v1995, 0.0
    %v2060 = vadd.f32 %v1996, 0.0
    %v2061 = vadd.f32 %v1997, 0.0
    %v2062 = vadd.f32 %v1998, 0.0
    %v2063 = vadd.f32 %v1999, 0.0
    %v2064 = vadd.f32 %v2000, 0.0
    %v2065 = vadd.f32 %v2001, 0.0
    %v2066 = vadd.f32 %v2002, 0.0
    %v2067 = vadd.f32 %v2003, 0.0
    %v2068 = vadd.f32 %v2004, 0.0
    %v2069 = vadd.f32 %v2005, 0.0
    %v2070 = vadd.f32 %v2006, 0.0
    %v2071 = vadd.f32 %v2007, 0.0
    %v2072 = vadd.f32 %v2008, 0.0
    %v2073 = vadd.f32 %v2009, 0.0
    %v2074 = vadd.f32 %v2010, 0.0
    %v2075 = vadd.f32 %v2011, 0.0
    %v2076 = vadd.f32 %v2012, 0.0
    %v2077 = vadd.f32 %v2013, 0.0
    %v2078 = vadd.f32 %v2014, 0.0
    %v2079 = vadd.f32 %v2015, 0.0
    %v2080 = vadd.f32 %v2016, 0.0
    %v2081 = vadd.f32 %v2017, 0.0
    %v2082 = vadd.f32 %v2018, 0.0
    %v2083 = vadd.f32 %v2019, 0.0
    %v2084 = vadd.f32 %v2020, 0.0
    %v2085 = vadd.f32 %v2021, 0.0
    %v2086 = vadd.f32 %v2022, 0.0
    %v2087 = vadd.f32 %v2023, 0.0
    %v2088 = vadd.f32 %v2024, 0.0
    %v2089 = vadd.f32 %v2025, 0.0
    %v2090 = vadd.f32 %v2026, 0.0
    %v2091 = vadd.f32 %v2027, 0.0
    %2092 = vset.pattern.permute.xlu0 5
    %2093 = vperm.xlu0 %2092, %v238
    %v2094 = vpop.permute.xlu0 %2093
    %2096 = vset.pattern.permute.xlu0 5
    %2097 = vperm.xlu0 %2096, %v242
    %v2098 = vpop.permute.xlu0 %2097
    %2100 = vset.pattern.permute.xlu0 5
    %2101 = vperm.xlu0 %2100, %v246
    %v2102 = vpop.permute.xlu0 %2101
    %2104 = vset.pattern.permute.xlu0 5
    %2105 = vperm.xlu0 %2104, %v250
    %v2106 = vpop.permute.xlu0 %2105
    %2108 = vset.pattern.permute.xlu0 5
    %2109 = vperm.xlu0 %2108, %v254
    %v2110 = vpop.permute.xlu0 %2109
    %2112 = vset.pattern.permute.xlu0 5
    %2113 = vperm.xlu0 %2112, %v258
    %v2114 = vpop.permute.xlu0 %2113
    %2116 = vset.pattern.permute.xlu0 5
    %2117 = vperm.xlu0 %2116, %v262
    %v2118 = vpop.permute.xlu0 %2117
    %2120 = vset.pattern.permute.xlu0 5
    %2121 = vperm.xlu0 %2120, %v266
    %v2122 = vpop.permute.xlu0 %2121
    %2124 = vset.pattern.permute.xlu0 5
    %2125 = vperm.xlu0 %2124, %v270
    %v2126 = vpop.permute.xlu0 %2125
    %2128 = vset.pattern.permute.xlu0 5
    %2129 = vperm.xlu0 %2128, %v274
    %v2130 = vpop.permute.xlu0 %2129
    %2132 = vset.pattern.permute.xlu0 5
    %2133 = vperm.xlu0 %2132, %v278
    %v2134 = vpop.permute.xlu0 %2133
    %2136 = vset.pattern.permute.xlu0 5
    %2137 = vperm.xlu0 %2136, %v282
    %v2138 = vpop.permute.xlu0 %2137
    %2140 = vset.pattern.permute.xlu0 5
    %2141 = vperm.xlu0 %2140, %v286
    %v2142 = vpop.permute.xlu0 %2141
    %2144 = vset.pattern.permute.xlu0 5
    %2145 = vperm.xlu0 %2144, %v290
    %v2146 = vpop.permute.xlu0 %2145
    %2148 = vset.pattern.permute.xlu0 5
    %2149 = vperm.xlu0 %2148, %v294
    %v2150 = vpop.permute.xlu0 %2149
    %2152 = vset.pattern.permute.xlu0 5
    %2153 = vperm.xlu0 %2152, %v298
    %v2154 = vpop.permute.xlu0 %2153
    %2156 = vset.pattern.permute.xlu0 5
    %2157 = vperm.xlu0 %2156, %v302
    %v2158 = vpop.permute.xlu0 %2157
    %2160 = vset.pattern.permute.xlu0 5
    %2161 = vperm.xlu0 %2160, %v306
    %v2162 = vpop.permute.xlu0 %2161
    %2164 = vset.pattern.permute.xlu0 5
    %2165 = vperm.xlu0 %2164, %v310
    %v2166 = vpop.permute.xlu0 %2165
    %2168 = vset.pattern.permute.xlu0 5
    %2169 = vperm.xlu0 %2168, %v314
    %v2170 = vpop.permute.xlu0 %2169
    %2172 = vset.pattern.permute.xlu0 5
    %2173 = vperm.xlu0 %2172, %v318
    %v2174 = vpop.permute.xlu0 %2173
    %2176 = vset.pattern.permute.xlu0 5
    %2177 = vperm.xlu0 %2176, %v322
    %v2178 = vpop.permute.xlu0 %2177
    %2180 = vset.pattern.permute.xlu0 5
    %2181 = vperm.xlu0 %2180, %v326
    %v2182 = vpop.permute.xlu0 %2181
    %2184 = vset.pattern.permute.xlu0 5
    %2185 = vperm.xlu0 %2184, %v330
    %v2186 = vpop.permute.xlu0 %2185
    %2188 = vset.pattern.permute.xlu0 5
    %2189 = vperm.xlu0 %2188, %v334
    %v2190 = vpop.permute.xlu0 %2189
    %2192 = vset.pattern.permute.xlu0 5
    %2193 = vperm.xlu0 %2192, %v338
    %v2194 = vpop.permute.xlu0 %2193
    %2196 = vset.pattern.permute.xlu0 5
    %2197 = vperm.xlu0 %2196, %v342
    %v2198 = vpop.permute.xlu0 %2197
    %2200 = vset.pattern.permute.xlu0 5
    %2201 = vperm.xlu0 %2200, %v346
    %v2202 = vpop.permute.xlu0 %2201
    %2204 = vset.pattern.permute.xlu0 5
    %2205 = vperm.xlu0 %2204, %v350
    %v2206 = vpop.permute.xlu0 %2205
    %2208 = vset.pattern.permute.xlu0 5
    %2209 = vperm.xlu0 %2208, %v354
    %v2210 = vpop.permute.xlu0 %2209
    %2212 = vset.pattern.permute.xlu0 5
    %2213 = vperm.xlu0 %2212, %v358
    %v2214 = vpop.permute.xlu0 %2213
    %2216 = vset.pattern.permute.xlu0 5
    %2217 = vperm.xlu0 %2216, %v362
    %v2218 = vpop.permute.xlu0 %2217
    %v2220 = vmul.f32 %v2094, %v1772
    %v2221 = vmul.f32 %v2094, %v1804
    %v2222 = vmul.f32 %v2098, %v1773
    %v2223 = vmul.f32 %v2098, %v1805
    %v2224 = vmul.f32 %v2102, %v1774
    %v2225 = vmul.f32 %v2102, %v1806
    %v2226 = vmul.f32 %v2106, %v1775
    %v2227 = vmul.f32 %v2106, %v1807
    %v2228 = vmul.f32 %v2110, %v1776
    %v2229 = vmul.f32 %v2110, %v1808
    %v2230 = vmul.f32 %v2114, %v1777
    %v2231 = vmul.f32 %v2114, %v1809
    %v2232 = vmul.f32 %v2118, %v1778
    %v2233 = vmul.f32 %v2118, %v1810
    %v2234 = vmul.f32 %v2122, %v1779
    %v2235 = vmul.f32 %v2122, %v1811
    %v2236 = vmul.f32 %v2126, %v1780
    %v2237 = vmul.f32 %v2126, %v1812
    %v2238 = vmul.f32 %v2130, %v1781
    %v2239 = vmul.f32 %v2130, %v1813
    %v2240 = vmul.f32 %v2134, %v1782
    %v2241 = vmul.f32 %v2134, %v1814
    %v2242 = vmul.f32 %v2138, %v1783
    %v2243 = vmul.f32 %v2138, %v1815
    %v2244 = vmul.f32 %v2142, %v1784
    %v2245 = vmul.f32 %v2142, %v1816
    %v2246 = vmul.f32 %v2146, %v1785
    %v2247 = vmul.f32 %v2146, %v1817
    %v2248 = vmul.f32 %v2150, %v1786
    %v2249 = vmul.f32 %v2150, %v1818
    %v2250 = vmul.f32 %v2154, %v1787
    %v2251 = vmul.f32 %v2154, %v1819
    %v2252 = vmul.f32 %v2158, %v1788
    %v2253 = vmul.f32 %v2158, %v1820
    %v2254 = vmul.f32 %v2162, %v1789
    %v2255 = vmul.f32 %v2162, %v1821
    %v2256 = vmul.f32 %v2166, %v1790
    %v2257 = vmul.f32 %v2166, %v1822
    %v2258 = vmul.f32 %v2170, %v1791
    %v2259 = vmul.f32 %v2170, %v1823
    %v2260 = vmul.f32 %v2174, %v1792
    %v2261 = vmul.f32 %v2174, %v1824
    %v2262 = vmul.f32 %v2178, %v1793
    %v2263 = vmul.f32 %v2178, %v1825
    %v2264 = vmul.f32 %v2182, %v1794
    %v2265 = vmul.f32 %v2182, %v1826
    %v2266 = vmul.f32 %v2186, %v1795
    %v2267 = vmul.f32 %v2186, %v1827
    %v2268 = vmul.f32 %v2190, %v1796
    %v2269 = vmul.f32 %v2190, %v1828
    %v2270 = vmul.f32 %v2194, %v1797
    %v2271 = vmul.f32 %v2194, %v1829
    %v2272 = vmul.f32 %v2198, %v1798
    %v2273 = vmul.f32 %v2198, %v1830
    %v2274 = vmul.f32 %v2202, %v1799
    %v2275 = vmul.f32 %v2202, %v1831
    %v2276 = vmul.f32 %v2206, %v1800
    %v2277 = vmul.f32 %v2206, %v1832
    %v2278 = vmul.f32 %v2210, %v1801
    %v2279 = vmul.f32 %v2210, %v1833
    %v2280 = vmul.f32 %v2214, %v1802
    %v2281 = vmul.f32 %v2214, %v1834
    %v2282 = vmul.f32 %v2218, %v1803
    %v2283 = vmul.f32 %v2218, %v1835
    %vm2348 = vcmask 1046528
    %v2349 = vrot.slane %v2220, 1
    %v2350 = vrot.slane %v2221, 1
    %v2351 = vsel %vm2348, %v2349, %v2350
    %v2352 = vrot.slane %v2222, 1
    %v2353 = vrot.slane %v2223, 1
    %v2354 = vsel %vm2348, %v2352, %v2353
    %v2355 = vrot.slane %v2224, 1
    %v2356 = vrot.slane %v2225, 1
    %v2357 = vsel %vm2348, %v2355, %v2356
    %v2358 = vrot.slane %v2226, 1
    %v2359 = vrot.slane %v2227, 1
    %v2360 = vsel %vm2348, %v2358, %v2359
    %v2361 = vrot.slane %v2228, 1
    %v2362 = vrot.slane %v2229, 1
    %v2363 = vsel %vm2348, %v2361, %v2362
    %v2364 = vrot.slane %v2230, 1
    %v2365 = vrot.slane %v2231, 1
    %v2366 = vsel %vm2348, %v2364, %v2365
    %v2367 = vrot.slane %v2232, 1
    %v2368 = vrot.slane %v2233, 1
    %v2369 = vsel %vm2348, %v2367, %v2368
    %v2370 = vrot.slane %v2234, 1
    %v2371 = vrot.slane %v2235, 1
    %v2372 = vsel %vm2348, %v2370, %v2371
    %v2373 = vrot.slane %v2236, 1
    %v2374 = vrot.slane %v2237, 1
    %v2375 = vsel %vm2348, %v2373, %v2374
    %v2376 = vrot.slane %v2238, 1
    %v2377 = vrot.slane %v2239, 1
    %v2378 = vsel %vm2348, %v2376, %v2377
    %v2379 = vrot.slane %v2240, 1
    %v2380 = vrot.slane %v2241, 1
    %v2381 = vsel %vm2348, %v2379, %v2380
    %v2382 = vrot.slane %v2242, 1
    %v2383 = vrot.slane %v2243, 1
    %v2384 = vsel %vm2348, %v2382, %v2383
    %v2385 = vrot.slane %v2244, 1
    %v2386 = vrot.slane %v2245, 1
    %v2387 = vsel %vm2348, %v2385, %v2386
    %v2388 = vrot.slane %v2246, 1
    %v2389 = vrot.slane %v2247, 1
    %v2390 = vsel %vm2348, %v2388, %v2389
    %v2391 = vrot.slane %v2248, 1
    %v2392 = vrot.slane %v2249, 1
    %v2393 = vsel %vm2348, %v2391, %v2392
    %v2394 = vrot.slane %v2250, 1
    %v2395 = vrot.slane %v2251, 1
    %v2396 = vsel %vm2348, %v2394, %v2395
    %v2397 = vrot.slane %v2252, 1
    %v2398 = vrot.slane %v2253, 1
    %v2399 = vsel %vm2348, %v2397, %v2398
    %v2400 = vrot.slane %v2254, 1
    %v2401 = vrot.slane %v2255, 1
    %v2402 = vsel %vm2348, %v2400, %v2401
    %v2403 = vrot.slane %v2256, 1
    %v2404 = vrot.slane %v2257, 1
    %v2405 = vsel %vm2348, %v2403, %v2404
    %v2406 = vrot.slane %v2258, 1
    %v2407 = vrot.slane %v2259, 1
    %v2408 = vsel %vm2348, %v2406, %v2407
    %v2409 = vrot.slane %v2260, 1
    %v2410 = vrot.slane %v2261, 1
    %v2411 = vsel %vm2348, %v2409, %v2410
    %v2412 = vrot.slane %v2262, 1
    %v2413 = vrot.slane %v2263, 1
    %v2414 = vsel %vm2348, %v2412, %v2413
    %v2415 = vrot.slane %v2264, 1
    %v2416 = vrot.slane %v2265, 1
    %v2417 = vsel %vm2348, %v2415, %v2416
    %v2418 = vrot.slane %v2266, 1
    %v2419 = vrot.slane %v2267, 1
    %v2420 = vsel %vm2348, %v2418, %v2419
    %v2421 = vrot.slane %v2268, 1
    %v2422 = vrot.slane %v2269, 1
    %v2423 = vsel %vm2348, %v2421, %v2422
    %v2424 = vrot.slane %v2270, 1
    %v2425 = vrot.slane %v2271, 1
    %v2426 = vsel %vm2348, %v2424, %v2425
    %v2427 = vrot.slane %v2272, 1
    %v2428 = vrot.slane %v2273, 1
    %v2429 = vsel %vm2348, %v2427, %v2428
    %v2430 = vrot.slane %v2274, 1
    %v2431 = vrot.slane %v2275, 1
    %v2432 = vsel %vm2348, %v2430, %v2431
    %v2433 = vrot.slane %v2276, 1
    %v2434 = vrot.slane %v2277, 1
    %v2435 = vsel %vm2348, %v2433, %v2434
    %v2436 = vrot.slane %v2278, 1
    %v2437 = vrot.slane %v2279, 1
    %v2438 = vsel %vm2348, %v2436, %v2437
    %v2439 = vrot.slane %v2280, 1
    %v2440 = vrot.slane %v2281, 1
    %v2441 = vsel %vm2348, %v2439, %v2440
    %v2442 = vrot.slane %v2282, 1
    %v2443 = vrot.slane %v2283, 1
    %v2444 = vsel %vm2348, %v2442, %v2443
    %v2509 = vadd.f32 %v2028, %v2351
    %v2510 = vadd.f32 %v2029, %v2350
    %v2511 = vadd.f32 %v2030, %v2354
    %v2512 = vadd.f32 %v2031, %v2353
    %v2513 = vadd.f32 %v2032, %v2357
    %v2514 = vadd.f32 %v2033, %v2356
    %v2515 = vadd.f32 %v2034, %v2360
    %v2516 = vadd.f32 %v2035, %v2359
    %v2517 = vadd.f32 %v2036, %v2363
    %v2518 = vadd.f32 %v2037, %v2362
    %v2519 = vadd.f32 %v2038, %v2366
    %v2520 = vadd.f32 %v2039, %v2365
    %v2521 = vadd.f32 %v2040, %v2369
    %v2522 = vadd.f32 %v2041, %v2368
    %v2523 = vadd.f32 %v2042, %v2372
    %v2524 = vadd.f32 %v2043, %v2371
    %v2525 = vadd.f32 %v2044, %v2375
    %v2526 = vadd.f32 %v2045, %v2374
    %v2527 = vadd.f32 %v2046, %v2378
    %v2528 = vadd.f32 %v2047, %v2377
    %v2529 = vadd.f32 %v2048, %v2381
    %v2530 = vadd.f32 %v2049, %v2380
    %v2531 = vadd.f32 %v2050, %v2384
    %v2532 = vadd.f32 %v2051, %v2383
    %v2533 = vadd.f32 %v2052, %v2387
    %v2534 = vadd.f32 %v2053, %v2386
    %v2535 = vadd.f32 %v2054, %v2390
    %v2536 = vadd.f32 %v2055, %v2389
    %v2537 = vadd.f32 %v2056, %v2393
    %v2538 = vadd.f32 %v2057, %v2392
    %v2539 = vadd.f32 %v2058, %v2396
    %v2540 = vadd.f32 %v2059, %v2395
    %v2541 = vadd.f32 %v2060, %v2399
    %v2542 = vadd.f32 %v2061, %v2398
    %v2543 = vadd.f32 %v2062, %v2402
    %v2544 = vadd.f32 %v2063, %v2401
    %v2545 = vadd.f32 %v2064, %v2405
    %v2546 = vadd.f32 %v2065, %v2404
    %v2547 = vadd.f32 %v2066, %v2408
    %v2548 = vadd.f32 %v2067, %v2407
    %v2549 = vadd.f32 %v2068, %v2411
    %v2550 = vadd.f32 %v2069, %v2410
    %v2551 = vadd.f32 %v2070, %v2414
    %v2552 = vadd.f32 %v2071, %v2413
    %v2553 = vadd.f32 %v2072, %v2417
    %v2554 = vadd.f32 %v2073, %v2416
    %v2555 = vadd.f32 %v2074, %v2420
    %v2556 = vadd.f32 %v2075, %v2419
    %v2557 = vadd.f32 %v2076, %v2423
    %v2558 = vadd.f32 %v2077, %v2422
    %v2559 = vadd.f32 %v2078, %v2426
    %v2560 = vadd.f32 %v2079, %v2425
    %v2561 = vadd.f32 %v2080, %v2429
    %v2562 = vadd.f32 %v2081, %v2428
    %v2563 = vadd.f32 %v2082, %v2432
    %v2564 = vadd.f32 %v2083, %v2431
    %v2565 = vadd.f32 %v2084, %v2435
    %v2566 = vadd.f32 %v2085, %v2434
    %v2567 = vadd.f32 %v2086, %v2438
    %v2568 = vadd.f32 %v2087, %v2437
    %v2569 = vadd.f32 %v2088, %v2441
    %v2570 = vadd.f32 %v2089, %v2440
    %v2571 = vadd.f32 %v2090, %v2444
    %v2572 = vadd.f32 %v2091, %v2443
    %2573 = vset.pattern.permute.xlu0 6
    %2574 = vperm.xlu0 %2573, %v238
    %v2575 = vpop.permute.xlu0 %2574
    %2577 = vset.pattern.permute.xlu0 6
    %2578 = vperm.xlu0 %2577, %v242
    %v2579 = vpop.permute.xlu0 %2578
    %2581 = vset.pattern.permute.xlu0 6
    %2582 = vperm.xlu0 %2581, %v246
    %v2583 = vpop.permute.xlu0 %2582
    %2585 = vset.pattern.permute.xlu0 6
    %2586 = vperm.xlu0 %2585, %v250
    %v2587 = vpop.permute.xlu0 %2586
    %2589 = vset.pattern.permute.xlu0 6
    %2590 = vperm.xlu0 %2589, %v254
    %v2591 = vpop.permute.xlu0 %2590
    %2593 = vset.pattern.permute.xlu0 6
    %2594 = vperm.xlu0 %2593, %v258
    %v2595 = vpop.permute.xlu0 %2594
    %2597 = vset.pattern.permute.xlu0 6
    %2598 = vperm.xlu0 %2597, %v262
    %v2599 = vpop.permute.xlu0 %2598
    %2601 = vset.pattern.permute.xlu0 6
    %2602 = vperm.xlu0 %2601, %v266
    %v2603 = vpop.permute.xlu0 %2602
    %2605 = vset.pattern.permute.xlu0 6
    %2606 = vperm.xlu0 %2605, %v270
    %v2607 = vpop.permute.xlu0 %2606
    %2609 = vset.pattern.permute.xlu0 6
    %2610 = vperm.xlu0 %2609, %v274
    %v2611 = vpop.permute.xlu0 %2610
    %2613 = vset.pattern.permute.xlu0 6
    %2614 = vperm.xlu0 %2613, %v278
    %v2615 = vpop.permute.xlu0 %2614
    %2617 = vset.pattern.permute.xlu0 6
    %2618 = vperm.xlu0 %2617, %v282
    %v2619 = vpop.permute.xlu0 %2618
    %2621 = vset.pattern.permute.xlu0 6
    %2622 = vperm.xlu0 %2621, %v286
    %v2623 = vpop.permute.xlu0 %2622
    %2625 = vset.pattern.permute.xlu0 6
    %2626 = vperm.xlu0 %2625, %v290
    %v2627 = vpop.permute.xlu0 %2626
    %2629 = vset.pattern.permute.xlu0 6
    %2630 = vperm.xlu0 %2629, %v294
    %v2631 = vpop.permute.xlu0 %2630
    %2633 = vset.pattern.permute.xlu0 6
    %2634 = vperm.xlu0 %2633, %v298
    %v2635 = vpop.permute.xlu0 %2634
    %2637 = vset.pattern.permute.xlu0 6
    %2638 = vperm.xlu0 %2637, %v302
    %v2639 = vpop.permute.xlu0 %2638
    %2641 = vset.pattern.permute.xlu0 6
    %2642 = vperm.xlu0 %2641, %v306
    %v2643 = vpop.permute.xlu0 %2642
    %2645 = vset.pattern.permute.xlu0 6
    %2646 = vperm.xlu0 %2645, %v310
    %v2647 = vpop.permute.xlu0 %2646
    %2649 = vset.pattern.permute.xlu0 6
    %2650 = vperm.xlu0 %2649, %v314
    %v2651 = vpop.permute.xlu0 %2650
    %2653 = vset.pattern.permute.xlu0 6
    %2654 = vperm.xlu0 %2653, %v318
    %v2655 = vpop.permute.xlu0 %2654
    %2657 = vset.pattern.permute.xlu0 6
    %2658 = vperm.xlu0 %2657, %v322
    %v2659 = vpop.permute.xlu0 %2658
    %2661 = vset.pattern.permute.xlu0 6
    %2662 = vperm.xlu0 %2661, %v326
    %v2663 = vpop.permute.xlu0 %2662
    %2665 = vset.pattern.permute.xlu0 6
    %2666 = vperm.xlu0 %2665, %v330
    %v2667 = vpop.permute.xlu0 %2666
    %2669 = vset.pattern.permute.xlu0 6
    %2670 = vperm.xlu0 %2669, %v334
    %v2671 = vpop.permute.xlu0 %2670
    %2673 = vset.pattern.permute.xlu0 6
    %2674 = vperm.xlu0 %2673, %v338
    %v2675 = vpop.permute.xlu0 %2674
    %2677 = vset.pattern.permute.xlu0 6
    %2678 = vperm.xlu0 %2677, %v342
    %v2679 = vpop.permute.xlu0 %2678
    %2681 = vset.pattern.permute.xlu0 6
    %2682 = vperm.xlu0 %2681, %v346
    %v2683 = vpop.permute.xlu0 %2682
    %2685 = vset.pattern.permute.xlu0 6
    %2686 = vperm.xlu0 %2685, %v350
    %v2687 = vpop.permute.xlu0 %2686
    %2689 = vset.pattern.permute.xlu0 6
    %2690 = vperm.xlu0 %2689, %v354
    %v2691 = vpop.permute.xlu0 %2690
    %2693 = vset.pattern.permute.xlu0 6
    %2694 = vperm.xlu0 %2693, %v358
    %v2695 = vpop.permute.xlu0 %2694
    %2697 = vset.pattern.permute.xlu0 6
    %2698 = vperm.xlu0 %2697, %v362
    %v2699 = vpop.permute.xlu0 %2698
    %v2701 = vmul.f32 %v2575, %v1772
    %v2702 = vmul.f32 %v2575, %v1804
    %v2703 = vmul.f32 %v2579, %v1773
    %v2704 = vmul.f32 %v2579, %v1805
    %v2705 = vmul.f32 %v2583, %v1774
    %v2706 = vmul.f32 %v2583, %v1806
    %v2707 = vmul.f32 %v2587, %v1775
    %v2708 = vmul.f32 %v2587, %v1807
    %v2709 = vmul.f32 %v2591, %v1776
    %v2710 = vmul.f32 %v2591, %v1808
    %v2711 = vmul.f32 %v2595, %v1777
    %v2712 = vmul.f32 %v2595, %v1809
    %v2713 = vmul.f32 %v2599, %v1778
    %v2714 = vmul.f32 %v2599, %v1810
    %v2715 = vmul.f32 %v2603, %v1779
    %v2716 = vmul.f32 %v2603, %v1811
    %v2717 = vmul.f32 %v2607, %v1780
    %v2718 = vmul.f32 %v2607, %v1812
    %v2719 = vmul.f32 %v2611, %v1781
    %v2720 = vmul.f32 %v2611, %v1813
    %v2721 = vmul.f32 %v2615, %v1782
    %v2722 = vmul.f32 %v2615, %v1814
    %v2723 = vmul.f32 %v2619, %v1783
    %v2724 = vmul.f32 %v2619, %v1815
    %v2725 = vmul.f32 %v2623, %v1784
    %v2726 = vmul.f32 %v2623, %v1816
    %v2727 = vmul.f32 %v2627, %v1785
    %v2728 = vmul.f32 %v2627, %v1817
    %v2729 = vmul.f32 %v2631, %v1786
    %v2730 = vmul.f32 %v2631, %v1818
    %v2731 = vmul.f32 %v2635, %v1787
    %v2732 = vmul.f32 %v2635, %v1819
    %v2733 = vmul.f32 %v2639, %v1788
    %v2734 = vmul.f32 %v2639, %v1820
    %v2735 = vmul.f32 %v2643, %v1789
    %v2736 = vmul.f32 %v2643, %v1821
    %v2737 = vmul.f32 %v2647, %v1790
    %v2738 = vmul.f32 %v2647, %v1822
    %v2739 = vmul.f32 %v2651, %v1791
    %v2740 = vmul.f32 %v2651, %v1823
    %v2741 = vmul.f32 %v2655, %v1792
    %v2742 = vmul.f32 %v2655, %v1824
    %v2743 = vmul.f32 %v2659, %v1793
    %v2744 = vmul.f32 %v2659, %v1825
    %v2745 = vmul.f32 %v2663, %v1794
    %v2746 = vmul.f32 %v2663, %v1826
    %v2747 = vmul.f32 %v2667, %v1795
    %v2748 = vmul.f32 %v2667, %v1827
    %v2749 = vmul.f32 %v2671, %v1796
    %v2750 = vmul.f32 %v2671, %v1828
    %v2751 = vmul.f32 %v2675, %v1797
    %v2752 = vmul.f32 %v2675, %v1829
    %v2753 = vmul.f32 %v2679, %v1798
    %v2754 = vmul.f32 %v2679, %v1830
    %v2755 = vmul.f32 %v2683, %v1799
    %v2756 = vmul.f32 %v2683, %v1831
    %v2757 = vmul.f32 %v2687, %v1800
    %v2758 = vmul.f32 %v2687, %v1832
    %v2759 = vmul.f32 %v2691, %v1801
    %v2760 = vmul.f32 %v2691, %v1833
    %v2761 = vmul.f32 %v2695, %v1802
    %v2762 = vmul.f32 %v2695, %v1834
    %v2763 = vmul.f32 %v2699, %v1803
    %v2764 = vmul.f32 %v2699, %v1835
    %vm2829 = vcmask 1045504
    %v2830 = vrot.slane %v2701, 2
    %v2831 = vrot.slane %v2702, 2
    %v2832 = vsel %vm2829, %v2830, %v2831
    %v2833 = vrot.slane %v2703, 2
    %v2834 = vrot.slane %v2704, 2
    %v2835 = vsel %vm2829, %v2833, %v2834
    %v2836 = vrot.slane %v2705, 2
    %v2837 = vrot.slane %v2706, 2
    %v2838 = vsel %vm2829, %v2836, %v2837
    %v2839 = vrot.slane %v2707, 2
    %v2840 = vrot.slane %v2708, 2
    %v2841 = vsel %vm2829, %v2839, %v2840
    %v2842 = vrot.slane %v2709, 2
    %v2843 = vrot.slane %v2710, 2
    %v2844 = vsel %vm2829, %v2842, %v2843
    %v2845 = vrot.slane %v2711, 2
    %v2846 = vrot.slane %v2712, 2
    %v2847 = vsel %vm2829, %v2845, %v2846
    %v2848 = vrot.slane %v2713, 2
    %v2849 = vrot.slane %v2714, 2
    %v2850 = vsel %vm2829, %v2848, %v2849
    %v2851 = vrot.slane %v2715, 2
    %v2852 = vrot.slane %v2716, 2
    %v2853 = vsel %vm2829, %v2851, %v2852
    %v2854 = vrot.slane %v2717, 2
    %v2855 = vrot.slane %v2718, 2
    %v2856 = vsel %vm2829, %v2854, %v2855
    %v2857 = vrot.slane %v2719, 2
    %v2858 = vrot.slane %v2720, 2
    %v2859 = vsel %vm2829, %v2857, %v2858
    %v2860 = vrot.slane %v2721, 2
    %v2861 = vrot.slane %v2722, 2
    %v2862 = vsel %vm2829, %v2860, %v2861
    %v2863 = vrot.slane %v2723, 2
    %v2864 = vrot.slane %v2724, 2
    %v2865 = vsel %vm2829, %v2863, %v2864
    %v2866 = vrot.slane %v2725, 2
    %v2867 = vrot.slane %v2726, 2
    %v2868 = vsel %vm2829, %v2866, %v2867
    %v2869 = vrot.slane %v2727, 2
    %v2870 = vrot.slane %v2728, 2
    %v2871 = vsel %vm2829, %v2869, %v2870
    %v2872 = vrot.slane %v2729, 2
    %v2873 = vrot.slane %v2730, 2
    %v2874 = vsel %vm2829, %v2872, %v2873
    %v2875 = vrot.slane %v2731, 2
    %v2876 = vrot.slane %v2732, 2
    %v2877 = vsel %vm2829, %v2875, %v2876
    %v2878 = vrot.slane %v2733, 2
    %v2879 = vrot.slane %v2734, 2
    %v2880 = vsel %vm2829, %v2878, %v2879
    %v2881 = vrot.slane %v2735, 2
    %v2882 = vrot.slane %v2736, 2
    %v2883 = vsel %vm2829, %v2881, %v2882
    %v2884 = vrot.slane %v2737, 2
    %v2885 = vrot.slane %v2738, 2
    %v2886 = vsel %vm2829, %v2884, %v2885
    %v2887 = vrot.slane %v2739, 2
    %v2888 = vrot.slane %v2740, 2
    %v2889 = vsel %vm2829, %v2887, %v2888
    %v2890 = vrot.slane %v2741, 2
    %v2891 = vrot.slane %v2742, 2
    %v2892 = vsel %vm2829, %v2890, %v2891
    %v2893 = vrot.slane %v2743, 2
    %v2894 = vrot.slane %v2744, 2
    %v2895 = vsel %vm2829, %v2893, %v2894
    %v2896 = vrot.slane %v2745, 2
    %v2897 = vrot.slane %v2746, 2
    %v2898 = vsel %vm2829, %v2896, %v2897
    %v2899 = vrot.slane %v2747, 2
    %v2900 = vrot.slane %v2748, 2
    %v2901 = vsel %vm2829, %v2899, %v2900
    %v2902 = vrot.slane %v2749, 2
    %v2903 = vrot.slane %v2750, 2
    %v2904 = vsel %vm2829, %v2902, %v2903
    %v2905 = vrot.slane %v2751, 2
    %v2906 = vrot.slane %v2752, 2
    %v2907 = vsel %vm2829, %v2905, %v2906
    %v2908 = vrot.slane %v2753, 2
    %v2909 = vrot.slane %v2754, 2
    %v2910 = vsel %vm2829, %v2908, %v2909
    %v2911 = vrot.slane %v2755, 2
    %v2912 = vrot.slane %v2756, 2
    %v2913 = vsel %vm2829, %v2911, %v2912
    %v2914 = vrot.slane %v2757, 2
    %v2915 = vrot.slane %v2758, 2
    %v2916 = vsel %vm2829, %v2914, %v2915
    %v2917 = vrot.slane %v2759, 2
    %v2918 = vrot.slane %v2760, 2
    %v2919 = vsel %vm2829, %v2917, %v2918
    %v2920 = vrot.slane %v2761, 2
    %v2921 = vrot.slane %v2762, 2
    %v2922 = vsel %vm2829, %v2920, %v2921
    %v2923 = vrot.slane %v2763, 2
    %v2924 = vrot.slane %v2764, 2
    %v2925 = vsel %vm2829, %v2923, %v2924
    %v2990 = vadd.f32 %v2509, %v2832
    %v2991 = vadd.f32 %v2510, %v2831
    %v2992 = vadd.f32 %v2511, %v2835
    %v2993 = vadd.f32 %v2512, %v2834
    %v2994 = vadd.f32 %v2513, %v2838
    %v2995 = vadd.f32 %v2514, %v2837
    %v2996 = vadd.f32 %v2515, %v2841
    %v2997 = vadd.f32 %v2516, %v2840
    %v2998 = vadd.f32 %v2517, %v2844
    %v2999 = vadd.f32 %v2518, %v2843
    %v3000 = vadd.f32 %v2519, %v2847
    %v3001 = vadd.f32 %v2520, %v2846
    %v3002 = vadd.f32 %v2521, %v2850
    %v3003 = vadd.f32 %v2522, %v2849
    %v3004 = vadd.f32 %v2523, %v2853
    %v3005 = vadd.f32 %v2524, %v2852
    %v3006 = vadd.f32 %v2525, %v2856
    %v3007 = vadd.f32 %v2526, %v2855
    %v3008 = vadd.f32 %v2527, %v2859
    %v3009 = vadd.f32 %v2528, %v2858
    %v3010 = vadd.f32 %v2529, %v2862
    %v3011 = vadd.f32 %v2530, %v2861
    %v3012 = vadd.f32 %v2531, %v2865
    %v3013 = vadd.f32 %v2532, %v2864
    %v3014 = vadd.f32 %v2533, %v2868
    %v3015 = vadd.f32 %v2534, %v2867
    %v3016 = vadd.f32 %v2535, %v2871
    %v3017 = vadd.f32 %v2536, %v2870
    %v3018 = vadd.f32 %v2537, %v2874
    %v3019 = vadd.f32 %v2538, %v2873
    %v3020 = vadd.f32 %v2539, %v2877
    %v3021 = vadd.f32 %v2540, %v2876
    %v3022 = vadd.f32 %v2541, %v2880
    %v3023 = vadd.f32 %v2542, %v2879
    %v3024 = vadd.f32 %v2543, %v2883
    %v3025 = vadd.f32 %v2544, %v2882
    %v3026 = vadd.f32 %v2545, %v2886
    %v3027 = vadd.f32 %v2546, %v2885
    %v3028 = vadd.f32 %v2547, %v2889
    %v3029 = vadd.f32 %v2548, %v2888
    %v3030 = vadd.f32 %v2549, %v2892
    %v3031 = vadd.f32 %v2550, %v2891
    %v3032 = vadd.f32 %v2551, %v2895
    %v3033 = vadd.f32 %v2552, %v2894
    %v3034 = vadd.f32 %v2553, %v2898
    %v3035 = vadd.f32 %v2554, %v2897
    %v3036 = vadd.f32 %v2555, %v2901
    %v3037 = vadd.f32 %v2556, %v2900
    %v3038 = vadd.f32 %v2557, %v2904
    %v3039 = vadd.f32 %v2558, %v2903
    %v3040 = vadd.f32 %v2559, %v2907
    %v3041 = vadd.f32 %v2560, %v2906
    %v3042 = vadd.f32 %v2561, %v2910
    %v3043 = vadd.f32 %v2562, %v2909
    %v3044 = vadd.f32 %v2563, %v2913
    %v3045 = vadd.f32 %v2564, %v2912
    %v3046 = vadd.f32 %v2565, %v2916
    %v3047 = vadd.f32 %v2566, %v2915
    %v3048 = vadd.f32 %v2567, %v2919
    %v3049 = vadd.f32 %v2568, %v2918
    %v3050 = vadd.f32 %v2569, %v2922
    %v3051 = vadd.f32 %v2570, %v2921
    %v3052 = vadd.f32 %v2571, %v2925
    %v3053 = vadd.f32 %v2572, %v2924
    %3054 = vset.pattern.permute.xlu0 7
    %3055 = vperm.xlu0 %3054, %v238
    %v3056 = vpop.permute.xlu0 %3055
    %3058 = vset.pattern.permute.xlu0 7
    %3059 = vperm.xlu0 %3058, %v242
    %v3060 = vpop.permute.xlu0 %3059
    %3062 = vset.pattern.permute.xlu0 7
    %3063 = vperm.xlu0 %3062, %v246
    %v3064 = vpop.permute.xlu0 %3063
    %3066 = vset.pattern.permute.xlu0 7
    %3067 = vperm.xlu0 %3066, %v250
    %v3068 = vpop.permute.xlu0 %3067
    %3070 = vset.pattern.permute.xlu0 7
    %3071 = vperm.xlu0 %3070, %v254
    %v3072 = vpop.permute.xlu0 %3071
    %3074 = vset.pattern.permute.xlu0 7
    %3075 = vperm.xlu0 %3074, %v258
    %v3076 = vpop.permute.xlu0 %3075
    %3078 = vset.pattern.permute.xlu0 7
    %3079 = vperm.xlu0 %3078, %v262
    %v3080 = vpop.permute.xlu0 %3079
    %3082 = vset.pattern.permute.xlu0 7
    %3083 = vperm.xlu0 %3082, %v266
    %v3084 = vpop.permute.xlu0 %3083
    %3086 = vset.pattern.permute.xlu0 7
    %3087 = vperm.xlu0 %3086, %v270
    %v3088 = vpop.permute.xlu0 %3087
    %3090 = vset.pattern.permute.xlu0 7
    %3091 = vperm.xlu0 %3090, %v274
    %v3092 = vpop.permute.xlu0 %3091
    %3094 = vset.pattern.permute.xlu0 7
    %3095 = vperm.xlu0 %3094, %v278
    %v3096 = vpop.permute.xlu0 %3095
    %3098 = vset.pattern.permute.xlu0 7
    %3099 = vperm.xlu0 %3098, %v282
    %v3100 = vpop.permute.xlu0 %3099
    %3102 = vset.pattern.permute.xlu0 7
    %3103 = vperm.xlu0 %3102, %v286
    %v3104 = vpop.permute.xlu0 %3103
    %3106 = vset.pattern.permute.xlu0 7
    %3107 = vperm.xlu0 %3106, %v290
    %v3108 = vpop.permute.xlu0 %3107
    %3110 = vset.pattern.permute.xlu0 7
    %3111 = vperm.xlu0 %3110, %v294
    %v3112 = vpop.permute.xlu0 %3111
    %3114 = vset.pattern.permute.xlu0 7
    %3115 = vperm.xlu0 %3114, %v298
    %v3116 = vpop.permute.xlu0 %3115
    %3118 = vset.pattern.permute.xlu0 7
    %3119 = vperm.xlu0 %3118, %v302
    %v3120 = vpop.permute.xlu0 %3119
    %3122 = vset.pattern.permute.xlu0 7
    %3123 = vperm.xlu0 %3122, %v306
    %v3124 = vpop.permute.xlu0 %3123
    %3126 = vset.pattern.permute.xlu0 7
    %3127 = vperm.xlu0 %3126, %v310
    %v3128 = vpop.permute.xlu0 %3127
    %3130 = vset.pattern.permute.xlu0 7
    %3131 = vperm.xlu0 %3130, %v314
    %v3132 = vpop.permute.xlu0 %3131
    %3134 = vset.pattern.permute.xlu0 7
    %3135 = vperm.xlu0 %3134, %v318
    %v3136 = vpop.permute.xlu0 %3135
    %3138 = vset.pattern.permute.xlu0 7
    %3139 = vperm.xlu0 %3138, %v322
    %v3140 = vpop.permute.xlu0 %3139
    %3142 = vset.pattern.permute.xlu0 7
    %3143 = vperm.xlu0 %3142, %v326
    %v3144 = vpop.permute.xlu0 %3143
    %3146 = vset.pattern.permute.xlu0 7
    %3147 = vperm.xlu0 %3146, %v330
    %v3148 = vpop.permute.xlu0 %3147
    %3150 = vset.pattern.permute.xlu0 7
    %3151 = vperm.xlu0 %3150, %v334
    %v3152 = vpop.permute.xlu0 %3151
    %3154 = vset.pattern.permute.xlu0 7
    %3155 = vperm.xlu0 %3154, %v338
    %v3156 = vpop.permute.xlu0 %3155
    %3158 = vset.pattern.permute.xlu0 7
    %3159 = vperm.xlu0 %3158, %v342
    %v3160 = vpop.permute.xlu0 %3159
    %3162 = vset.pattern.permute.xlu0 7
    %3163 = vperm.xlu0 %3162, %v346
    %v3164 = vpop.permute.xlu0 %3163
    %3166 = vset.pattern.permute.xlu0 7
    %3167 = vperm.xlu0 %3166, %v350
    %v3168 = vpop.permute.xlu0 %3167
    %3170 = vset.pattern.permute.xlu0 7
    %3171 = vperm.xlu0 %3170, %v354
    %v3172 = vpop.permute.xlu0 %3171
    %3174 = vset.pattern.permute.xlu0 7
    %3175 = vperm.xlu0 %3174, %v358
    %v3176 = vpop.permute.xlu0 %3175
    %3178 = vset.pattern.permute.xlu0 7
    %3179 = vperm.xlu0 %3178, %v362
    %v3180 = vpop.permute.xlu0 %3179
    %v3182 = vmul.f32 %v3056, %v1772
    %v3183 = vmul.f32 %v3056, %v1804
    %v3184 = vmul.f32 %v3060, %v1773
    %v3185 = vmul.f32 %v3060, %v1805
    %v3186 = vmul.f32 %v3064, %v1774
    %v3187 = vmul.f32 %v3064, %v1806
    %v3188 = vmul.f32 %v3068, %v1775
    %v3189 = vmul.f32 %v3068, %v1807
    %v3190 = vmul.f32 %v3072, %v1776
    %v3191 = vmul.f32 %v3072, %v1808
    %v3192 = vmul.f32 %v3076, %v1777
    %v3193 = vmul.f32 %v3076, %v1809
    %v3194 = vmul.f32 %v3080, %v1778
    %v3195 = vmul.f32 %v3080, %v1810
    %v3196 = vmul.f32 %v3084, %v1779
    %v3197 = vmul.f32 %v3084, %v1811
    %v3198 = vmul.f32 %v3088, %v1780
    %v3199 = vmul.f32 %v3088, %v1812
    %v3200 = vmul.f32 %v3092, %v1781
    %v3201 = vmul.f32 %v3092, %v1813
    %v3202 = vmul.f32 %v3096, %v1782
    %v3203 = vmul.f32 %v3096, %v1814
    %v3204 = vmul.f32 %v3100, %v1783
    %v3205 = vmul.f32 %v3100, %v1815
    %v3206 = vmul.f32 %v3104, %v1784
    %v3207 = vmul.f32 %v3104, %v1816
    %v3208 = vmul.f32 %v3108, %v1785
    %v3209 = vmul.f32 %v3108, %v1817
    %v3210 = vmul.f32 %v3112, %v1786
    %v3211 = vmul.f32 %v3112, %v1818
    %v3212 = vmul.f32 %v3116, %v1787
    %v3213 = vmul.f32 %v3116, %v1819
    %v3214 = vmul.f32 %v3120, %v1788
    %v3215 = vmul.f32 %v3120, %v1820
    %v3216 = vmul.f32 %v3124, %v1789
    %v3217 = vmul.f32 %v3124, %v1821
    %v3218 = vmul.f32 %v3128, %v1790
    %v3219 = vmul.f32 %v3128, %v1822
    %v3220 = vmul.f32 %v3132, %v1791
    %v3221 = vmul.f32 %v3132, %v1823
    %v3222 = vmul.f32 %v3136, %v1792
    %v3223 = vmul.f32 %v3136, %v1824
    %v3224 = vmul.f32 %v3140, %v1793
    %v3225 = vmul.f32 %v3140, %v1825
    %v3226 = vmul.f32 %v3144, %v1794
    %v3227 = vmul.f32 %v3144, %v1826
    %v3228 = vmul.f32 %v3148, %v1795
    %v3229 = vmul.f32 %v3148, %v1827
    %v3230 = vmul.f32 %v3152, %v1796
    %v3231 = vmul.f32 %v3152, %v1828
    %v3232 = vmul.f32 %v3156, %v1797
    %v3233 = vmul.f32 %v3156, %v1829
    %v3234 = vmul.f32 %v3160, %v1798
    %v3235 = vmul.f32 %v3160, %v1830
    %v3236 = vmul.f32 %v3164, %v1799
    %v3237 = vmul.f32 %v3164, %v1831
    %v3238 = vmul.f32 %v3168, %v1800
    %v3239 = vmul.f32 %v3168, %v1832
    %v3240 = vmul.f32 %v3172, %v1801
    %v3241 = vmul.f32 %v3172, %v1833
    %v3242 = vmul.f32 %v3176, %v1802
    %v3243 = vmul.f32 %v3176, %v1834
    %v3244 = vmul.f32 %v3180, %v1803
    %v3245 = vmul.f32 %v3180, %v1835
    %vm3310 = vcmask 1044480
    %v3311 = vrot.slane %v3182, 3
    %v3312 = vrot.slane %v3183, 3
    %v3313 = vsel %vm3310, %v3311, %v3312
    %v3314 = vrot.slane %v3184, 3
    %v3315 = vrot.slane %v3185, 3
    %v3316 = vsel %vm3310, %v3314, %v3315
    %v3317 = vrot.slane %v3186, 3
    %v3318 = vrot.slane %v3187, 3
    %v3319 = vsel %vm3310, %v3317, %v3318
    %v3320 = vrot.slane %v3188, 3
    %v3321 = vrot.slane %v3189, 3
    %v3322 = vsel %vm3310, %v3320, %v3321
    %v3323 = vrot.slane %v3190, 3
    %v3324 = vrot.slane %v3191, 3
    %v3325 = vsel %vm3310, %v3323, %v3324
    %v3326 = vrot.slane %v3192, 3
    %v3327 = vrot.slane %v3193, 3
    %v3328 = vsel %vm3310, %v3326, %v3327
    %v3329 = vrot.slane %v3194, 3
    %v3330 = vrot.slane %v3195, 3
    %v3331 = vsel %vm3310, %v3329, %v3330
    %v3332 = vrot.slane %v3196, 3
    %v3333 = vrot.slane %v3197, 3
    %v3334 = vsel %vm3310, %v3332, %v3333
    %v3335 = vrot.slane %v3198, 3
    %v3336 = vrot.slane %v3199, 3
    %v3337 = vsel %vm3310, %v3335, %v3336
    %v3338 = vrot.slane %v3200, 3
    %v3339 = vrot.slane %v3201, 3
    %v3340 = vsel %vm3310, %v3338, %v3339
    %v3341 = vrot.slane %v3202, 3
    %v3342 = vrot.slane %v3203, 3
    %v3343 = vsel %vm3310, %v3341, %v3342
    %v3344 = vrot.slane %v3204, 3
    %v3345 = vrot.slane %v3205, 3
    %v3346 = vsel %vm3310, %v3344, %v3345
    %v3347 = vrot.slane %v3206, 3
    %v3348 = vrot.slane %v3207, 3
    %v3349 = vsel %vm3310, %v3347, %v3348
    %v3350 = vrot.slane %v3208, 3
    %v3351 = vrot.slane %v3209, 3
    %v3352 = vsel %vm3310, %v3350, %v3351
    %v3353 = vrot.slane %v3210, 3
    %v3354 = vrot.slane %v3211, 3
    %v3355 = vsel %vm3310, %v3353, %v3354
    %v3356 = vrot.slane %v3212, 3
    %v3357 = vrot.slane %v3213, 3
    %v3358 = vsel %vm3310, %v3356, %v3357
    %v3359 = vrot.slane %v3214, 3
    %v3360 = vrot.slane %v3215, 3
    %v3361 = vsel %vm3310, %v3359, %v3360
    %v3362 = vrot.slane %v3216, 3
    %v3363 = vrot.slane %v3217, 3
    %v3364 = vsel %vm3310, %v3362, %v3363
    %v3365 = vrot.slane %v3218, 3
    %v3366 = vrot.slane %v3219, 3
    %v3367 = vsel %vm3310, %v3365, %v3366
    %v3368 = vrot.slane %v3220, 3
    %v3369 = vrot.slane %v3221, 3
    %v3370 = vsel %vm3310, %v3368, %v3369
    %v3371 = vrot.slane %v3222, 3
    %v3372 = vrot.slane %v3223, 3
    %v3373 = vsel %vm3310, %v3371, %v3372
    %v3374 = vrot.slane %v3224, 3
    %v3375 = vrot.slane %v3225, 3
    %v3376 = vsel %vm3310, %v3374, %v3375
    %v3377 = vrot.slane %v3226, 3
    %v3378 = vrot.slane %v3227, 3
    %v3379 = vsel %vm3310, %v3377, %v3378
    %v3380 = vrot.slane %v3228, 3
    %v3381 = vrot.slane %v3229, 3
    %v3382 = vsel %vm3310, %v3380, %v3381
    %v3383 = vrot.slane %v3230, 3
    %v3384 = vrot.slane %v3231, 3
    %v3385 = vsel %vm3310, %v3383, %v3384
    %v3386 = vrot.slane %v3232, 3
    %v3387 = vrot.slane %v3233, 3
    %v3388 = vsel %vm3310, %v3386, %v3387
    %v3389 = vrot.slane %v3234, 3
    %v3390 = vrot.slane %v3235, 3
    %v3391 = vsel %vm3310, %v3389, %v3390
    %v3392 = vrot.slane %v3236, 3
    %v3393 = vrot.slane %v3237, 3
    %v3394 = vsel %vm3310, %v3392, %v3393
    %v3395 = vrot.slane %v3238, 3
    %v3396 = vrot.slane %v3239, 3
    %v3397 = vsel %vm3310, %v3395, %v3396
    %v3398 = vrot.slane %v3240, 3
    %v3399 = vrot.slane %v3241, 3
    %v3400 = vsel %vm3310, %v3398, %v3399
    %v3401 = vrot.slane %v3242, 3
    %v3402 = vrot.slane %v3243, 3
    %v3403 = vsel %vm3310, %v3401, %v3402
    %v3404 = vrot.slane %v3244, 3
    %v3405 = vrot.slane %v3245, 3
    %v3406 = vsel %vm3310, %v3404, %v3405
    %v3471 = vadd.f32 %v2990, %v3313
    %v3472 = vadd.f32 %v2991, %v3312
    %v3473 = vadd.f32 %v2992, %v3316
    %v3474 = vadd.f32 %v2993, %v3315
    %v3475 = vadd.f32 %v2994, %v3319
    %v3476 = vadd.f32 %v2995, %v3318
    %v3477 = vadd.f32 %v2996, %v3322
    %v3478 = vadd.f32 %v2997, %v3321
    %v3479 = vadd.f32 %v2998, %v3325
    %v3480 = vadd.f32 %v2999, %v3324
    %v3481 = vadd.f32 %v3000, %v3328
    %v3482 = vadd.f32 %v3001, %v3327
    %v3483 = vadd.f32 %v3002, %v3331
    %v3484 = vadd.f32 %v3003, %v3330
    %v3485 = vadd.f32 %v3004, %v3334
    %v3486 = vadd.f32 %v3005, %v3333
    %v3487 = vadd.f32 %v3006, %v3337
    %v3488 = vadd.f32 %v3007, %v3336
    %v3489 = vadd.f32 %v3008, %v3340
    %v3490 = vadd.f32 %v3009, %v3339
    %v3491 = vadd.f32 %v3010, %v3343
    %v3492 = vadd.f32 %v3011, %v3342
    %v3493 = vadd.f32 %v3012, %v3346
    %v3494 = vadd.f32 %v3013, %v3345
    %v3495 = vadd.f32 %v3014, %v3349
    %v3496 = vadd.f32 %v3015, %v3348
    %v3497 = vadd.f32 %v3016, %v3352
    %v3498 = vadd.f32 %v3017, %v3351
    %v3499 = vadd.f32 %v3018, %v3355
    %v3500 = vadd.f32 %v3019, %v3354
    %v3501 = vadd.f32 %v3020, %v3358
    %v3502 = vadd.f32 %v3021, %v3357
    %v3503 = vadd.f32 %v3022, %v3361
    %v3504 = vadd.f32 %v3023, %v3360
    %v3505 = vadd.f32 %v3024, %v3364
    %v3506 = vadd.f32 %v3025, %v3363
    %v3507 = vadd.f32 %v3026, %v3367
    %v3508 = vadd.f32 %v3027, %v3366
    %v3509 = vadd.f32 %v3028, %v3370
    %v3510 = vadd.f32 %v3029, %v3369
    %v3511 = vadd.f32 %v3030, %v3373
    %v3512 = vadd.f32 %v3031, %v3372
    %v3513 = vadd.f32 %v3032, %v3376
    %v3514 = vadd.f32 %v3033, %v3375
    %v3515 = vadd.f32 %v3034, %v3379
    %v3516 = vadd.f32 %v3035, %v3378
    %v3517 = vadd.f32 %v3036, %v3382
    %v3518 = vadd.f32 %v3037, %v3381
    %v3519 = vadd.f32 %v3038, %v3385
    %v3520 = vadd.f32 %v3039, %v3384
    %v3521 = vadd.f32 %v3040, %v3388
    %v3522 = vadd.f32 %v3041, %v3387
    %v3523 = vadd.f32 %v3042, %v3391
    %v3524 = vadd.f32 %v3043, %v3390
    %v3525 = vadd.f32 %v3044, %v3394
    %v3526 = vadd.f32 %v3045, %v3393
    %v3527 = vadd.f32 %v3046, %v3397
    %v3528 = vadd.f32 %v3047, %v3396
    %v3529 = vadd.f32 %v3048, %v3400
    %v3530 = vadd.f32 %v3049, %v3399
    %v3531 = vadd.f32 %v3050, %v3403
    %v3532 = vadd.f32 %v3051, %v3402
    %v3533 = vadd.f32 %v3052, %v3406
    %v3534 = vadd.f32 %v3053, %v3405
    %3535 = vset.pattern.permute.xlu0 8
    %3536 = vperm.xlu0 %3535, %v238
    %v3537 = vpop.permute.xlu0 %3536
    %3539 = vset.pattern.permute.xlu0 8
    %3540 = vperm.xlu0 %3539, %v242
    %v3541 = vpop.permute.xlu0 %3540
    %3543 = vset.pattern.permute.xlu0 8
    %3544 = vperm.xlu0 %3543, %v246
    %v3545 = vpop.permute.xlu0 %3544
    %3547 = vset.pattern.permute.xlu0 8
    %3548 = vperm.xlu0 %3547, %v250
    %v3549 = vpop.permute.xlu0 %3548
    %3551 = vset.pattern.permute.xlu0 8
    %3552 = vperm.xlu0 %3551, %v254
    %v3553 = vpop.permute.xlu0 %3552
    %3555 = vset.pattern.permute.xlu0 8
    %3556 = vperm.xlu0 %3555, %v258
    %v3557 = vpop.permute.xlu0 %3556
    %3559 = vset.pattern.permute.xlu0 8
    %3560 = vperm.xlu0 %3559, %v262
    %v3561 = vpop.permute.xlu0 %3560
    %3563 = vset.pattern.permute.xlu0 8
    %3564 = vperm.xlu0 %3563, %v266
    %v3565 = vpop.permute.xlu0 %3564
    %3567 = vset.pattern.permute.xlu0 8
    %3568 = vperm.xlu0 %3567, %v270
    %v3569 = vpop.permute.xlu0 %3568
    %3571 = vset.pattern.permute.xlu0 8
    %3572 = vperm.xlu0 %3571, %v274
    %v3573 = vpop.permute.xlu0 %3572
    %3575 = vset.pattern.permute.xlu0 8
    %3576 = vperm.xlu0 %3575, %v278
    %v3577 = vpop.permute.xlu0 %3576
    %3579 = vset.pattern.permute.xlu0 8
    %3580 = vperm.xlu0 %3579, %v282
    %v3581 = vpop.permute.xlu0 %3580
    %3583 = vset.pattern.permute.xlu0 8
    %3584 = vperm.xlu0 %3583, %v286
    %v3585 = vpop.permute.xlu0 %3584
    %3587 = vset.pattern.permute.xlu0 8
    %3588 = vperm.xlu0 %3587, %v290
    %v3589 = vpop.permute.xlu0 %3588
    %3591 = vset.pattern.permute.xlu0 8
    %3592 = vperm.xlu0 %3591, %v294
    %v3593 = vpop.permute.xlu0 %3592
    %3595 = vset.pattern.permute.xlu0 8
    %3596 = vperm.xlu0 %3595, %v298
    %v3597 = vpop.permute.xlu0 %3596
    %3599 = vset.pattern.permute.xlu0 8
    %3600 = vperm.xlu0 %3599, %v302
    %v3601 = vpop.permute.xlu0 %3600
    %3603 = vset.pattern.permute.xlu0 8
    %3604 = vperm.xlu0 %3603, %v306
    %v3605 = vpop.permute.xlu0 %3604
    %3607 = vset.pattern.permute.xlu0 8
    %3608 = vperm.xlu0 %3607, %v310
    %v3609 = vpop.permute.xlu0 %3608
    %3611 = vset.pattern.permute.xlu0 8
    %3612 = vperm.xlu0 %3611, %v314
    %v3613 = vpop.permute.xlu0 %3612
    %3615 = vset.pattern.permute.xlu0 8
    %3616 = vperm.xlu0 %3615, %v318
    %v3617 = vpop.permute.xlu0 %3616
    %3619 = vset.pattern.permute.xlu0 8
    %3620 = vperm.xlu0 %3619, %v322
    %v3621 = vpop.permute.xlu0 %3620
    %3623 = vset.pattern.permute.xlu0 8
    %3624 = vperm.xlu0 %3623, %v326
    %v3625 = vpop.permute.xlu0 %3624
    %3627 = vset.pattern.permute.xlu0 8
    %3628 = vperm.xlu0 %3627, %v330
    %v3629 = vpop.permute.xlu0 %3628
    %3631 = vset.pattern.permute.xlu0 8
    %3632 = vperm.xlu0 %3631, %v334
    %v3633 = vpop.permute.xlu0 %3632
    %3635 = vset.pattern.permute.xlu0 8
    %3636 = vperm.xlu0 %3635, %v338
    %v3637 = vpop.permute.xlu0 %3636
    %3639 = vset.pattern.permute.xlu0 8
    %3640 = vperm.xlu0 %3639, %v342
    %v3641 = vpop.permute.xlu0 %3640
    %3643 = vset.pattern.permute.xlu0 8
    %3644 = vperm.xlu0 %3643, %v346
    %v3645 = vpop.permute.xlu0 %3644
    %3647 = vset.pattern.permute.xlu0 8
    %3648 = vperm.xlu0 %3647, %v350
    %v3649 = vpop.permute.xlu0 %3648
    %3651 = vset.pattern.permute.xlu0 8
    %3652 = vperm.xlu0 %3651, %v354
    %v3653 = vpop.permute.xlu0 %3652
    %3655 = vset.pattern.permute.xlu0 8
    %3656 = vperm.xlu0 %3655, %v358
    %v3657 = vpop.permute.xlu0 %3656
    %3659 = vset.pattern.permute.xlu0 8
    %3660 = vperm.xlu0 %3659, %v362
    %v3661 = vpop.permute.xlu0 %3660
    %v3663 = vmul.f32 %v3537, %v1772
    %v3664 = vmul.f32 %v3537, %v1804
    %v3665 = vmul.f32 %v3541, %v1773
    %v3666 = vmul.f32 %v3541, %v1805
    %v3667 = vmul.f32 %v3545, %v1774
    %v3668 = vmul.f32 %v3545, %v1806
    %v3669 = vmul.f32 %v3549, %v1775
    %v3670 = vmul.f32 %v3549, %v1807
    %v3671 = vmul.f32 %v3553, %v1776
    %v3672 = vmul.f32 %v3553, %v1808
    %v3673 = vmul.f32 %v3557, %v1777
    %v3674 = vmul.f32 %v3557, %v1809
    %v3675 = vmul.f32 %v3561, %v1778
    %v3676 = vmul.f32 %v3561, %v1810
    %v3677 = vmul.f32 %v3565, %v1779
    %v3678 = vmul.f32 %v3565, %v1811
    %v3679 = vmul.f32 %v3569, %v1780
    %v3680 = vmul.f32 %v3569, %v1812
    %v3681 = vmul.f32 %v3573, %v1781
    %v3682 = vmul.f32 %v3573, %v1813
    %v3683 = vmul.f32 %v3577, %v1782
    %v3684 = vmul.f32 %v3577, %v1814
    %v3685 = vmul.f32 %v3581, %v1783
    %v3686 = vmul.f32 %v3581, %v1815
    %v3687 = vmul.f32 %v3585, %v1784
    %v3688 = vmul.f32 %v3585, %v1816
    %v3689 = vmul.f32 %v3589, %v1785
    %v3690 = vmul.f32 %v3589, %v1817
    %v3691 = vmul.f32 %v3593, %v1786
    %v3692 = vmul.f32 %v3593, %v1818
    %v3693 = vmul.f32 %v3597, %v1787
    %v3694 = vmul.f32 %v3597, %v1819
    %v3695 = vmul.f32 %v3601, %v1788
    %v3696 = vmul.f32 %v3601, %v1820
    %v3697 = vmul.f32 %v3605, %v1789
    %v3698 = vmul.f32 %v3605, %v1821
    %v3699 = vmul.f32 %v3609, %v1790
    %v3700 = vmul.f32 %v3609, %v1822
    %v3701 = vmul.f32 %v3613, %v1791
    %v3702 = vmul.f32 %v3613, %v1823
    %v3703 = vmul.f32 %v3617, %v1792
    %v3704 = vmul.f32 %v3617, %v1824
    %v3705 = vmul.f32 %v3621, %v1793
    %v3706 = vmul.f32 %v3621, %v1825
    %v3707 = vmul.f32 %v3625, %v1794
    %v3708 = vmul.f32 %v3625, %v1826
    %v3709 = vmul.f32 %v3629, %v1795
    %v3710 = vmul.f32 %v3629, %v1827
    %v3711 = vmul.f32 %v3633, %v1796
    %v3712 = vmul.f32 %v3633, %v1828
    %v3713 = vmul.f32 %v3637, %v1797
    %v3714 = vmul.f32 %v3637, %v1829
    %v3715 = vmul.f32 %v3641, %v1798
    %v3716 = vmul.f32 %v3641, %v1830
    %v3717 = vmul.f32 %v3645, %v1799
    %v3718 = vmul.f32 %v3645, %v1831
    %v3719 = vmul.f32 %v3649, %v1800
    %v3720 = vmul.f32 %v3649, %v1832
    %v3721 = vmul.f32 %v3653, %v1801
    %v3722 = vmul.f32 %v3653, %v1833
    %v3723 = vmul.f32 %v3657, %v1802
    %v3724 = vmul.f32 %v3657, %v1834
    %v3725 = vmul.f32 %v3661, %v1803
    %v3726 = vmul.f32 %v3661, %v1835
    %v3791 = vrot.slane %v3663, 4
    %v3792 = vrot.slane %v3664, 4
    %v3793 = vsel %vm1771, %v3791, %v3792
    %v3794 = vrot.slane %v3665, 4
    %v3795 = vrot.slane %v3666, 4
    %v3796 = vsel %vm1771, %v3794, %v3795
    %v3797 = vrot.slane %v3667, 4
    %v3798 = vrot.slane %v3668, 4
    %v3799 = vsel %vm1771, %v3797, %v3798
    %v3800 = vrot.slane %v3669, 4
    %v3801 = vrot.slane %v3670, 4
    %v3802 = vsel %vm1771, %v3800, %v3801
    %v3803 = vrot.slane %v3671, 4
    %v3804 = vrot.slane %v3672, 4
    %v3805 = vsel %vm1771, %v3803, %v3804
    %v3806 = vrot.slane %v3673, 4
    %v3807 = vrot.slane %v3674, 4
    %v3808 = vsel %vm1771, %v3806, %v3807
    %v3809 = vrot.slane %v3675, 4
    %v3810 = vrot.slane %v3676, 4
    %v3811 = vsel %vm1771, %v3809, %v3810
    %v3812 = vrot.slane %v3677, 4
    %v3813 = vrot.slane %v3678, 4
    %v3814 = vsel %vm1771, %v3812, %v3813
    %v3815 = vrot.slane %v3679, 4
    %v3816 = vrot.slane %v3680, 4
    %v3817 = vsel %vm1771, %v3815, %v3816
    %v3818 = vrot.slane %v3681, 4
    %v3819 = vrot.slane %v3682, 4
    %v3820 = vsel %vm1771, %v3818, %v3819
    %v3821 = vrot.slane %v3683, 4
    %v3822 = vrot.slane %v3684, 4
    %v3823 = vsel %vm1771, %v3821, %v3822
    %v3824 = vrot.slane %v3685, 4
    %v3825 = vrot.slane %v3686, 4
    %v3826 = vsel %vm1771, %v3824, %v3825
    %v3827 = vrot.slane %v3687, 4
    %v3828 = vrot.slane %v3688, 4
    %v3829 = vsel %vm1771, %v3827, %v3828
    %v3830 = vrot.slane %v3689, 4
    %v3831 = vrot.slane %v3690, 4
    %v3832 = vsel %vm1771, %v3830, %v3831
    %v3833 = vrot.slane %v3691, 4
    %v3834 = vrot.slane %v3692, 4
    %v3835 = vsel %vm1771, %v3833, %v3834
    %v3836 = vrot.slane %v3693, 4
    %v3837 = vrot.slane %v3694, 4
    %v3838 = vsel %vm1771, %v3836, %v3837
    %v3839 = vrot.slane %v3695, 4
    %v3840 = vrot.slane %v3696, 4
    %v3841 = vsel %vm1771, %v3839, %v3840
    %v3842 = vrot.slane %v3697, 4
    %v3843 = vrot.slane %v3698, 4
    %v3844 = vsel %vm1771, %v3842, %v3843
    %v3845 = vrot.slane %v3699, 4
    %v3846 = vrot.slane %v3700, 4
    %v3847 = vsel %vm1771, %v3845, %v3846
    %v3848 = vrot.slane %v3701, 4
    %v3849 = vrot.slane %v3702, 4
    %v3850 = vsel %vm1771, %v3848, %v3849
    %v3851 = vrot.slane %v3703, 4
    %v3852 = vrot.slane %v3704, 4
    %v3853 = vsel %vm1771, %v3851, %v3852
    %v3854 = vrot.slane %v3705, 4
    %v3855 = vrot.slane %v3706, 4
    %v3856 = vsel %vm1771, %v3854, %v3855
    %v3857 = vrot.slane %v3707, 4
    %v3858 = vrot.slane %v3708, 4
    %v3859 = vsel %vm1771, %v3857, %v3858
    %v3860 = vrot.slane %v3709, 4
    %v3861 = vrot.slane %v3710, 4
    %v3862 = vsel %vm1771, %v3860, %v3861
    %v3863 = vrot.slane %v3711, 4
    %v3864 = vrot.slane %v3712, 4
    %v3865 = vsel %vm1771, %v3863, %v3864
    %v3866 = vrot.slane %v3713, 4
    %v3867 = vrot.slane %v3714, 4
    %v3868 = vsel %vm1771, %v3866, %v3867
    %v3869 = vrot.slane %v3715, 4
    %v3870 = vrot.slane %v3716, 4
    %v3871 = vsel %vm1771, %v3869, %v3870
    %v3872 = vrot.slane %v3717, 4
    %v3873 = vrot.slane %v3718, 4
    %v3874 = vsel %vm1771, %v3872, %v3873
    %v3875 = vrot.slane %v3719, 4
    %v3876 = vrot.slane %v3720, 4
    %v3877 = vsel %vm1771, %v3875, %v3876
    %v3878 = vrot.slane %v3721, 4
    %v3879 = vrot.slane %v3722, 4
    %v3880 = vsel %vm1771, %v3878, %v3879
    %v3881 = vrot.slane %v3723, 4
    %v3882 = vrot.slane %v3724, 4
    %v3883 = vsel %vm1771, %v3881, %v3882
    %v3884 = vrot.slane %v3725, 4
    %v3885 = vrot.slane %v3726, 4
    %v3886 = vsel %vm1771, %v3884, %v3885
    %v3951 = vadd.f32 %v3471, %v3793
    %v3952 = vadd.f32 %v3472, %v3792
    %v3953 = vadd.f32 %v3473, %v3796
    %v3954 = vadd.f32 %v3474, %v3795
    %v3955 = vadd.f32 %v3475, %v3799
    %v3956 = vadd.f32 %v3476, %v3798
    %v3957 = vadd.f32 %v3477, %v3802
    %v3958 = vadd.f32 %v3478, %v3801
    %v3959 = vadd.f32 %v3479, %v3805
    %v3960 = vadd.f32 %v3480, %v3804
    %v3961 = vadd.f32 %v3481, %v3808
    %v3962 = vadd.f32 %v3482, %v3807
    %v3963 = vadd.f32 %v3483, %v3811
    %v3964 = vadd.f32 %v3484, %v3810
    %v3965 = vadd.f32 %v3485, %v3814
    %v3966 = vadd.f32 %v3486, %v3813
    %v3967 = vadd.f32 %v3487, %v3817
    %v3968 = vadd.f32 %v3488, %v3816
    %v3969 = vadd.f32 %v3489, %v3820
    %v3970 = vadd.f32 %v3490, %v3819
    %v3971 = vadd.f32 %v3491, %v3823
    %v3972 = vadd.f32 %v3492, %v3822
    %v3973 = vadd.f32 %v3493, %v3826
    %v3974 = vadd.f32 %v3494, %v3825
    %v3975 = vadd.f32 %v3495, %v3829
    %v3976 = vadd.f32 %v3496, %v3828
    %v3977 = vadd.f32 %v3497, %v3832
    %v3978 = vadd.f32 %v3498, %v3831
    %v3979 = vadd.f32 %v3499, %v3835
    %v3980 = vadd.f32 %v3500, %v3834
    %v3981 = vadd.f32 %v3501, %v3838
    %v3982 = vadd.f32 %v3502, %v3837
    %v3983 = vadd.f32 %v3503, %v3841
    %v3984 = vadd.f32 %v3504, %v3840
    %v3985 = vadd.f32 %v3505, %v3844
    %v3986 = vadd.f32 %v3506, %v3843
    %v3987 = vadd.f32 %v3507, %v3847
    %v3988 = vadd.f32 %v3508, %v3846
    %v3989 = vadd.f32 %v3509, %v3850
    %v3990 = vadd.f32 %v3510, %v3849
    %v3991 = vadd.f32 %v3511, %v3853
    %v3992 = vadd.f32 %v3512, %v3852
    %v3993 = vadd.f32 %v3513, %v3856
    %v3994 = vadd.f32 %v3514, %v3855
    %v3995 = vadd.f32 %v3515, %v3859
    %v3996 = vadd.f32 %v3516, %v3858
    %v3997 = vadd.f32 %v3517, %v3862
    %v3998 = vadd.f32 %v3518, %v3861
    %v3999 = vadd.f32 %v3519, %v3865
    %v4000 = vadd.f32 %v3520, %v3864
    %v4001 = vadd.f32 %v3521, %v3868
    %v4002 = vadd.f32 %v3522, %v3867
    %v4003 = vadd.f32 %v3523, %v3871
    %v4004 = vadd.f32 %v3524, %v3870
    %v4005 = vadd.f32 %v3525, %v3874
    %v4006 = vadd.f32 %v3526, %v3873
    %v4007 = vadd.f32 %v3527, %v3877
    %v4008 = vadd.f32 %v3528, %v3876
    %v4009 = vadd.f32 %v3529, %v3880
    %v4010 = vadd.f32 %v3530, %v3879
    %v4011 = vadd.f32 %v3531, %v3883
    %v4012 = vadd.f32 %v3532, %v3882
    %v4013 = vadd.f32 %v3533, %v3886
    %v4014 = vadd.f32 %v3534, %v3885
    %4015 = vset.pattern.permute.xlu0 9
    %4016 = vperm.xlu0 %4015, %v238
    %v4017 = vpop.permute.xlu0 %4016
    %4019 = vset.pattern.permute.xlu0 9
    %4020 = vperm.xlu0 %4019, %v242
    %v4021 = vpop.permute.xlu0 %4020
    %4023 = vset.pattern.permute.xlu0 9
    %4024 = vperm.xlu0 %4023, %v246
    %v4025 = vpop.permute.xlu0 %4024
    %4027 = vset.pattern.permute.xlu0 9
    %4028 = vperm.xlu0 %4027, %v250
    %v4029 = vpop.permute.xlu0 %4028
    %4031 = vset.pattern.permute.xlu0 9
    %4032 = vperm.xlu0 %4031, %v254
    %v4033 = vpop.permute.xlu0 %4032
    %4035 = vset.pattern.permute.xlu0 9
    %4036 = vperm.xlu0 %4035, %v258
    %v4037 = vpop.permute.xlu0 %4036
    %4039 = vset.pattern.permute.xlu0 9
    %4040 = vperm.xlu0 %4039, %v262
    %v4041 = vpop.permute.xlu0 %4040
    %4043 = vset.pattern.permute.xlu0 9
    %4044 = vperm.xlu0 %4043, %v266
    %v4045 = vpop.permute.xlu0 %4044
    %4047 = vset.pattern.permute.xlu0 9
    %4048 = vperm.xlu0 %4047, %v270
    %v4049 = vpop.permute.xlu0 %4048
    %4051 = vset.pattern.permute.xlu0 9
    %4052 = vperm.xlu0 %4051, %v274
    %v4053 = vpop.permute.xlu0 %4052
    %4055 = vset.pattern.permute.xlu0 9
    %4056 = vperm.xlu0 %4055, %v278
    %v4057 = vpop.permute.xlu0 %4056
    %4059 = vset.pattern.permute.xlu0 9
    %4060 = vperm.xlu0 %4059, %v282
    %v4061 = vpop.permute.xlu0 %4060
    %4063 = vset.pattern.permute.xlu0 9
    %4064 = vperm.xlu0 %4063, %v286
    %v4065 = vpop.permute.xlu0 %4064
    %4067 = vset.pattern.permute.xlu0 9
    %4068 = vperm.xlu0 %4067, %v290
    %v4069 = vpop.permute.xlu0 %4068
    %4071 = vset.pattern.permute.xlu0 9
    %4072 = vperm.xlu0 %4071, %v294
    %v4073 = vpop.permute.xlu0 %4072
    %4075 = vset.pattern.permute.xlu0 9
    %4076 = vperm.xlu0 %4075, %v298
    %v4077 = vpop.permute.xlu0 %4076
    %4079 = vset.pattern.permute.xlu0 9
    %4080 = vperm.xlu0 %4079, %v302
    %v4081 = vpop.permute.xlu0 %4080
    %4083 = vset.pattern.permute.xlu0 9
    %4084 = vperm.xlu0 %4083, %v306
    %v4085 = vpop.permute.xlu0 %4084
    %4087 = vset.pattern.permute.xlu0 9
    %4088 = vperm.xlu0 %4087, %v310
    %v4089 = vpop.permute.xlu0 %4088
    %4091 = vset.pattern.permute.xlu0 9
    %4092 = vperm.xlu0 %4091, %v314
    %v4093 = vpop.permute.xlu0 %4092
    %4095 = vset.pattern.permute.xlu0 9
    %4096 = vperm.xlu0 %4095, %v318
    %v4097 = vpop.permute.xlu0 %4096
    %4099 = vset.pattern.permute.xlu0 9
    %4100 = vperm.xlu0 %4099, %v322
    %v4101 = vpop.permute.xlu0 %4100
    %4103 = vset.pattern.permute.xlu0 9
    %4104 = vperm.xlu0 %4103, %v326
    %v4105 = vpop.permute.xlu0 %4104
    %4107 = vset.pattern.permute.xlu0 9
    %4108 = vperm.xlu0 %4107, %v330
    %v4109 = vpop.permute.xlu0 %4108
    %4111 = vset.pattern.permute.xlu0 9
    %4112 = vperm.xlu0 %4111, %v334
    %v4113 = vpop.permute.xlu0 %4112
    %4115 = vset.pattern.permute.xlu0 9
    %4116 = vperm.xlu0 %4115, %v338
    %v4117 = vpop.permute.xlu0 %4116
    %4119 = vset.pattern.permute.xlu0 9
    %4120 = vperm.xlu0 %4119, %v342
    %v4121 = vpop.permute.xlu0 %4120
    %4123 = vset.pattern.permute.xlu0 9
    %4124 = vperm.xlu0 %4123, %v346
    %v4125 = vpop.permute.xlu0 %4124
    %4127 = vset.pattern.permute.xlu0 9
    %4128 = vperm.xlu0 %4127, %v350
    %v4129 = vpop.permute.xlu0 %4128
    %4131 = vset.pattern.permute.xlu0 9
    %4132 = vperm.xlu0 %4131, %v354
    %v4133 = vpop.permute.xlu0 %4132
    %4135 = vset.pattern.permute.xlu0 9
    %4136 = vperm.xlu0 %4135, %v358
    %v4137 = vpop.permute.xlu0 %4136
    %4139 = vset.pattern.permute.xlu0 9
    %4140 = vperm.xlu0 %4139, %v362
    %v4141 = vpop.permute.xlu0 %4140
    %v4143 = vmul.f32 %v4017, %v1772
    %v4144 = vmul.f32 %v4017, %v1804
    %v4145 = vmul.f32 %v4021, %v1773
    %v4146 = vmul.f32 %v4021, %v1805
    %v4147 = vmul.f32 %v4025, %v1774
    %v4148 = vmul.f32 %v4025, %v1806
    %v4149 = vmul.f32 %v4029, %v1775
    %v4150 = vmul.f32 %v4029, %v1807
    %v4151 = vmul.f32 %v4033, %v1776
    %v4152 = vmul.f32 %v4033, %v1808
    %v4153 = vmul.f32 %v4037, %v1777
    %v4154 = vmul.f32 %v4037, %v1809
    %v4155 = vmul.f32 %v4041, %v1778
    %v4156 = vmul.f32 %v4041, %v1810
    %v4157 = vmul.f32 %v4045, %v1779
    %v4158 = vmul.f32 %v4045, %v1811
    %v4159 = vmul.f32 %v4049, %v1780
    %v4160 = vmul.f32 %v4049, %v1812
    %v4161 = vmul.f32 %v4053, %v1781
    %v4162 = vmul.f32 %v4053, %v1813
    %v4163 = vmul.f32 %v4057, %v1782
    %v4164 = vmul.f32 %v4057, %v1814
    %v4165 = vmul.f32 %v4061, %v1783
    %v4166 = vmul.f32 %v4061, %v1815
    %v4167 = vmul.f32 %v4065, %v1784
    %v4168 = vmul.f32 %v4065, %v1816
    %v4169 = vmul.f32 %v4069, %v1785
    %v4170 = vmul.f32 %v4069, %v1817
    %v4171 = vmul.f32 %v4073, %v1786
    %v4172 = vmul.f32 %v4073, %v1818
    %v4173 = vmul.f32 %v4077, %v1787
    %v4174 = vmul.f32 %v4077, %v1819
    %v4175 = vmul.f32 %v4081, %v1788
    %v4176 = vmul.f32 %v4081, %v1820
    %v4177 = vmul.f32 %v4085, %v1789
    %v4178 = vmul.f32 %v4085, %v1821
    %v4179 = vmul.f32 %v4089, %v1790
    %v4180 = vmul.f32 %v4089, %v1822
    %v4181 = vmul.f32 %v4093, %v1791
    %v4182 = vmul.f32 %v4093, %v1823
    %v4183 = vmul.f32 %v4097, %v1792
    %v4184 = vmul.f32 %v4097, %v1824
    %v4185 = vmul.f32 %v4101, %v1793
    %v4186 = vmul.f32 %v4101, %v1825
    %v4187 = vmul.f32 %v4105, %v1794
    %v4188 = vmul.f32 %v4105, %v1826
    %v4189 = vmul.f32 %v4109, %v1795
    %v4190 = vmul.f32 %v4109, %v1827
    %v4191 = vmul.f32 %v4113, %v1796
    %v4192 = vmul.f32 %v4113, %v1828
    %v4193 = vmul.f32 %v4117, %v1797
    %v4194 = vmul.f32 %v4117, %v1829
    %v4195 = vmul.f32 %v4121, %v1798
    %v4196 = vmul.f32 %v4121, %v1830
    %v4197 = vmul.f32 %v4125, %v1799
    %v4198 = vmul.f32 %v4125, %v1831
    %v4199 = vmul.f32 %v4129, %v1800
    %v4200 = vmul.f32 %v4129, %v1832
    %v4201 = vmul.f32 %v4133, %v1801
    %v4202 = vmul.f32 %v4133, %v1833
    %v4203 = vmul.f32 %v4137, %v1802
    %v4204 = vmul.f32 %v4137, %v1834
    %v4205 = vmul.f32 %v4141, %v1803
    %v4206 = vmul.f32 %v4141, %v1835
    %vm4271 = vcmask 1042432
    %v4272 = vrot.slane %v4143, 5
    %v4273 = vrot.slane %v4144, 5
    %v4274 = vsel %vm4271, %v4272, %v4273
    %v4275 = vrot.slane %v4145, 5
    %v4276 = vrot.slane %v4146, 5
    %v4277 = vsel %vm4271, %v4275, %v4276
    %v4278 = vrot.slane %v4147, 5
    %v4279 = vrot.slane %v4148, 5
    %v4280 = vsel %vm4271, %v4278, %v4279
    %v4281 = vrot.slane %v4149, 5
    %v4282 = vrot.slane %v4150, 5
    %v4283 = vsel %vm4271, %v4281, %v4282
    %v4284 = vrot.slane %v4151, 5
    %v4285 = vrot.slane %v4152, 5
    %v4286 = vsel %vm4271, %v4284, %v4285
    %v4287 = vrot.slane %v4153, 5
    %v4288 = vrot.slane %v4154, 5
    %v4289 = vsel %vm4271, %v4287, %v4288
    %v4290 = vrot.slane %v4155, 5
    %v4291 = vrot.slane %v4156, 5
    %v4292 = vsel %vm4271, %v4290, %v4291
    %v4293 = vrot.slane %v4157, 5
    %v4294 = vrot.slane %v4158, 5
    %v4295 = vsel %vm4271, %v4293, %v4294
    %v4296 = vrot.slane %v4159, 5
    %v4297 = vrot.slane %v4160, 5
    %v4298 = vsel %vm4271, %v4296, %v4297
    %v4299 = vrot.slane %v4161, 5
    %v4300 = vrot.slane %v4162, 5
    %v4301 = vsel %vm4271, %v4299, %v4300
    %v4302 = vrot.slane %v4163, 5
    %v4303 = vrot.slane %v4164, 5
    %v4304 = vsel %vm4271, %v4302, %v4303
    %v4305 = vrot.slane %v4165, 5
    %v4306 = vrot.slane %v4166, 5
    %v4307 = vsel %vm4271, %v4305, %v4306
    %v4308 = vrot.slane %v4167, 5
    %v4309 = vrot.slane %v4168, 5
    %v4310 = vsel %vm4271, %v4308, %v4309
    %v4311 = vrot.slane %v4169, 5
    %v4312 = vrot.slane %v4170, 5
    %v4313 = vsel %vm4271, %v4311, %v4312
    %v4314 = vrot.slane %v4171, 5
    %v4315 = vrot.slane %v4172, 5
    %v4316 = vsel %vm4271, %v4314, %v4315
    %v4317 = vrot.slane %v4173, 5
    %v4318 = vrot.slane %v4174, 5
    %v4319 = vsel %vm4271, %v4317, %v4318
    %v4320 = vrot.slane %v4175, 5
    %v4321 = vrot.slane %v4176, 5
    %v4322 = vsel %vm4271, %v4320, %v4321
    %v4323 = vrot.slane %v4177, 5
    %v4324 = vrot.slane %v4178, 5
    %v4325 = vsel %vm4271, %v4323, %v4324
    %v4326 = vrot.slane %v4179, 5
    %v4327 = vrot.slane %v4180, 5
    %v4328 = vsel %vm4271, %v4326, %v4327
    %v4329 = vrot.slane %v4181, 5
    %v4330 = vrot.slane %v4182, 5
    %v4331 = vsel %vm4271, %v4329, %v4330
    %v4332 = vrot.slane %v4183, 5
    %v4333 = vrot.slane %v4184, 5
    %v4334 = vsel %vm4271, %v4332, %v4333
    %v4335 = vrot.slane %v4185, 5
    %v4336 = vrot.slane %v4186, 5
    %v4337 = vsel %vm4271, %v4335, %v4336
    %v4338 = vrot.slane %v4187, 5
    %v4339 = vrot.slane %v4188, 5
    %v4340 = vsel %vm4271, %v4338, %v4339
    %v4341 = vrot.slane %v4189, 5
    %v4342 = vrot.slane %v4190, 5
    %v4343 = vsel %vm4271, %v4341, %v4342
    %v4344 = vrot.slane %v4191, 5
    %v4345 = vrot.slane %v4192, 5
    %v4346 = vsel %vm4271, %v4344, %v4345
    %v4347 = vrot.slane %v4193, 5
    %v4348 = vrot.slane %v4194, 5
    %v4349 = vsel %vm4271, %v4347, %v4348
    %v4350 = vrot.slane %v4195, 5
    %v4351 = vrot.slane %v4196, 5
    %v4352 = vsel %vm4271, %v4350, %v4351
    %v4353 = vrot.slane %v4197, 5
    %v4354 = vrot.slane %v4198, 5
    %v4355 = vsel %vm4271, %v4353, %v4354
    %v4356 = vrot.slane %v4199, 5
    %v4357 = vrot.slane %v4200, 5
    %v4358 = vsel %vm4271, %v4356, %v4357
    %v4359 = vrot.slane %v4201, 5
    %v4360 = vrot.slane %v4202, 5
    %v4361 = vsel %vm4271, %v4359, %v4360
    %v4362 = vrot.slane %v4203, 5
    %v4363 = vrot.slane %v4204, 5
    %v4364 = vsel %vm4271, %v4362, %v4363
    %v4365 = vrot.slane %v4205, 5
    %v4366 = vrot.slane %v4206, 5
    %v4367 = vsel %vm4271, %v4365, %v4366
    %v4432 = vadd.f32 %v3951, %v4274
    %v4433 = vadd.f32 %v3952, %v4273
    %v4434 = vadd.f32 %v3953, %v4277
    %v4435 = vadd.f32 %v3954, %v4276
    %v4436 = vadd.f32 %v3955, %v4280
    %v4437 = vadd.f32 %v3956, %v4279
    %v4438 = vadd.f32 %v3957, %v4283
    %v4439 = vadd.f32 %v3958, %v4282
    %v4440 = vadd.f32 %v3959, %v4286
    %v4441 = vadd.f32 %v3960, %v4285
    %v4442 = vadd.f32 %v3961, %v4289
    %v4443 = vadd.f32 %v3962, %v4288
    %v4444 = vadd.f32 %v3963, %v4292
    %v4445 = vadd.f32 %v3964, %v4291
    %v4446 = vadd.f32 %v3965, %v4295
    %v4447 = vadd.f32 %v3966, %v4294
    %v4448 = vadd.f32 %v3967, %v4298
    %v4449 = vadd.f32 %v3968, %v4297
    %v4450 = vadd.f32 %v3969, %v4301
    %v4451 = vadd.f32 %v3970, %v4300
    %v4452 = vadd.f32 %v3971, %v4304
    %v4453 = vadd.f32 %v3972, %v4303
    %v4454 = vadd.f32 %v3973, %v4307
    %v4455 = vadd.f32 %v3974, %v4306
    %v4456 = vadd.f32 %v3975, %v4310
    %v4457 = vadd.f32 %v3976, %v4309
    %v4458 = vadd.f32 %v3977, %v4313
    %v4459 = vadd.f32 %v3978, %v4312
    %v4460 = vadd.f32 %v3979, %v4316
    %v4461 = vadd.f32 %v3980, %v4315
    %v4462 = vadd.f32 %v3981, %v4319
    %v4463 = vadd.f32 %v3982, %v4318
    %v4464 = vadd.f32 %v3983, %v4322
    %v4465 = vadd.f32 %v3984, %v4321
    %v4466 = vadd.f32 %v3985, %v4325
    %v4467 = vadd.f32 %v3986, %v4324
    %v4468 = vadd.f32 %v3987, %v4328
    %v4469 = vadd.f32 %v3988, %v4327
    %v4470 = vadd.f32 %v3989, %v4331
    %v4471 = vadd.f32 %v3990, %v4330
    %v4472 = vadd.f32 %v3991, %v4334
    %v4473 = vadd.f32 %v3992, %v4333
    %v4474 = vadd.f32 %v3993, %v4337
    %v4475 = vadd.f32 %v3994, %v4336
    %v4476 = vadd.f32 %v3995, %v4340
    %v4477 = vadd.f32 %v3996, %v4339
    %v4478 = vadd.f32 %v3997, %v4343
    %v4479 = vadd.f32 %v3998, %v4342
    %v4480 = vadd.f32 %v3999, %v4346
    %v4481 = vadd.f32 %v4000, %v4345
    %v4482 = vadd.f32 %v4001, %v4349
    %v4483 = vadd.f32 %v4002, %v4348
    %v4484 = vadd.f32 %v4003, %v4352
    %v4485 = vadd.f32 %v4004, %v4351
    %v4486 = vadd.f32 %v4005, %v4355
    %v4487 = vadd.f32 %v4006, %v4354
    %v4488 = vadd.f32 %v4007, %v4358
    %v4489 = vadd.f32 %v4008, %v4357
    %v4490 = vadd.f32 %v4009, %v4361
    %v4491 = vadd.f32 %v4010, %v4360
    %v4492 = vadd.f32 %v4011, %v4364
    %v4493 = vadd.f32 %v4012, %v4363
    %v4494 = vadd.f32 %v4013, %v4367
    %v4495 = vadd.f32 %v4014, %v4366
    %4496 = vset.pattern.permute.xlu0 10
    %4497 = vperm.xlu0 %4496, %v238
    %v4498 = vpop.permute.xlu0 %4497
    %4500 = vset.pattern.permute.xlu0 10
    %4501 = vperm.xlu0 %4500, %v242
    %v4502 = vpop.permute.xlu0 %4501
    %4504 = vset.pattern.permute.xlu0 10
    %4505 = vperm.xlu0 %4504, %v246
    %v4506 = vpop.permute.xlu0 %4505
    %4508 = vset.pattern.permute.xlu0 10
    %4509 = vperm.xlu0 %4508, %v250
    %v4510 = vpop.permute.xlu0 %4509
    %4512 = vset.pattern.permute.xlu0 10
    %4513 = vperm.xlu0 %4512, %v254
    %v4514 = vpop.permute.xlu0 %4513
    %4516 = vset.pattern.permute.xlu0 10
    %4517 = vperm.xlu0 %4516, %v258
    %v4518 = vpop.permute.xlu0 %4517
    %4520 = vset.pattern.permute.xlu0 10
    %4521 = vperm.xlu0 %4520, %v262
    %v4522 = vpop.permute.xlu0 %4521
    %4524 = vset.pattern.permute.xlu0 10
    %4525 = vperm.xlu0 %4524, %v266
    %v4526 = vpop.permute.xlu0 %4525
    %4528 = vset.pattern.permute.xlu0 10
    %4529 = vperm.xlu0 %4528, %v270
    %v4530 = vpop.permute.xlu0 %4529
    %4532 = vset.pattern.permute.xlu0 10
    %4533 = vperm.xlu0 %4532, %v274
    %v4534 = vpop.permute.xlu0 %4533
    %4536 = vset.pattern.permute.xlu0 10
    %4537 = vperm.xlu0 %4536, %v278
    %v4538 = vpop.permute.xlu0 %4537
    %4540 = vset.pattern.permute.xlu0 10
    %4541 = vperm.xlu0 %4540, %v282
    %v4542 = vpop.permute.xlu0 %4541
    %4544 = vset.pattern.permute.xlu0 10
    %4545 = vperm.xlu0 %4544, %v286
    %v4546 = vpop.permute.xlu0 %4545
    %4548 = vset.pattern.permute.xlu0 10
    %4549 = vperm.xlu0 %4548, %v290
    %v4550 = vpop.permute.xlu0 %4549
    %4552 = vset.pattern.permute.xlu0 10
    %4553 = vperm.xlu0 %4552, %v294
    %v4554 = vpop.permute.xlu0 %4553
    %4556 = vset.pattern.permute.xlu0 10
    %4557 = vperm.xlu0 %4556, %v298
    %v4558 = vpop.permute.xlu0 %4557
    %4560 = vset.pattern.permute.xlu0 10
    %4561 = vperm.xlu0 %4560, %v302
    %v4562 = vpop.permute.xlu0 %4561
    %4564 = vset.pattern.permute.xlu0 10
    %4565 = vperm.xlu0 %4564, %v306
    %v4566 = vpop.permute.xlu0 %4565
    %4568 = vset.pattern.permute.xlu0 10
    %4569 = vperm.xlu0 %4568, %v310
    %v4570 = vpop.permute.xlu0 %4569
    %4572 = vset.pattern.permute.xlu0 10
    %4573 = vperm.xlu0 %4572, %v314
    %v4574 = vpop.permute.xlu0 %4573
    %4576 = vset.pattern.permute.xlu0 10
    %4577 = vperm.xlu0 %4576, %v318
    %v4578 = vpop.permute.xlu0 %4577
    %4580 = vset.pattern.permute.xlu0 10
    %4581 = vperm.xlu0 %4580, %v322
    %v4582 = vpop.permute.xlu0 %4581
    %4584 = vset.pattern.permute.xlu0 10
    %4585 = vperm.xlu0 %4584, %v326
    %v4586 = vpop.permute.xlu0 %4585
    %4588 = vset.pattern.permute.xlu0 10
    %4589 = vperm.xlu0 %4588, %v330
    %v4590 = vpop.permute.xlu0 %4589
    %4592 = vset.pattern.permute.xlu0 10
    %4593 = vperm.xlu0 %4592, %v334
    %v4594 = vpop.permute.xlu0 %4593
    %4596 = vset.pattern.permute.xlu0 10
    %4597 = vperm.xlu0 %4596, %v338
    %v4598 = vpop.permute.xlu0 %4597
    %4600 = vset.pattern.permute.xlu0 10
    %4601 = vperm.xlu0 %4600, %v342
    %v4602 = vpop.permute.xlu0 %4601
    %4604 = vset.pattern.permute.xlu0 10
    %4605 = vperm.xlu0 %4604, %v346
    %v4606 = vpop.permute.xlu0 %4605
    %4608 = vset.pattern.permute.xlu0 10
    %4609 = vperm.xlu0 %4608, %v350
    %v4610 = vpop.permute.xlu0 %4609
    %4612 = vset.pattern.permute.xlu0 10
    %4613 = vperm.xlu0 %4612, %v354
    %v4614 = vpop.permute.xlu0 %4613
    %4616 = vset.pattern.permute.xlu0 10
    %4617 = vperm.xlu0 %4616, %v358
    %v4618 = vpop.permute.xlu0 %4617
    %4620 = vset.pattern.permute.xlu0 10
    %4621 = vperm.xlu0 %4620, %v362
    %v4622 = vpop.permute.xlu0 %4621
    %v4624 = vmul.f32 %v4498, %v1772
    %v4625 = vmul.f32 %v4498, %v1804
    %v4626 = vmul.f32 %v4502, %v1773
    %v4627 = vmul.f32 %v4502, %v1805
    %v4628 = vmul.f32 %v4506, %v1774
    %v4629 = vmul.f32 %v4506, %v1806
    %v4630 = vmul.f32 %v4510, %v1775
    %v4631 = vmul.f32 %v4510, %v1807
    %v4632 = vmul.f32 %v4514, %v1776
    %v4633 = vmul.f32 %v4514, %v1808
    %v4634 = vmul.f32 %v4518, %v1777
    %v4635 = vmul.f32 %v4518, %v1809
    %v4636 = vmul.f32 %v4522, %v1778
    %v4637 = vmul.f32 %v4522, %v1810
    %v4638 = vmul.f32 %v4526, %v1779
    %v4639 = vmul.f32 %v4526, %v1811
    %v4640 = vmul.f32 %v4530, %v1780
    %v4641 = vmul.f32 %v4530, %v1812
    %v4642 = vmul.f32 %v4534, %v1781
    %v4643 = vmul.f32 %v4534, %v1813
    %v4644 = vmul.f32 %v4538, %v1782
    %v4645 = vmul.f32 %v4538, %v1814
    %v4646 = vmul.f32 %v4542, %v1783
    %v4647 = vmul.f32 %v4542, %v1815
    %v4648 = vmul.f32 %v4546, %v1784
    %v4649 = vmul.f32 %v4546, %v1816
    %v4650 = vmul.f32 %v4550, %v1785
    %v4651 = vmul.f32 %v4550, %v1817
    %v4652 = vmul.f32 %v4554, %v1786
    %v4653 = vmul.f32 %v4554, %v1818
    %v4654 = vmul.f32 %v4558, %v1787
    %v4655 = vmul.f32 %v4558, %v1819
    %v4656 = vmul.f32 %v4562, %v1788
    %v4657 = vmul.f32 %v4562, %v1820
    %v4658 = vmul.f32 %v4566, %v1789
    %v4659 = vmul.f32 %v4566, %v1821
    %v4660 = vmul.f32 %v4570, %v1790
    %v4661 = vmul.f32 %v4570, %v1822
    %v4662 = vmul.f32 %v4574, %v1791
    %v4663 = vmul.f32 %v4574, %v1823
    %v4664 = vmul.f32 %v4578, %v1792
    %v4665 = vmul.f32 %v4578, %v1824
    %v4666 = vmul.f32 %v4582, %v1793
    %v4667 = vmul.f32 %v4582, %v1825
    %v4668 = vmul.f32 %v4586, %v1794
    %v4669 = vmul.f32 %v4586, %v1826
    %v4670 = vmul.f32 %v4590, %v1795
    %v4671 = vmul.f32 %v4590, %v1827
    %v4672 = vmul.f32 %v4594, %v1796
    %v4673 = vmul.f32 %v4594, %v1828
    %v4674 = vmul.f32 %v4598, %v1797
    %v4675 = vmul.f32 %v4598, %v1829
    %v4676 = vmul.f32 %v4602, %v1798
    %v4677 = vmul.f32 %v4602, %v1830
    %v4678 = vmul.f32 %v4606, %v1799
    %v4679 = vmul.f32 %v4606, %v1831
    %v4680 = vmul.f32 %v4610, %v1800
    %v4681 = vmul.f32 %v4610, %v1832
    %v4682 = vmul.f32 %v4614, %v1801
    %v4683 = vmul.f32 %v4614, %v1833
    %v4684 = vmul.f32 %v4618, %v1802
    %v4685 = vmul.f32 %v4618, %v1834
    %v4686 = vmul.f32 %v4622, %v1803
    %v4687 = vmul.f32 %v4622, %v1835
    %vm4752 = vcmask 1041408
    %v4753 = vrot.slane %v4624, 6
    %v4754 = vrot.slane %v4625, 6
    %v4755 = vsel %vm4752, %v4753, %v4754
    %v4756 = vrot.slane %v4626, 6
    %v4757 = vrot.slane %v4627, 6
    %v4758 = vsel %vm4752, %v4756, %v4757
    %v4759 = vrot.slane %v4628, 6
    %v4760 = vrot.slane %v4629, 6
    %v4761 = vsel %vm4752, %v4759, %v4760
    %v4762 = vrot.slane %v4630, 6
    %v4763 = vrot.slane %v4631, 6
    %v4764 = vsel %vm4752, %v4762, %v4763
    %v4765 = vrot.slane %v4632, 6
    %v4766 = vrot.slane %v4633, 6
    %v4767 = vsel %vm4752, %v4765, %v4766
    %v4768 = vrot.slane %v4634, 6
    %v4769 = vrot.slane %v4635, 6
    %v4770 = vsel %vm4752, %v4768, %v4769
    %v4771 = vrot.slane %v4636, 6
    %v4772 = vrot.slane %v4637, 6
    %v4773 = vsel %vm4752, %v4771, %v4772
    %v4774 = vrot.slane %v4638, 6
    %v4775 = vrot.slane %v4639, 6
    %v4776 = vsel %vm4752, %v4774, %v4775
    %v4777 = vrot.slane %v4640, 6
    %v4778 = vrot.slane %v4641, 6
    %v4779 = vsel %vm4752, %v4777, %v4778
    %v4780 = vrot.slane %v4642, 6
    %v4781 = vrot.slane %v4643, 6
    %v4782 = vsel %vm4752, %v4780, %v4781
    %v4783 = vrot.slane %v4644, 6
    %v4784 = vrot.slane %v4645, 6
    %v4785 = vsel %vm4752, %v4783, %v4784
    %v4786 = vrot.slane %v4646, 6
    %v4787 = vrot.slane %v4647, 6
    %v4788 = vsel %vm4752, %v4786, %v4787
    %v4789 = vrot.slane %v4648, 6
    %v4790 = vrot.slane %v4649, 6
    %v4791 = vsel %vm4752, %v4789, %v4790
    %v4792 = vrot.slane %v4650, 6
    %v4793 = vrot.slane %v4651, 6
    %v4794 = vsel %vm4752, %v4792, %v4793
    %v4795 = vrot.slane %v4652, 6
    %v4796 = vrot.slane %v4653, 6
    %v4797 = vsel %vm4752, %v4795, %v4796
    %v4798 = vrot.slane %v4654, 6
    %v4799 = vrot.slane %v4655, 6
    %v4800 = vsel %vm4752, %v4798, %v4799
    %v4801 = vrot.slane %v4656, 6
    %v4802 = vrot.slane %v4657, 6
    %v4803 = vsel %vm4752, %v4801, %v4802
    %v4804 = vrot.slane %v4658, 6
    %v4805 = vrot.slane %v4659, 6
    %v4806 = vsel %vm4752, %v4804, %v4805
    %v4807 = vrot.slane %v4660, 6
    %v4808 = vrot.slane %v4661, 6
    %v4809 = vsel %vm4752, %v4807, %v4808
    %v4810 = vrot.slane %v4662, 6
    %v4811 = vrot.slane %v4663, 6
    %v4812 = vsel %vm4752, %v4810, %v4811
    %v4813 = vrot.slane %v4664, 6
    %v4814 = vrot.slane %v4665, 6
    %v4815 = vsel %vm4752, %v4813, %v4814
    %v4816 = vrot.slane %v4666, 6
    %v4817 = vrot.slane %v4667, 6
    %v4818 = vsel %vm4752, %v4816, %v4817
    %v4819 = vrot.slane %v4668, 6
    %v4820 = vrot.slane %v4669, 6
    %v4821 = vsel %vm4752, %v4819, %v4820
    %v4822 = vrot.slane %v4670, 6
    %v4823 = vrot.slane %v4671, 6
    %v4824 = vsel %vm4752, %v4822, %v4823
    %v4825 = vrot.slane %v4672, 6
    %v4826 = vrot.slane %v4673, 6
    %v4827 = vsel %vm4752, %v4825, %v4826
    %v4828 = vrot.slane %v4674, 6
    %v4829 = vrot.slane %v4675, 6
    %v4830 = vsel %vm4752, %v4828, %v4829
    %v4831 = vrot.slane %v4676, 6
    %v4832 = vrot.slane %v4677, 6
    %v4833 = vsel %vm4752, %v4831, %v4832
    %v4834 = vrot.slane %v4678, 6
    %v4835 = vrot.slane %v4679, 6
    %v4836 = vsel %vm4752, %v4834, %v4835
    %v4837 = vrot.slane %v4680, 6
    %v4838 = vrot.slane %v4681, 6
    %v4839 = vsel %vm4752, %v4837, %v4838
    %v4840 = vrot.slane %v4682, 6
    %v4841 = vrot.slane %v4683, 6
    %v4842 = vsel %vm4752, %v4840, %v4841
    %v4843 = vrot.slane %v4684, 6
    %v4844 = vrot.slane %v4685, 6
    %v4845 = vsel %vm4752, %v4843, %v4844
    %v4846 = vrot.slane %v4686, 6
    %v4847 = vrot.slane %v4687, 6
    %v4848 = vsel %vm4752, %v4846, %v4847
    %v4913 = vadd.f32 %v4432, %v4755
    %v4914 = vadd.f32 %v4433, %v4754
    %v4915 = vadd.f32 %v4434, %v4758
    %v4916 = vadd.f32 %v4435, %v4757
    %v4917 = vadd.f32 %v4436, %v4761
    %v4918 = vadd.f32 %v4437, %v4760
    %v4919 = vadd.f32 %v4438, %v4764
    %v4920 = vadd.f32 %v4439, %v4763
    %v4921 = vadd.f32 %v4440, %v4767
    %v4922 = vadd.f32 %v4441, %v4766
    %v4923 = vadd.f32 %v4442, %v4770
    %v4924 = vadd.f32 %v4443, %v4769
    %v4925 = vadd.f32 %v4444, %v4773
    %v4926 = vadd.f32 %v4445, %v4772
    %v4927 = vadd.f32 %v4446, %v4776
    %v4928 = vadd.f32 %v4447, %v4775
    %v4929 = vadd.f32 %v4448, %v4779
    %v4930 = vadd.f32 %v4449, %v4778
    %v4931 = vadd.f32 %v4450, %v4782
    %v4932 = vadd.f32 %v4451, %v4781
    %v4933 = vadd.f32 %v4452, %v4785
    %v4934 = vadd.f32 %v4453, %v4784
    %v4935 = vadd.f32 %v4454, %v4788
    %v4936 = vadd.f32 %v4455, %v4787
    %v4937 = vadd.f32 %v4456, %v4791
    %v4938 = vadd.f32 %v4457, %v4790
    %v4939 = vadd.f32 %v4458, %v4794
    %v4940 = vadd.f32 %v4459, %v4793
    %v4941 = vadd.f32 %v4460, %v4797
    %v4942 = vadd.f32 %v4461, %v4796
    %v4943 = vadd.f32 %v4462, %v4800
    %v4944 = vadd.f32 %v4463, %v4799
    %v4945 = vadd.f32 %v4464, %v4803
    %v4946 = vadd.f32 %v4465, %v4802
    %v4947 = vadd.f32 %v4466, %v4806
    %v4948 = vadd.f32 %v4467, %v4805
    %v4949 = vadd.f32 %v4468, %v4809
    %v4950 = vadd.f32 %v4469, %v4808
    %v4951 = vadd.f32 %v4470, %v4812
    %v4952 = vadd.f32 %v4471, %v4811
    %v4953 = vadd.f32 %v4472, %v4815
    %v4954 = vadd.f32 %v4473, %v4814
    %v4955 = vadd.f32 %v4474, %v4818
    %v4956 = vadd.f32 %v4475, %v4817
    %v4957 = vadd.f32 %v4476, %v4821
    %v4958 = vadd.f32 %v4477, %v4820
    %v4959 = vadd.f32 %v4478, %v4824
    %v4960 = vadd.f32 %v4479, %v4823
    %v4961 = vadd.f32 %v4480, %v4827
    %v4962 = vadd.f32 %v4481, %v4826
    %v4963 = vadd.f32 %v4482, %v4830
    %v4964 = vadd.f32 %v4483, %v4829
    %v4965 = vadd.f32 %v4484, %v4833
    %v4966 = vadd.f32 %v4485, %v4832
    %v4967 = vadd.f32 %v4486, %v4836
    %v4968 = vadd.f32 %v4487, %v4835
    %v4969 = vadd.f32 %v4488, %v4839
    %v4970 = vadd.f32 %v4489, %v4838
    %v4971 = vadd.f32 %v4490, %v4842
    %v4972 = vadd.f32 %v4491, %v4841
    %v4973 = vadd.f32 %v4492, %v4845
    %v4974 = vadd.f32 %v4493, %v4844
    %v4975 = vadd.f32 %v4494, %v4848
    %v4976 = vadd.f32 %v4495, %v4847
    %4977 = vset.pattern.permute.xlu0 11
    %4978 = vperm.xlu0 %4977, %v238
    %v4979 = vpop.permute.xlu0 %4978
    %4981 = vset.pattern.permute.xlu0 11
    %4982 = vperm.xlu0 %4981, %v242
    %v4983 = vpop.permute.xlu0 %4982
    %4985 = vset.pattern.permute.xlu0 11
    %4986 = vperm.xlu0 %4985, %v246
    %v4987 = vpop.permute.xlu0 %4986
    %4989 = vset.pattern.permute.xlu0 11
    %4990 = vperm.xlu0 %4989, %v250
    %v4991 = vpop.permute.xlu0 %4990
    %4993 = vset.pattern.permute.xlu0 11
    %4994 = vperm.xlu0 %4993, %v254
    %v4995 = vpop.permute.xlu0 %4994
    %4997 = vset.pattern.permute.xlu0 11
    %4998 = vperm.xlu0 %4997, %v258
    %v4999 = vpop.permute.xlu0 %4998
    %5001 = vset.pattern.permute.xlu0 11
    %5002 = vperm.xlu0 %5001, %v262
    %v5003 = vpop.permute.xlu0 %5002
    %5005 = vset.pattern.permute.xlu0 11
    %5006 = vperm.xlu0 %5005, %v266
    %v5007 = vpop.permute.xlu0 %5006
    %5009 = vset.pattern.permute.xlu0 11
    %5010 = vperm.xlu0 %5009, %v270
    %v5011 = vpop.permute.xlu0 %5010
    %5013 = vset.pattern.permute.xlu0 11
    %5014 = vperm.xlu0 %5013, %v274
    %v5015 = vpop.permute.xlu0 %5014
    %5017 = vset.pattern.permute.xlu0 11
    %5018 = vperm.xlu0 %5017, %v278
    %v5019 = vpop.permute.xlu0 %5018
    %5021 = vset.pattern.permute.xlu0 11
    %5022 = vperm.xlu0 %5021, %v282
    %v5023 = vpop.permute.xlu0 %5022
    %5025 = vset.pattern.permute.xlu0 11
    %5026 = vperm.xlu0 %5025, %v286
    %v5027 = vpop.permute.xlu0 %5026
    %5029 = vset.pattern.permute.xlu0 11
    %5030 = vperm.xlu0 %5029, %v290
    %v5031 = vpop.permute.xlu0 %5030
    %5033 = vset.pattern.permute.xlu0 11
    %5034 = vperm.xlu0 %5033, %v294
    %v5035 = vpop.permute.xlu0 %5034
    %5037 = vset.pattern.permute.xlu0 11
    %5038 = vperm.xlu0 %5037, %v298
    %v5039 = vpop.permute.xlu0 %5038
    %5041 = vset.pattern.permute.xlu0 11
    %5042 = vperm.xlu0 %5041, %v302
    %v5043 = vpop.permute.xlu0 %5042
    %5045 = vset.pattern.permute.xlu0 11
    %5046 = vperm.xlu0 %5045, %v306
    %v5047 = vpop.permute.xlu0 %5046
    %5049 = vset.pattern.permute.xlu0 11
    %5050 = vperm.xlu0 %5049, %v310
    %v5051 = vpop.permute.xlu0 %5050
    %5053 = vset.pattern.permute.xlu0 11
    %5054 = vperm.xlu0 %5053, %v314
    %v5055 = vpop.permute.xlu0 %5054
    %5057 = vset.pattern.permute.xlu0 11
    %5058 = vperm.xlu0 %5057, %v318
    %v5059 = vpop.permute.xlu0 %5058
    %5061 = vset.pattern.permute.xlu0 11
    %5062 = vperm.xlu0 %5061, %v322
    %v5063 = vpop.permute.xlu0 %5062
    %5065 = vset.pattern.permute.xlu0 11
    %5066 = vperm.xlu0 %5065, %v326
    %v5067 = vpop.permute.xlu0 %5066
    %5069 = vset.pattern.permute.xlu0 11
    %5070 = vperm.xlu0 %5069, %v330
    %v5071 = vpop.permute.xlu0 %5070
    %5073 = vset.pattern.permute.xlu0 11
    %5074 = vperm.xlu0 %5073, %v334
    %v5075 = vpop.permute.xlu0 %5074
    %5077 = vset.pattern.permute.xlu0 11
    %5078 = vperm.xlu0 %5077, %v338
    %v5079 = vpop.permute.xlu0 %5078
    %5081 = vset.pattern.permute.xlu0 11
    %5082 = vperm.xlu0 %5081, %v342
    %v5083 = vpop.permute.xlu0 %5082
    %5085 = vset.pattern.permute.xlu0 11
    %5086 = vperm.xlu0 %5085, %v346
    %v5087 = vpop.permute.xlu0 %5086
    %5089 = vset.pattern.permute.xlu0 11
    %5090 = vperm.xlu0 %5089, %v350
    %v5091 = vpop.permute.xlu0 %5090
    %5093 = vset.pattern.permute.xlu0 11
    %5094 = vperm.xlu0 %5093, %v354
    %v5095 = vpop.permute.xlu0 %5094
    %5097 = vset.pattern.permute.xlu0 11
    %5098 = vperm.xlu0 %5097, %v358
    %v5099 = vpop.permute.xlu0 %5098
    %5101 = vset.pattern.permute.xlu0 11
    %5102 = vperm.xlu0 %5101, %v362
    %v5103 = vpop.permute.xlu0 %5102
    %v5105 = vmul.f32 %v4979, %v1772
    %v5106 = vmul.f32 %v4979, %v1804
    %v5107 = vmul.f32 %v4983, %v1773
    %v5108 = vmul.f32 %v4983, %v1805
    %v5109 = vmul.f32 %v4987, %v1774
    %v5110 = vmul.f32 %v4987, %v1806
    %v5111 = vmul.f32 %v4991, %v1775
    %v5112 = vmul.f32 %v4991, %v1807
    %v5113 = vmul.f32 %v4995, %v1776
    %v5114 = vmul.f32 %v4995, %v1808
    %v5115 = vmul.f32 %v4999, %v1777
    %v5116 = vmul.f32 %v4999, %v1809
    %v5117 = vmul.f32 %v5003, %v1778
    %v5118 = vmul.f32 %v5003, %v1810
    %v5119 = vmul.f32 %v5007, %v1779
    %v5120 = vmul.f32 %v5007, %v1811
    %v5121 = vmul.f32 %v5011, %v1780
    %v5122 = vmul.f32 %v5011, %v1812
    %v5123 = vmul.f32 %v5015, %v1781
    %v5124 = vmul.f32 %v5015, %v1813
    %v5125 = vmul.f32 %v5019, %v1782
    %v5126 = vmul.f32 %v5019, %v1814
    %v5127 = vmul.f32 %v5023, %v1783
    %v5128 = vmul.f32 %v5023, %v1815
    %v5129 = vmul.f32 %v5027, %v1784
    %v5130 = vmul.f32 %v5027, %v1816
    %v5131 = vmul.f32 %v5031, %v1785
    %v5132 = vmul.f32 %v5031, %v1817
    %v5133 = vmul.f32 %v5035, %v1786
    %v5134 = vmul.f32 %v5035, %v1818
    %v5135 = vmul.f32 %v5039, %v1787
    %v5136 = vmul.f32 %v5039, %v1819
    %v5137 = vmul.f32 %v5043, %v1788
    %v5138 = vmul.f32 %v5043, %v1820
    %v5139 = vmul.f32 %v5047, %v1789
    %v5140 = vmul.f32 %v5047, %v1821
    %v5141 = vmul.f32 %v5051, %v1790
    %v5142 = vmul.f32 %v5051, %v1822
    %v5143 = vmul.f32 %v5055, %v1791
    %v5144 = vmul.f32 %v5055, %v1823
    %v5145 = vmul.f32 %v5059, %v1792
    %v5146 = vmul.f32 %v5059, %v1824
    %v5147 = vmul.f32 %v5063, %v1793
    %v5148 = vmul.f32 %v5063, %v1825
    %v5149 = vmul.f32 %v5067, %v1794
    %v5150 = vmul.f32 %v5067, %v1826
    %v5151 = vmul.f32 %v5071, %v1795
    %v5152 = vmul.f32 %v5071, %v1827
    %v5153 = vmul.f32 %v5075, %v1796
    %v5154 = vmul.f32 %v5075, %v1828
    %v5155 = vmul.f32 %v5079, %v1797
    %v5156 = vmul.f32 %v5079, %v1829
    %v5157 = vmul.f32 %v5083, %v1798
    %v5158 = vmul.f32 %v5083, %v1830
    %v5159 = vmul.f32 %v5087, %v1799
    %v5160 = vmul.f32 %v5087, %v1831
    %v5161 = vmul.f32 %v5091, %v1800
    %v5162 = vmul.f32 %v5091, %v1832
    %v5163 = vmul.f32 %v5095, %v1801
    %v5164 = vmul.f32 %v5095, %v1833
    %v5165 = vmul.f32 %v5099, %v1802
    %v5166 = vmul.f32 %v5099, %v1834
    %v5167 = vmul.f32 %v5103, %v1803
    %v5168 = vmul.f32 %v5103, %v1835
    %vm5233 = vcmask 1040384
    %v5234 = vrot.slane %v5105, 7
    %v5235 = vrot.slane %v5106, 7
    %v5236 = vsel %vm5233, %v5234, %v5235
    %v5237 = vrot.slane %v5107, 7
    %v5238 = vrot.slane %v5108, 7
    %v5239 = vsel %vm5233, %v5237, %v5238
    %v5240 = vrot.slane %v5109, 7
    %v5241 = vrot.slane %v5110, 7
    %v5242 = vsel %vm5233, %v5240, %v5241
    %v5243 = vrot.slane %v5111, 7
    %v5244 = vrot.slane %v5112, 7
    %v5245 = vsel %vm5233, %v5243, %v5244
    %v5246 = vrot.slane %v5113, 7
    %v5247 = vrot.slane %v5114, 7
    %v5248 = vsel %vm5233, %v5246, %v5247
    %v5249 = vrot.slane %v5115, 7
    %v5250 = vrot.slane %v5116, 7
    %v5251 = vsel %vm5233, %v5249, %v5250
    %v5252 = vrot.slane %v5117, 7
    %v5253 = vrot.slane %v5118, 7
    %v5254 = vsel %vm5233, %v5252, %v5253
    %v5255 = vrot.slane %v5119, 7
    %v5256 = vrot.slane %v5120, 7
    %v5257 = vsel %vm5233, %v5255, %v5256
    %v5258 = vrot.slane %v5121, 7
    %v5259 = vrot.slane %v5122, 7
    %v5260 = vsel %vm5233, %v5258, %v5259
    %v5261 = vrot.slane %v5123, 7
    %v5262 = vrot.slane %v5124, 7
    %v5263 = vsel %vm5233, %v5261, %v5262
    %v5264 = vrot.slane %v5125, 7
    %v5265 = vrot.slane %v5126, 7
    %v5266 = vsel %vm5233, %v5264, %v5265
    %v5267 = vrot.slane %v5127, 7
    %v5268 = vrot.slane %v5128, 7
    %v5269 = vsel %vm5233, %v5267, %v5268
    %v5270 = vrot.slane %v5129, 7
    %v5271 = vrot.slane %v5130, 7
    %v5272 = vsel %vm5233, %v5270, %v5271
    %v5273 = vrot.slane %v5131, 7
    %v5274 = vrot.slane %v5132, 7
    %v5275 = vsel %vm5233, %v5273, %v5274
    %v5276 = vrot.slane %v5133, 7
    %v5277 = vrot.slane %v5134, 7
    %v5278 = vsel %vm5233, %v5276, %v5277
    %v5279 = vrot.slane %v5135, 7
    %v5280 = vrot.slane %v5136, 7
    %v5281 = vsel %vm5233, %v5279, %v5280
    %v5282 = vrot.slane %v5137, 7
    %v5283 = vrot.slane %v5138, 7
    %v5284 = vsel %vm5233, %v5282, %v5283
    %v5285 = vrot.slane %v5139, 7
    %v5286 = vrot.slane %v5140, 7
    %v5287 = vsel %vm5233, %v5285, %v5286
    %v5288 = vrot.slane %v5141, 7
    %v5289 = vrot.slane %v5142, 7
    %v5290 = vsel %vm5233, %v5288, %v5289
    %v5291 = vrot.slane %v5143, 7
    %v5292 = vrot.slane %v5144, 7
    %v5293 = vsel %vm5233, %v5291, %v5292
    %v5294 = vrot.slane %v5145, 7
    %v5295 = vrot.slane %v5146, 7
    %v5296 = vsel %vm5233, %v5294, %v5295
    %v5297 = vrot.slane %v5147, 7
    %v5298 = vrot.slane %v5148, 7
    %v5299 = vsel %vm5233, %v5297, %v5298
    %v5300 = vrot.slane %v5149, 7
    %v5301 = vrot.slane %v5150, 7
    %v5302 = vsel %vm5233, %v5300, %v5301
    %v5303 = vrot.slane %v5151, 7
    %v5304 = vrot.slane %v5152, 7
    %v5305 = vsel %vm5233, %v5303, %v5304
    %v5306 = vrot.slane %v5153, 7
    %v5307 = vrot.slane %v5154, 7
    %v5308 = vsel %vm5233, %v5306, %v5307
    %v5309 = vrot.slane %v5155, 7
    %v5310 = vrot.slane %v5156, 7
    %v5311 = vsel %vm5233, %v5309, %v5310
    %v5312 = vrot.slane %v5157, 7
    %v5313 = vrot.slane %v5158, 7
    %v5314 = vsel %vm5233, %v5312, %v5313
    %v5315 = vrot.slane %v5159, 7
    %v5316 = vrot.slane %v5160, 7
    %v5317 = vsel %vm5233, %v5315, %v5316
    %v5318 = vrot.slane %v5161, 7
    %v5319 = vrot.slane %v5162, 7
    %v5320 = vsel %vm5233, %v5318, %v5319
    %v5321 = vrot.slane %v5163, 7
    %v5322 = vrot.slane %v5164, 7
    %v5323 = vsel %vm5233, %v5321, %v5322
    %v5324 = vrot.slane %v5165, 7
    %v5325 = vrot.slane %v5166, 7
    %v5326 = vsel %vm5233, %v5324, %v5325
    %v5327 = vrot.slane %v5167, 7
    %v5328 = vrot.slane %v5168, 7
    %v5329 = vsel %vm5233, %v5327, %v5328
    %v5394 = vadd.f32 %v4913, %v5236
    %v5395 = vadd.f32 %v4914, %v5235
    %v5396 = vadd.f32 %v4915, %v5239
    %v5397 = vadd.f32 %v4916, %v5238
    %v5398 = vadd.f32 %v4917, %v5242
    %v5399 = vadd.f32 %v4918, %v5241
    %v5400 = vadd.f32 %v4919, %v5245
    %v5401 = vadd.f32 %v4920, %v5244
    %v5402 = vadd.f32 %v4921, %v5248
    %v5403 = vadd.f32 %v4922, %v5247
    %v5404 = vadd.f32 %v4923, %v5251
    %v5405 = vadd.f32 %v4924, %v5250
    %v5406 = vadd.f32 %v4925, %v5254
    %v5407 = vadd.f32 %v4926, %v5253
    %v5408 = vadd.f32 %v4927, %v5257
    %v5409 = vadd.f32 %v4928, %v5256
    %v5410 = vadd.f32 %v4929, %v5260
    %v5411 = vadd.f32 %v4930, %v5259
    %v5412 = vadd.f32 %v4931, %v5263
    %v5413 = vadd.f32 %v4932, %v5262
    %v5414 = vadd.f32 %v4933, %v5266
    %v5415 = vadd.f32 %v4934, %v5265
    %v5416 = vadd.f32 %v4935, %v5269
    %v5417 = vadd.f32 %v4936, %v5268
    %v5418 = vadd.f32 %v4937, %v5272
    %v5419 = vadd.f32 %v4938, %v5271
    %v5420 = vadd.f32 %v4939, %v5275
    %v5421 = vadd.f32 %v4940, %v5274
    %v5422 = vadd.f32 %v4941, %v5278
    %v5423 = vadd.f32 %v4942, %v5277
    %v5424 = vadd.f32 %v4943, %v5281
    %v5425 = vadd.f32 %v4944, %v5280
    %v5426 = vadd.f32 %v4945, %v5284
    %v5427 = vadd.f32 %v4946, %v5283
    %v5428 = vadd.f32 %v4947, %v5287
    %v5429 = vadd.f32 %v4948, %v5286
    %v5430 = vadd.f32 %v4949, %v5290
    %v5431 = vadd.f32 %v4950, %v5289
    %v5432 = vadd.f32 %v4951, %v5293
    %v5433 = vadd.f32 %v4952, %v5292
    %v5434 = vadd.f32 %v4953, %v5296
    %v5435 = vadd.f32 %v4954, %v5295
    %v5436 = vadd.f32 %v4955, %v5299
    %v5437 = vadd.f32 %v4956, %v5298
    %v5438 = vadd.f32 %v4957, %v5302
    %v5439 = vadd.f32 %v4958, %v5301
    %v5440 = vadd.f32 %v4959, %v5305
    %v5441 = vadd.f32 %v4960, %v5304
    %v5442 = vadd.f32 %v4961, %v5308
    %v5443 = vadd.f32 %v4962, %v5307
    %v5444 = vadd.f32 %v4963, %v5311
    %v5445 = vadd.f32 %v4964, %v5310
    %v5446 = vadd.f32 %v4965, %v5314
    %v5447 = vadd.f32 %v4966, %v5313
    %v5448 = vadd.f32 %v4967, %v5317
    %v5449 = vadd.f32 %v4968, %v5316
    %v5450 = vadd.f32 %v4969, %v5320
    %v5451 = vadd.f32 %v4970, %v5319
    %v5452 = vadd.f32 %v4971, %v5323
    %v5453 = vadd.f32 %v4972, %v5322
    %v5454 = vadd.f32 %v4973, %v5326
    %v5455 = vadd.f32 %v4974, %v5325
    %v5456 = vadd.f32 %v4975, %v5329
    %v5457 = vadd.f32 %v4976, %v5328
    %5458 = vset.pattern.permute.xlu0 13
    %5459 = vperm.xlu0 %5458, %v238
    %v5460 = vpop.permute.xlu0 %5459
    %5462 = vset.pattern.permute.xlu0 13
    %5463 = vperm.xlu0 %5462, %v242
    %v5464 = vpop.permute.xlu0 %5463
    %5466 = vset.pattern.permute.xlu0 13
    %5467 = vperm.xlu0 %5466, %v246
    %v5468 = vpop.permute.xlu0 %5467
    %5470 = vset.pattern.permute.xlu0 13
    %5471 = vperm.xlu0 %5470, %v250
    %v5472 = vpop.permute.xlu0 %5471
    %5474 = vset.pattern.permute.xlu0 13
    %5475 = vperm.xlu0 %5474, %v254
    %v5476 = vpop.permute.xlu0 %5475
    %5478 = vset.pattern.permute.xlu0 13
    %5479 = vperm.xlu0 %5478, %v258
    %v5480 = vpop.permute.xlu0 %5479
    %5482 = vset.pattern.permute.xlu0 13
    %5483 = vperm.xlu0 %5482, %v262
    %v5484 = vpop.permute.xlu0 %5483
    %5486 = vset.pattern.permute.xlu0 13
    %5487 = vperm.xlu0 %5486, %v266
    %v5488 = vpop.permute.xlu0 %5487
    %5490 = vset.pattern.permute.xlu0 13
    %5491 = vperm.xlu0 %5490, %v270
    %v5492 = vpop.permute.xlu0 %5491
    %5494 = vset.pattern.permute.xlu0 13
    %5495 = vperm.xlu0 %5494, %v274
    %v5496 = vpop.permute.xlu0 %5495
    %5498 = vset.pattern.permute.xlu0 13
    %5499 = vperm.xlu0 %5498, %v278
    %v5500 = vpop.permute.xlu0 %5499
    %5502 = vset.pattern.permute.xlu0 13
    %5503 = vperm.xlu0 %5502, %v282
    %v5504 = vpop.permute.xlu0 %5503
    %5506 = vset.pattern.permute.xlu0 13
    %5507 = vperm.xlu0 %5506, %v286
    %v5508 = vpop.permute.xlu0 %5507
    %5510 = vset.pattern.permute.xlu0 13
    %5511 = vperm.xlu0 %5510, %v290
    %v5512 = vpop.permute.xlu0 %5511
    %5514 = vset.pattern.permute.xlu0 13
    %5515 = vperm.xlu0 %5514, %v294
    %v5516 = vpop.permute.xlu0 %5515
    %5518 = vset.pattern.permute.xlu0 13
    %5519 = vperm.xlu0 %5518, %v298
    %v5520 = vpop.permute.xlu0 %5519
    %5522 = vset.pattern.permute.xlu0 13
    %5523 = vperm.xlu0 %5522, %v302
    %v5524 = vpop.permute.xlu0 %5523
    %5526 = vset.pattern.permute.xlu0 13
    %5527 = vperm.xlu0 %5526, %v306
    %v5528 = vpop.permute.xlu0 %5527
    %5530 = vset.pattern.permute.xlu0 13
    %5531 = vperm.xlu0 %5530, %v310
    %v5532 = vpop.permute.xlu0 %5531
    %5534 = vset.pattern.permute.xlu0 13
    %5535 = vperm.xlu0 %5534, %v314
    %v5536 = vpop.permute.xlu0 %5535
    %5538 = vset.pattern.permute.xlu0 13
    %5539 = vperm.xlu0 %5538, %v318
    %v5540 = vpop.permute.xlu0 %5539
    %5542 = vset.pattern.permute.xlu0 13
    %5543 = vperm.xlu0 %5542, %v322
    %v5544 = vpop.permute.xlu0 %5543
    %5546 = vset.pattern.permute.xlu0 13
    %5547 = vperm.xlu0 %5546, %v326
    %v5548 = vpop.permute.xlu0 %5547
    %5550 = vset.pattern.permute.xlu0 13
    %5551 = vperm.xlu0 %5550, %v330
    %v5552 = vpop.permute.xlu0 %5551
    %5554 = vset.pattern.permute.xlu0 13
    %5555 = vperm.xlu0 %5554, %v334
    %v5556 = vpop.permute.xlu0 %5555
    %5558 = vset.pattern.permute.xlu0 13
    %5559 = vperm.xlu0 %5558, %v338
    %v5560 = vpop.permute.xlu0 %5559
    %5562 = vset.pattern.permute.xlu0 13
    %5563 = vperm.xlu0 %5562, %v342
    %v5564 = vpop.permute.xlu0 %5563
    %5566 = vset.pattern.permute.xlu0 13
    %5567 = vperm.xlu0 %5566, %v346
    %v5568 = vpop.permute.xlu0 %5567
    %5570 = vset.pattern.permute.xlu0 13
    %5571 = vperm.xlu0 %5570, %v350
    %v5572 = vpop.permute.xlu0 %5571
    %5574 = vset.pattern.permute.xlu0 13
    %5575 = vperm.xlu0 %5574, %v354
    %v5576 = vpop.permute.xlu0 %5575
    %5578 = vset.pattern.permute.xlu0 13
    %5579 = vperm.xlu0 %5578, %v358
    %v5580 = vpop.permute.xlu0 %5579
    %5582 = vset.pattern.permute.xlu0 13
    %5583 = vperm.xlu0 %5582, %v362
    %v5584 = vpop.permute.xlu0 %5583
    %v5586 = vadd.f32 %v5394, %v5460
    %v5587 = vadd.f32 %v5395, %v5460
    %v5588 = vadd.f32 %v5396, %v5464
    %v5589 = vadd.f32 %v5397, %v5464
    %v5590 = vadd.f32 %v5398, %v5468
    %v5591 = vadd.f32 %v5399, %v5468
    %v5592 = vadd.f32 %v5400, %v5472
    %v5593 = vadd.f32 %v5401, %v5472
    %v5594 = vadd.f32 %v5402, %v5476
    %v5595 = vadd.f32 %v5403, %v5476
    %v5596 = vadd.f32 %v5404, %v5480
    %v5597 = vadd.f32 %v5405, %v5480
    %v5598 = vadd.f32 %v5406, %v5484
    %v5599 = vadd.f32 %v5407, %v5484
    %v5600 = vadd.f32 %v5408, %v5488
    %v5601 = vadd.f32 %v5409, %v5488
    %v5602 = vadd.f32 %v5410, %v5492
    %v5603 = vadd.f32 %v5411, %v5492
    %v5604 = vadd.f32 %v5412, %v5496
    %v5605 = vadd.f32 %v5413, %v5496
    %v5606 = vadd.f32 %v5414, %v5500
    %v5607 = vadd.f32 %v5415, %v5500
    %v5608 = vadd.f32 %v5416, %v5504
    %v5609 = vadd.f32 %v5417, %v5504
    %v5610 = vadd.f32 %v5418, %v5508
    %v5611 = vadd.f32 %v5419, %v5508
    %v5612 = vadd.f32 %v5420, %v5512
    %v5613 = vadd.f32 %v5421, %v5512
    %v5614 = vadd.f32 %v5422, %v5516
    %v5615 = vadd.f32 %v5423, %v5516
    %v5616 = vadd.f32 %v5424, %v5520
    %v5617 = vadd.f32 %v5425, %v5520
    %v5618 = vadd.f32 %v5426, %v5524
    %v5619 = vadd.f32 %v5427, %v5524
    %v5620 = vadd.f32 %v5428, %v5528
    %v5621 = vadd.f32 %v5429, %v5528
    %v5622 = vadd.f32 %v5430, %v5532
    %v5623 = vadd.f32 %v5431, %v5532
    %v5624 = vadd.f32 %v5432, %v5536
    %v5625 = vadd.f32 %v5433, %v5536
    %v5626 = vadd.f32 %v5434, %v5540
    %v5627 = vadd.f32 %v5435, %v5540
    %v5628 = vadd.f32 %v5436, %v5544
    %v5629 = vadd.f32 %v5437, %v5544
    %v5630 = vadd.f32 %v5438, %v5548
    %v5631 = vadd.f32 %v5439, %v5548
    %v5632 = vadd.f32 %v5440, %v5552
    %v5633 = vadd.f32 %v5441, %v5552
    %v5634 = vadd.f32 %v5442, %v5556
    %v5635 = vadd.f32 %v5443, %v5556
    %v5636 = vadd.f32 %v5444, %v5560
    %v5637 = vadd.f32 %v5445, %v5560
    %v5638 = vadd.f32 %v5446, %v5564
    %v5639 = vadd.f32 %v5447, %v5564
    %v5640 = vadd.f32 %v5448, %v5568
    %v5641 = vadd.f32 %v5449, %v5568
    %v5642 = vadd.f32 %v5450, %v5572
    %v5643 = vadd.f32 %v5451, %v5572
    %v5644 = vadd.f32 %v5452, %v5576
    %v5645 = vadd.f32 %v5453, %v5576
    %v5646 = vadd.f32 %v5454, %v5580
    %v5647 = vadd.f32 %v5455, %v5580
    %v5648 = vadd.f32 %v5456, %v5584
    %v5649 = vadd.f32 %v5457, %v5584
    %v5650 = vmul.f32 %v365, %v34
    %v5651 = vmul.f32 %v369, %v34
    %v5652 = vmul.f32 %v373, %v34
    %v5653 = vmul.f32 %v377, %v34
    %v5654 = vmul.f32 %v381, %v34
    %v5655 = vmul.f32 %v385, %v34
    %v5656 = vmul.f32 %v389, %v34
    %v5657 = vmul.f32 %v393, %v34
    %v5658 = vmul.f32 %v397, %v34
    %v5659 = vmul.f32 %v401, %v34
    %v5660 = vmul.f32 %v405, %v34
    %v5661 = vmul.f32 %v409, %v34
    %v5662 = vmul.f32 %v413, %v34
    %v5663 = vmul.f32 %v417, %v34
    %v5664 = vmul.f32 %v421, %v34
    %v5665 = vmul.f32 %v425, %v34
    %v5666 = vmul.f32 %v429, %v34
    %v5667 = vmul.f32 %v433, %v34
    %v5668 = vmul.f32 %v437, %v34
    %v5669 = vmul.f32 %v441, %v34
    %v5670 = vmul.f32 %v445, %v34
    %v5671 = vmul.f32 %v449, %v34
    %v5672 = vmul.f32 %v453, %v34
    %v5673 = vmul.f32 %v457, %v34
    %v5674 = vmul.f32 %v461, %v34
    %v5675 = vmul.f32 %v465, %v34
    %v5676 = vmul.f32 %v469, %v34
    %v5677 = vmul.f32 %v473, %v34
    %v5678 = vmul.f32 %v477, %v34
    %v5679 = vmul.f32 %v481, %v34
    %v5680 = vmul.f32 %v485, %v34
    %v5681 = vmul.f32 %v489, %v34
    %v5682 = vadd.f32 %v5650, 0.0
    %v5683 = vadd.f32 %v5651, 0.0
    %v5684 = vadd.f32 %v5652, 0.0
    %v5685 = vadd.f32 %v5653, 0.0
    %v5686 = vadd.f32 %v5654, 0.0
    %v5687 = vadd.f32 %v5655, 0.0
    %v5688 = vadd.f32 %v5656, 0.0
    %v5689 = vadd.f32 %v5657, 0.0
    %v5690 = vadd.f32 %v5658, 0.0
    %v5691 = vadd.f32 %v5659, 0.0
    %v5692 = vadd.f32 %v5660, 0.0
    %v5693 = vadd.f32 %v5661, 0.0
    %v5694 = vadd.f32 %v5662, 0.0
    %v5695 = vadd.f32 %v5663, 0.0
    %v5696 = vadd.f32 %v5664, 0.0
    %v5697 = vadd.f32 %v5665, 0.0
    %v5698 = vadd.f32 %v5666, 0.0
    %v5699 = vadd.f32 %v5667, 0.0
    %v5700 = vadd.f32 %v5668, 0.0
    %v5701 = vadd.f32 %v5669, 0.0
    %v5702 = vadd.f32 %v5670, 0.0
    %v5703 = vadd.f32 %v5671, 0.0
    %v5704 = vadd.f32 %v5672, 0.0
    %v5705 = vadd.f32 %v5673, 0.0
    %v5706 = vadd.f32 %v5674, 0.0
    %v5707 = vadd.f32 %v5675, 0.0
    %v5708 = vadd.f32 %v5676, 0.0
    %v5709 = vadd.f32 %v5677, 0.0
    %v5710 = vadd.f32 %v5678, 0.0
    %v5711 = vadd.f32 %v5679, 0.0
    %v5712 = vadd.f32 %v5680, 0.0
    %v5713 = vadd.f32 %v5681, 0.0
    %v5714 = vmul.f32 %v557, %v34
    %v5715 = vmul.f32 %v561, %v34
    %v5716 = vmul.f32 %v565, %v34
    %v5717 = vmul.f32 %v569, %v34
    %v5718 = vmul.f32 %v573, %v34
    %v5719 = vmul.f32 %v577, %v34
    %v5720 = vmul.f32 %v581, %v34
    %v5721 = vmul.f32 %v585, %v34
    %v5722 = vmul.f32 %v589, %v34
    %v5723 = vmul.f32 %v593, %v34
    %v5724 = vmul.f32 %v597, %v34
    %v5725 = vmul.f32 %v601, %v34
    %v5726 = vmul.f32 %v605, %v34
    %v5727 = vmul.f32 %v609, %v34
    %v5728 = vmul.f32 %v613, %v34
    %v5729 = vmul.f32 %v617, %v34
    %v5730 = vmul.f32 %v621, %v34
    %v5731 = vmul.f32 %v625, %v34
    %v5732 = vmul.f32 %v629, %v34
    %v5733 = vmul.f32 %v633, %v34
    %v5734 = vmul.f32 %v637, %v34
    %v5735 = vmul.f32 %v641, %v34
    %v5736 = vmul.f32 %v645, %v34
    %v5737 = vmul.f32 %v649, %v34
    %v5738 = vmul.f32 %v653, %v34
    %v5739 = vmul.f32 %v657, %v34
    %v5740 = vmul.f32 %v661, %v34
    %v5741 = vmul.f32 %v665, %v34
    %v5742 = vmul.f32 %v669, %v34
    %v5743 = vmul.f32 %v673, %v34
    %v5744 = vmul.f32 %v677, %v34
    %v5745 = vmul.f32 %v681, %v34
    %5778 = vrot.lane.b32.xlu0 %v5714, 127
    %v5779 = vpop.permute.xlu0 %5778
    %5780 = vrot.lane.b32.xlu0 %v5715, 127
    %v5781 = vpop.permute.xlu0 %5780
    %5782 = vrot.lane.b32.xlu0 %v5716, 127
    %v5783 = vpop.permute.xlu0 %5782
    %5784 = vrot.lane.b32.xlu0 %v5717, 127
    %v5785 = vpop.permute.xlu0 %5784
    %5786 = vrot.lane.b32.xlu0 %v5718, 127
    %v5787 = vpop.permute.xlu0 %5786
    %5788 = vrot.lane.b32.xlu0 %v5719, 127
    %v5789 = vpop.permute.xlu0 %5788
    %5790 = vrot.lane.b32.xlu0 %v5720, 127
    %v5791 = vpop.permute.xlu0 %5790
    %5792 = vrot.lane.b32.xlu0 %v5721, 127
    %v5793 = vpop.permute.xlu0 %5792
    %5794 = vrot.lane.b32.xlu0 %v5722, 127
    %v5795 = vpop.permute.xlu0 %5794
    %5796 = vrot.lane.b32.xlu0 %v5723, 127
    %v5797 = vpop.permute.xlu0 %5796
    %5798 = vrot.lane.b32.xlu0 %v5724, 127
    %v5799 = vpop.permute.xlu0 %5798
    %5800 = vrot.lane.b32.xlu0 %v5725, 127
    %v5801 = vpop.permute.xlu0 %5800
    %5802 = vrot.lane.b32.xlu0 %v5726, 127
    %v5803 = vpop.permute.xlu0 %5802
    %5804 = vrot.lane.b32.xlu0 %v5727, 127
    %v5805 = vpop.permute.xlu0 %5804
    %5806 = vrot.lane.b32.xlu0 %v5728, 127
    %v5807 = vpop.permute.xlu0 %5806
    %5808 = vrot.lane.b32.xlu0 %v5729, 127
    %v5809 = vpop.permute.xlu0 %5808
    %5810 = vrot.lane.b32.xlu0 %v5730, 127
    %v5811 = vpop.permute.xlu0 %5810
    %5812 = vrot.lane.b32.xlu0 %v5731, 127
    %v5813 = vpop.permute.xlu0 %5812
    %5814 = vrot.lane.b32.xlu0 %v5732, 127
    %v5815 = vpop.permute.xlu0 %5814
    %5816 = vrot.lane.b32.xlu0 %v5733, 127
    %v5817 = vpop.permute.xlu0 %5816
    %5818 = vrot.lane.b32.xlu0 %v5734, 127
    %v5819 = vpop.permute.xlu0 %5818
    %5820 = vrot.lane.b32.xlu0 %v5735, 127
    %v5821 = vpop.permute.xlu0 %5820
    %5822 = vrot.lane.b32.xlu0 %v5736, 127
    %v5823 = vpop.permute.xlu0 %5822
    %5824 = vrot.lane.b32.xlu0 %v5737, 127
    %v5825 = vpop.permute.xlu0 %5824
    %5826 = vrot.lane.b32.xlu0 %v5738, 127
    %v5827 = vpop.permute.xlu0 %5826
    %5828 = vrot.lane.b32.xlu0 %v5739, 127
    %v5829 = vpop.permute.xlu0 %5828
    %5830 = vrot.lane.b32.xlu0 %v5740, 127
    %v5831 = vpop.permute.xlu0 %5830
    %5832 = vrot.lane.b32.xlu0 %v5741, 127
    %v5833 = vpop.permute.xlu0 %5832
    %5834 = vrot.lane.b32.xlu0 %v5742, 127
    %v5835 = vpop.permute.xlu0 %5834
    %5836 = vrot.lane.b32.xlu0 %v5743, 127
    %v5837 = vpop.permute.xlu0 %5836
    %5838 = vrot.lane.b32.xlu0 %v5744, 127
    %v5839 = vpop.permute.xlu0 %5838
    %5840 = vrot.lane.b32.xlu0 %v5745, 127
    %v5841 = vpop.permute.xlu0 %5840
    %v5874 = vadd.f32 %v5682, %v5779
    %v5875 = vadd.f32 %v5683, %v5781
    %v5876 = vadd.f32 %v5684, %v5783
    %v5877 = vadd.f32 %v5685, %v5785
    %v5878 = vadd.f32 %v5686, %v5787
    %v5879 = vadd.f32 %v5687, %v5789
    %v5880 = vadd.f32 %v5688, %v5791
    %v5881 = vadd.f32 %v5689, %v5793
    %v5882 = vadd.f32 %v5690, %v5795
    %v5883 = vadd.f32 %v5691, %v5797
    %v5884 = vadd.f32 %v5692, %v5799
    %v5885 = vadd.f32 %v5693, %v5801
    %v5886 = vadd.f32 %v5694, %v5803
    %v5887 = vadd.f32 %v5695, %v5805
    %v5888 = vadd.f32 %v5696, %v5807
    %v5889 = vadd.f32 %v5697, %v5809
    %v5890 = vadd.f32 %v5698, %v5811
    %v5891 = vadd.f32 %v5699, %v5813
    %v5892 = vadd.f32 %v5700, %v5815
    %v5893 = vadd.f32 %v5701, %v5817
    %v5894 = vadd.f32 %v5702, %v5819
    %v5895 = vadd.f32 %v5703, %v5821
    %v5896 = vadd.f32 %v5704, %v5823
    %v5897 = vadd.f32 %v5705, %v5825
    %v5898 = vadd.f32 %v5706, %v5827
    %v5899 = vadd.f32 %v5707, %v5829
    %v5900 = vadd.f32 %v5708, %v5831
    %v5901 = vadd.f32 %v5709, %v5833
    %v5902 = vadd.f32 %v5710, %v5835
    %v5903 = vadd.f32 %v5711, %v5837
    %v5904 = vadd.f32 %v5712, %v5839
    %v5905 = vadd.f32 %v5713, %v5841
    %v5906 = vmul.f32 %v877, %v34
    %v5907 = vmul.f32 %v881, %v34
    %v5908 = vmul.f32 %v885, %v34
    %v5909 = vmul.f32 %v889, %v34
    %v5910 = vmul.f32 %v893, %v34
    %v5911 = vmul.f32 %v897, %v34
    %v5912 = vmul.f32 %v901, %v34
    %v5913 = vmul.f32 %v905, %v34
    %v5914 = vmul.f32 %v909, %v34
    %v5915 = vmul.f32 %v913, %v34
    %v5916 = vmul.f32 %v917, %v34
    %v5917 = vmul.f32 %v921, %v34
    %v5918 = vmul.f32 %v925, %v34
    %v5919 = vmul.f32 %v929, %v34
    %v5920 = vmul.f32 %v933, %v34
    %v5921 = vmul.f32 %v937, %v34
    %v5922 = vmul.f32 %v941, %v34
    %v5923 = vmul.f32 %v945, %v34
    %v5924 = vmul.f32 %v949, %v34
    %v5925 = vmul.f32 %v953, %v34
    %v5926 = vmul.f32 %v957, %v34
    %v5927 = vmul.f32 %v961, %v34
    %v5928 = vmul.f32 %v965, %v34
    %v5929 = vmul.f32 %v969, %v34
    %v5930 = vmul.f32 %v973, %v34
    %v5931 = vmul.f32 %v977, %v34
    %v5932 = vmul.f32 %v981, %v34
    %v5933 = vmul.f32 %v985, %v34
    %v5934 = vmul.f32 %v989, %v34
    %v5935 = vmul.f32 %v993, %v34
    %v5936 = vmul.f32 %v997, %v34
    %v5937 = vmul.f32 %v1001, %v34
    %5970 = vrot.lane.b32.xlu0 %v5906, 126
    %v5971 = vpop.permute.xlu0 %5970
    %5972 = vrot.lane.b32.xlu0 %v5907, 126
    %v5973 = vpop.permute.xlu0 %5972
    %5974 = vrot.lane.b32.xlu0 %v5908, 126
    %v5975 = vpop.permute.xlu0 %5974
    %5976 = vrot.lane.b32.xlu0 %v5909, 126
    %v5977 = vpop.permute.xlu0 %5976
    %5978 = vrot.lane.b32.xlu0 %v5910, 126
    %v5979 = vpop.permute.xlu0 %5978
    %5980 = vrot.lane.b32.xlu0 %v5911, 126
    %v5981 = vpop.permute.xlu0 %5980
    %5982 = vrot.lane.b32.xlu0 %v5912, 126
    %v5983 = vpop.permute.xlu0 %5982
    %5984 = vrot.lane.b32.xlu0 %v5913, 126
    %v5985 = vpop.permute.xlu0 %5984
    %5986 = vrot.lane.b32.xlu0 %v5914, 126
    %v5987 = vpop.permute.xlu0 %5986
    %5988 = vrot.lane.b32.xlu0 %v5915, 126
    %v5989 = vpop.permute.xlu0 %5988
    %5990 = vrot.lane.b32.xlu0 %v5916, 126
    %v5991 = vpop.permute.xlu0 %5990
    %5992 = vrot.lane.b32.xlu0 %v5917, 126
    %v5993 = vpop.permute.xlu0 %5992
    %5994 = vrot.lane.b32.xlu0 %v5918, 126
    %v5995 = vpop.permute.xlu0 %5994
    %5996 = vrot.lane.b32.xlu0 %v5919, 126
    %v5997 = vpop.permute.xlu0 %5996
    %5998 = vrot.lane.b32.xlu0 %v5920, 126
    %v5999 = vpop.permute.xlu0 %5998
    %6000 = vrot.lane.b32.xlu0 %v5921, 126
    %v6001 = vpop.permute.xlu0 %6000
    %6002 = vrot.lane.b32.xlu0 %v5922, 126
    %v6003 = vpop.permute.xlu0 %6002
    %6004 = vrot.lane.b32.xlu0 %v5923, 126
    %v6005 = vpop.permute.xlu0 %6004
    %6006 = vrot.lane.b32.xlu0 %v5924, 126
    %v6007 = vpop.permute.xlu0 %6006
    %6008 = vrot.lane.b32.xlu0 %v5925, 126
    %v6009 = vpop.permute.xlu0 %6008
    %6010 = vrot.lane.b32.xlu0 %v5926, 126
    %v6011 = vpop.permute.xlu0 %6010
    %6012 = vrot.lane.b32.xlu0 %v5927, 126
    %v6013 = vpop.permute.xlu0 %6012
    %6014 = vrot.lane.b32.xlu0 %v5928, 126
    %v6015 = vpop.permute.xlu0 %6014
    %6016 = vrot.lane.b32.xlu0 %v5929, 126
    %v6017 = vpop.permute.xlu0 %6016
    %6018 = vrot.lane.b32.xlu0 %v5930, 126
    %v6019 = vpop.permute.xlu0 %6018
    %6020 = vrot.lane.b32.xlu0 %v5931, 126
    %v6021 = vpop.permute.xlu0 %6020
    %6022 = vrot.lane.b32.xlu0 %v5932, 126
    %v6023 = vpop.permute.xlu0 %6022
    %6024 = vrot.lane.b32.xlu0 %v5933, 126
    %v6025 = vpop.permute.xlu0 %6024
    %6026 = vrot.lane.b32.xlu0 %v5934, 126
    %v6027 = vpop.permute.xlu0 %6026
    %6028 = vrot.lane.b32.xlu0 %v5935, 126
    %v6029 = vpop.permute.xlu0 %6028
    %6030 = vrot.lane.b32.xlu0 %v5936, 126
    %v6031 = vpop.permute.xlu0 %6030
    %6032 = vrot.lane.b32.xlu0 %v5937, 126
    %v6033 = vpop.permute.xlu0 %6032
    %v6066 = vadd.f32 %v5874, %v5971
    %v6067 = vadd.f32 %v5875, %v5973
    %v6068 = vadd.f32 %v5876, %v5975
    %v6069 = vadd.f32 %v5877, %v5977
    %v6070 = vadd.f32 %v5878, %v5979
    %v6071 = vadd.f32 %v5879, %v5981
    %v6072 = vadd.f32 %v5880, %v5983
    %v6073 = vadd.f32 %v5881, %v5985
    %v6074 = vadd.f32 %v5882, %v5987
    %v6075 = vadd.f32 %v5883, %v5989
    %v6076 = vadd.f32 %v5884, %v5991
    %v6077 = vadd.f32 %v5885, %v5993
    %v6078 = vadd.f32 %v5886, %v5995
    %v6079 = vadd.f32 %v5887, %v5997
    %v6080 = vadd.f32 %v5888, %v5999
    %v6081 = vadd.f32 %v5889, %v6001
    %v6082 = vadd.f32 %v5890, %v6003
    %v6083 = vadd.f32 %v5891, %v6005
    %v6084 = vadd.f32 %v5892, %v6007
    %v6085 = vadd.f32 %v5893, %v6009
    %v6086 = vadd.f32 %v5894, %v6011
    %v6087 = vadd.f32 %v5895, %v6013
    %v6088 = vadd.f32 %v5896, %v6015
    %v6089 = vadd.f32 %v5897, %v6017
    %v6090 = vadd.f32 %v5898, %v6019
    %v6091 = vadd.f32 %v5899, %v6021
    %v6092 = vadd.f32 %v5900, %v6023
    %v6093 = vadd.f32 %v5901, %v6025
    %v6094 = vadd.f32 %v5902, %v6027
    %v6095 = vadd.f32 %v5903, %v6029
    %v6096 = vadd.f32 %v5904, %v6031
    %v6097 = vadd.f32 %v5905, %v6033
    %v6098 = vmul.f32 %v1197, %v34
    %v6099 = vmul.f32 %v1201, %v34
    %v6100 = vmul.f32 %v1205, %v34
    %v6101 = vmul.f32 %v1209, %v34
    %v6102 = vmul.f32 %v1213, %v34
    %v6103 = vmul.f32 %v1217, %v34
    %v6104 = vmul.f32 %v1221, %v34
    %v6105 = vmul.f32 %v1225, %v34
    %v6106 = vmul.f32 %v1229, %v34
    %v6107 = vmul.f32 %v1233, %v34
    %v6108 = vmul.f32 %v1237, %v34
    %v6109 = vmul.f32 %v1241, %v34
    %v6110 = vmul.f32 %v1245, %v34
    %v6111 = vmul.f32 %v1249, %v34
    %v6112 = vmul.f32 %v1253, %v34
    %v6113 = vmul.f32 %v1257, %v34
    %v6114 = vmul.f32 %v1261, %v34
    %v6115 = vmul.f32 %v1265, %v34
    %v6116 = vmul.f32 %v1269, %v34
    %v6117 = vmul.f32 %v1273, %v34
    %v6118 = vmul.f32 %v1277, %v34
    %v6119 = vmul.f32 %v1281, %v34
    %v6120 = vmul.f32 %v1285, %v34
    %v6121 = vmul.f32 %v1289, %v34
    %v6122 = vmul.f32 %v1293, %v34
    %v6123 = vmul.f32 %v1297, %v34
    %v6124 = vmul.f32 %v1301, %v34
    %v6125 = vmul.f32 %v1305, %v34
    %v6126 = vmul.f32 %v1309, %v34
    %v6127 = vmul.f32 %v1313, %v34
    %v6128 = vmul.f32 %v1317, %v34
    %v6129 = vmul.f32 %v1321, %v34
    %6162 = vrot.lane.b32.xlu0 %v6098, 125
    %v6163 = vpop.permute.xlu0 %6162
    %6164 = vrot.lane.b32.xlu0 %v6099, 125
    %v6165 = vpop.permute.xlu0 %6164
    %6166 = vrot.lane.b32.xlu0 %v6100, 125
    %v6167 = vpop.permute.xlu0 %6166
    %6168 = vrot.lane.b32.xlu0 %v6101, 125
    %v6169 = vpop.permute.xlu0 %6168
    %6170 = vrot.lane.b32.xlu0 %v6102, 125
    %v6171 = vpop.permute.xlu0 %6170
    %6172 = vrot.lane.b32.xlu0 %v6103, 125
    %v6173 = vpop.permute.xlu0 %6172
    %6174 = vrot.lane.b32.xlu0 %v6104, 125
    %v6175 = vpop.permute.xlu0 %6174
    %6176 = vrot.lane.b32.xlu0 %v6105, 125
    %v6177 = vpop.permute.xlu0 %6176
    %6178 = vrot.lane.b32.xlu0 %v6106, 125
    %v6179 = vpop.permute.xlu0 %6178
    %6180 = vrot.lane.b32.xlu0 %v6107, 125
    %v6181 = vpop.permute.xlu0 %6180
    %6182 = vrot.lane.b32.xlu0 %v6108, 125
    %v6183 = vpop.permute.xlu0 %6182
    %6184 = vrot.lane.b32.xlu0 %v6109, 125
    %v6185 = vpop.permute.xlu0 %6184
    %6186 = vrot.lane.b32.xlu0 %v6110, 125
    %v6187 = vpop.permute.xlu0 %6186
    %6188 = vrot.lane.b32.xlu0 %v6111, 125
    %v6189 = vpop.permute.xlu0 %6188
    %6190 = vrot.lane.b32.xlu0 %v6112, 125
    %v6191 = vpop.permute.xlu0 %6190
    %6192 = vrot.lane.b32.xlu0 %v6113, 125
    %v6193 = vpop.permute.xlu0 %6192
    %6194 = vrot.lane.b32.xlu0 %v6114, 125
    %v6195 = vpop.permute.xlu0 %6194
    %6196 = vrot.lane.b32.xlu0 %v6115, 125
    %v6197 = vpop.permute.xlu0 %6196
    %6198 = vrot.lane.b32.xlu0 %v6116, 125
    %v6199 = vpop.permute.xlu0 %6198
    %6200 = vrot.lane.b32.xlu0 %v6117, 125
    %v6201 = vpop.permute.xlu0 %6200
    %6202 = vrot.lane.b32.xlu0 %v6118, 125
    %v6203 = vpop.permute.xlu0 %6202
    %6204 = vrot.lane.b32.xlu0 %v6119, 125
    %v6205 = vpop.permute.xlu0 %6204
    %6206 = vrot.lane.b32.xlu0 %v6120, 125
    %v6207 = vpop.permute.xlu0 %6206
    %6208 = vrot.lane.b32.xlu0 %v6121, 125
    %v6209 = vpop.permute.xlu0 %6208
    %6210 = vrot.lane.b32.xlu0 %v6122, 125
    %v6211 = vpop.permute.xlu0 %6210
    %6212 = vrot.lane.b32.xlu0 %v6123, 125
    %v6213 = vpop.permute.xlu0 %6212
    %6214 = vrot.lane.b32.xlu0 %v6124, 125
    %v6215 = vpop.permute.xlu0 %6214
    %6216 = vrot.lane.b32.xlu0 %v6125, 125
    %v6217 = vpop.permute.xlu0 %6216
    %6218 = vrot.lane.b32.xlu0 %v6126, 125
    %v6219 = vpop.permute.xlu0 %6218
    %6220 = vrot.lane.b32.xlu0 %v6127, 125
    %v6221 = vpop.permute.xlu0 %6220
    %6222 = vrot.lane.b32.xlu0 %v6128, 125
    %v6223 = vpop.permute.xlu0 %6222
    %6224 = vrot.lane.b32.xlu0 %v6129, 125
    %v6225 = vpop.permute.xlu0 %6224
    %v6258 = vadd.f32 %v6066, %v6163
    %v6259 = vadd.f32 %v6067, %v6165
    %v6260 = vadd.f32 %v6068, %v6167
    %v6261 = vadd.f32 %v6069, %v6169
    %v6262 = vadd.f32 %v6070, %v6171
    %v6263 = vadd.f32 %v6071, %v6173
    %v6264 = vadd.f32 %v6072, %v6175
    %v6265 = vadd.f32 %v6073, %v6177
    %v6266 = vadd.f32 %v6074, %v6179
    %v6267 = vadd.f32 %v6075, %v6181
    %v6268 = vadd.f32 %v6076, %v6183
    %v6269 = vadd.f32 %v6077, %v6185
    %v6270 = vadd.f32 %v6078, %v6187
    %v6271 = vadd.f32 %v6079, %v6189
    %v6272 = vadd.f32 %v6080, %v6191
    %v6273 = vadd.f32 %v6081, %v6193
    %v6274 = vadd.f32 %v6082, %v6195
    %v6275 = vadd.f32 %v6083, %v6197
    %v6276 = vadd.f32 %v6084, %v6199
    %v6277 = vadd.f32 %v6085, %v6201
    %v6278 = vadd.f32 %v6086, %v6203
    %v6279 = vadd.f32 %v6087, %v6205
    %v6280 = vadd.f32 %v6088, %v6207
    %v6281 = vadd.f32 %v6089, %v6209
    %v6282 = vadd.f32 %v6090, %v6211
    %v6283 = vadd.f32 %v6091, %v6213
    %v6284 = vadd.f32 %v6092, %v6215
    %v6285 = vadd.f32 %v6093, %v6217
    %v6286 = vadd.f32 %v6094, %v6219
    %v6287 = vadd.f32 %v6095, %v6221
    %v6288 = vadd.f32 %v6096, %v6223
    %v6289 = vadd.f32 %v6097, %v6225
    %v6290 = vadd.f32 %v6258, %v1517
    %v6291 = vadd.f32 %v6259, %v1521
    %v6292 = vadd.f32 %v6260, %v1525
    %v6293 = vadd.f32 %v6261, %v1529
    %v6294 = vadd.f32 %v6262, %v1533
    %v6295 = vadd.f32 %v6263, %v1537
    %v6296 = vadd.f32 %v6264, %v1541
    %v6297 = vadd.f32 %v6265, %v1545
    %v6298 = vadd.f32 %v6266, %v1549
    %v6299 = vadd.f32 %v6267, %v1553
    %v6300 = vadd.f32 %v6268, %v1557
    %v6301 = vadd.f32 %v6269, %v1561
    %v6302 = vadd.f32 %v6270, %v1565
    %v6303 = vadd.f32 %v6271, %v1569
    %v6304 = vadd.f32 %v6272, %v1573
    %v6305 = vadd.f32 %v6273, %v1577
    %v6306 = vadd.f32 %v6274, %v1581
    %v6307 = vadd.f32 %v6275, %v1585
    %v6308 = vadd.f32 %v6276, %v1589
    %v6309 = vadd.f32 %v6277, %v1593
    %v6310 = vadd.f32 %v6278, %v1597
    %v6311 = vadd.f32 %v6279, %v1601
    %v6312 = vadd.f32 %v6280, %v1605
    %v6313 = vadd.f32 %v6281, %v1609
    %v6314 = vadd.f32 %v6282, %v1613
    %v6315 = vadd.f32 %v6283, %v1617
    %v6316 = vadd.f32 %v6284, %v1621
    %v6317 = vadd.f32 %v6285, %v1625
    %v6318 = vadd.f32 %v6286, %v1629
    %v6319 = vadd.f32 %v6287, %v1633
    %v6320 = vadd.f32 %v6288, %v1637
    %v6321 = vadd.f32 %v6289, %v1641
    %v6354 = vrot.slane %v6290, 4
    %v6355 = vrot.slane %v6291, 4
    %v6356 = vrot.slane %v6292, 4
    %v6357 = vrot.slane %v6293, 4
    %v6358 = vrot.slane %v6294, 4
    %v6359 = vrot.slane %v6295, 4
    %v6360 = vrot.slane %v6296, 4
    %v6361 = vrot.slane %v6297, 4
    %v6362 = vrot.slane %v6298, 4
    %v6363 = vrot.slane %v6299, 4
    %v6364 = vrot.slane %v6300, 4
    %v6365 = vrot.slane %v6301, 4
    %v6366 = vrot.slane %v6302, 4
    %v6367 = vrot.slane %v6303, 4
    %v6368 = vrot.slane %v6304, 4
    %v6369 = vrot.slane %v6305, 4
    %v6370 = vrot.slane %v6306, 4
    %v6371 = vrot.slane %v6307, 4
    %v6372 = vrot.slane %v6308, 4
    %v6373 = vrot.slane %v6309, 4
    %v6374 = vrot.slane %v6310, 4
    %v6375 = vrot.slane %v6311, 4
    %v6376 = vrot.slane %v6312, 4
    %v6377 = vrot.slane %v6313, 4
    %v6378 = vrot.slane %v6314, 4
    %v6379 = vrot.slane %v6315, 4
    %v6380 = vrot.slane %v6316, 4
    %v6381 = vrot.slane %v6317, 4
    %v6382 = vrot.slane %v6318, 4
    %v6383 = vrot.slane %v6319, 4
    %v6384 = vrot.slane %v6320, 4
    %v6385 = vrot.slane %v6321, 4
    %v6418 = vsel %vm1771, 0.0, %v6354
    %v6419 = vsel %vm1771, 0.0, %v6355
    %v6420 = vsel %vm1771, 0.0, %v6356
    %v6421 = vsel %vm1771, 0.0, %v6357
    %v6422 = vsel %vm1771, 0.0, %v6358
    %v6423 = vsel %vm1771, 0.0, %v6359
    %v6424 = vsel %vm1771, 0.0, %v6360
    %v6425 = vsel %vm1771, 0.0, %v6361
    %v6426 = vsel %vm1771, 0.0, %v6362
    %v6427 = vsel %vm1771, 0.0, %v6363
    %v6428 = vsel %vm1771, 0.0, %v6364
    %v6429 = vsel %vm1771, 0.0, %v6365
    %v6430 = vsel %vm1771, 0.0, %v6366
    %v6431 = vsel %vm1771, 0.0, %v6367
    %v6432 = vsel %vm1771, 0.0, %v6368
    %v6433 = vsel %vm1771, 0.0, %v6369
    %v6434 = vsel %vm1771, 0.0, %v6370
    %v6435 = vsel %vm1771, 0.0, %v6371
    %v6436 = vsel %vm1771, 0.0, %v6372
    %v6437 = vsel %vm1771, 0.0, %v6373
    %v6438 = vsel %vm1771, 0.0, %v6374
    %v6439 = vsel %vm1771, 0.0, %v6375
    %v6440 = vsel %vm1771, 0.0, %v6376
    %v6441 = vsel %vm1771, 0.0, %v6377
    %v6442 = vsel %vm1771, 0.0, %v6378
    %v6443 = vsel %vm1771, 0.0, %v6379
    %v6444 = vsel %vm1771, 0.0, %v6380
    %v6445 = vsel %vm1771, 0.0, %v6381
    %v6446 = vsel %vm1771, 0.0, %v6382
    %v6447 = vsel %vm1771, 0.0, %v6383
    %v6448 = vsel %vm1771, 0.0, %v6384
    %v6449 = vsel %vm1771, 0.0, %v6385
    %v6450 = vsel %vm1771, %v6354, 0.0
    %v6451 = vsel %vm1771, %v6355, 0.0
    %v6452 = vsel %vm1771, %v6356, 0.0
    %v6453 = vsel %vm1771, %v6357, 0.0
    %v6454 = vsel %vm1771, %v6358, 0.0
    %v6455 = vsel %vm1771, %v6359, 0.0
    %v6456 = vsel %vm1771, %v6360, 0.0
    %v6457 = vsel %vm1771, %v6361, 0.0
    %v6458 = vsel %vm1771, %v6362, 0.0
    %v6459 = vsel %vm1771, %v6363, 0.0
    %v6460 = vsel %vm1771, %v6364, 0.0
    %v6461 = vsel %vm1771, %v6365, 0.0
    %v6462 = vsel %vm1771, %v6366, 0.0
    %v6463 = vsel %vm1771, %v6367, 0.0
    %v6464 = vsel %vm1771, %v6368, 0.0
    %v6465 = vsel %vm1771, %v6369, 0.0
    %v6466 = vsel %vm1771, %v6370, 0.0
    %v6467 = vsel %vm1771, %v6371, 0.0
    %v6468 = vsel %vm1771, %v6372, 0.0
    %v6469 = vsel %vm1771, %v6373, 0.0
    %v6470 = vsel %vm1771, %v6374, 0.0
    %v6471 = vsel %vm1771, %v6375, 0.0
    %v6472 = vsel %vm1771, %v6376, 0.0
    %v6473 = vsel %vm1771, %v6377, 0.0
    %v6474 = vsel %vm1771, %v6378, 0.0
    %v6475 = vsel %vm1771, %v6379, 0.0
    %v6476 = vsel %vm1771, %v6380, 0.0
    %v6477 = vsel %vm1771, %v6381, 0.0
    %v6478 = vsel %vm1771, %v6382, 0.0
    %v6479 = vsel %vm1771, %v6383, 0.0
    %v6480 = vsel %vm1771, %v6384, 0.0
    %v6481 = vsel %vm1771, %v6385, 0.0
    %v6482 = vmul.f32 %v1838, %v6418
    %v6483 = vmul.f32 %v1838, %v6450
    %v6484 = vmul.f32 %v1842, %v6419
    %v6485 = vmul.f32 %v1842, %v6451
    %v6486 = vmul.f32 %v1846, %v6420
    %v6487 = vmul.f32 %v1846, %v6452
    %v6488 = vmul.f32 %v1850, %v6421
    %v6489 = vmul.f32 %v1850, %v6453
    %v6490 = vmul.f32 %v1854, %v6422
    %v6491 = vmul.f32 %v1854, %v6454
    %v6492 = vmul.f32 %v1858, %v6423
    %v6493 = vmul.f32 %v1858, %v6455
    %v6494 = vmul.f32 %v1862, %v6424
    %v6495 = vmul.f32 %v1862, %v6456
    %v6496 = vmul.f32 %v1866, %v6425
    %v6497 = vmul.f32 %v1866, %v6457
    %v6498 = vmul.f32 %v1870, %v6426
    %v6499 = vmul.f32 %v1870, %v6458
    %v6500 = vmul.f32 %v1874, %v6427
    %v6501 = vmul.f32 %v1874, %v6459
    %v6502 = vmul.f32 %v1878, %v6428
    %v6503 = vmul.f32 %v1878, %v6460
    %v6504 = vmul.f32 %v1882, %v6429
    %v6505 = vmul.f32 %v1882, %v6461
    %v6506 = vmul.f32 %v1886, %v6430
    %v6507 = vmul.f32 %v1886, %v6462
    %v6508 = vmul.f32 %v1890, %v6431
    %v6509 = vmul.f32 %v1890, %v6463
    %v6510 = vmul.f32 %v1894, %v6432
    %v6511 = vmul.f32 %v1894, %v6464
    %v6512 = vmul.f32 %v1898, %v6433
    %v6513 = vmul.f32 %v1898, %v6465
    %v6514 = vmul.f32 %v1902, %v6434
    %v6515 = vmul.f32 %v1902, %v6466
    %v6516 = vmul.f32 %v1906, %v6435
    %v6517 = vmul.f32 %v1906, %v6467
    %v6518 = vmul.f32 %v1910, %v6436
    %v6519 = vmul.f32 %v1910, %v6468
    %v6520 = vmul.f32 %v1914, %v6437
    %v6521 = vmul.f32 %v1914, %v6469
    %v6522 = vmul.f32 %v1918, %v6438
    %v6523 = vmul.f32 %v1918, %v6470
    %v6524 = vmul.f32 %v1922, %v6439
    %v6525 = vmul.f32 %v1922, %v6471
    %v6526 = vmul.f32 %v1926, %v6440
    %v6527 = vmul.f32 %v1926, %v6472
    %v6528 = vmul.f32 %v1930, %v6441
    %v6529 = vmul.f32 %v1930, %v6473
    %v6530 = vmul.f32 %v1934, %v6442
    %v6531 = vmul.f32 %v1934, %v6474
    %v6532 = vmul.f32 %v1938, %v6443
    %v6533 = vmul.f32 %v1938, %v6475
    %v6534 = vmul.f32 %v1942, %v6444
    %v6535 = vmul.f32 %v1942, %v6476
    %v6536 = vmul.f32 %v1946, %v6445
    %v6537 = vmul.f32 %v1946, %v6477
    %v6538 = vmul.f32 %v1950, %v6446
    %v6539 = vmul.f32 %v1950, %v6478
    %v6540 = vmul.f32 %v1954, %v6447
    %v6541 = vmul.f32 %v1954, %v6479
    %v6542 = vmul.f32 %v1958, %v6448
    %v6543 = vmul.f32 %v1958, %v6480
    %v6544 = vmul.f32 %v1962, %v6449
    %v6545 = vmul.f32 %v1962, %v6481
    %v6546 = vadd.f32 %v6482, 0.0
    %v6547 = vadd.f32 %v6483, 0.0
    %v6548 = vadd.f32 %v6484, 0.0
    %v6549 = vadd.f32 %v6485, 0.0
    %v6550 = vadd.f32 %v6486, 0.0
    %v6551 = vadd.f32 %v6487, 0.0
    %v6552 = vadd.f32 %v6488, 0.0
    %v6553 = vadd.f32 %v6489, 0.0
    %v6554 = vadd.f32 %v6490, 0.0
    %v6555 = vadd.f32 %v6491, 0.0
    %v6556 = vadd.f32 %v6492, 0.0
    %v6557 = vadd.f32 %v6493, 0.0
    %v6558 = vadd.f32 %v6494, 0.0
    %v6559 = vadd.f32 %v6495, 0.0
    %v6560 = vadd.f32 %v6496, 0.0
    %v6561 = vadd.f32 %v6497, 0.0
    %v6562 = vadd.f32 %v6498, 0.0
    %v6563 = vadd.f32 %v6499, 0.0
    %v6564 = vadd.f32 %v6500, 0.0
    %v6565 = vadd.f32 %v6501, 0.0
    %v6566 = vadd.f32 %v6502, 0.0
    %v6567 = vadd.f32 %v6503, 0.0
    %v6568 = vadd.f32 %v6504, 0.0
    %v6569 = vadd.f32 %v6505, 0.0
    %v6570 = vadd.f32 %v6506, 0.0
    %v6571 = vadd.f32 %v6507, 0.0
    %v6572 = vadd.f32 %v6508, 0.0
    %v6573 = vadd.f32 %v6509, 0.0
    %v6574 = vadd.f32 %v6510, 0.0
    %v6575 = vadd.f32 %v6511, 0.0
    %v6576 = vadd.f32 %v6512, 0.0
    %v6577 = vadd.f32 %v6513, 0.0
    %v6578 = vadd.f32 %v6514, 0.0
    %v6579 = vadd.f32 %v6515, 0.0
    %v6580 = vadd.f32 %v6516, 0.0
    %v6581 = vadd.f32 %v6517, 0.0
    %v6582 = vadd.f32 %v6518, 0.0
    %v6583 = vadd.f32 %v6519, 0.0
    %v6584 = vadd.f32 %v6520, 0.0
    %v6585 = vadd.f32 %v6521, 0.0
    %v6586 = vadd.f32 %v6522, 0.0
    %v6587 = vadd.f32 %v6523, 0.0
    %v6588 = vadd.f32 %v6524, 0.0
    %v6589 = vadd.f32 %v6525, 0.0
    %v6590 = vadd.f32 %v6526, 0.0
    %v6591 = vadd.f32 %v6527, 0.0
    %v6592 = vadd.f32 %v6528, 0.0
    %v6593 = vadd.f32 %v6529, 0.0
    %v6594 = vadd.f32 %v6530, 0.0
    %v6595 = vadd.f32 %v6531, 0.0
    %v6596 = vadd.f32 %v6532, 0.0
    %v6597 = vadd.f32 %v6533, 0.0
    %v6598 = vadd.f32 %v6534, 0.0
    %v6599 = vadd.f32 %v6535, 0.0
    %v6600 = vadd.f32 %v6536, 0.0
    %v6601 = vadd.f32 %v6537, 0.0
    %v6602 = vadd.f32 %v6538, 0.0
    %v6603 = vadd.f32 %v6539, 0.0
    %v6604 = vadd.f32 %v6540, 0.0
    %v6605 = vadd.f32 %v6541, 0.0
    %v6606 = vadd.f32 %v6542, 0.0
    %v6607 = vadd.f32 %v6543, 0.0
    %v6608 = vadd.f32 %v6544, 0.0
    %v6609 = vadd.f32 %v6545, 0.0
    %v6610 = vmul.f32 %v2094, %v6418
    %v6611 = vmul.f32 %v2094, %v6450
    %v6612 = vmul.f32 %v2098, %v6419
    %v6613 = vmul.f32 %v2098, %v6451
    %v6614 = vmul.f32 %v2102, %v6420
    %v6615 = vmul.f32 %v2102, %v6452
    %v6616 = vmul.f32 %v2106, %v6421
    %v6617 = vmul.f32 %v2106, %v6453
    %v6618 = vmul.f32 %v2110, %v6422
    %v6619 = vmul.f32 %v2110, %v6454
    %v6620 = vmul.f32 %v2114, %v6423
    %v6621 = vmul.f32 %v2114, %v6455
    %v6622 = vmul.f32 %v2118, %v6424
    %v6623 = vmul.f32 %v2118, %v6456
    %v6624 = vmul.f32 %v2122, %v6425
    %v6625 = vmul.f32 %v2122, %v6457
    %v6626 = vmul.f32 %v2126, %v6426
    %v6627 = vmul.f32 %v2126, %v6458
    %v6628 = vmul.f32 %v2130, %v6427
    %v6629 = vmul.f32 %v2130, %v6459
    %v6630 = vmul.f32 %v2134, %v6428
    %v6631 = vmul.f32 %v2134, %v6460
    %v6632 = vmul.f32 %v2138, %v6429
    %v6633 = vmul.f32 %v2138, %v6461
    %v6634 = vmul.f32 %v2142, %v6430
    %v6635 = vmul.f32 %v2142, %v6462
    %v6636 = vmul.f32 %v2146, %v6431
    %v6637 = vmul.f32 %v2146, %v6463
    %v6638 = vmul.f32 %v2150, %v6432
    %v6639 = vmul.f32 %v2150, %v6464
    %v6640 = vmul.f32 %v2154, %v6433
    %v6641 = vmul.f32 %v2154, %v6465
    %v6642 = vmul.f32 %v2158, %v6434
    %v6643 = vmul.f32 %v2158, %v6466
    %v6644 = vmul.f32 %v2162, %v6435
    %v6645 = vmul.f32 %v2162, %v6467
    %v6646 = vmul.f32 %v2166, %v6436
    %v6647 = vmul.f32 %v2166, %v6468
    %v6648 = vmul.f32 %v2170, %v6437
    %v6649 = vmul.f32 %v2170, %v6469
    %v6650 = vmul.f32 %v2174, %v6438
    %v6651 = vmul.f32 %v2174, %v6470
    %v6652 = vmul.f32 %v2178, %v6439
    %v6653 = vmul.f32 %v2178, %v6471
    %v6654 = vmul.f32 %v2182, %v6440
    %v6655 = vmul.f32 %v2182, %v6472
    %v6656 = vmul.f32 %v2186, %v6441
    %v6657 = vmul.f32 %v2186, %v6473
    %v6658 = vmul.f32 %v2190, %v6442
    %v6659 = vmul.f32 %v2190, %v6474
    %v6660 = vmul.f32 %v2194, %v6443
    %v6661 = vmul.f32 %v2194, %v6475
    %v6662 = vmul.f32 %v2198, %v6444
    %v6663 = vmul.f32 %v2198, %v6476
    %v6664 = vmul.f32 %v2202, %v6445
    %v6665 = vmul.f32 %v2202, %v6477
    %v6666 = vmul.f32 %v2206, %v6446
    %v6667 = vmul.f32 %v2206, %v6478
    %v6668 = vmul.f32 %v2210, %v6447
    %v6669 = vmul.f32 %v2210, %v6479
    %v6670 = vmul.f32 %v2214, %v6448
    %v6671 = vmul.f32 %v2214, %v6480
    %v6672 = vmul.f32 %v2218, %v6449
    %v6673 = vmul.f32 %v2218, %v6481
    %v6738 = vrot.slane %v6610, 1
    %v6739 = vrot.slane %v6611, 1
    %v6740 = vsel %vm2348, %v6738, %v6739
    %v6741 = vrot.slane %v6612, 1
    %v6742 = vrot.slane %v6613, 1
    %v6743 = vsel %vm2348, %v6741, %v6742
    %v6744 = vrot.slane %v6614, 1
    %v6745 = vrot.slane %v6615, 1
    %v6746 = vsel %vm2348, %v6744, %v6745
    %v6747 = vrot.slane %v6616, 1
    %v6748 = vrot.slane %v6617, 1
    %v6749 = vsel %vm2348, %v6747, %v6748
    %v6750 = vrot.slane %v6618, 1
    %v6751 = vrot.slane %v6619, 1
    %v6752 = vsel %vm2348, %v6750, %v6751
    %v6753 = vrot.slane %v6620, 1
    %v6754 = vrot.slane %v6621, 1
    %v6755 = vsel %vm2348, %v6753, %v6754
    %v6756 = vrot.slane %v6622, 1
    %v6757 = vrot.slane %v6623, 1
    %v6758 = vsel %vm2348, %v6756, %v6757
    %v6759 = vrot.slane %v6624, 1
    %v6760 = vrot.slane %v6625, 1
    %v6761 = vsel %vm2348, %v6759, %v6760
    %v6762 = vrot.slane %v6626, 1
    %v6763 = vrot.slane %v6627, 1
    %v6764 = vsel %vm2348, %v6762, %v6763
    %v6765 = vrot.slane %v6628, 1
    %v6766 = vrot.slane %v6629, 1
    %v6767 = vsel %vm2348, %v6765, %v6766
    %v6768 = vrot.slane %v6630, 1
    %v6769 = vrot.slane %v6631, 1
    %v6770 = vsel %vm2348, %v6768, %v6769
    %v6771 = vrot.slane %v6632, 1
    %v6772 = vrot.slane %v6633, 1
    %v6773 = vsel %vm2348, %v6771, %v6772
    %v6774 = vrot.slane %v6634, 1
    %v6775 = vrot.slane %v6635, 1
    %v6776 = vsel %vm2348, %v6774, %v6775
    %v6777 = vrot.slane %v6636, 1
    %v6778 = vrot.slane %v6637, 1
    %v6779 = vsel %vm2348, %v6777, %v6778
    %v6780 = vrot.slane %v6638, 1
    %v6781 = vrot.slane %v6639, 1
    %v6782 = vsel %vm2348, %v6780, %v6781
    %v6783 = vrot.slane %v6640, 1
    %v6784 = vrot.slane %v6641, 1
    %v6785 = vsel %vm2348, %v6783, %v6784
    %v6786 = vrot.slane %v6642, 1
    %v6787 = vrot.slane %v6643, 1
    %v6788 = vsel %vm2348, %v6786, %v6787
    %v6789 = vrot.slane %v6644, 1
    %v6790 = vrot.slane %v6645, 1
    %v6791 = vsel %vm2348, %v6789, %v6790
    %v6792 = vrot.slane %v6646, 1
    %v6793 = vrot.slane %v6647, 1
    %v6794 = vsel %vm2348, %v6792, %v6793
    %v6795 = vrot.slane %v6648, 1
    %v6796 = vrot.slane %v6649, 1
    %v6797 = vsel %vm2348, %v6795, %v6796
    %v6798 = vrot.slane %v6650, 1
    %v6799 = vrot.slane %v6651, 1
    %v6800 = vsel %vm2348, %v6798, %v6799
    %v6801 = vrot.slane %v6652, 1
    %v6802 = vrot.slane %v6653, 1
    %v6803 = vsel %vm2348, %v6801, %v6802
    %v6804 = vrot.slane %v6654, 1
    %v6805 = vrot.slane %v6655, 1
    %v6806 = vsel %vm2348, %v6804, %v6805
    %v6807 = vrot.slane %v6656, 1
    %v6808 = vrot.slane %v6657, 1
    %v6809 = vsel %vm2348, %v6807, %v6808
    %v6810 = vrot.slane %v6658, 1
    %v6811 = vrot.slane %v6659, 1
    %v6812 = vsel %vm2348, %v6810, %v6811
    %v6813 = vrot.slane %v6660, 1
    %v6814 = vrot.slane %v6661, 1
    %v6815 = vsel %vm2348, %v6813, %v6814
    %v6816 = vrot.slane %v6662, 1
    %v6817 = vrot.slane %v6663, 1
    %v6818 = vsel %vm2348, %v6816, %v6817
    %v6819 = vrot.slane %v6664, 1
    %v6820 = vrot.slane %v6665, 1
    %v6821 = vsel %vm2348, %v6819, %v6820
    %v6822 = vrot.slane %v6666, 1
    %v6823 = vrot.slane %v6667, 1
    %v6824 = vsel %vm2348, %v6822, %v6823
    %v6825 = vrot.slane %v6668, 1
    %v6826 = vrot.slane %v6669, 1
    %v6827 = vsel %vm2348, %v6825, %v6826
    %v6828 = vrot.slane %v6670, 1
    %v6829 = vrot.slane %v6671, 1
    %v6830 = vsel %vm2348, %v6828, %v6829
    %v6831 = vrot.slane %v6672, 1
    %v6832 = vrot.slane %v6673, 1
    %v6833 = vsel %vm2348, %v6831, %v6832
    %v6898 = vadd.f32 %v6546, %v6740
    %v6899 = vadd.f32 %v6547, %v6739
    %v6900 = vadd.f32 %v6548, %v6743
    %v6901 = vadd.f32 %v6549, %v6742
    %v6902 = vadd.f32 %v6550, %v6746
    %v6903 = vadd.f32 %v6551, %v6745
    %v6904 = vadd.f32 %v6552, %v6749
    %v6905 = vadd.f32 %v6553, %v6748
    %v6906 = vadd.f32 %v6554, %v6752
    %v6907 = vadd.f32 %v6555, %v6751
    %v6908 = vadd.f32 %v6556, %v6755
    %v6909 = vadd.f32 %v6557, %v6754
    %v6910 = vadd.f32 %v6558, %v6758
    %v6911 = vadd.f32 %v6559, %v6757
    %v6912 = vadd.f32 %v6560, %v6761
    %v6913 = vadd.f32 %v6561, %v6760
    %v6914 = vadd.f32 %v6562, %v6764
    %v6915 = vadd.f32 %v6563, %v6763
    %v6916 = vadd.f32 %v6564, %v6767
    %v6917 = vadd.f32 %v6565, %v6766
    %v6918 = vadd.f32 %v6566, %v6770
    %v6919 = vadd.f32 %v6567, %v6769
    %v6920 = vadd.f32 %v6568, %v6773
    %v6921 = vadd.f32 %v6569, %v6772
    %v6922 = vadd.f32 %v6570, %v6776
    %v6923 = vadd.f32 %v6571, %v6775
    %v6924 = vadd.f32 %v6572, %v6779
    %v6925 = vadd.f32 %v6573, %v6778
    %v6926 = vadd.f32 %v6574, %v6782
    %v6927 = vadd.f32 %v6575, %v6781
    %v6928 = vadd.f32 %v6576, %v6785
    %v6929 = vadd.f32 %v6577, %v6784
    %v6930 = vadd.f32 %v6578, %v6788
    %v6931 = vadd.f32 %v6579, %v6787
    %v6932 = vadd.f32 %v6580, %v6791
    %v6933 = vadd.f32 %v6581, %v6790
    %v6934 = vadd.f32 %v6582, %v6794
    %v6935 = vadd.f32 %v6583, %v6793
    %v6936 = vadd.f32 %v6584, %v6797
    %v6937 = vadd.f32 %v6585, %v6796
    %v6938 = vadd.f32 %v6586, %v6800
    %v6939 = vadd.f32 %v6587, %v6799
    %v6940 = vadd.f32 %v6588, %v6803
    %v6941 = vadd.f32 %v6589, %v6802
    %v6942 = vadd.f32 %v6590, %v6806
    %v6943 = vadd.f32 %v6591, %v6805
    %v6944 = vadd.f32 %v6592, %v6809
    %v6945 = vadd.f32 %v6593, %v6808
    %v6946 = vadd.f32 %v6594, %v6812
    %v6947 = vadd.f32 %v6595, %v6811
    %v6948 = vadd.f32 %v6596, %v6815
    %v6949 = vadd.f32 %v6597, %v6814
    %v6950 = vadd.f32 %v6598, %v6818
    %v6951 = vadd.f32 %v6599, %v6817
    %v6952 = vadd.f32 %v6600, %v6821
    %v6953 = vadd.f32 %v6601, %v6820
    %v6954 = vadd.f32 %v6602, %v6824
    %v6955 = vadd.f32 %v6603, %v6823
    %v6956 = vadd.f32 %v6604, %v6827
    %v6957 = vadd.f32 %v6605, %v6826
    %v6958 = vadd.f32 %v6606, %v6830
    %v6959 = vadd.f32 %v6607, %v6829
    %v6960 = vadd.f32 %v6608, %v6833
    %v6961 = vadd.f32 %v6609, %v6832
    %v6962 = vmul.f32 %v2575, %v6418
    %v6963 = vmul.f32 %v2575, %v6450
    %v6964 = vmul.f32 %v2579, %v6419
    %v6965 = vmul.f32 %v2579, %v6451
    %v6966 = vmul.f32 %v2583, %v6420
    %v6967 = vmul.f32 %v2583, %v6452
    %v6968 = vmul.f32 %v2587, %v6421
    %v6969 = vmul.f32 %v2587, %v6453
    %v6970 = vmul.f32 %v2591, %v6422
    %v6971 = vmul.f32 %v2591, %v6454
    %v6972 = vmul.f32 %v2595, %v6423
    %v6973 = vmul.f32 %v2595, %v6455
    %v6974 = vmul.f32 %v2599, %v6424
    %v6975 = vmul.f32 %v2599, %v6456
    %v6976 = vmul.f32 %v2603, %v6425
    %v6977 = vmul.f32 %v2603, %v6457
    %v6978 = vmul.f32 %v2607, %v6426
    %v6979 = vmul.f32 %v2607, %v6458
    %v6980 = vmul.f32 %v2611, %v6427
    %v6981 = vmul.f32 %v2611, %v6459
    %v6982 = vmul.f32 %v2615, %v6428
    %v6983 = vmul.f32 %v2615, %v6460
    %v6984 = vmul.f32 %v2619, %v6429
    %v6985 = vmul.f32 %v2619, %v6461
    %v6986 = vmul.f32 %v2623, %v6430
    %v6987 = vmul.f32 %v2623, %v6462
    %v6988 = vmul.f32 %v2627, %v6431
    %v6989 = vmul.f32 %v2627, %v6463
    %v6990 = vmul.f32 %v2631, %v6432
    %v6991 = vmul.f32 %v2631, %v6464
    %v6992 = vmul.f32 %v2635, %v6433
    %v6993 = vmul.f32 %v2635, %v6465
    %v6994 = vmul.f32 %v2639, %v6434
    %v6995 = vmul.f32 %v2639, %v6466
    %v6996 = vmul.f32 %v2643, %v6435
    %v6997 = vmul.f32 %v2643, %v6467
    %v6998 = vmul.f32 %v2647, %v6436
    %v6999 = vmul.f32 %v2647, %v6468
    %v7000 = vmul.f32 %v2651, %v6437
    %v7001 = vmul.f32 %v2651, %v6469
    %v7002 = vmul.f32 %v2655, %v6438
    %v7003 = vmul.f32 %v2655, %v6470
    %v7004 = vmul.f32 %v2659, %v6439
    %v7005 = vmul.f32 %v2659, %v6471
    %v7006 = vmul.f32 %v2663, %v6440
    %v7007 = vmul.f32 %v2663, %v6472
    %v7008 = vmul.f32 %v2667, %v6441
    %v7009 = vmul.f32 %v2667, %v6473
    %v7010 = vmul.f32 %v2671, %v6442
    %v7011 = vmul.f32 %v2671, %v6474
    %v7012 = vmul.f32 %v2675, %v6443
    %v7013 = vmul.f32 %v2675, %v6475
    %v7014 = vmul.f32 %v2679, %v6444
    %v7015 = vmul.f32 %v2679, %v6476
    %v7016 = vmul.f32 %v2683, %v6445
    %v7017 = vmul.f32 %v2683, %v6477
    %v7018 = vmul.f32 %v2687, %v6446
    %v7019 = vmul.f32 %v2687, %v6478
    %v7020 = vmul.f32 %v2691, %v6447
    %v7021 = vmul.f32 %v2691, %v6479
    %v7022 = vmul.f32 %v2695, %v6448
    %v7023 = vmul.f32 %v2695, %v6480
    %v7024 = vmul.f32 %v2699, %v6449
    %v7025 = vmul.f32 %v2699, %v6481
    %v7090 = vrot.slane %v6962, 2
    %v7091 = vrot.slane %v6963, 2
    %v7092 = vsel %vm2829, %v7090, %v7091
    %v7093 = vrot.slane %v6964, 2
    %v7094 = vrot.slane %v6965, 2
    %v7095 = vsel %vm2829, %v7093, %v7094
    %v7096 = vrot.slane %v6966, 2
    %v7097 = vrot.slane %v6967, 2
    %v7098 = vsel %vm2829, %v7096, %v7097
    %v7099 = vrot.slane %v6968, 2
    %v7100 = vrot.slane %v6969, 2
    %v7101 = vsel %vm2829, %v7099, %v7100
    %v7102 = vrot.slane %v6970, 2
    %v7103 = vrot.slane %v6971, 2
    %v7104 = vsel %vm2829, %v7102, %v7103
    %v7105 = vrot.slane %v6972, 2
    %v7106 = vrot.slane %v6973, 2
    %v7107 = vsel %vm2829, %v7105, %v7106
    %v7108 = vrot.slane %v6974, 2
    %v7109 = vrot.slane %v6975, 2
    %v7110 = vsel %vm2829, %v7108, %v7109
    %v7111 = vrot.slane %v6976, 2
    %v7112 = vrot.slane %v6977, 2
    %v7113 = vsel %vm2829, %v7111, %v7112
    %v7114 = vrot.slane %v6978, 2
    %v7115 = vrot.slane %v6979, 2
    %v7116 = vsel %vm2829, %v7114, %v7115
    %v7117 = vrot.slane %v6980, 2
    %v7118 = vrot.slane %v6981, 2
    %v7119 = vsel %vm2829, %v7117, %v7118
    %v7120 = vrot.slane %v6982, 2
    %v7121 = vrot.slane %v6983, 2
    %v7122 = vsel %vm2829, %v7120, %v7121
    %v7123 = vrot.slane %v6984, 2
    %v7124 = vrot.slane %v6985, 2
    %v7125 = vsel %vm2829, %v7123, %v7124
    %v7126 = vrot.slane %v6986, 2
    %v7127 = vrot.slane %v6987, 2
    %v7128 = vsel %vm2829, %v7126, %v7127
    %v7129 = vrot.slane %v6988, 2
    %v7130 = vrot.slane %v6989, 2
    %v7131 = vsel %vm2829, %v7129, %v7130
    %v7132 = vrot.slane %v6990, 2
    %v7133 = vrot.slane %v6991, 2
    %v7134 = vsel %vm2829, %v7132, %v7133
    %v7135 = vrot.slane %v6992, 2
    %v7136 = vrot.slane %v6993, 2
    %v7137 = vsel %vm2829, %v7135, %v7136
    %v7138 = vrot.slane %v6994, 2
    %v7139 = vrot.slane %v6995, 2
    %v7140 = vsel %vm2829, %v7138, %v7139
    %v7141 = vrot.slane %v6996, 2
    %v7142 = vrot.slane %v6997, 2
    %v7143 = vsel %vm2829, %v7141, %v7142
    %v7144 = vrot.slane %v6998, 2
    %v7145 = vrot.slane %v6999, 2
    %v7146 = vsel %vm2829, %v7144, %v7145
    %v7147 = vrot.slane %v7000, 2
    %v7148 = vrot.slane %v7001, 2
    %v7149 = vsel %vm2829, %v7147, %v7148
    %v7150 = vrot.slane %v7002, 2
    %v7151 = vrot.slane %v7003, 2
    %v7152 = vsel %vm2829, %v7150, %v7151
    %v7153 = vrot.slane %v7004, 2
    %v7154 = vrot.slane %v7005, 2
    %v7155 = vsel %vm2829, %v7153, %v7154
    %v7156 = vrot.slane %v7006, 2
    %v7157 = vrot.slane %v7007, 2
    %v7158 = vsel %vm2829, %v7156, %v7157
    %v7159 = vrot.slane %v7008, 2
    %v7160 = vrot.slane %v7009, 2
    %v7161 = vsel %vm2829, %v7159, %v7160
    %v7162 = vrot.slane %v7010, 2
    %v7163 = vrot.slane %v7011, 2
    %v7164 = vsel %vm2829, %v7162, %v7163
    %v7165 = vrot.slane %v7012, 2
    %v7166 = vrot.slane %v7013, 2
    %v7167 = vsel %vm2829, %v7165, %v7166
    %v7168 = vrot.slane %v7014, 2
    %v7169 = vrot.slane %v7015, 2
    %v7170 = vsel %vm2829, %v7168, %v7169
    %v7171 = vrot.slane %v7016, 2
    %v7172 = vrot.slane %v7017, 2
    %v7173 = vsel %vm2829, %v7171, %v7172
    %v7174 = vrot.slane %v7018, 2
    %v7175 = vrot.slane %v7019, 2
    %v7176 = vsel %vm2829, %v7174, %v7175
    %v7177 = vrot.slane %v7020, 2
    %v7178 = vrot.slane %v7021, 2
    %v7179 = vsel %vm2829, %v7177, %v7178
    %v7180 = vrot.slane %v7022, 2
    %v7181 = vrot.slane %v7023, 2
    %v7182 = vsel %vm2829, %v7180, %v7181
    %v7183 = vrot.slane %v7024, 2
    %v7184 = vrot.slane %v7025, 2
    %v7185 = vsel %vm2829, %v7183, %v7184
    %v7250 = vadd.f32 %v6898, %v7092
    %v7251 = vadd.f32 %v6899, %v7091
    %v7252 = vadd.f32 %v6900, %v7095
    %v7253 = vadd.f32 %v6901, %v7094
    %v7254 = vadd.f32 %v6902, %v7098
    %v7255 = vadd.f32 %v6903, %v7097
    %v7256 = vadd.f32 %v6904, %v7101
    %v7257 = vadd.f32 %v6905, %v7100
    %v7258 = vadd.f32 %v6906, %v7104
    %v7259 = vadd.f32 %v6907, %v7103
    %v7260 = vadd.f32 %v6908, %v7107
    %v7261 = vadd.f32 %v6909, %v7106
    %v7262 = vadd.f32 %v6910, %v7110
    %v7263 = vadd.f32 %v6911, %v7109
    %v7264 = vadd.f32 %v6912, %v7113
    %v7265 = vadd.f32 %v6913, %v7112
    %v7266 = vadd.f32 %v6914, %v7116
    %v7267 = vadd.f32 %v6915, %v7115
    %v7268 = vadd.f32 %v6916, %v7119
    %v7269 = vadd.f32 %v6917, %v7118
    %v7270 = vadd.f32 %v6918, %v7122
    %v7271 = vadd.f32 %v6919, %v7121
    %v7272 = vadd.f32 %v6920, %v7125
    %v7273 = vadd.f32 %v6921, %v7124
    %v7274 = vadd.f32 %v6922, %v7128
    %v7275 = vadd.f32 %v6923, %v7127
    %v7276 = vadd.f32 %v6924, %v7131
    %v7277 = vadd.f32 %v6925, %v7130
    %v7278 = vadd.f32 %v6926, %v7134
    %v7279 = vadd.f32 %v6927, %v7133
    %v7280 = vadd.f32 %v6928, %v7137
    %v7281 = vadd.f32 %v6929, %v7136
    %v7282 = vadd.f32 %v6930, %v7140
    %v7283 = vadd.f32 %v6931, %v7139
    %v7284 = vadd.f32 %v6932, %v7143
    %v7285 = vadd.f32 %v6933, %v7142
    %v7286 = vadd.f32 %v6934, %v7146
    %v7287 = vadd.f32 %v6935, %v7145
    %v7288 = vadd.f32 %v6936, %v7149
    %v7289 = vadd.f32 %v6937, %v7148
    %v7290 = vadd.f32 %v6938, %v7152
    %v7291 = vadd.f32 %v6939, %v7151
    %v7292 = vadd.f32 %v6940, %v7155
    %v7293 = vadd.f32 %v6941, %v7154
    %v7294 = vadd.f32 %v6942, %v7158
    %v7295 = vadd.f32 %v6943, %v7157
    %v7296 = vadd.f32 %v6944, %v7161
    %v7297 = vadd.f32 %v6945, %v7160
    %v7298 = vadd.f32 %v6946, %v7164
    %v7299 = vadd.f32 %v6947, %v7163
    %v7300 = vadd.f32 %v6948, %v7167
    %v7301 = vadd.f32 %v6949, %v7166
    %v7302 = vadd.f32 %v6950, %v7170
    %v7303 = vadd.f32 %v6951, %v7169
    %v7304 = vadd.f32 %v6952, %v7173
    %v7305 = vadd.f32 %v6953, %v7172
    %v7306 = vadd.f32 %v6954, %v7176
    %v7307 = vadd.f32 %v6955, %v7175
    %v7308 = vadd.f32 %v6956, %v7179
    %v7309 = vadd.f32 %v6957, %v7178
    %v7310 = vadd.f32 %v6958, %v7182
    %v7311 = vadd.f32 %v6959, %v7181
    %v7312 = vadd.f32 %v6960, %v7185
    %v7313 = vadd.f32 %v6961, %v7184
    %v7314 = vmul.f32 %v3056, %v6418
    %v7315 = vmul.f32 %v3056, %v6450
    %v7316 = vmul.f32 %v3060, %v6419
    %v7317 = vmul.f32 %v3060, %v6451
    %v7318 = vmul.f32 %v3064, %v6420
    %v7319 = vmul.f32 %v3064, %v6452
    %v7320 = vmul.f32 %v3068, %v6421
    %v7321 = vmul.f32 %v3068, %v6453
    %v7322 = vmul.f32 %v3072, %v6422
    %v7323 = vmul.f32 %v3072, %v6454
    %v7324 = vmul.f32 %v3076, %v6423
    %v7325 = vmul.f32 %v3076, %v6455
    %v7326 = vmul.f32 %v3080, %v6424
    %v7327 = vmul.f32 %v3080, %v6456
    %v7328 = vmul.f32 %v3084, %v6425
    %v7329 = vmul.f32 %v3084, %v6457
    %v7330 = vmul.f32 %v3088, %v6426
    %v7331 = vmul.f32 %v3088, %v6458
    %v7332 = vmul.f32 %v3092, %v6427
    %v7333 = vmul.f32 %v3092, %v6459
    %v7334 = vmul.f32 %v3096, %v6428
    %v7335 = vmul.f32 %v3096, %v6460
    %v7336 = vmul.f32 %v3100, %v6429
    %v7337 = vmul.f32 %v3100, %v6461
    %v7338 = vmul.f32 %v3104, %v6430
    %v7339 = vmul.f32 %v3104, %v6462
    %v7340 = vmul.f32 %v3108, %v6431
    %v7341 = vmul.f32 %v3108, %v6463
    %v7342 = vmul.f32 %v3112, %v6432
    %v7343 = vmul.f32 %v3112, %v6464
    %v7344 = vmul.f32 %v3116, %v6433
    %v7345 = vmul.f32 %v3116, %v6465
    %v7346 = vmul.f32 %v3120, %v6434
    %v7347 = vmul.f32 %v3120, %v6466
    %v7348 = vmul.f32 %v3124, %v6435
    %v7349 = vmul.f32 %v3124, %v6467
    %v7350 = vmul.f32 %v3128, %v6436
    %v7351 = vmul.f32 %v3128, %v6468
    %v7352 = vmul.f32 %v3132, %v6437
    %v7353 = vmul.f32 %v3132, %v6469
    %v7354 = vmul.f32 %v3136, %v6438
    %v7355 = vmul.f32 %v3136, %v6470
    %v7356 = vmul.f32 %v3140, %v6439
    %v7357 = vmul.f32 %v3140, %v6471
    %v7358 = vmul.f32 %v3144, %v6440
    %v7359 = vmul.f32 %v3144, %v6472
    %v7360 = vmul.f32 %v3148, %v6441
    %v7361 = vmul.f32 %v3148, %v6473
    %v7362 = vmul.f32 %v3152, %v6442
    %v7363 = vmul.f32 %v3152, %v6474
    %v7364 = vmul.f32 %v3156, %v6443
    %v7365 = vmul.f32 %v3156, %v6475
    %v7366 = vmul.f32 %v3160, %v6444
    %v7367 = vmul.f32 %v3160, %v6476
    %v7368 = vmul.f32 %v3164, %v6445
    %v7369 = vmul.f32 %v3164, %v6477
    %v7370 = vmul.f32 %v3168, %v6446
    %v7371 = vmul.f32 %v3168, %v6478
    %v7372 = vmul.f32 %v3172, %v6447
    %v7373 = vmul.f32 %v3172, %v6479
    %v7374 = vmul.f32 %v3176, %v6448
    %v7375 = vmul.f32 %v3176, %v6480
    %v7376 = vmul.f32 %v3180, %v6449
    %v7377 = vmul.f32 %v3180, %v6481
    %v7442 = vrot.slane %v7314, 3
    %v7443 = vrot.slane %v7315, 3
    %v7444 = vsel %vm3310, %v7442, %v7443
    %v7445 = vrot.slane %v7316, 3
    %v7446 = vrot.slane %v7317, 3
    %v7447 = vsel %vm3310, %v7445, %v7446
    %v7448 = vrot.slane %v7318, 3
    %v7449 = vrot.slane %v7319, 3
    %v7450 = vsel %vm3310, %v7448, %v7449
    %v7451 = vrot.slane %v7320, 3
    %v7452 = vrot.slane %v7321, 3
    %v7453 = vsel %vm3310, %v7451, %v7452
    %v7454 = vrot.slane %v7322, 3
    %v7455 = vrot.slane %v7323, 3
    %v7456 = vsel %vm3310, %v7454, %v7455
    %v7457 = vrot.slane %v7324, 3
    %v7458 = vrot.slane %v7325, 3
    %v7459 = vsel %vm3310, %v7457, %v7458
    %v7460 = vrot.slane %v7326, 3
    %v7461 = vrot.slane %v7327, 3
    %v7462 = vsel %vm3310, %v7460, %v7461
    %v7463 = vrot.slane %v7328, 3
    %v7464 = vrot.slane %v7329, 3
    %v7465 = vsel %vm3310, %v7463, %v7464
    %v7466 = vrot.slane %v7330, 3
    %v7467 = vrot.slane %v7331, 3
    %v7468 = vsel %vm3310, %v7466, %v7467
    %v7469 = vrot.slane %v7332, 3
    %v7470 = vrot.slane %v7333, 3
    %v7471 = vsel %vm3310, %v7469, %v7470
    %v7472 = vrot.slane %v7334, 3
    %v7473 = vrot.slane %v7335, 3
    %v7474 = vsel %vm3310, %v7472, %v7473
    %v7475 = vrot.slane %v7336, 3
    %v7476 = vrot.slane %v7337, 3
    %v7477 = vsel %vm3310, %v7475, %v7476
    %v7478 = vrot.slane %v7338, 3
    %v7479 = vrot.slane %v7339, 3
    %v7480 = vsel %vm3310, %v7478, %v7479
    %v7481 = vrot.slane %v7340, 3
    %v7482 = vrot.slane %v7341, 3
    %v7483 = vsel %vm3310, %v7481, %v7482
    %v7484 = vrot.slane %v7342, 3
    %v7485 = vrot.slane %v7343, 3
    %v7486 = vsel %vm3310, %v7484, %v7485
    %v7487 = vrot.slane %v7344, 3
    %v7488 = vrot.slane %v7345, 3
    %v7489 = vsel %vm3310, %v7487, %v7488
    %v7490 = vrot.slane %v7346, 3
    %v7491 = vrot.slane %v7347, 3
    %v7492 = vsel %vm3310, %v7490, %v7491
    %v7493 = vrot.slane %v7348, 3
    %v7494 = vrot.slane %v7349, 3
    %v7495 = vsel %vm3310, %v7493, %v7494
    %v7496 = vrot.slane %v7350, 3
    %v7497 = vrot.slane %v7351, 3
    %v7498 = vsel %vm3310, %v7496, %v7497
    %v7499 = vrot.slane %v7352, 3
    %v7500 = vrot.slane %v7353, 3
    %v7501 = vsel %vm3310, %v7499, %v7500
    %v7502 = vrot.slane %v7354, 3
    %v7503 = vrot.slane %v7355, 3
    %v7504 = vsel %vm3310, %v7502, %v7503
    %v7505 = vrot.slane %v7356, 3
    %v7506 = vrot.slane %v7357, 3
    %v7507 = vsel %vm3310, %v7505, %v7506
    %v7508 = vrot.slane %v7358, 3
    %v7509 = vrot.slane %v7359, 3
    %v7510 = vsel %vm3310, %v7508, %v7509
    %v7511 = vrot.slane %v7360, 3
    %v7512 = vrot.slane %v7361, 3
    %v7513 = vsel %vm3310, %v7511, %v7512
    %v7514 = vrot.slane %v7362, 3
    %v7515 = vrot.slane %v7363, 3
    %v7516 = vsel %vm3310, %v7514, %v7515
    %v7517 = vrot.slane %v7364, 3
    %v7518 = vrot.slane %v7365, 3
    %v7519 = vsel %vm3310, %v7517, %v7518
    %v7520 = vrot.slane %v7366, 3
    %v7521 = vrot.slane %v7367, 3
    %v7522 = vsel %vm3310, %v7520, %v7521
    %v7523 = vrot.slane %v7368, 3
    %v7524 = vrot.slane %v7369, 3
    %v7525 = vsel %vm3310, %v7523, %v7524
    %v7526 = vrot.slane %v7370, 3
    %v7527 = vrot.slane %v7371, 3
    %v7528 = vsel %vm3310, %v7526, %v7527
    %v7529 = vrot.slane %v7372, 3
    %v7530 = vrot.slane %v7373, 3
    %v7531 = vsel %vm3310, %v7529, %v7530
    %v7532 = vrot.slane %v7374, 3
    %v7533 = vrot.slane %v7375, 3
    %v7534 = vsel %vm3310, %v7532, %v7533
    %v7535 = vrot.slane %v7376, 3
    %v7536 = vrot.slane %v7377, 3
    %v7537 = vsel %vm3310, %v7535, %v7536
    %v7602 = vadd.f32 %v7250, %v7444
    %v7603 = vadd.f32 %v7251, %v7443
    %v7604 = vadd.f32 %v7252, %v7447
    %v7605 = vadd.f32 %v7253, %v7446
    %v7606 = vadd.f32 %v7254, %v7450
    %v7607 = vadd.f32 %v7255, %v7449
    %v7608 = vadd.f32 %v7256, %v7453
    %v7609 = vadd.f32 %v7257, %v7452
    %v7610 = vadd.f32 %v7258, %v7456
    %v7611 = vadd.f32 %v7259, %v7455
    %v7612 = vadd.f32 %v7260, %v7459
    %v7613 = vadd.f32 %v7261, %v7458
    %v7614 = vadd.f32 %v7262, %v7462
    %v7615 = vadd.f32 %v7263, %v7461
    %v7616 = vadd.f32 %v7264, %v7465
    %v7617 = vadd.f32 %v7265, %v7464
    %v7618 = vadd.f32 %v7266, %v7468
    %v7619 = vadd.f32 %v7267, %v7467
    %v7620 = vadd.f32 %v7268, %v7471
    %v7621 = vadd.f32 %v7269, %v7470
    %v7622 = vadd.f32 %v7270, %v7474
    %v7623 = vadd.f32 %v7271, %v7473
    %v7624 = vadd.f32 %v7272, %v7477
    %v7625 = vadd.f32 %v7273, %v7476
    %v7626 = vadd.f32 %v7274, %v7480
    %v7627 = vadd.f32 %v7275, %v7479
    %v7628 = vadd.f32 %v7276, %v7483
    %v7629 = vadd.f32 %v7277, %v7482
    %v7630 = vadd.f32 %v7278, %v7486
    %v7631 = vadd.f32 %v7279, %v7485
    %v7632 = vadd.f32 %v7280, %v7489
    %v7633 = vadd.f32 %v7281, %v7488
    %v7634 = vadd.f32 %v7282, %v7492
    %v7635 = vadd.f32 %v7283, %v7491
    %v7636 = vadd.f32 %v7284, %v7495
    %v7637 = vadd.f32 %v7285, %v7494
    %v7638 = vadd.f32 %v7286, %v7498
    %v7639 = vadd.f32 %v7287, %v7497
    %v7640 = vadd.f32 %v7288, %v7501
    %v7641 = vadd.f32 %v7289, %v7500
    %v7642 = vadd.f32 %v7290, %v7504
    %v7643 = vadd.f32 %v7291, %v7503
    %v7644 = vadd.f32 %v7292, %v7507
    %v7645 = vadd.f32 %v7293, %v7506
    %v7646 = vadd.f32 %v7294, %v7510
    %v7647 = vadd.f32 %v7295, %v7509
    %v7648 = vadd.f32 %v7296, %v7513
    %v7649 = vadd.f32 %v7297, %v7512
    %v7650 = vadd.f32 %v7298, %v7516
    %v7651 = vadd.f32 %v7299, %v7515
    %v7652 = vadd.f32 %v7300, %v7519
    %v7653 = vadd.f32 %v7301, %v7518
    %v7654 = vadd.f32 %v7302, %v7522
    %v7655 = vadd.f32 %v7303, %v7521
    %v7656 = vadd.f32 %v7304, %v7525
    %v7657 = vadd.f32 %v7305, %v7524
    %v7658 = vadd.f32 %v7306, %v7528
    %v7659 = vadd.f32 %v7307, %v7527
    %v7660 = vadd.f32 %v7308, %v7531
    %v7661 = vadd.f32 %v7309, %v7530
    %v7662 = vadd.f32 %v7310, %v7534
    %v7663 = vadd.f32 %v7311, %v7533
    %v7664 = vadd.f32 %v7312, %v7537
    %v7665 = vadd.f32 %v7313, %v7536
    %v7666 = vmul.f32 %v3537, %v6418
    %v7667 = vmul.f32 %v3537, %v6450
    %v7668 = vmul.f32 %v3541, %v6419
    %v7669 = vmul.f32 %v3541, %v6451
    %v7670 = vmul.f32 %v3545, %v6420
    %v7671 = vmul.f32 %v3545, %v6452
    %v7672 = vmul.f32 %v3549, %v6421
    %v7673 = vmul.f32 %v3549, %v6453
    %v7674 = vmul.f32 %v3553, %v6422
    %v7675 = vmul.f32 %v3553, %v6454
    %v7676 = vmul.f32 %v3557, %v6423
    %v7677 = vmul.f32 %v3557, %v6455
    %v7678 = vmul.f32 %v3561, %v6424
    %v7679 = vmul.f32 %v3561, %v6456
    %v7680 = vmul.f32 %v3565, %v6425
    %v7681 = vmul.f32 %v3565, %v6457
    %v7682 = vmul.f32 %v3569, %v6426
    %v7683 = vmul.f32 %v3569, %v6458
    %v7684 = vmul.f32 %v3573, %v6427
    %v7685 = vmul.f32 %v3573, %v6459
    %v7686 = vmul.f32 %v3577, %v6428
    %v7687 = vmul.f32 %v3577, %v6460
    %v7688 = vmul.f32 %v3581, %v6429
    %v7689 = vmul.f32 %v3581, %v6461
    %v7690 = vmul.f32 %v3585, %v6430
    %v7691 = vmul.f32 %v3585, %v6462
    %v7692 = vmul.f32 %v3589, %v6431
    %v7693 = vmul.f32 %v3589, %v6463
    %v7694 = vmul.f32 %v3593, %v6432
    %v7695 = vmul.f32 %v3593, %v6464
    %v7696 = vmul.f32 %v3597, %v6433
    %v7697 = vmul.f32 %v3597, %v6465
    %v7698 = vmul.f32 %v3601, %v6434
    %v7699 = vmul.f32 %v3601, %v6466
    %v7700 = vmul.f32 %v3605, %v6435
    %v7701 = vmul.f32 %v3605, %v6467
    %v7702 = vmul.f32 %v3609, %v6436
    %v7703 = vmul.f32 %v3609, %v6468
    %v7704 = vmul.f32 %v3613, %v6437
    %v7705 = vmul.f32 %v3613, %v6469
    %v7706 = vmul.f32 %v3617, %v6438
    %v7707 = vmul.f32 %v3617, %v6470
    %v7708 = vmul.f32 %v3621, %v6439
    %v7709 = vmul.f32 %v3621, %v6471
    %v7710 = vmul.f32 %v3625, %v6440
    %v7711 = vmul.f32 %v3625, %v6472
    %v7712 = vmul.f32 %v3629, %v6441
    %v7713 = vmul.f32 %v3629, %v6473
    %v7714 = vmul.f32 %v3633, %v6442
    %v7715 = vmul.f32 %v3633, %v6474
    %v7716 = vmul.f32 %v3637, %v6443
    %v7717 = vmul.f32 %v3637, %v6475
    %v7718 = vmul.f32 %v3641, %v6444
    %v7719 = vmul.f32 %v3641, %v6476
    %v7720 = vmul.f32 %v3645, %v6445
    %v7721 = vmul.f32 %v3645, %v6477
    %v7722 = vmul.f32 %v3649, %v6446
    %v7723 = vmul.f32 %v3649, %v6478
    %v7724 = vmul.f32 %v3653, %v6447
    %v7725 = vmul.f32 %v3653, %v6479
    %v7726 = vmul.f32 %v3657, %v6448
    %v7727 = vmul.f32 %v3657, %v6480
    %v7728 = vmul.f32 %v3661, %v6449
    %v7729 = vmul.f32 %v3661, %v6481
    %v7794 = vrot.slane %v7666, 4
    %v7795 = vrot.slane %v7667, 4
    %v7796 = vsel %vm1771, %v7794, %v7795
    %v7797 = vrot.slane %v7668, 4
    %v7798 = vrot.slane %v7669, 4
    %v7799 = vsel %vm1771, %v7797, %v7798
    %v7800 = vrot.slane %v7670, 4
    %v7801 = vrot.slane %v7671, 4
    %v7802 = vsel %vm1771, %v7800, %v7801
    %v7803 = vrot.slane %v7672, 4
    %v7804 = vrot.slane %v7673, 4
    %v7805 = vsel %vm1771, %v7803, %v7804
    %v7806 = vrot.slane %v7674, 4
    %v7807 = vrot.slane %v7675, 4
    %v7808 = vsel %vm1771, %v7806, %v7807
    %v7809 = vrot.slane %v7676, 4
    %v7810 = vrot.slane %v7677, 4
    %v7811 = vsel %vm1771, %v7809, %v7810
    %v7812 = vrot.slane %v7678, 4
    %v7813 = vrot.slane %v7679, 4
    %v7814 = vsel %vm1771, %v7812, %v7813
    %v7815 = vrot.slane %v7680, 4
    %v7816 = vrot.slane %v7681, 4
    %v7817 = vsel %vm1771, %v7815, %v7816
    %v7818 = vrot.slane %v7682, 4
    %v7819 = vrot.slane %v7683, 4
    %v7820 = vsel %vm1771, %v7818, %v7819
    %v7821 = vrot.slane %v7684, 4
    %v7822 = vrot.slane %v7685, 4
    %v7823 = vsel %vm1771, %v7821, %v7822
    %v7824 = vrot.slane %v7686, 4
    %v7825 = vrot.slane %v7687, 4
    %v7826 = vsel %vm1771, %v7824, %v7825
    %v7827 = vrot.slane %v7688, 4
    %v7828 = vrot.slane %v7689, 4
    %v7829 = vsel %vm1771, %v7827, %v7828
    %v7830 = vrot.slane %v7690, 4
    %v7831 = vrot.slane %v7691, 4
    %v7832 = vsel %vm1771, %v7830, %v7831
    %v7833 = vrot.slane %v7692, 4
    %v7834 = vrot.slane %v7693, 4
    %v7835 = vsel %vm1771, %v7833, %v7834
    %v7836 = vrot.slane %v7694, 4
    %v7837 = vrot.slane %v7695, 4
    %v7838 = vsel %vm1771, %v7836, %v7837
    %v7839 = vrot.slane %v7696, 4
    %v7840 = vrot.slane %v7697, 4
    %v7841 = vsel %vm1771, %v7839, %v7840
    %v7842 = vrot.slane %v7698, 4
    %v7843 = vrot.slane %v7699, 4
    %v7844 = vsel %vm1771, %v7842, %v7843
    %v7845 = vrot.slane %v7700, 4
    %v7846 = vrot.slane %v7701, 4
    %v7847 = vsel %vm1771, %v7845, %v7846
    %v7848 = vrot.slane %v7702, 4
    %v7849 = vrot.slane %v7703, 4
    %v7850 = vsel %vm1771, %v7848, %v7849
    %v7851 = vrot.slane %v7704, 4
    %v7852 = vrot.slane %v7705, 4
    %v7853 = vsel %vm1771, %v7851, %v7852
    %v7854 = vrot.slane %v7706, 4
    %v7855 = vrot.slane %v7707, 4
    %v7856 = vsel %vm1771, %v7854, %v7855
    %v7857 = vrot.slane %v7708, 4
    %v7858 = vrot.slane %v7709, 4
    %v7859 = vsel %vm1771, %v7857, %v7858
    %v7860 = vrot.slane %v7710, 4
    %v7861 = vrot.slane %v7711, 4
    %v7862 = vsel %vm1771, %v7860, %v7861
    %v7863 = vrot.slane %v7712, 4
    %v7864 = vrot.slane %v7713, 4
    %v7865 = vsel %vm1771, %v7863, %v7864
    %v7866 = vrot.slane %v7714, 4
    %v7867 = vrot.slane %v7715, 4
    %v7868 = vsel %vm1771, %v7866, %v7867
    %v7869 = vrot.slane %v7716, 4
    %v7870 = vrot.slane %v7717, 4
    %v7871 = vsel %vm1771, %v7869, %v7870
    %v7872 = vrot.slane %v7718, 4
    %v7873 = vrot.slane %v7719, 4
    %v7874 = vsel %vm1771, %v7872, %v7873
    %v7875 = vrot.slane %v7720, 4
    %v7876 = vrot.slane %v7721, 4
    %v7877 = vsel %vm1771, %v7875, %v7876
    %v7878 = vrot.slane %v7722, 4
    %v7879 = vrot.slane %v7723, 4
    %v7880 = vsel %vm1771, %v7878, %v7879
    %v7881 = vrot.slane %v7724, 4
    %v7882 = vrot.slane %v7725, 4
    %v7883 = vsel %vm1771, %v7881, %v7882
    %v7884 = vrot.slane %v7726, 4
    %v7885 = vrot.slane %v7727, 4
    %v7886 = vsel %vm1771, %v7884, %v7885
    %v7887 = vrot.slane %v7728, 4
    %v7888 = vrot.slane %v7729, 4
    %v7889 = vsel %vm1771, %v7887, %v7888
    %v7954 = vadd.f32 %v7602, %v7796
    %v7955 = vadd.f32 %v7603, %v7795
    %v7956 = vadd.f32 %v7604, %v7799
    %v7957 = vadd.f32 %v7605, %v7798
    %v7958 = vadd.f32 %v7606, %v7802
    %v7959 = vadd.f32 %v7607, %v7801
    %v7960 = vadd.f32 %v7608, %v7805
    %v7961 = vadd.f32 %v7609, %v7804
    %v7962 = vadd.f32 %v7610, %v7808
    %v7963 = vadd.f32 %v7611, %v7807
    %v7964 = vadd.f32 %v7612, %v7811
    %v7965 = vadd.f32 %v7613, %v7810
    %v7966 = vadd.f32 %v7614, %v7814
    %v7967 = vadd.f32 %v7615, %v7813
    %v7968 = vadd.f32 %v7616, %v7817
    %v7969 = vadd.f32 %v7617, %v7816
    %v7970 = vadd.f32 %v7618, %v7820
    %v7971 = vadd.f32 %v7619, %v7819
    %v7972 = vadd.f32 %v7620, %v7823
    %v7973 = vadd.f32 %v7621, %v7822
    %v7974 = vadd.f32 %v7622, %v7826
    %v7975 = vadd.f32 %v7623, %v7825
    %v7976 = vadd.f32 %v7624, %v7829
    %v7977 = vadd.f32 %v7625, %v7828
    %v7978 = vadd.f32 %v7626, %v7832
    %v7979 = vadd.f32 %v7627, %v7831
    %v7980 = vadd.f32 %v7628, %v7835
    %v7981 = vadd.f32 %v7629, %v7834
    %v7982 = vadd.f32 %v7630, %v7838
    %v7983 = vadd.f32 %v7631, %v7837
    %v7984 = vadd.f32 %v7632, %v7841
    %v7985 = vadd.f32 %v7633, %v7840
    %v7986 = vadd.f32 %v7634, %v7844
    %v7987 = vadd.f32 %v7635, %v7843
    %v7988 = vadd.f32 %v7636, %v7847
    %v7989 = vadd.f32 %v7637, %v7846
    %v7990 = vadd.f32 %v7638, %v7850
    %v7991 = vadd.f32 %v7639, %v7849
    %v7992 = vadd.f32 %v7640, %v7853
    %v7993 = vadd.f32 %v7641, %v7852
    %v7994 = vadd.f32 %v7642, %v7856
    %v7995 = vadd.f32 %v7643, %v7855
    %v7996 = vadd.f32 %v7644, %v7859
    %v7997 = vadd.f32 %v7645, %v7858
    %v7998 = vadd.f32 %v7646, %v7862
    %v7999 = vadd.f32 %v7647, %v7861
    %v8000 = vadd.f32 %v7648, %v7865
    %v8001 = vadd.f32 %v7649, %v7864
    %v8002 = vadd.f32 %v7650, %v7868
    %v8003 = vadd.f32 %v7651, %v7867
    %v8004 = vadd.f32 %v7652, %v7871
    %v8005 = vadd.f32 %v7653, %v7870
    %v8006 = vadd.f32 %v7654, %v7874
    %v8007 = vadd.f32 %v7655, %v7873
    %v8008 = vadd.f32 %v7656, %v7877
    %v8009 = vadd.f32 %v7657, %v7876
    %v8010 = vadd.f32 %v7658, %v7880
    %v8011 = vadd.f32 %v7659, %v7879
    %v8012 = vadd.f32 %v7660, %v7883
    %v8013 = vadd.f32 %v7661, %v7882
    %v8014 = vadd.f32 %v7662, %v7886
    %v8015 = vadd.f32 %v7663, %v7885
    %v8016 = vadd.f32 %v7664, %v7889
    %v8017 = vadd.f32 %v7665, %v7888
    %v8018 = vmul.f32 %v4017, %v6418
    %v8019 = vmul.f32 %v4017, %v6450
    %v8020 = vmul.f32 %v4021, %v6419
    %v8021 = vmul.f32 %v4021, %v6451
    %v8022 = vmul.f32 %v4025, %v6420
    %v8023 = vmul.f32 %v4025, %v6452
    %v8024 = vmul.f32 %v4029, %v6421
    %v8025 = vmul.f32 %v4029, %v6453
    %v8026 = vmul.f32 %v4033, %v6422
    %v8027 = vmul.f32 %v4033, %v6454
    %v8028 = vmul.f32 %v4037, %v6423
    %v8029 = vmul.f32 %v4037, %v6455
    %v8030 = vmul.f32 %v4041, %v6424
    %v8031 = vmul.f32 %v4041, %v6456
    %v8032 = vmul.f32 %v4045, %v6425
    %v8033 = vmul.f32 %v4045, %v6457
    %v8034 = vmul.f32 %v4049, %v6426
    %v8035 = vmul.f32 %v4049, %v6458
    %v8036 = vmul.f32 %v4053, %v6427
    %v8037 = vmul.f32 %v4053, %v6459
    %v8038 = vmul.f32 %v4057, %v6428
    %v8039 = vmul.f32 %v4057, %v6460
    %v8040 = vmul.f32 %v4061, %v6429
    %v8041 = vmul.f32 %v4061, %v6461
    %v8042 = vmul.f32 %v4065, %v6430
    %v8043 = vmul.f32 %v4065, %v6462
    %v8044 = vmul.f32 %v4069, %v6431
    %v8045 = vmul.f32 %v4069, %v6463
    %v8046 = vmul.f32 %v4073, %v6432
    %v8047 = vmul.f32 %v4073, %v6464
    %v8048 = vmul.f32 %v4077, %v6433
    %v8049 = vmul.f32 %v4077, %v6465
    %v8050 = vmul.f32 %v4081, %v6434
    %v8051 = vmul.f32 %v4081, %v6466
    %v8052 = vmul.f32 %v4085, %v6435
    %v8053 = vmul.f32 %v4085, %v6467
    %v8054 = vmul.f32 %v4089, %v6436
    %v8055 = vmul.f32 %v4089, %v6468
    %v8056 = vmul.f32 %v4093, %v6437
    %v8057 = vmul.f32 %v4093, %v6469
    %v8058 = vmul.f32 %v4097, %v6438
    %v8059 = vmul.f32 %v4097, %v6470
    %v8060 = vmul.f32 %v4101, %v6439
    %v8061 = vmul.f32 %v4101, %v6471
    %v8062 = vmul.f32 %v4105, %v6440
    %v8063 = vmul.f32 %v4105, %v6472
    %v8064 = vmul.f32 %v4109, %v6441
    %v8065 = vmul.f32 %v4109, %v6473
    %v8066 = vmul.f32 %v4113, %v6442
    %v8067 = vmul.f32 %v4113, %v6474
    %v8068 = vmul.f32 %v4117, %v6443
    %v8069 = vmul.f32 %v4117, %v6475
    %v8070 = vmul.f32 %v4121, %v6444
    %v8071 = vmul.f32 %v4121, %v6476
    %v8072 = vmul.f32 %v4125, %v6445
    %v8073 = vmul.f32 %v4125, %v6477
    %v8074 = vmul.f32 %v4129, %v6446
    %v8075 = vmul.f32 %v4129, %v6478
    %v8076 = vmul.f32 %v4133, %v6447
    %v8077 = vmul.f32 %v4133, %v6479
    %v8078 = vmul.f32 %v4137, %v6448
    %v8079 = vmul.f32 %v4137, %v6480
    %v8080 = vmul.f32 %v4141, %v6449
    %v8081 = vmul.f32 %v4141, %v6481
    %v8146 = vrot.slane %v8018, 5
    %v8147 = vrot.slane %v8019, 5
    %v8148 = vsel %vm4271, %v8146, %v8147
    %v8149 = vrot.slane %v8020, 5
    %v8150 = vrot.slane %v8021, 5
    %v8151 = vsel %vm4271, %v8149, %v8150
    %v8152 = vrot.slane %v8022, 5
    %v8153 = vrot.slane %v8023, 5
    %v8154 = vsel %vm4271, %v8152, %v8153
    %v8155 = vrot.slane %v8024, 5
    %v8156 = vrot.slane %v8025, 5
    %v8157 = vsel %vm4271, %v8155, %v8156
    %v8158 = vrot.slane %v8026, 5
    %v8159 = vrot.slane %v8027, 5
    %v8160 = vsel %vm4271, %v8158, %v8159
    %v8161 = vrot.slane %v8028, 5
    %v8162 = vrot.slane %v8029, 5
    %v8163 = vsel %vm4271, %v8161, %v8162
    %v8164 = vrot.slane %v8030, 5
    %v8165 = vrot.slane %v8031, 5
    %v8166 = vsel %vm4271, %v8164, %v8165
    %v8167 = vrot.slane %v8032, 5
    %v8168 = vrot.slane %v8033, 5
    %v8169 = vsel %vm4271, %v8167, %v8168
    %v8170 = vrot.slane %v8034, 5
    %v8171 = vrot.slane %v8035, 5
    %v8172 = vsel %vm4271, %v8170, %v8171
    %v8173 = vrot.slane %v8036, 5
    %v8174 = vrot.slane %v8037, 5
    %v8175 = vsel %vm4271, %v8173, %v8174
    %v8176 = vrot.slane %v8038, 5
    %v8177 = vrot.slane %v8039, 5
    %v8178 = vsel %vm4271, %v8176, %v8177
    %v8179 = vrot.slane %v8040, 5
    %v8180 = vrot.slane %v8041, 5
    %v8181 = vsel %vm4271, %v8179, %v8180
    %v8182 = vrot.slane %v8042, 5
    %v8183 = vrot.slane %v8043, 5
    %v8184 = vsel %vm4271, %v8182, %v8183
    %v8185 = vrot.slane %v8044, 5
    %v8186 = vrot.slane %v8045, 5
    %v8187 = vsel %vm4271, %v8185, %v8186
    %v8188 = vrot.slane %v8046, 5
    %v8189 = vrot.slane %v8047, 5
    %v8190 = vsel %vm4271, %v8188, %v8189
    %v8191 = vrot.slane %v8048, 5
    %v8192 = vrot.slane %v8049, 5
    %v8193 = vsel %vm4271, %v8191, %v8192
    %v8194 = vrot.slane %v8050, 5
    %v8195 = vrot.slane %v8051, 5
    %v8196 = vsel %vm4271, %v8194, %v8195
    %v8197 = vrot.slane %v8052, 5
    %v8198 = vrot.slane %v8053, 5
    %v8199 = vsel %vm4271, %v8197, %v8198
    %v8200 = vrot.slane %v8054, 5
    %v8201 = vrot.slane %v8055, 5
    %v8202 = vsel %vm4271, %v8200, %v8201
    %v8203 = vrot.slane %v8056, 5
    %v8204 = vrot.slane %v8057, 5
    %v8205 = vsel %vm4271, %v8203, %v8204
    %v8206 = vrot.slane %v8058, 5
    %v8207 = vrot.slane %v8059, 5
    %v8208 = vsel %vm4271, %v8206, %v8207
    %v8209 = vrot.slane %v8060, 5
    %v8210 = vrot.slane %v8061, 5
    %v8211 = vsel %vm4271, %v8209, %v8210
    %v8212 = vrot.slane %v8062, 5
    %v8213 = vrot.slane %v8063, 5
    %v8214 = vsel %vm4271, %v8212, %v8213
    %v8215 = vrot.slane %v8064, 5
    %v8216 = vrot.slane %v8065, 5
    %v8217 = vsel %vm4271, %v8215, %v8216
    %v8218 = vrot.slane %v8066, 5
    %v8219 = vrot.slane %v8067, 5
    %v8220 = vsel %vm4271, %v8218, %v8219
    %v8221 = vrot.slane %v8068, 5
    %v8222 = vrot.slane %v8069, 5
    %v8223 = vsel %vm4271, %v8221, %v8222
    %v8224 = vrot.slane %v8070, 5
    %v8225 = vrot.slane %v8071, 5
    %v8226 = vsel %vm4271, %v8224, %v8225
    %v8227 = vrot.slane %v8072, 5
    %v8228 = vrot.slane %v8073, 5
    %v8229 = vsel %vm4271, %v8227, %v8228
    %v8230 = vrot.slane %v8074, 5
    %v8231 = vrot.slane %v8075, 5
    %v8232 = vsel %vm4271, %v8230, %v8231
    %v8233 = vrot.slane %v8076, 5
    %v8234 = vrot.slane %v8077, 5
    %v8235 = vsel %vm4271, %v8233, %v8234
    %v8236 = vrot.slane %v8078, 5
    %v8237 = vrot.slane %v8079, 5
    %v8238 = vsel %vm4271, %v8236, %v8237
    %v8239 = vrot.slane %v8080, 5
    %v8240 = vrot.slane %v8081, 5
    %v8241 = vsel %vm4271, %v8239, %v8240
    %v8306 = vadd.f32 %v7954, %v8148
    %v8307 = vadd.f32 %v7955, %v8147
    %v8308 = vadd.f32 %v7956, %v8151
    %v8309 = vadd.f32 %v7957, %v8150
    %v8310 = vadd.f32 %v7958, %v8154
    %v8311 = vadd.f32 %v7959, %v8153
    %v8312 = vadd.f32 %v7960, %v8157
    %v8313 = vadd.f32 %v7961, %v8156
    %v8314 = vadd.f32 %v7962, %v8160
    %v8315 = vadd.f32 %v7963, %v8159
    %v8316 = vadd.f32 %v7964, %v8163
    %v8317 = vadd.f32 %v7965, %v8162
    %v8318 = vadd.f32 %v7966, %v8166
    %v8319 = vadd.f32 %v7967, %v8165
    %v8320 = vadd.f32 %v7968, %v8169
    %v8321 = vadd.f32 %v7969, %v8168
    %v8322 = vadd.f32 %v7970, %v8172
    %v8323 = vadd.f32 %v7971, %v8171
    %v8324 = vadd.f32 %v7972, %v8175
    %v8325 = vadd.f32 %v7973, %v8174
    %v8326 = vadd.f32 %v7974, %v8178
    %v8327 = vadd.f32 %v7975, %v8177
    %v8328 = vadd.f32 %v7976, %v8181
    %v8329 = vadd.f32 %v7977, %v8180
    %v8330 = vadd.f32 %v7978, %v8184
    %v8331 = vadd.f32 %v7979, %v8183
    %v8332 = vadd.f32 %v7980, %v8187
    %v8333 = vadd.f32 %v7981, %v8186
    %v8334 = vadd.f32 %v7982, %v8190
    %v8335 = vadd.f32 %v7983, %v8189
    %v8336 = vadd.f32 %v7984, %v8193
    %v8337 = vadd.f32 %v7985, %v8192
    %v8338 = vadd.f32 %v7986, %v8196
    %v8339 = vadd.f32 %v7987, %v8195
    %v8340 = vadd.f32 %v7988, %v8199
    %v8341 = vadd.f32 %v7989, %v8198
    %v8342 = vadd.f32 %v7990, %v8202
    %v8343 = vadd.f32 %v7991, %v8201
    %v8344 = vadd.f32 %v7992, %v8205
    %v8345 = vadd.f32 %v7993, %v8204
    %v8346 = vadd.f32 %v7994, %v8208
    %v8347 = vadd.f32 %v7995, %v8207
    %v8348 = vadd.f32 %v7996, %v8211
    %v8349 = vadd.f32 %v7997, %v8210
    %v8350 = vadd.f32 %v7998, %v8214
    %v8351 = vadd.f32 %v7999, %v8213
    %v8352 = vadd.f32 %v8000, %v8217
    %v8353 = vadd.f32 %v8001, %v8216
    %v8354 = vadd.f32 %v8002, %v8220
    %v8355 = vadd.f32 %v8003, %v8219
    %v8356 = vadd.f32 %v8004, %v8223
    %v8357 = vadd.f32 %v8005, %v8222
    %v8358 = vadd.f32 %v8006, %v8226
    %v8359 = vadd.f32 %v8007, %v8225
    %v8360 = vadd.f32 %v8008, %v8229
    %v8361 = vadd.f32 %v8009, %v8228
    %v8362 = vadd.f32 %v8010, %v8232
    %v8363 = vadd.f32 %v8011, %v8231
    %v8364 = vadd.f32 %v8012, %v8235
    %v8365 = vadd.f32 %v8013, %v8234
    %v8366 = vadd.f32 %v8014, %v8238
    %v8367 = vadd.f32 %v8015, %v8237
    %v8368 = vadd.f32 %v8016, %v8241
    %v8369 = vadd.f32 %v8017, %v8240
    %v8370 = vmul.f32 %v4498, %v6418
    %v8371 = vmul.f32 %v4498, %v6450
    %v8372 = vmul.f32 %v4502, %v6419
    %v8373 = vmul.f32 %v4502, %v6451
    %v8374 = vmul.f32 %v4506, %v6420
    %v8375 = vmul.f32 %v4506, %v6452
    %v8376 = vmul.f32 %v4510, %v6421
    %v8377 = vmul.f32 %v4510, %v6453
    %v8378 = vmul.f32 %v4514, %v6422
    %v8379 = vmul.f32 %v4514, %v6454
    %v8380 = vmul.f32 %v4518, %v6423
    %v8381 = vmul.f32 %v4518, %v6455
    %v8382 = vmul.f32 %v4522, %v6424
    %v8383 = vmul.f32 %v4522, %v6456
    %v8384 = vmul.f32 %v4526, %v6425
    %v8385 = vmul.f32 %v4526, %v6457
    %v8386 = vmul.f32 %v4530, %v6426
    %v8387 = vmul.f32 %v4530, %v6458
    %v8388 = vmul.f32 %v4534, %v6427
    %v8389 = vmul.f32 %v4534, %v6459
    %v8390 = vmul.f32 %v4538, %v6428
    %v8391 = vmul.f32 %v4538, %v6460
    %v8392 = vmul.f32 %v4542, %v6429
    %v8393 = vmul.f32 %v4542, %v6461
    %v8394 = vmul.f32 %v4546, %v6430
    %v8395 = vmul.f32 %v4546, %v6462
    %v8396 = vmul.f32 %v4550, %v6431
    %v8397 = vmul.f32 %v4550, %v6463
    %v8398 = vmul.f32 %v4554, %v6432
    %v8399 = vmul.f32 %v4554, %v6464
    %v8400 = vmul.f32 %v4558, %v6433
    %v8401 = vmul.f32 %v4558, %v6465
    %v8402 = vmul.f32 %v4562, %v6434
    %v8403 = vmul.f32 %v4562, %v6466
    %v8404 = vmul.f32 %v4566, %v6435
    %v8405 = vmul.f32 %v4566, %v6467
    %v8406 = vmul.f32 %v4570, %v6436
    %v8407 = vmul.f32 %v4570, %v6468
    %v8408 = vmul.f32 %v4574, %v6437
    %v8409 = vmul.f32 %v4574, %v6469
    %v8410 = vmul.f32 %v4578, %v6438
    %v8411 = vmul.f32 %v4578, %v6470
    %v8412 = vmul.f32 %v4582, %v6439
    %v8413 = vmul.f32 %v4582, %v6471
    %v8414 = vmul.f32 %v4586, %v6440
    %v8415 = vmul.f32 %v4586, %v6472
    %v8416 = vmul.f32 %v4590, %v6441
    %v8417 = vmul.f32 %v4590, %v6473
    %v8418 = vmul.f32 %v4594, %v6442
    %v8419 = vmul.f32 %v4594, %v6474
    %v8420 = vmul.f32 %v4598, %v6443
    %v8421 = vmul.f32 %v4598, %v6475
    %v8422 = vmul.f32 %v4602, %v6444
    %v8423 = vmul.f32 %v4602, %v6476
    %v8424 = vmul.f32 %v4606, %v6445
    %v8425 = vmul.f32 %v4606, %v6477
    %v8426 = vmul.f32 %v4610, %v6446
    %v8427 = vmul.f32 %v4610, %v6478
    %v8428 = vmul.f32 %v4614, %v6447
    %v8429 = vmul.f32 %v4614, %v6479
    %v8430 = vmul.f32 %v4618, %v6448
    %v8431 = vmul.f32 %v4618, %v6480
    %v8432 = vmul.f32 %v4622, %v6449
    %v8433 = vmul.f32 %v4622, %v6481
    %v8498 = vrot.slane %v8370, 6
    %v8499 = vrot.slane %v8371, 6
    %v8500 = vsel %vm4752, %v8498, %v8499
    %v8501 = vrot.slane %v8372, 6
    %v8502 = vrot.slane %v8373, 6
    %v8503 = vsel %vm4752, %v8501, %v8502
    %v8504 = vrot.slane %v8374, 6
    %v8505 = vrot.slane %v8375, 6
    %v8506 = vsel %vm4752, %v8504, %v8505
    %v8507 = vrot.slane %v8376, 6
    %v8508 = vrot.slane %v8377, 6
    %v8509 = vsel %vm4752, %v8507, %v8508
    %v8510 = vrot.slane %v8378, 6
    %v8511 = vrot.slane %v8379, 6
    %v8512 = vsel %vm4752, %v8510, %v8511
    %v8513 = vrot.slane %v8380, 6
    %v8514 = vrot.slane %v8381, 6
    %v8515 = vsel %vm4752, %v8513, %v8514
    %v8516 = vrot.slane %v8382, 6
    %v8517 = vrot.slane %v8383, 6
    %v8518 = vsel %vm4752, %v8516, %v8517
    %v8519 = vrot.slane %v8384, 6
    %v8520 = vrot.slane %v8385, 6
    %v8521 = vsel %vm4752, %v8519, %v8520
    %v8522 = vrot.slane %v8386, 6
    %v8523 = vrot.slane %v8387, 6
    %v8524 = vsel %vm4752, %v8522, %v8523
    %v8525 = vrot.slane %v8388, 6
    %v8526 = vrot.slane %v8389, 6
    %v8527 = vsel %vm4752, %v8525, %v8526
    %v8528 = vrot.slane %v8390, 6
    %v8529 = vrot.slane %v8391, 6
    %v8530 = vsel %vm4752, %v8528, %v8529
    %v8531 = vrot.slane %v8392, 6
    %v8532 = vrot.slane %v8393, 6
    %v8533 = vsel %vm4752, %v8531, %v8532
    %v8534 = vrot.slane %v8394, 6
    %v8535 = vrot.slane %v8395, 6
    %v8536 = vsel %vm4752, %v8534, %v8535
    %v8537 = vrot.slane %v8396, 6
    %v8538 = vrot.slane %v8397, 6
    %v8539 = vsel %vm4752, %v8537, %v8538
    %v8540 = vrot.slane %v8398, 6
    %v8541 = vrot.slane %v8399, 6
    %v8542 = vsel %vm4752, %v8540, %v8541
    %v8543 = vrot.slane %v8400, 6
    %v8544 = vrot.slane %v8401, 6
    %v8545 = vsel %vm4752, %v8543, %v8544
    %v8546 = vrot.slane %v8402, 6
    %v8547 = vrot.slane %v8403, 6
    %v8548 = vsel %vm4752, %v8546, %v8547
    %v8549 = vrot.slane %v8404, 6
    %v8550 = vrot.slane %v8405, 6
    %v8551 = vsel %vm4752, %v8549, %v8550
    %v8552 = vrot.slane %v8406, 6
    %v8553 = vrot.slane %v8407, 6
    %v8554 = vsel %vm4752, %v8552, %v8553
    %v8555 = vrot.slane %v8408, 6
    %v8556 = vrot.slane %v8409, 6
    %v8557 = vsel %vm4752, %v8555, %v8556
    %v8558 = vrot.slane %v8410, 6
    %v8559 = vrot.slane %v8411, 6
    %v8560 = vsel %vm4752, %v8558, %v8559
    %v8561 = vrot.slane %v8412, 6
    %v8562 = vrot.slane %v8413, 6
    %v8563 = vsel %vm4752, %v8561, %v8562
    %v8564 = vrot.slane %v8414, 6
    %v8565 = vrot.slane %v8415, 6
    %v8566 = vsel %vm4752, %v8564, %v8565
    %v8567 = vrot.slane %v8416, 6
    %v8568 = vrot.slane %v8417, 6
    %v8569 = vsel %vm4752, %v8567, %v8568
    %v8570 = vrot.slane %v8418, 6
    %v8571 = vrot.slane %v8419, 6
    %v8572 = vsel %vm4752, %v8570, %v8571
    %v8573 = vrot.slane %v8420, 6
    %v8574 = vrot.slane %v8421, 6
    %v8575 = vsel %vm4752, %v8573, %v8574
    %v8576 = vrot.slane %v8422, 6
    %v8577 = vrot.slane %v8423, 6
    %v8578 = vsel %vm4752, %v8576, %v8577
    %v8579 = vrot.slane %v8424, 6
    %v8580 = vrot.slane %v8425, 6
    %v8581 = vsel %vm4752, %v8579, %v8580
    %v8582 = vrot.slane %v8426, 6
    %v8583 = vrot.slane %v8427, 6
    %v8584 = vsel %vm4752, %v8582, %v8583
    %v8585 = vrot.slane %v8428, 6
    %v8586 = vrot.slane %v8429, 6
    %v8587 = vsel %vm4752, %v8585, %v8586
    %v8588 = vrot.slane %v8430, 6
    %v8589 = vrot.slane %v8431, 6
    %v8590 = vsel %vm4752, %v8588, %v8589
    %v8591 = vrot.slane %v8432, 6
    %v8592 = vrot.slane %v8433, 6
    %v8593 = vsel %vm4752, %v8591, %v8592
    %v8658 = vadd.f32 %v8306, %v8500
    %v8659 = vadd.f32 %v8307, %v8499
    %v8660 = vadd.f32 %v8308, %v8503
    %v8661 = vadd.f32 %v8309, %v8502
    %v8662 = vadd.f32 %v8310, %v8506
    %v8663 = vadd.f32 %v8311, %v8505
    %v8664 = vadd.f32 %v8312, %v8509
    %v8665 = vadd.f32 %v8313, %v8508
    %v8666 = vadd.f32 %v8314, %v8512
    %v8667 = vadd.f32 %v8315, %v8511
    %v8668 = vadd.f32 %v8316, %v8515
    %v8669 = vadd.f32 %v8317, %v8514
    %v8670 = vadd.f32 %v8318, %v8518
    %v8671 = vadd.f32 %v8319, %v8517
    %v8672 = vadd.f32 %v8320, %v8521
    %v8673 = vadd.f32 %v8321, %v8520
    %v8674 = vadd.f32 %v8322, %v8524
    %v8675 = vadd.f32 %v8323, %v8523
    %v8676 = vadd.f32 %v8324, %v8527
    %v8677 = vadd.f32 %v8325, %v8526
    %v8678 = vadd.f32 %v8326, %v8530
    %v8679 = vadd.f32 %v8327, %v8529
    %v8680 = vadd.f32 %v8328, %v8533
    %v8681 = vadd.f32 %v8329, %v8532
    %v8682 = vadd.f32 %v8330, %v8536
    %v8683 = vadd.f32 %v8331, %v8535
    %v8684 = vadd.f32 %v8332, %v8539
    %v8685 = vadd.f32 %v8333, %v8538
    %v8686 = vadd.f32 %v8334, %v8542
    %v8687 = vadd.f32 %v8335, %v8541
    %v8688 = vadd.f32 %v8336, %v8545
    %v8689 = vadd.f32 %v8337, %v8544
    %v8690 = vadd.f32 %v8338, %v8548
    %v8691 = vadd.f32 %v8339, %v8547
    %v8692 = vadd.f32 %v8340, %v8551
    %v8693 = vadd.f32 %v8341, %v8550
    %v8694 = vadd.f32 %v8342, %v8554
    %v8695 = vadd.f32 %v8343, %v8553
    %v8696 = vadd.f32 %v8344, %v8557
    %v8697 = vadd.f32 %v8345, %v8556
    %v8698 = vadd.f32 %v8346, %v8560
    %v8699 = vadd.f32 %v8347, %v8559
    %v8700 = vadd.f32 %v8348, %v8563
    %v8701 = vadd.f32 %v8349, %v8562
    %v8702 = vadd.f32 %v8350, %v8566
    %v8703 = vadd.f32 %v8351, %v8565
    %v8704 = vadd.f32 %v8352, %v8569
    %v8705 = vadd.f32 %v8353, %v8568
    %v8706 = vadd.f32 %v8354, %v8572
    %v8707 = vadd.f32 %v8355, %v8571
    %v8708 = vadd.f32 %v8356, %v8575
    %v8709 = vadd.f32 %v8357, %v8574
    %v8710 = vadd.f32 %v8358, %v8578
    %v8711 = vadd.f32 %v8359, %v8577
    %v8712 = vadd.f32 %v8360, %v8581
    %v8713 = vadd.f32 %v8361, %v8580
    %v8714 = vadd.f32 %v8362, %v8584
    %v8715 = vadd.f32 %v8363, %v8583
    %v8716 = vadd.f32 %v8364, %v8587
    %v8717 = vadd.f32 %v8365, %v8586
    %v8718 = vadd.f32 %v8366, %v8590
    %v8719 = vadd.f32 %v8367, %v8589
    %v8720 = vadd.f32 %v8368, %v8593
    %v8721 = vadd.f32 %v8369, %v8592
    %v8722 = vmul.f32 %v4979, %v6418
    %v8723 = vmul.f32 %v4979, %v6450
    %v8724 = vmul.f32 %v4983, %v6419
    %v8725 = vmul.f32 %v4983, %v6451
    %v8726 = vmul.f32 %v4987, %v6420
    %v8727 = vmul.f32 %v4987, %v6452
    %v8728 = vmul.f32 %v4991, %v6421
    %v8729 = vmul.f32 %v4991, %v6453
    %v8730 = vmul.f32 %v4995, %v6422
    %v8731 = vmul.f32 %v4995, %v6454
    %v8732 = vmul.f32 %v4999, %v6423
    %v8733 = vmul.f32 %v4999, %v6455
    %v8734 = vmul.f32 %v5003, %v6424
    %v8735 = vmul.f32 %v5003, %v6456
    %v8736 = vmul.f32 %v5007, %v6425
    %v8737 = vmul.f32 %v5007, %v6457
    %v8738 = vmul.f32 %v5011, %v6426
    %v8739 = vmul.f32 %v5011, %v6458
    %v8740 = vmul.f32 %v5015, %v6427
    %v8741 = vmul.f32 %v5015, %v6459
    %v8742 = vmul.f32 %v5019, %v6428
    %v8743 = vmul.f32 %v5019, %v6460
    %v8744 = vmul.f32 %v5023, %v6429
    %v8745 = vmul.f32 %v5023, %v6461
    %v8746 = vmul.f32 %v5027, %v6430
    %v8747 = vmul.f32 %v5027, %v6462
    %v8748 = vmul.f32 %v5031, %v6431
    %v8749 = vmul.f32 %v5031, %v6463
    %v8750 = vmul.f32 %v5035, %v6432
    %v8751 = vmul.f32 %v5035, %v6464
    %v8752 = vmul.f32 %v5039, %v6433
    %v8753 = vmul.f32 %v5039, %v6465
    %v8754 = vmul.f32 %v5043, %v6434
    %v8755 = vmul.f32 %v5043, %v6466
    %v8756 = vmul.f32 %v5047, %v6435
    %v8757 = vmul.f32 %v5047, %v6467
    %v8758 = vmul.f32 %v5051, %v6436
    %v8759 = vmul.f32 %v5051, %v6468
    %v8760 = vmul.f32 %v5055, %v6437
    %v8761 = vmul.f32 %v5055, %v6469
    %v8762 = vmul.f32 %v5059, %v6438
    %v8763 = vmul.f32 %v5059, %v6470
    %v8764 = vmul.f32 %v5063, %v6439
    %v8765 = vmul.f32 %v5063, %v6471
    %v8766 = vmul.f32 %v5067, %v6440
    %v8767 = vmul.f32 %v5067, %v6472
    %v8768 = vmul.f32 %v5071, %v6441
    %v8769 = vmul.f32 %v5071, %v6473
    %v8770 = vmul.f32 %v5075, %v6442
    %v8771 = vmul.f32 %v5075, %v6474
    %v8772 = vmul.f32 %v5079, %v6443
    %v8773 = vmul.f32 %v5079, %v6475
    %v8774 = vmul.f32 %v5083, %v6444
    %v8775 = vmul.f32 %v5083, %v6476
    %v8776 = vmul.f32 %v5087, %v6445
    %v8777 = vmul.f32 %v5087, %v6477
    %v8778 = vmul.f32 %v5091, %v6446
    %v8779 = vmul.f32 %v5091, %v6478
    %v8780 = vmul.f32 %v5095, %v6447
    %v8781 = vmul.f32 %v5095, %v6479
    %v8782 = vmul.f32 %v5099, %v6448
    %v8783 = vmul.f32 %v5099, %v6480
    %v8784 = vmul.f32 %v5103, %v6449
    %v8785 = vmul.f32 %v5103, %v6481
    %v8850 = vrot.slane %v8722, 7
    %v8851 = vrot.slane %v8723, 7
    %v8852 = vsel %vm5233, %v8850, %v8851
    %v8853 = vrot.slane %v8724, 7
    %v8854 = vrot.slane %v8725, 7
    %v8855 = vsel %vm5233, %v8853, %v8854
    %v8856 = vrot.slane %v8726, 7
    %v8857 = vrot.slane %v8727, 7
    %v8858 = vsel %vm5233, %v8856, %v8857
    %v8859 = vrot.slane %v8728, 7
    %v8860 = vrot.slane %v8729, 7
    %v8861 = vsel %vm5233, %v8859, %v8860
    %v8862 = vrot.slane %v8730, 7
    %v8863 = vrot.slane %v8731, 7
    %v8864 = vsel %vm5233, %v8862, %v8863
    %v8865 = vrot.slane %v8732, 7
    %v8866 = vrot.slane %v8733, 7
    %v8867 = vsel %vm5233, %v8865, %v8866
    %v8868 = vrot.slane %v8734, 7
    %v8869 = vrot.slane %v8735, 7
    %v8870 = vsel %vm5233, %v8868, %v8869
    %v8871 = vrot.slane %v8736, 7
    %v8872 = vrot.slane %v8737, 7
    %v8873 = vsel %vm5233, %v8871, %v8872
    %v8874 = vrot.slane %v8738, 7
    %v8875 = vrot.slane %v8739, 7
    %v8876 = vsel %vm5233, %v8874, %v8875
    %v8877 = vrot.slane %v8740, 7
    %v8878 = vrot.slane %v8741, 7
    %v8879 = vsel %vm5233, %v8877, %v8878
    %v8880 = vrot.slane %v8742, 7
    %v8881 = vrot.slane %v8743, 7
    %v8882 = vsel %vm5233, %v8880, %v8881
    %v8883 = vrot.slane %v8744, 7
    %v8884 = vrot.slane %v8745, 7
    %v8885 = vsel %vm5233, %v8883, %v8884
    %v8886 = vrot.slane %v8746, 7
    %v8887 = vrot.slane %v8747, 7
    %v8888 = vsel %vm5233, %v8886, %v8887
    %v8889 = vrot.slane %v8748, 7
    %v8890 = vrot.slane %v8749, 7
    %v8891 = vsel %vm5233, %v8889, %v8890
    %v8892 = vrot.slane %v8750, 7
    %v8893 = vrot.slane %v8751, 7
    %v8894 = vsel %vm5233, %v8892, %v8893
    %v8895 = vrot.slane %v8752, 7
    %v8896 = vrot.slane %v8753, 7
    %v8897 = vsel %vm5233, %v8895, %v8896
    %v8898 = vrot.slane %v8754, 7
    %v8899 = vrot.slane %v8755, 7
    %v8900 = vsel %vm5233, %v8898, %v8899
    %v8901 = vrot.slane %v8756, 7
    %v8902 = vrot.slane %v8757, 7
    %v8903 = vsel %vm5233, %v8901, %v8902
    %v8904 = vrot.slane %v8758, 7
    %v8905 = vrot.slane %v8759, 7
    %v8906 = vsel %vm5233, %v8904, %v8905
    %v8907 = vrot.slane %v8760, 7
    %v8908 = vrot.slane %v8761, 7
    %v8909 = vsel %vm5233, %v8907, %v8908
    %v8910 = vrot.slane %v8762, 7
    %v8911 = vrot.slane %v8763, 7
    %v8912 = vsel %vm5233, %v8910, %v8911
    %v8913 = vrot.slane %v8764, 7
    %v8914 = vrot.slane %v8765, 7
    %v8915 = vsel %vm5233, %v8913, %v8914
    %v8916 = vrot.slane %v8766, 7
    %v8917 = vrot.slane %v8767, 7
    %v8918 = vsel %vm5233, %v8916, %v8917
    %v8919 = vrot.slane %v8768, 7
    %v8920 = vrot.slane %v8769, 7
    %v8921 = vsel %vm5233, %v8919, %v8920
    %v8922 = vrot.slane %v8770, 7
    %v8923 = vrot.slane %v8771, 7
    %v8924 = vsel %vm5233, %v8922, %v8923
    %v8925 = vrot.slane %v8772, 7
    %v8926 = vrot.slane %v8773, 7
    %v8927 = vsel %vm5233, %v8925, %v8926
    %v8928 = vrot.slane %v8774, 7
    %v8929 = vrot.slane %v8775, 7
    %v8930 = vsel %vm5233, %v8928, %v8929
    %v8931 = vrot.slane %v8776, 7
    %v8932 = vrot.slane %v8777, 7
    %v8933 = vsel %vm5233, %v8931, %v8932
    %v8934 = vrot.slane %v8778, 7
    %v8935 = vrot.slane %v8779, 7
    %v8936 = vsel %vm5233, %v8934, %v8935
    %v8937 = vrot.slane %v8780, 7
    %v8938 = vrot.slane %v8781, 7
    %v8939 = vsel %vm5233, %v8937, %v8938
    %v8940 = vrot.slane %v8782, 7
    %v8941 = vrot.slane %v8783, 7
    %v8942 = vsel %vm5233, %v8940, %v8941
    %v8943 = vrot.slane %v8784, 7
    %v8944 = vrot.slane %v8785, 7
    %v8945 = vsel %vm5233, %v8943, %v8944
    %v9010 = vadd.f32 %v8658, %v8852
    %v9011 = vadd.f32 %v8659, %v8851
    %v9012 = vadd.f32 %v8660, %v8855
    %v9013 = vadd.f32 %v8661, %v8854
    %v9014 = vadd.f32 %v8662, %v8858
    %v9015 = vadd.f32 %v8663, %v8857
    %v9016 = vadd.f32 %v8664, %v8861
    %v9017 = vadd.f32 %v8665, %v8860
    %v9018 = vadd.f32 %v8666, %v8864
    %v9019 = vadd.f32 %v8667, %v8863
    %v9020 = vadd.f32 %v8668, %v8867
    %v9021 = vadd.f32 %v8669, %v8866
    %v9022 = vadd.f32 %v8670, %v8870
    %v9023 = vadd.f32 %v8671, %v8869
    %v9024 = vadd.f32 %v8672, %v8873
    %v9025 = vadd.f32 %v8673, %v8872
    %v9026 = vadd.f32 %v8674, %v8876
    %v9027 = vadd.f32 %v8675, %v8875
    %v9028 = vadd.f32 %v8676, %v8879
    %v9029 = vadd.f32 %v8677, %v8878
    %v9030 = vadd.f32 %v8678, %v8882
    %v9031 = vadd.f32 %v8679, %v8881
    %v9032 = vadd.f32 %v8680, %v8885
    %v9033 = vadd.f32 %v8681, %v8884
    %v9034 = vadd.f32 %v8682, %v8888
    %v9035 = vadd.f32 %v8683, %v8887
    %v9036 = vadd.f32 %v8684, %v8891
    %v9037 = vadd.f32 %v8685, %v8890
    %v9038 = vadd.f32 %v8686, %v8894
    %v9039 = vadd.f32 %v8687, %v8893
    %v9040 = vadd.f32 %v8688, %v8897
    %v9041 = vadd.f32 %v8689, %v8896
    %v9042 = vadd.f32 %v8690, %v8900
    %v9043 = vadd.f32 %v8691, %v8899
    %v9044 = vadd.f32 %v8692, %v8903
    %v9045 = vadd.f32 %v8693, %v8902
    %v9046 = vadd.f32 %v8694, %v8906
    %v9047 = vadd.f32 %v8695, %v8905
    %v9048 = vadd.f32 %v8696, %v8909
    %v9049 = vadd.f32 %v8697, %v8908
    %v9050 = vadd.f32 %v8698, %v8912
    %v9051 = vadd.f32 %v8699, %v8911
    %v9052 = vadd.f32 %v8700, %v8915
    %v9053 = vadd.f32 %v8701, %v8914
    %v9054 = vadd.f32 %v8702, %v8918
    %v9055 = vadd.f32 %v8703, %v8917
    %v9056 = vadd.f32 %v8704, %v8921
    %v9057 = vadd.f32 %v8705, %v8920
    %v9058 = vadd.f32 %v8706, %v8924
    %v9059 = vadd.f32 %v8707, %v8923
    %v9060 = vadd.f32 %v8708, %v8927
    %v9061 = vadd.f32 %v8709, %v8926
    %v9062 = vadd.f32 %v8710, %v8930
    %v9063 = vadd.f32 %v8711, %v8929
    %v9064 = vadd.f32 %v8712, %v8933
    %v9065 = vadd.f32 %v8713, %v8932
    %v9066 = vadd.f32 %v8714, %v8936
    %v9067 = vadd.f32 %v8715, %v8935
    %v9068 = vadd.f32 %v8716, %v8939
    %v9069 = vadd.f32 %v8717, %v8938
    %v9070 = vadd.f32 %v8718, %v8942
    %v9071 = vadd.f32 %v8719, %v8941
    %v9072 = vadd.f32 %v8720, %v8945
    %v9073 = vadd.f32 %v8721, %v8944
    %v9074 = vadd.f32 %v9010, %v5460
    %v9075 = vadd.f32 %v9011, %v5460
    %v9076 = vadd.f32 %v9012, %v5464
    %v9077 = vadd.f32 %v9013, %v5464
    %v9078 = vadd.f32 %v9014, %v5468
    %v9079 = vadd.f32 %v9015, %v5468
    %v9080 = vadd.f32 %v9016, %v5472
    %v9081 = vadd.f32 %v9017, %v5472
    %v9082 = vadd.f32 %v9018, %v5476
    %v9083 = vadd.f32 %v9019, %v5476
    %v9084 = vadd.f32 %v9020, %v5480
    %v9085 = vadd.f32 %v9021, %v5480
    %v9086 = vadd.f32 %v9022, %v5484
    %v9087 = vadd.f32 %v9023, %v5484
    %v9088 = vadd.f32 %v9024, %v5488
    %v9089 = vadd.f32 %v9025, %v5488
    %v9090 = vadd.f32 %v9026, %v5492
    %v9091 = vadd.f32 %v9027, %v5492
    %v9092 = vadd.f32 %v9028, %v5496
    %v9093 = vadd.f32 %v9029, %v5496
    %v9094 = vadd.f32 %v9030, %v5500
    %v9095 = vadd.f32 %v9031, %v5500
    %v9096 = vadd.f32 %v9032, %v5504
    %v9097 = vadd.f32 %v9033, %v5504
    %v9098 = vadd.f32 %v9034, %v5508
    %v9099 = vadd.f32 %v9035, %v5508
    %v9100 = vadd.f32 %v9036, %v5512
    %v9101 = vadd.f32 %v9037, %v5512
    %v9102 = vadd.f32 %v9038, %v5516
    %v9103 = vadd.f32 %v9039, %v5516
    %v9104 = vadd.f32 %v9040, %v5520
    %v9105 = vadd.f32 %v9041, %v5520
    %v9106 = vadd.f32 %v9042, %v5524
    %v9107 = vadd.f32 %v9043, %v5524
    %v9108 = vadd.f32 %v9044, %v5528
    %v9109 = vadd.f32 %v9045, %v5528
    %v9110 = vadd.f32 %v9046, %v5532
    %v9111 = vadd.f32 %v9047, %v5532
    %v9112 = vadd.f32 %v9048, %v5536
    %v9113 = vadd.f32 %v9049, %v5536
    %v9114 = vadd.f32 %v9050, %v5540
    %v9115 = vadd.f32 %v9051, %v5540
    %v9116 = vadd.f32 %v9052, %v5544
    %v9117 = vadd.f32 %v9053, %v5544
    %v9118 = vadd.f32 %v9054, %v5548
    %v9119 = vadd.f32 %v9055, %v5548
    %v9120 = vadd.f32 %v9056, %v5552
    %v9121 = vadd.f32 %v9057, %v5552
    %v9122 = vadd.f32 %v9058, %v5556
    %v9123 = vadd.f32 %v9059, %v5556
    %v9124 = vadd.f32 %v9060, %v5560
    %v9125 = vadd.f32 %v9061, %v5560
    %v9126 = vadd.f32 %v9062, %v5564
    %v9127 = vadd.f32 %v9063, %v5564
    %v9128 = vadd.f32 %v9064, %v5568
    %v9129 = vadd.f32 %v9065, %v5568
    %v9130 = vadd.f32 %v9066, %v5572
    %v9131 = vadd.f32 %v9067, %v5572
    %v9132 = vadd.f32 %v9068, %v5576
    %v9133 = vadd.f32 %v9069, %v5576
    %v9134 = vadd.f32 %v9070, %v5580
    %v9135 = vadd.f32 %v9071, %v5580
    %v9136 = vadd.f32 %v9072, %v5584
    %v9137 = vadd.f32 %v9073, %v5584
    %v9138 = vld [vmem:[%s2] sm:$0xff]
    %v9139 = vld [vmem:[%s2 + $0x8] sm:$0x1]
    %v9140 = vld [vmem:[%s2 + $0x10] sm:$0xff]
    %v9141 = vld [vmem:[%s2 + $0x18] sm:$0x1]
    %v9142 = vld [vmem:[%s2 + $0x20] sm:$0xff]
    %v9143 = vld [vmem:[%s2 + $0x28] sm:$0x1]
    %v9144 = vld [vmem:[%s2 + $0x30] sm:$0xff]
    %v9145 = vld [vmem:[%s2 + $0x38] sm:$0x1]
    %v9146 = vld [vmem:[%s2 + $0x40] sm:$0xff]
    %v9147 = vld [vmem:[%s2 + $0x48] sm:$0x1]
    %v9148 = vld [vmem:[%s2 + $0x50] sm:$0xff]
    %v9149 = vld [vmem:[%s2 + $0x58] sm:$0x1]
    %v9150 = vld [vmem:[%s2 + $0x60] sm:$0xff]
    %v9151 = vld [vmem:[%s2 + $0x68] sm:$0x1]
    %v9152 = vld [vmem:[%s2 + $0x70] sm:$0xff]
    %v9153 = vld [vmem:[%s2 + $0x78] sm:$0x1]
    %v9154 = vld [vmem:[%s2 + $0x80] sm:$0xff]
    %v9155 = vld [vmem:[%s2 + $0x88] sm:$0x1]
    %v9156 = vld [vmem:[%s2 + $0x90] sm:$0xff]
    %v9157 = vld [vmem:[%s2 + $0x98] sm:$0x1]
    %v9158 = vld [vmem:[%s2 + $0xa0] sm:$0xff]
    %v9159 = vld [vmem:[%s2 + $0xa8] sm:$0x1]
    %v9160 = vld [vmem:[%s2 + $0xb0] sm:$0xff]
    %v9161 = vld [vmem:[%s2 + $0xb8] sm:$0x1]
    %v9162 = vld [vmem:[%s2 + $0xc0] sm:$0xff]
    %v9163 = vld [vmem:[%s2 + $0xc8] sm:$0x1]
    %v9164 = vld [vmem:[%s2 + $0xd0] sm:$0xff]
    %v9165 = vld [vmem:[%s2 + $0xd8] sm:$0x1]
    %v9166 = vld [vmem:[%s2 + $0xe0] sm:$0xff]
    %v9167 = vld [vmem:[%s2 + $0xe8] sm:$0x1]
    %v9168 = vld [vmem:[%s2 + $0xf0] sm:$0xff]
    %v9169 = vld [vmem:[%s2 + $0xf8] sm:$0x1]
    %v9170 = vld [vmem:[%s2 + $0x100] sm:$0xff]
    %v9171 = vld [vmem:[%s2 + $0x108] sm:$0x1]
    %v9172 = vld [vmem:[%s2 + $0x110] sm:$0xff]
    %v9173 = vld [vmem:[%s2 + $0x118] sm:$0x1]
    %v9174 = vld [vmem:[%s2 + $0x120] sm:$0xff]
    %v9175 = vld [vmem:[%s2 + $0x128] sm:$0x1]
    %v9176 = vld [vmem:[%s2 + $0x130] sm:$0xff]
    %v9177 = vld [vmem:[%s2 + $0x138] sm:$0x1]
    %v9178 = vld [vmem:[%s2 + $0x140] sm:$0xff]
    %v9179 = vld [vmem:[%s2 + $0x148] sm:$0x1]
    %v9180 = vld [vmem:[%s2 + $0x150] sm:$0xff]
    %v9181 = vld [vmem:[%s2 + $0x158] sm:$0x1]
    %v9182 = vld [vmem:[%s2 + $0x160] sm:$0xff]
    %v9183 = vld [vmem:[%s2 + $0x168] sm:$0x1]
    %v9184 = vld [vmem:[%s2 + $0x170] sm:$0xff]
    %v9185 = vld [vmem:[%s2 + $0x178] sm:$0x1]
    %v9186 = vld [vmem:[%s2 + $0x180] sm:$0xff]
    %v9187 = vld [vmem:[%s2 + $0x188] sm:$0x1]
    %v9188 = vld [vmem:[%s2 + $0x190] sm:$0xff]
    %v9189 = vld [vmem:[%s2 + $0x198] sm:$0x1]
    %v9190 = vld [vmem:[%s2 + $0x1a0] sm:$0xff]
    %v9191 = vld [vmem:[%s2 + $0x1a8] sm:$0x1]
    %v9192 = vld [vmem:[%s2 + $0x1b0] sm:$0xff]
    %v9193 = vld [vmem:[%s2 + $0x1b8] sm:$0x1]
    %v9194 = vld [vmem:[%s2 + $0x1c0] sm:$0xff]
    %v9195 = vld [vmem:[%s2 + $0x1c8] sm:$0x1]
    %v9196 = vld [vmem:[%s2 + $0x1d0] sm:$0xff]
    %v9197 = vld [vmem:[%s2 + $0x1d8] sm:$0x1]
    %v9198 = vld [vmem:[%s2 + $0x1e0] sm:$0xff]
    %v9199 = vld [vmem:[%s2 + $0x1e8] sm:$0x1]
    %v9200 = vld [vmem:[%s2 + $0x1f0] sm:$0xff]
    %v9201 = vld [vmem:[%s2 + $0x1f8] sm:$0x1]
    %v9202 = vmul.f32 %v5586, %v9138
    %v9203 = vmul.f32 %v5587, %v9139
    %v9204 = vmul.f32 %v5588, %v9140
    %v9205 = vmul.f32 %v5589, %v9141
    %v9206 = vmul.f32 %v5590, %v9142
    %v9207 = vmul.f32 %v5591, %v9143
    %v9208 = vmul.f32 %v5592, %v9144
    %v9209 = vmul.f32 %v5593, %v9145
    %v9210 = vmul.f32 %v5594, %v9146
    %v9211 = vmul.f32 %v5595, %v9147
    %v9212 = vmul.f32 %v5596, %v9148
    %v9213 = vmul.f32 %v5597, %v9149
    %v9214 = vmul.f32 %v5598, %v9150
    %v9215 = vmul.f32 %v5599, %v9151
    %v9216 = vmul.f32 %v5600, %v9152
    %v9217 = vmul.f32 %v5601, %v9153
    %v9218 = vmul.f32 %v5602, %v9154
    %v9219 = vmul.f32 %v5603, %v9155
    %v9220 = vmul.f32 %v5604, %v9156
    %v9221 = vmul.f32 %v5605, %v9157
    %v9222 = vmul.f32 %v5606, %v9158
    %v9223 = vmul.f32 %v5607, %v9159
    %v9224 = vmul.f32 %v5608, %v9160
    %v9225 = vmul.f32 %v5609, %v9161
    %v9226 = vmul.f32 %v5610, %v9162
    %v9227 = vmul.f32 %v5611, %v9163
    %v9228 = vmul.f32 %v5612, %v9164
    %v9229 = vmul.f32 %v5613, %v9165
    %v9230 = vmul.f32 %v5614, %v9166
    %v9231 = vmul.f32 %v5615, %v9167
    %v9232 = vmul.f32 %v5616, %v9168
    %v9233 = vmul.f32 %v5617, %v9169
    %v9234 = vmul.f32 %v5618, %v9170
    %v9235 = vmul.f32 %v5619, %v9171
    %v9236 = vmul.f32 %v5620, %v9172
    %v9237 = vmul.f32 %v5621, %v9173
    %v9238 = vmul.f32 %v5622, %v9174
    %v9239 = vmul.f32 %v5623, %v9175
    %v9240 = vmul.f32 %v5624, %v9176
    %v9241 = vmul.f32 %v5625, %v9177
    %v9242 = vmul.f32 %v5626, %v9178
    %v9243 = vmul.f32 %v5627, %v9179
    %v9244 = vmul.f32 %v5628, %v9180
    %v9245 = vmul.f32 %v5629, %v9181
    %v9246 = vmul.f32 %v5630, %v9182
    %v9247 = vmul.f32 %v5631, %v9183
    %v9248 = vmul.f32 %v5632, %v9184
    %v9249 = vmul.f32 %v5633, %v9185
    %v9250 = vmul.f32 %v5634, %v9186
    %v9251 = vmul.f32 %v5635, %v9187
    %v9252 = vmul.f32 %v5636, %v9188
    %v9253 = vmul.f32 %v5637, %v9189
    %v9254 = vmul.f32 %v5638, %v9190
    %v9255 = vmul.f32 %v5639, %v9191
    %v9256 = vmul.f32 %v5640, %v9192
    %v9257 = vmul.f32 %v5641, %v9193
    %v9258 = vmul.f32 %v5642, %v9194
    %v9259 = vmul.f32 %v5643, %v9195
    %v9260 = vmul.f32 %v5644, %v9196
    %v9261 = vmul.f32 %v5645, %v9197
    %v9262 = vmul.f32 %v5646, %v9198
    %v9263 = vmul.f32 %v5647, %v9199
    %v9264 = vmul.f32 %v5648, %v9200
    %v9265 = vmul.f32 %v5649, %v9201
    %vm9266 = vcmask 138240
    %v9267 = vsel %vm9266, %v9202, 0.0
    %9268 = vadd.xlane.f32.xlu0 %v9267
    %v9269 = vpop.xlane.xlu0 %9268
    %vm9270 = vcmask 131072
    %v9271 = vsel %vm9270, %v9203, 0.0
    %9272 = vadd.xlane.f32.xlu0 %v9271
    %v9273 = vpop.xlane.xlu0 %9272
    %v9274 = vsel %vm9266, %v9204, 0.0
    %9275 = vadd.xlane.f32.xlu0 %v9274
    %v9276 = vpop.xlane.xlu0 %9275
    %v9277 = vsel %vm9270, %v9205, 0.0
    %9278 = vadd.xlane.f32.xlu0 %v9277
    %v9279 = vpop.xlane.xlu0 %9278
    %v9280 = vsel %vm9266, %v9206, 0.0
    %9281 = vadd.xlane.f32.xlu0 %v9280
    %v9282 = vpop.xlane.xlu0 %9281
    %v9283 = vsel %vm9270, %v9207, 0.0
    %9284 = vadd.xlane.f32.xlu0 %v9283
    %v9285 = vpop.xlane.xlu0 %9284
    %v9286 = vsel %vm9266, %v9208, 0.0
    %9287 = vadd.xlane.f32.xlu0 %v9286
    %v9288 = vpop.xlane.xlu0 %9287
    %v9289 = vsel %vm9270, %v9209, 0.0
    %9290 = vadd.xlane.f32.xlu0 %v9289
    %v9291 = vpop.xlane.xlu0 %9290
    %v9292 = vsel %vm9266, %v9210, 0.0
    %9293 = vadd.xlane.f32.xlu0 %v9292
    %v9294 = vpop.xlane.xlu0 %9293
    %v9295 = vsel %vm9270, %v9211, 0.0
    %9296 = vadd.xlane.f32.xlu0 %v9295
    %v9297 = vpop.xlane.xlu0 %9296
    %v9298 = vsel %vm9266, %v9212, 0.0
    %9299 = vadd.xlane.f32.xlu0 %v9298
    %v9300 = vpop.xlane.xlu0 %9299
    %v9301 = vsel %vm9270, %v9213, 0.0
    %9302 = vadd.xlane.f32.xlu0 %v9301
    %v9303 = vpop.xlane.xlu0 %9302
    %v9304 = vsel %vm9266, %v9214, 0.0
    %9305 = vadd.xlane.f32.xlu0 %v9304
    %v9306 = vpop.xlane.xlu0 %9305
    %v9307 = vsel %vm9270, %v9215, 0.0
    %9308 = vadd.xlane.f32.xlu0 %v9307
    %v9309 = vpop.xlane.xlu0 %9308
    %v9310 = vsel %vm9266, %v9216, 0.0
    %9311 = vadd.xlane.f32.xlu0 %v9310
    %v9312 = vpop.xlane.xlu0 %9311
    %v9313 = vsel %vm9270, %v9217, 0.0
    %9314 = vadd.xlane.f32.xlu0 %v9313
    %v9315 = vpop.xlane.xlu0 %9314
    %v9316 = vsel %vm9266, %v9218, 0.0
    %9317 = vadd.xlane.f32.xlu0 %v9316
    %v9318 = vpop.xlane.xlu0 %9317
    %v9319 = vsel %vm9270, %v9219, 0.0
    %9320 = vadd.xlane.f32.xlu0 %v9319
    %v9321 = vpop.xlane.xlu0 %9320
    %v9322 = vsel %vm9266, %v9220, 0.0
    %9323 = vadd.xlane.f32.xlu0 %v9322
    %v9324 = vpop.xlane.xlu0 %9323
    %v9325 = vsel %vm9270, %v9221, 0.0
    %9326 = vadd.xlane.f32.xlu0 %v9325
    %v9327 = vpop.xlane.xlu0 %9326
    %v9328 = vsel %vm9266, %v9222, 0.0
    %9329 = vadd.xlane.f32.xlu0 %v9328
    %v9330 = vpop.xlane.xlu0 %9329
    %v9331 = vsel %vm9270, %v9223, 0.0
    %9332 = vadd.xlane.f32.xlu0 %v9331
    %v9333 = vpop.xlane.xlu0 %9332
    %v9334 = vsel %vm9266, %v9224, 0.0
    %9335 = vadd.xlane.f32.xlu0 %v9334
    %v9336 = vpop.xlane.xlu0 %9335
    %v9337 = vsel %vm9270, %v9225, 0.0
    %9338 = vadd.xlane.f32.xlu0 %v9337
    %v9339 = vpop.xlane.xlu0 %9338
    %v9340 = vsel %vm9266, %v9226, 0.0
    %9341 = vadd.xlane.f32.xlu0 %v9340
    %v9342 = vpop.xlane.xlu0 %9341
    %v9343 = vsel %vm9270, %v9227, 0.0
    %9344 = vadd.xlane.f32.xlu0 %v9343
    %v9345 = vpop.xlane.xlu0 %9344
    %v9346 = vsel %vm9266, %v9228, 0.0
    %9347 = vadd.xlane.f32.xlu0 %v9346
    %v9348 = vpop.xlane.xlu0 %9347
    %v9349 = vsel %vm9270, %v9229, 0.0
    %9350 = vadd.xlane.f32.xlu0 %v9349
    %v9351 = vpop.xlane.xlu0 %9350
    %v9352 = vsel %vm9266, %v9230, 0.0
    %9353 = vadd.xlane.f32.xlu0 %v9352
    %v9354 = vpop.xlane.xlu0 %9353
    %v9355 = vsel %vm9270, %v9231, 0.0
    %9356 = vadd.xlane.f32.xlu0 %v9355
    %v9357 = vpop.xlane.xlu0 %9356
    %v9358 = vsel %vm9266, %v9232, 0.0
    %9359 = vadd.xlane.f32.xlu0 %v9358
    %v9360 = vpop.xlane.xlu0 %9359
    %v9361 = vsel %vm9270, %v9233, 0.0
    %9362 = vadd.xlane.f32.xlu0 %v9361
    %v9363 = vpop.xlane.xlu0 %9362
    %v9364 = vsel %vm9266, %v9234, 0.0
    %9365 = vadd.xlane.f32.xlu0 %v9364
    %v9366 = vpop.xlane.xlu0 %9365
    %v9367 = vsel %vm9270, %v9235, 0.0
    %9368 = vadd.xlane.f32.xlu0 %v9367
    %v9369 = vpop.xlane.xlu0 %9368
    %v9370 = vsel %vm9266, %v9236, 0.0
    %9371 = vadd.xlane.f32.xlu0 %v9370
    %v9372 = vpop.xlane.xlu0 %9371
    %v9373 = vsel %vm9270, %v9237, 0.0
    %9374 = vadd.xlane.f32.xlu0 %v9373
    %v9375 = vpop.xlane.xlu0 %9374
    %v9376 = vsel %vm9266, %v9238, 0.0
    %9377 = vadd.xlane.f32.xlu0 %v9376
    %v9378 = vpop.xlane.xlu0 %9377
    %v9379 = vsel %vm9270, %v9239, 0.0
    %9380 = vadd.xlane.f32.xlu0 %v9379
    %v9381 = vpop.xlane.xlu0 %9380
    %v9382 = vsel %vm9266, %v9240, 0.0
    %9383 = vadd.xlane.f32.xlu0 %v9382
    %v9384 = vpop.xlane.xlu0 %9383
    %v9385 = vsel %vm9270, %v9241, 0.0
    %9386 = vadd.xlane.f32.xlu0 %v9385
    %v9387 = vpop.xlane.xlu0 %9386
    %v9388 = vsel %vm9266, %v9242, 0.0
    %9389 = vadd.xlane.f32.xlu0 %v9388
    %v9390 = vpop.xlane.xlu0 %9389
    %v9391 = vsel %vm9270, %v9243, 0.0
    %9392 = vadd.xlane.f32.xlu0 %v9391
    %v9393 = vpop.xlane.xlu0 %9392
    %v9394 = vsel %vm9266, %v9244, 0.0
    %9395 = vadd.xlane.f32.xlu0 %v9394
    %v9396 = vpop.xlane.xlu0 %9395
    %v9397 = vsel %vm9270, %v9245, 0.0
    %9398 = vadd.xlane.f32.xlu0 %v9397
    %v9399 = vpop.xlane.xlu0 %9398
    %v9400 = vsel %vm9266, %v9246, 0.0
    %9401 = vadd.xlane.f32.xlu0 %v9400
    %v9402 = vpop.xlane.xlu0 %9401
    %v9403 = vsel %vm9270, %v9247, 0.0
    %9404 = vadd.xlane.f32.xlu0 %v9403
    %v9405 = vpop.xlane.xlu0 %9404
    %v9406 = vsel %vm9266, %v9248, 0.0
    %9407 = vadd.xlane.f32.xlu0 %v9406
    %v9408 = vpop.xlane.xlu0 %9407
    %v9409 = vsel %vm9270, %v9249, 0.0
    %9410 = vadd.xlane.f32.xlu0 %v9409
    %v9411 = vpop.xlane.xlu0 %9410
    %v9412 = vsel %vm9266, %v9250, 0.0
    %9413 = vadd.xlane.f32.xlu0 %v9412
    %v9414 = vpop.xlane.xlu0 %9413
    %v9415 = vsel %vm9270, %v9251, 0.0
    %9416 = vadd.xlane.f32.xlu0 %v9415
    %v9417 = vpop.xlane.xlu0 %9416
    %v9418 = vsel %vm9266, %v9252, 0.0
    %9419 = vadd.xlane.f32.xlu0 %v9418
    %v9420 = vpop.xlane.xlu0 %9419
    %v9421 = vsel %vm9270, %v9253, 0.0
    %9422 = vadd.xlane.f32.xlu0 %v9421
    %v9423 = vpop.xlane.xlu0 %9422
    %v9424 = vsel %vm9266, %v9254, 0.0
    %9425 = vadd.xlane.f32.xlu0 %v9424
    %v9426 = vpop.xlane.xlu0 %9425
    %v9427 = vsel %vm9270, %v9255, 0.0
    %9428 = vadd.xlane.f32.xlu0 %v9427
    %v9429 = vpop.xlane.xlu0 %9428
    %v9430 = vsel %vm9266, %v9256, 0.0
    %9431 = vadd.xlane.f32.xlu0 %v9430
    %v9432 = vpop.xlane.xlu0 %9431
    %v9433 = vsel %vm9270, %v9257, 0.0
    %9434 = vadd.xlane.f32.xlu0 %v9433
    %v9435 = vpop.xlane.xlu0 %9434
    %v9436 = vsel %vm9266, %v9258, 0.0
    %9437 = vadd.xlane.f32.xlu0 %v9436
    %v9438 = vpop.xlane.xlu0 %9437
    %v9439 = vsel %vm9270, %v9259, 0.0
    %9440 = vadd.xlane.f32.xlu0 %v9439
    %v9441 = vpop.xlane.xlu0 %9440
    %v9442 = vsel %vm9266, %v9260, 0.0
    %9443 = vadd.xlane.f32.xlu0 %v9442
    %v9444 = vpop.xlane.xlu0 %9443
    %v9445 = vsel %vm9270, %v9261, 0.0
    %9446 = vadd.xlane.f32.xlu0 %v9445
    %v9447 = vpop.xlane.xlu0 %9446
    %v9448 = vsel %vm9266, %v9262, 0.0
    %9449 = vadd.xlane.f32.xlu0 %v9448
    %v9450 = vpop.xlane.xlu0 %9449
    %v9451 = vsel %vm9270, %v9263, 0.0
    %9452 = vadd.xlane.f32.xlu0 %v9451
    %v9453 = vpop.xlane.xlu0 %9452
    %v9454 = vsel %vm9266, %v9264, 0.0
    %9455 = vadd.xlane.f32.xlu0 %v9454
    %v9456 = vpop.xlane.xlu0 %9455
    %v9457 = vsel %vm9270, %v9265, 0.0
    %9458 = vadd.xlane.f32.xlu0 %v9457
    %v9459 = vpop.xlane.xlu0 %9458
    %v9460 = vsel %vm5233, %v9273, 0.0
    %v9461 = vadd.f32 %v9269, %v9460
    %v9462 = vrot.slane %v9461, 4
    %v9463 = vadd.f32 %v9461, %v9462
    %v9464 = vrot.slane %v9463, 2
    %v9465 = vadd.f32 %v9463, %v9464
    %v9466 = vrot.slane %v9465, 1
    %v9467 = vadd.f32 %v9465, %v9466
    %v9468 = vsel %vm5233, %v9279, 0.0
    %v9469 = vadd.f32 %v9276, %v9468
    %v9470 = vrot.slane %v9469, 4
    %v9471 = vadd.f32 %v9469, %v9470
    %v9472 = vrot.slane %v9471, 2
    %v9473 = vadd.f32 %v9471, %v9472
    %v9474 = vrot.slane %v9473, 1
    %v9475 = vadd.f32 %v9473, %v9474
    %v9476 = vsel %vm5233, %v9285, 0.0
    %v9477 = vadd.f32 %v9282, %v9476
    %v9478 = vrot.slane %v9477, 4
    %v9479 = vadd.f32 %v9477, %v9478
    %v9480 = vrot.slane %v9479, 2
    %v9481 = vadd.f32 %v9479, %v9480
    %v9482 = vrot.slane %v9481, 1
    %v9483 = vadd.f32 %v9481, %v9482
    %v9484 = vsel %vm5233, %v9291, 0.0
    %v9485 = vadd.f32 %v9288, %v9484
    %v9486 = vrot.slane %v9485, 4
    %v9487 = vadd.f32 %v9485, %v9486
    %v9488 = vrot.slane %v9487, 2
    %v9489 = vadd.f32 %v9487, %v9488
    %v9490 = vrot.slane %v9489, 1
    %v9491 = vadd.f32 %v9489, %v9490
    %v9492 = vsel %vm5233, %v9297, 0.0
    %v9493 = vadd.f32 %v9294, %v9492
    %v9494 = vrot.slane %v9493, 4
    %v9495 = vadd.f32 %v9493, %v9494
    %v9496 = vrot.slane %v9495, 2
    %v9497 = vadd.f32 %v9495, %v9496
    %v9498 = vrot.slane %v9497, 1
    %v9499 = vadd.f32 %v9497, %v9498
    %v9500 = vsel %vm5233, %v9303, 0.0
    %v9501 = vadd.f32 %v9300, %v9500
    %v9502 = vrot.slane %v9501, 4
    %v9503 = vadd.f32 %v9501, %v9502
    %v9504 = vrot.slane %v9503, 2
    %v9505 = vadd.f32 %v9503, %v9504
    %v9506 = vrot.slane %v9505, 1
    %v9507 = vadd.f32 %v9505, %v9506
    %v9508 = vsel %vm5233, %v9309, 0.0
    %v9509 = vadd.f32 %v9306, %v9508
    %v9510 = vrot.slane %v9509, 4
    %v9511 = vadd.f32 %v9509, %v9510
    %v9512 = vrot.slane %v9511, 2
    %v9513 = vadd.f32 %v9511, %v9512
    %v9514 = vrot.slane %v9513, 1
    %v9515 = vadd.f32 %v9513, %v9514
    %v9516 = vsel %vm5233, %v9315, 0.0
    %v9517 = vadd.f32 %v9312, %v9516
    %v9518 = vrot.slane %v9517, 4
    %v9519 = vadd.f32 %v9517, %v9518
    %v9520 = vrot.slane %v9519, 2
    %v9521 = vadd.f32 %v9519, %v9520
    %v9522 = vrot.slane %v9521, 1
    %v9523 = vadd.f32 %v9521, %v9522
    %v9524 = vsel %vm5233, %v9321, 0.0
    %v9525 = vadd.f32 %v9318, %v9524
    %v9526 = vrot.slane %v9525, 4
    %v9527 = vadd.f32 %v9525, %v9526
    %v9528 = vrot.slane %v9527, 2
    %v9529 = vadd.f32 %v9527, %v9528
    %v9530 = vrot.slane %v9529, 1
    %v9531 = vadd.f32 %v9529, %v9530
    %v9532 = vsel %vm5233, %v9327, 0.0
    %v9533 = vadd.f32 %v9324, %v9532
    %v9534 = vrot.slane %v9533, 4
    %v9535 = vadd.f32 %v9533, %v9534
    %v9536 = vrot.slane %v9535, 2
    %v9537 = vadd.f32 %v9535, %v9536
    %v9538 = vrot.slane %v9537, 1
    %v9539 = vadd.f32 %v9537, %v9538
    %v9540 = vsel %vm5233, %v9333, 0.0
    %v9541 = vadd.f32 %v9330, %v9540
    %v9542 = vrot.slane %v9541, 4
    %v9543 = vadd.f32 %v9541, %v9542
    %v9544 = vrot.slane %v9543, 2
    %v9545 = vadd.f32 %v9543, %v9544
    %v9546 = vrot.slane %v9545, 1
    %v9547 = vadd.f32 %v9545, %v9546
    %v9548 = vsel %vm5233, %v9339, 0.0
    %v9549 = vadd.f32 %v9336, %v9548
    %v9550 = vrot.slane %v9549, 4
    %v9551 = vadd.f32 %v9549, %v9550
    %v9552 = vrot.slane %v9551, 2
    %v9553 = vadd.f32 %v9551, %v9552
    %v9554 = vrot.slane %v9553, 1
    %v9555 = vadd.f32 %v9553, %v9554
    %v9556 = vsel %vm5233, %v9345, 0.0
    %v9557 = vadd.f32 %v9342, %v9556
    %v9558 = vrot.slane %v9557, 4
    %v9559 = vadd.f32 %v9557, %v9558
    %v9560 = vrot.slane %v9559, 2
    %v9561 = vadd.f32 %v9559, %v9560
    %v9562 = vrot.slane %v9561, 1
    %v9563 = vadd.f32 %v9561, %v9562
    %v9564 = vsel %vm5233, %v9351, 0.0
    %v9565 = vadd.f32 %v9348, %v9564
    %v9566 = vrot.slane %v9565, 4
    %v9567 = vadd.f32 %v9565, %v9566
    %v9568 = vrot.slane %v9567, 2
    %v9569 = vadd.f32 %v9567, %v9568
    %v9570 = vrot.slane %v9569, 1
    %v9571 = vadd.f32 %v9569, %v9570
    %v9572 = vsel %vm5233, %v9357, 0.0
    %v9573 = vadd.f32 %v9354, %v9572
    %v9574 = vrot.slane %v9573, 4
    %v9575 = vadd.f32 %v9573, %v9574
    %v9576 = vrot.slane %v9575, 2
    %v9577 = vadd.f32 %v9575, %v9576
    %v9578 = vrot.slane %v9577, 1
    %v9579 = vadd.f32 %v9577, %v9578
    %v9580 = vsel %vm5233, %v9363, 0.0
    %v9581 = vadd.f32 %v9360, %v9580
    %v9582 = vrot.slane %v9581, 4
    %v9583 = vadd.f32 %v9581, %v9582
    %v9584 = vrot.slane %v9583, 2
    %v9585 = vadd.f32 %v9583, %v9584
    %v9586 = vrot.slane %v9585, 1
    %v9587 = vadd.f32 %v9585, %v9586
    %v9588 = vsel %vm5233, %v9369, 0.0
    %v9589 = vadd.f32 %v9366, %v9588
    %v9590 = vrot.slane %v9589, 4
    %v9591 = vadd.f32 %v9589, %v9590
    %v9592 = vrot.slane %v9591, 2
    %v9593 = vadd.f32 %v9591, %v9592
    %v9594 = vrot.slane %v9593, 1
    %v9595 = vadd.f32 %v9593, %v9594
    %v9596 = vsel %vm5233, %v9375, 0.0
    %v9597 = vadd.f32 %v9372, %v9596
    %v9598 = vrot.slane %v9597, 4
    %v9599 = vadd.f32 %v9597, %v9598
    %v9600 = vrot.slane %v9599, 2
    %v9601 = vadd.f32 %v9599, %v9600
    %v9602 = vrot.slane %v9601, 1
    %v9603 = vadd.f32 %v9601, %v9602
    %v9604 = vsel %vm5233, %v9381, 0.0
    %v9605 = vadd.f32 %v9378, %v9604
    %v9606 = vrot.slane %v9605, 4
    %v9607 = vadd.f32 %v9605, %v9606
    %v9608 = vrot.slane %v9607, 2
    %v9609 = vadd.f32 %v9607, %v9608
    %v9610 = vrot.slane %v9609, 1
    %v9611 = vadd.f32 %v9609, %v9610
    %v9612 = vsel %vm5233, %v9387, 0.0
    %v9613 = vadd.f32 %v9384, %v9612
    %v9614 = vrot.slane %v9613, 4
    %v9615 = vadd.f32 %v9613, %v9614
    %v9616 = vrot.slane %v9615, 2
    %v9617 = vadd.f32 %v9615, %v9616
    %v9618 = vrot.slane %v9617, 1
    %v9619 = vadd.f32 %v9617, %v9618
    %v9620 = vsel %vm5233, %v9393, 0.0
    %v9621 = vadd.f32 %v9390, %v9620
    %v9622 = vrot.slane %v9621, 4
    %v9623 = vadd.f32 %v9621, %v9622
    %v9624 = vrot.slane %v9623, 2
    %v9625 = vadd.f32 %v9623, %v9624
    %v9626 = vrot.slane %v9625, 1
    %v9627 = vadd.f32 %v9625, %v9626
    %v9628 = vsel %vm5233, %v9399, 0.0
    %v9629 = vadd.f32 %v9396, %v9628
    %v9630 = vrot.slane %v9629, 4
    %v9631 = vadd.f32 %v9629, %v9630
    %v9632 = vrot.slane %v9631, 2
    %v9633 = vadd.f32 %v9631, %v9632
    %v9634 = vrot.slane %v9633, 1
    %v9635 = vadd.f32 %v9633, %v9634
    %v9636 = vsel %vm5233, %v9405, 0.0
    %v9637 = vadd.f32 %v9402, %v9636
    %v9638 = vrot.slane %v9637, 4
    %v9639 = vadd.f32 %v9637, %v9638
    %v9640 = vrot.slane %v9639, 2
    %v9641 = vadd.f32 %v9639, %v9640
    %v9642 = vrot.slane %v9641, 1
    %v9643 = vadd.f32 %v9641, %v9642
    %v9644 = vsel %vm5233, %v9411, 0.0
    %v9645 = vadd.f32 %v9408, %v9644
    %v9646 = vrot.slane %v9645, 4
    %v9647 = vadd.f32 %v9645, %v9646
    %v9648 = vrot.slane %v9647, 2
    %v9649 = vadd.f32 %v9647, %v9648
    %v9650 = vrot.slane %v9649, 1
    %v9651 = vadd.f32 %v9649, %v9650
    %v9652 = vsel %vm5233, %v9417, 0.0
    %v9653 = vadd.f32 %v9414, %v9652
    %v9654 = vrot.slane %v9653, 4
    %v9655 = vadd.f32 %v9653, %v9654
    %v9656 = vrot.slane %v9655, 2
    %v9657 = vadd.f32 %v9655, %v9656
    %v9658 = vrot.slane %v9657, 1
    %v9659 = vadd.f32 %v9657, %v9658
    %v9660 = vsel %vm5233, %v9423, 0.0
    %v9661 = vadd.f32 %v9420, %v9660
    %v9662 = vrot.slane %v9661, 4
    %v9663 = vadd.f32 %v9661, %v9662
    %v9664 = vrot.slane %v9663, 2
    %v9665 = vadd.f32 %v9663, %v9664
    %v9666 = vrot.slane %v9665, 1
    %v9667 = vadd.f32 %v9665, %v9666
    %v9668 = vsel %vm5233, %v9429, 0.0
    %v9669 = vadd.f32 %v9426, %v9668
    %v9670 = vrot.slane %v9669, 4
    %v9671 = vadd.f32 %v9669, %v9670
    %v9672 = vrot.slane %v9671, 2
    %v9673 = vadd.f32 %v9671, %v9672
    %v9674 = vrot.slane %v9673, 1
    %v9675 = vadd.f32 %v9673, %v9674
    %v9676 = vsel %vm5233, %v9435, 0.0
    %v9677 = vadd.f32 %v9432, %v9676
    %v9678 = vrot.slane %v9677, 4
    %v9679 = vadd.f32 %v9677, %v9678
    %v9680 = vrot.slane %v9679, 2
    %v9681 = vadd.f32 %v9679, %v9680
    %v9682 = vrot.slane %v9681, 1
    %v9683 = vadd.f32 %v9681, %v9682
    %v9684 = vsel %vm5233, %v9441, 0.0
    %v9685 = vadd.f32 %v9438, %v9684
    %v9686 = vrot.slane %v9685, 4
    %v9687 = vadd.f32 %v9685, %v9686
    %v9688 = vrot.slane %v9687, 2
    %v9689 = vadd.f32 %v9687, %v9688
    %v9690 = vrot.slane %v9689, 1
    %v9691 = vadd.f32 %v9689, %v9690
    %v9692 = vsel %vm5233, %v9447, 0.0
    %v9693 = vadd.f32 %v9444, %v9692
    %v9694 = vrot.slane %v9693, 4
    %v9695 = vadd.f32 %v9693, %v9694
    %v9696 = vrot.slane %v9695, 2
    %v9697 = vadd.f32 %v9695, %v9696
    %v9698 = vrot.slane %v9697, 1
    %v9699 = vadd.f32 %v9697, %v9698
    %v9700 = vsel %vm5233, %v9453, 0.0
    %v9701 = vadd.f32 %v9450, %v9700
    %v9702 = vrot.slane %v9701, 4
    %v9703 = vadd.f32 %v9701, %v9702
    %v9704 = vrot.slane %v9703, 2
    %v9705 = vadd.f32 %v9703, %v9704
    %v9706 = vrot.slane %v9705, 1
    %v9707 = vadd.f32 %v9705, %v9706
    %v9708 = vsel %vm5233, %v9459, 0.0
    %v9709 = vadd.f32 %v9456, %v9708
    %v9710 = vrot.slane %v9709, 4
    %v9711 = vadd.f32 %v9709, %v9710
    %v9712 = vrot.slane %v9711, 2
    %v9713 = vadd.f32 %v9711, %v9712
    %v9714 = vrot.slane %v9713, 1
    %v9715 = vadd.f32 %v9713, %v9714
    %v9716 = vadd.f32 %v9467, %v9475
    %v9717 = vadd.f32 %v9716, %v9483
    %v9718 = vadd.f32 %v9717, %v9491
    %v9719 = vadd.f32 %v9718, %v9499
    %v9720 = vadd.f32 %v9719, %v9507
    %v9721 = vadd.f32 %v9720, %v9515
    %v9722 = vadd.f32 %v9721, %v9523
    %v9723 = vadd.f32 %v9722, %v9531
    %v9724 = vadd.f32 %v9723, %v9539
    %v9725 = vadd.f32 %v9724, %v9547
    %v9726 = vadd.f32 %v9725, %v9555
    %v9727 = vadd.f32 %v9726, %v9563
    %v9728 = vadd.f32 %v9727, %v9571
    %v9729 = vadd.f32 %v9728, %v9579
    %v9730 = vadd.f32 %v9729, %v9587
    %v9731 = vadd.f32 %v9730, %v9595
    %v9732 = vadd.f32 %v9731, %v9603
    %v9733 = vadd.f32 %v9732, %v9611
    %v9734 = vadd.f32 %v9733, %v9619
    %v9735 = vadd.f32 %v9734, %v9627
    %v9736 = vadd.f32 %v9735, %v9635
    %v9737 = vadd.f32 %v9736, %v9643
    %v9738 = vadd.f32 %v9737, %v9651
    %v9739 = vadd.f32 %v9738, %v9659
    %v9740 = vadd.f32 %v9739, %v9667
    %v9741 = vadd.f32 %v9740, %v9675
    %v9742 = vadd.f32 %v9741, %v9683
    %v9743 = vadd.f32 %v9742, %v9691
    %v9744 = vadd.f32 %v9743, %v9699
    %v9745 = vadd.f32 %v9744, %v9707
    %v9746 = vadd.f32 %v9745, %v9715
    %v9747 = vmul.f32 %v9074, %v9138
    %v9748 = vmul.f32 %v9075, %v9139
    %v9749 = vmul.f32 %v9076, %v9140
    %v9750 = vmul.f32 %v9077, %v9141
    %v9751 = vmul.f32 %v9078, %v9142
    %v9752 = vmul.f32 %v9079, %v9143
    %v9753 = vmul.f32 %v9080, %v9144
    %v9754 = vmul.f32 %v9081, %v9145
    %v9755 = vmul.f32 %v9082, %v9146
    %v9756 = vmul.f32 %v9083, %v9147
    %v9757 = vmul.f32 %v9084, %v9148
    %v9758 = vmul.f32 %v9085, %v9149
    %v9759 = vmul.f32 %v9086, %v9150
    %v9760 = vmul.f32 %v9087, %v9151
    %v9761 = vmul.f32 %v9088, %v9152
    %v9762 = vmul.f32 %v9089, %v9153
    %v9763 = vmul.f32 %v9090, %v9154
    %v9764 = vmul.f32 %v9091, %v9155
    %v9765 = vmul.f32 %v9092, %v9156
    %v9766 = vmul.f32 %v9093, %v9157
    %v9767 = vmul.f32 %v9094, %v9158
    %v9768 = vmul.f32 %v9095, %v9159
    %v9769 = vmul.f32 %v9096, %v9160
    %v9770 = vmul.f32 %v9097, %v9161
    %v9771 = vmul.f32 %v9098, %v9162
    %v9772 = vmul.f32 %v9099, %v9163
    %v9773 = vmul.f32 %v9100, %v9164
    %v9774 = vmul.f32 %v9101, %v9165
    %v9775 = vmul.f32 %v9102, %v9166
    %v9776 = vmul.f32 %v9103, %v9167
    %v9777 = vmul.f32 %v9104, %v9168
    %v9778 = vmul.f32 %v9105, %v9169
    %v9779 = vmul.f32 %v9106, %v9170
    %v9780 = vmul.f32 %v9107, %v9171
    %v9781 = vmul.f32 %v9108, %v9172
    %v9782 = vmul.f32 %v9109, %v9173
    %v9783 = vmul.f32 %v9110, %v9174
    %v9784 = vmul.f32 %v9111, %v9175
    %v9785 = vmul.f32 %v9112, %v9176
    %v9786 = vmul.f32 %v9113, %v9177
    %v9787 = vmul.f32 %v9114, %v9178
    %v9788 = vmul.f32 %v9115, %v9179
    %v9789 = vmul.f32 %v9116, %v9180
    %v9790 = vmul.f32 %v9117, %v9181
    %v9791 = vmul.f32 %v9118, %v9182
    %v9792 = vmul.f32 %v9119, %v9183
    %v9793 = vmul.f32 %v9120, %v9184
    %v9794 = vmul.f32 %v9121, %v9185
    %v9795 = vmul.f32 %v9122, %v9186
    %v9796 = vmul.f32 %v9123, %v9187
    %v9797 = vmul.f32 %v9124, %v9188
    %v9798 = vmul.f32 %v9125, %v9189
    %v9799 = vmul.f32 %v9126, %v9190
    %v9800 = vmul.f32 %v9127, %v9191
    %v9801 = vmul.f32 %v9128, %v9192
    %v9802 = vmul.f32 %v9129, %v9193
    %v9803 = vmul.f32 %v9130, %v9194
    %v9804 = vmul.f32 %v9131, %v9195
    %v9805 = vmul.f32 %v9132, %v9196
    %v9806 = vmul.f32 %v9133, %v9197
    %v9807 = vmul.f32 %v9134, %v9198
    %v9808 = vmul.f32 %v9135, %v9199
    %v9809 = vmul.f32 %v9136, %v9200
    %v9810 = vmul.f32 %v9137, %v9201
    %v9811 = vsel %vm9266, %v9747, 0.0
    %9812 = vadd.xlane.f32.xlu0 %v9811
    %v9813 = vpop.xlane.xlu0 %9812
    %v9814 = vsel %vm9270, %v9748, 0.0
    %9815 = vadd.xlane.f32.xlu0 %v9814
    %v9816 = vpop.xlane.xlu0 %9815
    %v9817 = vsel %vm9266, %v9749, 0.0
    %9818 = vadd.xlane.f32.xlu0 %v9817
    %v9819 = vpop.xlane.xlu0 %9818
    %v9820 = vsel %vm9270, %v9750, 0.0
    %9821 = vadd.xlane.f32.xlu0 %v9820
    %v9822 = vpop.xlane.xlu0 %9821
    %v9823 = vsel %vm9266, %v9751, 0.0
    %9824 = vadd.xlane.f32.xlu0 %v9823
    %v9825 = vpop.xlane.xlu0 %9824
    %v9826 = vsel %vm9270, %v9752, 0.0
    %9827 = vadd.xlane.f32.xlu0 %v9826
    %v9828 = vpop.xlane.xlu0 %9827
    %v9829 = vsel %vm9266, %v9753, 0.0
    %9830 = vadd.xlane.f32.xlu0 %v9829
    %v9831 = vpop.xlane.xlu0 %9830
    %v9832 = vsel %vm9270, %v9754, 0.0
    %9833 = vadd.xlane.f32.xlu0 %v9832
    %v9834 = vpop.xlane.xlu0 %9833
    %v9835 = vsel %vm9266, %v9755, 0.0
    %9836 = vadd.xlane.f32.xlu0 %v9835
    %v9837 = vpop.xlane.xlu0 %9836
    %v9838 = vsel %vm9270, %v9756, 0.0
    %9839 = vadd.xlane.f32.xlu0 %v9838
    %v9840 = vpop.xlane.xlu0 %9839
    %v9841 = vsel %vm9266, %v9757, 0.0
    %9842 = vadd.xlane.f32.xlu0 %v9841
    %v9843 = vpop.xlane.xlu0 %9842
    %v9844 = vsel %vm9270, %v9758, 0.0
    %9845 = vadd.xlane.f32.xlu0 %v9844
    %v9846 = vpop.xlane.xlu0 %9845
    %v9847 = vsel %vm9266, %v9759, 0.0
    %9848 = vadd.xlane.f32.xlu0 %v9847
    %v9849 = vpop.xlane.xlu0 %9848
    %v9850 = vsel %vm9270, %v9760, 0.0
    %9851 = vadd.xlane.f32.xlu0 %v9850
    %v9852 = vpop.xlane.xlu0 %9851
    %v9853 = vsel %vm9266, %v9761, 0.0
    %9854 = vadd.xlane.f32.xlu0 %v9853
    %v9855 = vpop.xlane.xlu0 %9854
    %v9856 = vsel %vm9270, %v9762, 0.0
    %9857 = vadd.xlane.f32.xlu0 %v9856
    %v9858 = vpop.xlane.xlu0 %9857
    %v9859 = vsel %vm9266, %v9763, 0.0
    %9860 = vadd.xlane.f32.xlu0 %v9859
    %v9861 = vpop.xlane.xlu0 %9860
    %v9862 = vsel %vm9270, %v9764, 0.0
    %9863 = vadd.xlane.f32.xlu0 %v9862
    %v9864 = vpop.xlane.xlu0 %9863
    %v9865 = vsel %vm9266, %v9765, 0.0
    %9866 = vadd.xlane.f32.xlu0 %v9865
    %v9867 = vpop.xlane.xlu0 %9866
    %v9868 = vsel %vm9270, %v9766, 0.0
    %9869 = vadd.xlane.f32.xlu0 %v9868
    %v9870 = vpop.xlane.xlu0 %9869
    %v9871 = vsel %vm9266, %v9767, 0.0
    %9872 = vadd.xlane.f32.xlu0 %v9871
    %v9873 = vpop.xlane.xlu0 %9872
    %v9874 = vsel %vm9270, %v9768, 0.0
    %9875 = vadd.xlane.f32.xlu0 %v9874
    %v9876 = vpop.xlane.xlu0 %9875
    %v9877 = vsel %vm9266, %v9769, 0.0
    %9878 = vadd.xlane.f32.xlu0 %v9877
    %v9879 = vpop.xlane.xlu0 %9878
    %v9880 = vsel %vm9270, %v9770, 0.0
    %9881 = vadd.xlane.f32.xlu0 %v9880
    %v9882 = vpop.xlane.xlu0 %9881
    %v9883 = vsel %vm9266, %v9771, 0.0
    %9884 = vadd.xlane.f32.xlu0 %v9883
    %v9885 = vpop.xlane.xlu0 %9884
    %v9886 = vsel %vm9270, %v9772, 0.0
    %9887 = vadd.xlane.f32.xlu0 %v9886
    %v9888 = vpop.xlane.xlu0 %9887
    %v9889 = vsel %vm9266, %v9773, 0.0
    %9890 = vadd.xlane.f32.xlu0 %v9889
    %v9891 = vpop.xlane.xlu0 %9890
    %v9892 = vsel %vm9270, %v9774, 0.0
    %9893 = vadd.xlane.f32.xlu0 %v9892
    %v9894 = vpop.xlane.xlu0 %9893
    %v9895 = vsel %vm9266, %v9775, 0.0
    %9896 = vadd.xlane.f32.xlu0 %v9895
    %v9897 = vpop.xlane.xlu0 %9896
    %v9898 = vsel %vm9270, %v9776, 0.0
    %9899 = vadd.xlane.f32.xlu0 %v9898
    %v9900 = vpop.xlane.xlu0 %9899
    %v9901 = vsel %vm9266, %v9777, 0.0
    %9902 = vadd.xlane.f32.xlu0 %v9901
    %v9903 = vpop.xlane.xlu0 %9902
    %v9904 = vsel %vm9270, %v9778, 0.0
    %9905 = vadd.xlane.f32.xlu0 %v9904
    %v9906 = vpop.xlane.xlu0 %9905
    %v9907 = vsel %vm9266, %v9779, 0.0
    %9908 = vadd.xlane.f32.xlu0 %v9907
    %v9909 = vpop.xlane.xlu0 %9908
    %v9910 = vsel %vm9270, %v9780, 0.0
    %9911 = vadd.xlane.f32.xlu0 %v9910
    %v9912 = vpop.xlane.xlu0 %9911
    %v9913 = vsel %vm9266, %v9781, 0.0
    %9914 = vadd.xlane.f32.xlu0 %v9913
    %v9915 = vpop.xlane.xlu0 %9914
    %v9916 = vsel %vm9270, %v9782, 0.0
    %9917 = vadd.xlane.f32.xlu0 %v9916
    %v9918 = vpop.xlane.xlu0 %9917
    %v9919 = vsel %vm9266, %v9783, 0.0
    %9920 = vadd.xlane.f32.xlu0 %v9919
    %v9921 = vpop.xlane.xlu0 %9920
    %v9922 = vsel %vm9270, %v9784, 0.0
    %9923 = vadd.xlane.f32.xlu0 %v9922
    %v9924 = vpop.xlane.xlu0 %9923
    %v9925 = vsel %vm9266, %v9785, 0.0
    %9926 = vadd.xlane.f32.xlu0 %v9925
    %v9927 = vpop.xlane.xlu0 %9926
    %v9928 = vsel %vm9270, %v9786, 0.0
    %9929 = vadd.xlane.f32.xlu0 %v9928
    %v9930 = vpop.xlane.xlu0 %9929
    %v9931 = vsel %vm9266, %v9787, 0.0
    %9932 = vadd.xlane.f32.xlu0 %v9931
    %v9933 = vpop.xlane.xlu0 %9932
    %v9934 = vsel %vm9270, %v9788, 0.0
    %9935 = vadd.xlane.f32.xlu0 %v9934
    %v9936 = vpop.xlane.xlu0 %9935
    %v9937 = vsel %vm9266, %v9789, 0.0
    %9938 = vadd.xlane.f32.xlu0 %v9937
    %v9939 = vpop.xlane.xlu0 %9938
    %v9940 = vsel %vm9270, %v9790, 0.0
    %9941 = vadd.xlane.f32.xlu0 %v9940
    %v9942 = vpop.xlane.xlu0 %9941
    %v9943 = vsel %vm9266, %v9791, 0.0
    %9944 = vadd.xlane.f32.xlu0 %v9943
    %v9945 = vpop.xlane.xlu0 %9944
    %v9946 = vsel %vm9270, %v9792, 0.0
    %9947 = vadd.xlane.f32.xlu0 %v9946
    %v9948 = vpop.xlane.xlu0 %9947
    %v9949 = vsel %vm9266, %v9793, 0.0
    %9950 = vadd.xlane.f32.xlu0 %v9949
    %v9951 = vpop.xlane.xlu0 %9950
    %v9952 = vsel %vm9270, %v9794, 0.0
    %9953 = vadd.xlane.f32.xlu0 %v9952
    %v9954 = vpop.xlane.xlu0 %9953
    %v9955 = vsel %vm9266, %v9795, 0.0
    %9956 = vadd.xlane.f32.xlu0 %v9955
    %v9957 = vpop.xlane.xlu0 %9956
    %v9958 = vsel %vm9270, %v9796, 0.0
    %9959 = vadd.xlane.f32.xlu0 %v9958
    %v9960 = vpop.xlane.xlu0 %9959
    %v9961 = vsel %vm9266, %v9797, 0.0
    %9962 = vadd.xlane.f32.xlu0 %v9961
    %v9963 = vpop.xlane.xlu0 %9962
    %v9964 = vsel %vm9270, %v9798, 0.0
    %9965 = vadd.xlane.f32.xlu0 %v9964
    %v9966 = vpop.xlane.xlu0 %9965
    %v9967 = vsel %vm9266, %v9799, 0.0
    %9968 = vadd.xlane.f32.xlu0 %v9967
    %v9969 = vpop.xlane.xlu0 %9968
    %v9970 = vsel %vm9270, %v9800, 0.0
    %9971 = vadd.xlane.f32.xlu0 %v9970
    %v9972 = vpop.xlane.xlu0 %9971
    %v9973 = vsel %vm9266, %v9801, 0.0
    %9974 = vadd.xlane.f32.xlu0 %v9973
    %v9975 = vpop.xlane.xlu0 %9974
    %v9976 = vsel %vm9270, %v9802, 0.0
    %9977 = vadd.xlane.f32.xlu0 %v9976
    %v9978 = vpop.xlane.xlu0 %9977
    %v9979 = vsel %vm9266, %v9803, 0.0
    %9980 = vadd.xlane.f32.xlu0 %v9979
    %v9981 = vpop.xlane.xlu0 %9980
    %v9982 = vsel %vm9270, %v9804, 0.0
    %9983 = vadd.xlane.f32.xlu0 %v9982
    %v9984 = vpop.xlane.xlu0 %9983
    %v9985 = vsel %vm9266, %v9805, 0.0
    %9986 = vadd.xlane.f32.xlu0 %v9985
    %v9987 = vpop.xlane.xlu0 %9986
    %v9988 = vsel %vm9270, %v9806, 0.0
    %9989 = vadd.xlane.f32.xlu0 %v9988
    %v9990 = vpop.xlane.xlu0 %9989
    %v9991 = vsel %vm9266, %v9807, 0.0
    %9992 = vadd.xlane.f32.xlu0 %v9991
    %v9993 = vpop.xlane.xlu0 %9992
    %v9994 = vsel %vm9270, %v9808, 0.0
    %9995 = vadd.xlane.f32.xlu0 %v9994
    %v9996 = vpop.xlane.xlu0 %9995
    %v9997 = vsel %vm9266, %v9809, 0.0
    %9998 = vadd.xlane.f32.xlu0 %v9997
    %v9999 = vpop.xlane.xlu0 %9998
    %v10000 = vsel %vm9270, %v9810, 0.0
    %10001 = vadd.xlane.f32.xlu0 %v10000
    %v10002 = vpop.xlane.xlu0 %10001
    %v10003 = vsel %vm5233, %v9816, 0.0
    %v10004 = vadd.f32 %v9813, %v10003
    %v10005 = vrot.slane %v10004, 4
    %v10006 = vadd.f32 %v10004, %v10005
    %v10007 = vrot.slane %v10006, 2
    %v10008 = vadd.f32 %v10006, %v10007
    %v10009 = vrot.slane %v10008, 1
    %v10010 = vadd.f32 %v10008, %v10009
    %v10011 = vsel %vm5233, %v9822, 0.0
    %v10012 = vadd.f32 %v9819, %v10011
    %v10013 = vrot.slane %v10012, 4
    %v10014 = vadd.f32 %v10012, %v10013
    %v10015 = vrot.slane %v10014, 2
    %v10016 = vadd.f32 %v10014, %v10015
    %v10017 = vrot.slane %v10016, 1
    %v10018 = vadd.f32 %v10016, %v10017
    %v10019 = vsel %vm5233, %v9828, 0.0
    %v10020 = vadd.f32 %v9825, %v10019
    %v10021 = vrot.slane %v10020, 4
    %v10022 = vadd.f32 %v10020, %v10021
    %v10023 = vrot.slane %v10022, 2
    %v10024 = vadd.f32 %v10022, %v10023
    %v10025 = vrot.slane %v10024, 1
    %v10026 = vadd.f32 %v10024, %v10025
    %v10027 = vsel %vm5233, %v9834, 0.0
    %v10028 = vadd.f32 %v9831, %v10027
    %v10029 = vrot.slane %v10028, 4
    %v10030 = vadd.f32 %v10028, %v10029
    %v10031 = vrot.slane %v10030, 2
    %v10032 = vadd.f32 %v10030, %v10031
    %v10033 = vrot.slane %v10032, 1
    %v10034 = vadd.f32 %v10032, %v10033
    %v10035 = vsel %vm5233, %v9840, 0.0
    %v10036 = vadd.f32 %v9837, %v10035
    %v10037 = vrot.slane %v10036, 4
    %v10038 = vadd.f32 %v10036, %v10037
    %v10039 = vrot.slane %v10038, 2
    %v10040 = vadd.f32 %v10038, %v10039
    %v10041 = vrot.slane %v10040, 1
    %v10042 = vadd.f32 %v10040, %v10041
    %v10043 = vsel %vm5233, %v9846, 0.0
    %v10044 = vadd.f32 %v9843, %v10043
    %v10045 = vrot.slane %v10044, 4
    %v10046 = vadd.f32 %v10044, %v10045
    %v10047 = vrot.slane %v10046, 2
    %v10048 = vadd.f32 %v10046, %v10047
    %v10049 = vrot.slane %v10048, 1
    %v10050 = vadd.f32 %v10048, %v10049
    %v10051 = vsel %vm5233, %v9852, 0.0
    %v10052 = vadd.f32 %v9849, %v10051
    %v10053 = vrot.slane %v10052, 4
    %v10054 = vadd.f32 %v10052, %v10053
    %v10055 = vrot.slane %v10054, 2
    %v10056 = vadd.f32 %v10054, %v10055
    %v10057 = vrot.slane %v10056, 1
    %v10058 = vadd.f32 %v10056, %v10057
    %v10059 = vsel %vm5233, %v9858, 0.0
    %v10060 = vadd.f32 %v9855, %v10059
    %v10061 = vrot.slane %v10060, 4
    %v10062 = vadd.f32 %v10060, %v10061
    %v10063 = vrot.slane %v10062, 2
    %v10064 = vadd.f32 %v10062, %v10063
    %v10065 = vrot.slane %v10064, 1
    %v10066 = vadd.f32 %v10064, %v10065
    %v10067 = vsel %vm5233, %v9864, 0.0
    %v10068 = vadd.f32 %v9861, %v10067
    %v10069 = vrot.slane %v10068, 4
    %v10070 = vadd.f32 %v10068, %v10069
    %v10071 = vrot.slane %v10070, 2
    %v10072 = vadd.f32 %v10070, %v10071
    %v10073 = vrot.slane %v10072, 1
    %v10074 = vadd.f32 %v10072, %v10073
    %v10075 = vsel %vm5233, %v9870, 0.0
    %v10076 = vadd.f32 %v9867, %v10075
    %v10077 = vrot.slane %v10076, 4
    %v10078 = vadd.f32 %v10076, %v10077
    %v10079 = vrot.slane %v10078, 2
    %v10080 = vadd.f32 %v10078, %v10079
    %v10081 = vrot.slane %v10080, 1
    %v10082 = vadd.f32 %v10080, %v10081
    %v10083 = vsel %vm5233, %v9876, 0.0
    %v10084 = vadd.f32 %v9873, %v10083
    %v10085 = vrot.slane %v10084, 4
    %v10086 = vadd.f32 %v10084, %v10085
    %v10087 = vrot.slane %v10086, 2
    %v10088 = vadd.f32 %v10086, %v10087
    %v10089 = vrot.slane %v10088, 1
    %v10090 = vadd.f32 %v10088, %v10089
    %v10091 = vsel %vm5233, %v9882, 0.0
    %v10092 = vadd.f32 %v9879, %v10091
    %v10093 = vrot.slane %v10092, 4
    %v10094 = vadd.f32 %v10092, %v10093
    %v10095 = vrot.slane %v10094, 2
    %v10096 = vadd.f32 %v10094, %v10095
    %v10097 = vrot.slane %v10096, 1
    %v10098 = vadd.f32 %v10096, %v10097
    %v10099 = vsel %vm5233, %v9888, 0.0
    %v10100 = vadd.f32 %v9885, %v10099
    %v10101 = vrot.slane %v10100, 4
    %v10102 = vadd.f32 %v10100, %v10101
    %v10103 = vrot.slane %v10102, 2
    %v10104 = vadd.f32 %v10102, %v10103
    %v10105 = vrot.slane %v10104, 1
    %v10106 = vadd.f32 %v10104, %v10105
    %v10107 = vsel %vm5233, %v9894, 0.0
    %v10108 = vadd.f32 %v9891, %v10107
    %v10109 = vrot.slane %v10108, 4
    %v10110 = vadd.f32 %v10108, %v10109
    %v10111 = vrot.slane %v10110, 2
    %v10112 = vadd.f32 %v10110, %v10111
    %v10113 = vrot.slane %v10112, 1
    %v10114 = vadd.f32 %v10112, %v10113
    %v10115 = vsel %vm5233, %v9900, 0.0
    %v10116 = vadd.f32 %v9897, %v10115
    %v10117 = vrot.slane %v10116, 4
    %v10118 = vadd.f32 %v10116, %v10117
    %v10119 = vrot.slane %v10118, 2
    %v10120 = vadd.f32 %v10118, %v10119
    %v10121 = vrot.slane %v10120, 1
    %v10122 = vadd.f32 %v10120, %v10121
    %v10123 = vsel %vm5233, %v9906, 0.0
    %v10124 = vadd.f32 %v9903, %v10123
    %v10125 = vrot.slane %v10124, 4
    %v10126 = vadd.f32 %v10124, %v10125
    %v10127 = vrot.slane %v10126, 2
    %v10128 = vadd.f32 %v10126, %v10127
    %v10129 = vrot.slane %v10128, 1
    %v10130 = vadd.f32 %v10128, %v10129
    %v10131 = vsel %vm5233, %v9912, 0.0
    %v10132 = vadd.f32 %v9909, %v10131
    %v10133 = vrot.slane %v10132, 4
    %v10134 = vadd.f32 %v10132, %v10133
    %v10135 = vrot.slane %v10134, 2
    %v10136 = vadd.f32 %v10134, %v10135
    %v10137 = vrot.slane %v10136, 1
    %v10138 = vadd.f32 %v10136, %v10137
    %v10139 = vsel %vm5233, %v9918, 0.0
    %v10140 = vadd.f32 %v9915, %v10139
    %v10141 = vrot.slane %v10140, 4
    %v10142 = vadd.f32 %v10140, %v10141
    %v10143 = vrot.slane %v10142, 2
    %v10144 = vadd.f32 %v10142, %v10143
    %v10145 = vrot.slane %v10144, 1
    %v10146 = vadd.f32 %v10144, %v10145
    %v10147 = vsel %vm5233, %v9924, 0.0
    %v10148 = vadd.f32 %v9921, %v10147
    %v10149 = vrot.slane %v10148, 4
    %v10150 = vadd.f32 %v10148, %v10149
    %v10151 = vrot.slane %v10150, 2
    %v10152 = vadd.f32 %v10150, %v10151
    %v10153 = vrot.slane %v10152, 1
    %v10154 = vadd.f32 %v10152, %v10153
    %v10155 = vsel %vm5233, %v9930, 0.0
    %v10156 = vadd.f32 %v9927, %v10155
    %v10157 = vrot.slane %v10156, 4
    %v10158 = vadd.f32 %v10156, %v10157
    %v10159 = vrot.slane %v10158, 2
    %v10160 = vadd.f32 %v10158, %v10159
    %v10161 = vrot.slane %v10160, 1
    %v10162 = vadd.f32 %v10160, %v10161
    %v10163 = vsel %vm5233, %v9936, 0.0
    %v10164 = vadd.f32 %v9933, %v10163
    %v10165 = vrot.slane %v10164, 4
    %v10166 = vadd.f32 %v10164, %v10165
    %v10167 = vrot.slane %v10166, 2
    %v10168 = vadd.f32 %v10166, %v10167
    %v10169 = vrot.slane %v10168, 1
    %v10170 = vadd.f32 %v10168, %v10169
    %v10171 = vsel %vm5233, %v9942, 0.0
    %v10172 = vadd.f32 %v9939, %v10171
    %v10173 = vrot.slane %v10172, 4
    %v10174 = vadd.f32 %v10172, %v10173
    %v10175 = vrot.slane %v10174, 2
    %v10176 = vadd.f32 %v10174, %v10175
    %v10177 = vrot.slane %v10176, 1
    %v10178 = vadd.f32 %v10176, %v10177
    %v10179 = vsel %vm5233, %v9948, 0.0
    %v10180 = vadd.f32 %v9945, %v10179
    %v10181 = vrot.slane %v10180, 4
    %v10182 = vadd.f32 %v10180, %v10181
    %v10183 = vrot.slane %v10182, 2
    %v10184 = vadd.f32 %v10182, %v10183
    %v10185 = vrot.slane %v10184, 1
    %v10186 = vadd.f32 %v10184, %v10185
    %v10187 = vsel %vm5233, %v9954, 0.0
    %v10188 = vadd.f32 %v9951, %v10187
    %v10189 = vrot.slane %v10188, 4
    %v10190 = vadd.f32 %v10188, %v10189
    %v10191 = vrot.slane %v10190, 2
    %v10192 = vadd.f32 %v10190, %v10191
    %v10193 = vrot.slane %v10192, 1
    %v10194 = vadd.f32 %v10192, %v10193
    %v10195 = vsel %vm5233, %v9960, 0.0
    %v10196 = vadd.f32 %v9957, %v10195
    %v10197 = vrot.slane %v10196, 4
    %v10198 = vadd.f32 %v10196, %v10197
    %v10199 = vrot.slane %v10198, 2
    %v10200 = vadd.f32 %v10198, %v10199
    %v10201 = vrot.slane %v10200, 1
    %v10202 = vadd.f32 %v10200, %v10201
    %v10203 = vsel %vm5233, %v9966, 0.0
    %v10204 = vadd.f32 %v9963, %v10203
    %v10205 = vrot.slane %v10204, 4
    %v10206 = vadd.f32 %v10204, %v10205
    %v10207 = vrot.slane %v10206, 2
    %v10208 = vadd.f32 %v10206, %v10207
    %v10209 = vrot.slane %v10208, 1
    %v10210 = vadd.f32 %v10208, %v10209
    %v10211 = vsel %vm5233, %v9972, 0.0
    %v10212 = vadd.f32 %v9969, %v10211
    %v10213 = vrot.slane %v10212, 4
    %v10214 = vadd.f32 %v10212, %v10213
    %v10215 = vrot.slane %v10214, 2
    %v10216 = vadd.f32 %v10214, %v10215
    %v10217 = vrot.slane %v10216, 1
    %v10218 = vadd.f32 %v10216, %v10217
    %v10219 = vsel %vm5233, %v9978, 0.0
    %v10220 = vadd.f32 %v9975, %v10219
    %v10221 = vrot.slane %v10220, 4
    %v10222 = vadd.f32 %v10220, %v10221
    %v10223 = vrot.slane %v10222, 2
    %v10224 = vadd.f32 %v10222, %v10223
    %v10225 = vrot.slane %v10224, 1
    %v10226 = vadd.f32 %v10224, %v10225
    %v10227 = vsel %vm5233, %v9984, 0.0
    %v10228 = vadd.f32 %v9981, %v10227
    %v10229 = vrot.slane %v10228, 4
    %v10230 = vadd.f32 %v10228, %v10229
    %v10231 = vrot.slane %v10230, 2
    %v10232 = vadd.f32 %v10230, %v10231
    %v10233 = vrot.slane %v10232, 1
    %v10234 = vadd.f32 %v10232, %v10233
    %v10235 = vsel %vm5233, %v9990, 0.0
    %v10236 = vadd.f32 %v9987, %v10235
    %v10237 = vrot.slane %v10236, 4
    %v10238 = vadd.f32 %v10236, %v10237
    %v10239 = vrot.slane %v10238, 2
    %v10240 = vadd.f32 %v10238, %v10239
    %v10241 = vrot.slane %v10240, 1
    %v10242 = vadd.f32 %v10240, %v10241
    %v10243 = vsel %vm5233, %v9996, 0.0
    %v10244 = vadd.f32 %v9993, %v10243
    %v10245 = vrot.slane %v10244, 4
    %v10246 = vadd.f32 %v10244, %v10245
    %v10247 = vrot.slane %v10246, 2
    %v10248 = vadd.f32 %v10246, %v10247
    %v10249 = vrot.slane %v10248, 1
    %v10250 = vadd.f32 %v10248, %v10249
    %v10251 = vsel %vm5233, %v10002, 0.0
    %v10252 = vadd.f32 %v9999, %v10251
    %v10253 = vrot.slane %v10252, 4
    %v10254 = vadd.f32 %v10252, %v10253
    %v10255 = vrot.slane %v10254, 2
    %v10256 = vadd.f32 %v10254, %v10255
    %v10257 = vrot.slane %v10256, 1
    %v10258 = vadd.f32 %v10256, %v10257
    %v10259 = vadd.f32 %v10010, %v10018
    %v10260 = vadd.f32 %v10259, %v10026
    %v10261 = vadd.f32 %v10260, %v10034
    %v10262 = vadd.f32 %v10261, %v10042
    %v10263 = vadd.f32 %v10262, %v10050
    %v10264 = vadd.f32 %v10263, %v10058
    %v10265 = vadd.f32 %v10264, %v10066
    %v10266 = vadd.f32 %v10265, %v10074
    %v10267 = vadd.f32 %v10266, %v10082
    %v10268 = vadd.f32 %v10267, %v10090
    %v10269 = vadd.f32 %v10268, %v10098
    %v10270 = vadd.f32 %v10269, %v10106
    %v10271 = vadd.f32 %v10270, %v10114
    %v10272 = vadd.f32 %v10271, %v10122
    %v10273 = vadd.f32 %v10272, %v10130
    %v10274 = vadd.f32 %v10273, %v10138
    %v10275 = vadd.f32 %v10274, %v10146
    %v10276 = vadd.f32 %v10275, %v10154
    %v10277 = vadd.f32 %v10276, %v10162
    %v10278 = vadd.f32 %v10277, %v10170
    %v10279 = vadd.f32 %v10278, %v10178
    %v10280 = vadd.f32 %v10279, %v10186
    %v10281 = vadd.f32 %v10280, %v10194
    %v10282 = vadd.f32 %v10281, %v10202
    %v10283 = vadd.f32 %v10282, %v10210
    %v10284 = vadd.f32 %v10283, %v10218
    %v10285 = vadd.f32 %v10284, %v10226
    %v10286 = vadd.f32 %v10285, %v10234
    %v10287 = vadd.f32 %v10286, %v10242
    %v10288 = vadd.f32 %v10287, %v10250
    %v10289 = vadd.f32 %v10288, %v10258
    %v10290 = vsel %vm5233, %v9746, %v10289
    %v10291 = vlaneseq
    %v10292 = vshrl.u32 %v10291, 7
    %v10293 = vsub.s32 0, %v10292
    %v10294 = vrot.slane %v15, %v10293
    %10296 = vrot.lane.b32.xlu0 %v10294, 114
    %v10297 = vpop.permute.xlu0 %10296
    %v10299 = vadd.f32 %v10290, %v10297
    %s10300 = scalar_lea.vmem %s2, 512
    %v10301 = vld [vmem:[%s10300] sm:$0xff]
    %v10302 = vld [vmem:[%s10300 + $0x8] sm:$0x1]
    %v10303 = vld [vmem:[%s10300 + $0x10] sm:$0xff]
    %v10304 = vld [vmem:[%s10300 + $0x18] sm:$0x1]
    %v10305 = vld [vmem:[%s10300 + $0x20] sm:$0xff]
    %v10306 = vld [vmem:[%s10300 + $0x28] sm:$0x1]
    %v10307 = vld [vmem:[%s10300 + $0x30] sm:$0xff]
    %v10308 = vld [vmem:[%s10300 + $0x38] sm:$0x1]
    %v10309 = vld [vmem:[%s10300 + $0x40] sm:$0xff]
    %v10310 = vld [vmem:[%s10300 + $0x48] sm:$0x1]
    %v10311 = vld [vmem:[%s10300 + $0x50] sm:$0xff]
    %v10312 = vld [vmem:[%s10300 + $0x58] sm:$0x1]
    %v10313 = vld [vmem:[%s10300 + $0x60] sm:$0xff]
    %v10314 = vld [vmem:[%s10300 + $0x68] sm:$0x1]
    %v10315 = vld [vmem:[%s10300 + $0x70] sm:$0xff]
    %v10316 = vld [vmem:[%s10300 + $0x78] sm:$0x1]
    %v10317 = vld [vmem:[%s10300 + $0x80] sm:$0xff]
    %v10318 = vld [vmem:[%s10300 + $0x88] sm:$0x1]
    %v10319 = vld [vmem:[%s10300 + $0x90] sm:$0xff]
    %v10320 = vld [vmem:[%s10300 + $0x98] sm:$0x1]
    %v10321 = vld [vmem:[%s10300 + $0xa0] sm:$0xff]
    %v10322 = vld [vmem:[%s10300 + $0xa8] sm:$0x1]
    %v10323 = vld [vmem:[%s10300 + $0xb0] sm:$0xff]
    %v10324 = vld [vmem:[%s10300 + $0xb8] sm:$0x1]
    %v10325 = vld [vmem:[%s10300 + $0xc0] sm:$0xff]
    %v10326 = vld [vmem:[%s10300 + $0xc8] sm:$0x1]
    %v10327 = vld [vmem:[%s10300 + $0xd0] sm:$0xff]
    %v10328 = vld [vmem:[%s10300 + $0xd8] sm:$0x1]
    %v10329 = vld [vmem:[%s10300 + $0xe0] sm:$0xff]
    %v10330 = vld [vmem:[%s10300 + $0xe8] sm:$0x1]
    %v10331 = vld [vmem:[%s10300 + $0xf0] sm:$0xff]
    %v10332 = vld [vmem:[%s10300 + $0xf8] sm:$0x1]
    %v10333 = vld [vmem:[%s10300 + $0x100] sm:$0xff]
    %v10334 = vld [vmem:[%s10300 + $0x108] sm:$0x1]
    %v10335 = vld [vmem:[%s10300 + $0x110] sm:$0xff]
    %v10336 = vld [vmem:[%s10300 + $0x118] sm:$0x1]
    %v10337 = vld [vmem:[%s10300 + $0x120] sm:$0xff]
    %v10338 = vld [vmem:[%s10300 + $0x128] sm:$0x1]
    %v10339 = vld [vmem:[%s10300 + $0x130] sm:$0xff]
    %v10340 = vld [vmem:[%s10300 + $0x138] sm:$0x1]
    %v10341 = vld [vmem:[%s10300 + $0x140] sm:$0xff]
    %v10342 = vld [vmem:[%s10300 + $0x148] sm:$0x1]
    %v10343 = vld [vmem:[%s10300 + $0x150] sm:$0xff]
    %v10344 = vld [vmem:[%s10300 + $0x158] sm:$0x1]
    %v10345 = vld [vmem:[%s10300 + $0x160] sm:$0xff]
    %v10346 = vld [vmem:[%s10300 + $0x168] sm:$0x1]
    %v10347 = vld [vmem:[%s10300 + $0x170] sm:$0xff]
    %v10348 = vld [vmem:[%s10300 + $0x178] sm:$0x1]
    %v10349 = vld [vmem:[%s10300 + $0x180] sm:$0xff]
    %v10350 = vld [vmem:[%s10300 + $0x188] sm:$0x1]
    %v10351 = vld [vmem:[%s10300 + $0x190] sm:$0xff]
    %v10352 = vld [vmem:[%s10300 + $0x198] sm:$0x1]
    %v10353 = vld [vmem:[%s10300 + $0x1a0] sm:$0xff]
    %v10354 = vld [vmem:[%s10300 + $0x1a8] sm:$0x1]
    %v10355 = vld [vmem:[%s10300 + $0x1b0] sm:$0xff]
    %v10356 = vld [vmem:[%s10300 + $0x1b8] sm:$0x1]
    %v10357 = vld [vmem:[%s10300 + $0x1c0] sm:$0xff]
    %v10358 = vld [vmem:[%s10300 + $0x1c8] sm:$0x1]
    %v10359 = vld [vmem:[%s10300 + $0x1d0] sm:$0xff]
    %v10360 = vld [vmem:[%s10300 + $0x1d8] sm:$0x1]
    %v10361 = vld [vmem:[%s10300 + $0x1e0] sm:$0xff]
    %v10362 = vld [vmem:[%s10300 + $0x1e8] sm:$0x1]
    %v10363 = vld [vmem:[%s10300 + $0x1f0] sm:$0xff]
    %v10364 = vld [vmem:[%s10300 + $0x1f8] sm:$0x1]
    %v10365 = vmul.f32 %v5586, %v10301
    %v10366 = vmul.f32 %v5587, %v10302
    %v10367 = vmul.f32 %v5588, %v10303
    %v10368 = vmul.f32 %v5589, %v10304
    %v10369 = vmul.f32 %v5590, %v10305
    %v10370 = vmul.f32 %v5591, %v10306
    %v10371 = vmul.f32 %v5592, %v10307
    %v10372 = vmul.f32 %v5593, %v10308
    %v10373 = vmul.f32 %v5594, %v10309
    %v10374 = vmul.f32 %v5595, %v10310
    %v10375 = vmul.f32 %v5596, %v10311
    %v10376 = vmul.f32 %v5597, %v10312
    %v10377 = vmul.f32 %v5598, %v10313
    %v10378 = vmul.f32 %v5599, %v10314
    %v10379 = vmul.f32 %v5600, %v10315
    %v10380 = vmul.f32 %v5601, %v10316
    %v10381 = vmul.f32 %v5602, %v10317
    %v10382 = vmul.f32 %v5603, %v10318
    %v10383 = vmul.f32 %v5604, %v10319
    %v10384 = vmul.f32 %v5605, %v10320
    %v10385 = vmul.f32 %v5606, %v10321
    %v10386 = vmul.f32 %v5607, %v10322
    %v10387 = vmul.f32 %v5608, %v10323
    %v10388 = vmul.f32 %v5609, %v10324
    %v10389 = vmul.f32 %v5610, %v10325
    %v10390 = vmul.f32 %v5611, %v10326
    %v10391 = vmul.f32 %v5612, %v10327
    %v10392 = vmul.f32 %v5613, %v10328
    %v10393 = vmul.f32 %v5614, %v10329
    %v10394 = vmul.f32 %v5615, %v10330
    %v10395 = vmul.f32 %v5616, %v10331
    %v10396 = vmul.f32 %v5617, %v10332
    %v10397 = vmul.f32 %v5618, %v10333
    %v10398 = vmul.f32 %v5619, %v10334
    %v10399 = vmul.f32 %v5620, %v10335
    %v10400 = vmul.f32 %v5621, %v10336
    %v10401 = vmul.f32 %v5622, %v10337
    %v10402 = vmul.f32 %v5623, %v10338
    %v10403 = vmul.f32 %v5624, %v10339
    %v10404 = vmul.f32 %v5625, %v10340
    %v10405 = vmul.f32 %v5626, %v10341
    %v10406 = vmul.f32 %v5627, %v10342
    %v10407 = vmul.f32 %v5628, %v10343
    %v10408 = vmul.f32 %v5629, %v10344
    %v10409 = vmul.f32 %v5630, %v10345
    %v10410 = vmul.f32 %v5631, %v10346
    %v10411 = vmul.f32 %v5632, %v10347
    %v10412 = vmul.f32 %v5633, %v10348
    %v10413 = vmul.f32 %v5634, %v10349
    %v10414 = vmul.f32 %v5635, %v10350
    %v10415 = vmul.f32 %v5636, %v10351
    %v10416 = vmul.f32 %v5637, %v10352
    %v10417 = vmul.f32 %v5638, %v10353
    %v10418 = vmul.f32 %v5639, %v10354
    %v10419 = vmul.f32 %v5640, %v10355
    %v10420 = vmul.f32 %v5641, %v10356
    %v10421 = vmul.f32 %v5642, %v10357
    %v10422 = vmul.f32 %v5643, %v10358
    %v10423 = vmul.f32 %v5644, %v10359
    %v10424 = vmul.f32 %v5645, %v10360
    %v10425 = vmul.f32 %v5646, %v10361
    %v10426 = vmul.f32 %v5647, %v10362
    %v10427 = vmul.f32 %v5648, %v10363
    %v10428 = vmul.f32 %v5649, %v10364
    %v10429 = vsel %vm9266, %v10365, 0.0
    %10430 = vadd.xlane.f32.xlu0 %v10429
    %v10431 = vpop.xlane.xlu0 %10430
    %v10432 = vsel %vm9270, %v10366, 0.0
    %10433 = vadd.xlane.f32.xlu0 %v10432
    %v10434 = vpop.xlane.xlu0 %10433
    %v10435 = vsel %vm9266, %v10367, 0.0
    %10436 = vadd.xlane.f32.xlu0 %v10435
    %v10437 = vpop.xlane.xlu0 %10436
    %v10438 = vsel %vm9270, %v10368, 0.0
    %10439 = vadd.xlane.f32.xlu0 %v10438
    %v10440 = vpop.xlane.xlu0 %10439
    %v10441 = vsel %vm9266, %v10369, 0.0
    %10442 = vadd.xlane.f32.xlu0 %v10441
    %v10443 = vpop.xlane.xlu0 %10442
    %v10444 = vsel %vm9270, %v10370, 0.0
    %10445 = vadd.xlane.f32.xlu0 %v10444
    %v10446 = vpop.xlane.xlu0 %10445
    %v10447 = vsel %vm9266, %v10371, 0.0
    %10448 = vadd.xlane.f32.xlu0 %v10447
    %v10449 = vpop.xlane.xlu0 %10448
    %v10450 = vsel %vm9270, %v10372, 0.0
    %10451 = vadd.xlane.f32.xlu0 %v10450
    %v10452 = vpop.xlane.xlu0 %10451
    %v10453 = vsel %vm9266, %v10373, 0.0
    %10454 = vadd.xlane.f32.xlu0 %v10453
    %v10455 = vpop.xlane.xlu0 %10454
    %v10456 = vsel %vm9270, %v10374, 0.0
    %10457 = vadd.xlane.f32.xlu0 %v10456
    %v10458 = vpop.xlane.xlu0 %10457
    %v10459 = vsel %vm9266, %v10375, 0.0
    %10460 = vadd.xlane.f32.xlu0 %v10459
    %v10461 = vpop.xlane.xlu0 %10460
    %v10462 = vsel %vm9270, %v10376, 0.0
    %10463 = vadd.xlane.f32.xlu0 %v10462
    %v10464 = vpop.xlane.xlu0 %10463
    %v10465 = vsel %vm9266, %v10377, 0.0
    %10466 = vadd.xlane.f32.xlu0 %v10465
    %v10467 = vpop.xlane.xlu0 %10466
    %v10468 = vsel %vm9270, %v10378, 0.0
    %10469 = vadd.xlane.f32.xlu0 %v10468
    %v10470 = vpop.xlane.xlu0 %10469
    %v10471 = vsel %vm9266, %v10379, 0.0
    %10472 = vadd.xlane.f32.xlu0 %v10471
    %v10473 = vpop.xlane.xlu0 %10472
    %v10474 = vsel %vm9270, %v10380, 0.0
    %10475 = vadd.xlane.f32.xlu0 %v10474
    %v10476 = vpop.xlane.xlu0 %10475
    %v10477 = vsel %vm9266, %v10381, 0.0
    %10478 = vadd.xlane.f32.xlu0 %v10477
    %v10479 = vpop.xlane.xlu0 %10478
    %v10480 = vsel %vm9270, %v10382, 0.0
    %10481 = vadd.xlane.f32.xlu0 %v10480
    %v10482 = vpop.xlane.xlu0 %10481
    %v10483 = vsel %vm9266, %v10383, 0.0
    %10484 = vadd.xlane.f32.xlu0 %v10483
    %v10485 = vpop.xlane.xlu0 %10484
    %v10486 = vsel %vm9270, %v10384, 0.0
    %10487 = vadd.xlane.f32.xlu0 %v10486
    %v10488 = vpop.xlane.xlu0 %10487
    %v10489 = vsel %vm9266, %v10385, 0.0
    %10490 = vadd.xlane.f32.xlu0 %v10489
    %v10491 = vpop.xlane.xlu0 %10490
    %v10492 = vsel %vm9270, %v10386, 0.0
    %10493 = vadd.xlane.f32.xlu0 %v10492
    %v10494 = vpop.xlane.xlu0 %10493
    %v10495 = vsel %vm9266, %v10387, 0.0
    %10496 = vadd.xlane.f32.xlu0 %v10495
    %v10497 = vpop.xlane.xlu0 %10496
    %v10498 = vsel %vm9270, %v10388, 0.0
    %10499 = vadd.xlane.f32.xlu0 %v10498
    %v10500 = vpop.xlane.xlu0 %10499
    %v10501 = vsel %vm9266, %v10389, 0.0
    %10502 = vadd.xlane.f32.xlu0 %v10501
    %v10503 = vpop.xlane.xlu0 %10502
    %v10504 = vsel %vm9270, %v10390, 0.0
    %10505 = vadd.xlane.f32.xlu0 %v10504
    %v10506 = vpop.xlane.xlu0 %10505
    %v10507 = vsel %vm9266, %v10391, 0.0
    %10508 = vadd.xlane.f32.xlu0 %v10507
    %v10509 = vpop.xlane.xlu0 %10508
    %v10510 = vsel %vm9270, %v10392, 0.0
    %10511 = vadd.xlane.f32.xlu0 %v10510
    %v10512 = vpop.xlane.xlu0 %10511
    %v10513 = vsel %vm9266, %v10393, 0.0
    %10514 = vadd.xlane.f32.xlu0 %v10513
    %v10515 = vpop.xlane.xlu0 %10514
    %v10516 = vsel %vm9270, %v10394, 0.0
    %10517 = vadd.xlane.f32.xlu0 %v10516
    %v10518 = vpop.xlane.xlu0 %10517
    %v10519 = vsel %vm9266, %v10395, 0.0
    %10520 = vadd.xlane.f32.xlu0 %v10519
    %v10521 = vpop.xlane.xlu0 %10520
    %v10522 = vsel %vm9270, %v10396, 0.0
    %10523 = vadd.xlane.f32.xlu0 %v10522
    %v10524 = vpop.xlane.xlu0 %10523
    %v10525 = vsel %vm9266, %v10397, 0.0
    %10526 = vadd.xlane.f32.xlu0 %v10525
    %v10527 = vpop.xlane.xlu0 %10526
    %v10528 = vsel %vm9270, %v10398, 0.0
    %10529 = vadd.xlane.f32.xlu0 %v10528
    %v10530 = vpop.xlane.xlu0 %10529
    %v10531 = vsel %vm9266, %v10399, 0.0
    %10532 = vadd.xlane.f32.xlu0 %v10531
    %v10533 = vpop.xlane.xlu0 %10532
    %v10534 = vsel %vm9270, %v10400, 0.0
    %10535 = vadd.xlane.f32.xlu0 %v10534
    %v10536 = vpop.xlane.xlu0 %10535
    %v10537 = vsel %vm9266, %v10401, 0.0
    %10538 = vadd.xlane.f32.xlu0 %v10537
    %v10539 = vpop.xlane.xlu0 %10538
    %v10540 = vsel %vm9270, %v10402, 0.0
    %10541 = vadd.xlane.f32.xlu0 %v10540
    %v10542 = vpop.xlane.xlu0 %10541
    %v10543 = vsel %vm9266, %v10403, 0.0
    %10544 = vadd.xlane.f32.xlu0 %v10543
    %v10545 = vpop.xlane.xlu0 %10544
    %v10546 = vsel %vm9270, %v10404, 0.0
    %10547 = vadd.xlane.f32.xlu0 %v10546
    %v10548 = vpop.xlane.xlu0 %10547
    %v10549 = vsel %vm9266, %v10405, 0.0
    %10550 = vadd.xlane.f32.xlu0 %v10549
    %v10551 = vpop.xlane.xlu0 %10550
    %v10552 = vsel %vm9270, %v10406, 0.0
    %10553 = vadd.xlane.f32.xlu0 %v10552
    %v10554 = vpop.xlane.xlu0 %10553
    %v10555 = vsel %vm9266, %v10407, 0.0
    %10556 = vadd.xlane.f32.xlu0 %v10555
    %v10557 = vpop.xlane.xlu0 %10556
    %v10558 = vsel %vm9270, %v10408, 0.0
    %10559 = vadd.xlane.f32.xlu0 %v10558
    %v10560 = vpop.xlane.xlu0 %10559
    %v10561 = vsel %vm9266, %v10409, 0.0
    %10562 = vadd.xlane.f32.xlu0 %v10561
    %v10563 = vpop.xlane.xlu0 %10562
    %v10564 = vsel %vm9270, %v10410, 0.0
    %10565 = vadd.xlane.f32.xlu0 %v10564
    %v10566 = vpop.xlane.xlu0 %10565
    %v10567 = vsel %vm9266, %v10411, 0.0
    %10568 = vadd.xlane.f32.xlu0 %v10567
    %v10569 = vpop.xlane.xlu0 %10568
    %v10570 = vsel %vm9270, %v10412, 0.0
    %10571 = vadd.xlane.f32.xlu0 %v10570
    %v10572 = vpop.xlane.xlu0 %10571
    %v10573 = vsel %vm9266, %v10413, 0.0
    %10574 = vadd.xlane.f32.xlu0 %v10573
    %v10575 = vpop.xlane.xlu0 %10574
    %v10576 = vsel %vm9270, %v10414, 0.0
    %10577 = vadd.xlane.f32.xlu0 %v10576
    %v10578 = vpop.xlane.xlu0 %10577
    %v10579 = vsel %vm9266, %v10415, 0.0
    %10580 = vadd.xlane.f32.xlu0 %v10579
    %v10581 = vpop.xlane.xlu0 %10580
    %v10582 = vsel %vm9270, %v10416, 0.0
    %10583 = vadd.xlane.f32.xlu0 %v10582
    %v10584 = vpop.xlane.xlu0 %10583
    %v10585 = vsel %vm9266, %v10417, 0.0
    %10586 = vadd.xlane.f32.xlu0 %v10585
    %v10587 = vpop.xlane.xlu0 %10586
    %v10588 = vsel %vm9270, %v10418, 0.0
    %10589 = vadd.xlane.f32.xlu0 %v10588
    %v10590 = vpop.xlane.xlu0 %10589
    %v10591 = vsel %vm9266, %v10419, 0.0
    %10592 = vadd.xlane.f32.xlu0 %v10591
    %v10593 = vpop.xlane.xlu0 %10592
    %v10594 = vsel %vm9270, %v10420, 0.0
    %10595 = vadd.xlane.f32.xlu0 %v10594
    %v10596 = vpop.xlane.xlu0 %10595
    %v10597 = vsel %vm9266, %v10421, 0.0
    %10598 = vadd.xlane.f32.xlu0 %v10597
    %v10599 = vpop.xlane.xlu0 %10598
    %v10600 = vsel %vm9270, %v10422, 0.0
    %10601 = vadd.xlane.f32.xlu0 %v10600
    %v10602 = vpop.xlane.xlu0 %10601
    %v10603 = vsel %vm9266, %v10423, 0.0
    %10604 = vadd.xlane.f32.xlu0 %v10603
    %v10605 = vpop.xlane.xlu0 %10604
    %v10606 = vsel %vm9270, %v10424, 0.0
    %10607 = vadd.xlane.f32.xlu0 %v10606
    %v10608 = vpop.xlane.xlu0 %10607
    %v10609 = vsel %vm9266, %v10425, 0.0
    %10610 = vadd.xlane.f32.xlu0 %v10609
    %v10611 = vpop.xlane.xlu0 %10610
    %v10612 = vsel %vm9270, %v10426, 0.0
    %10613 = vadd.xlane.f32.xlu0 %v10612
    %v10614 = vpop.xlane.xlu0 %10613
    %v10615 = vsel %vm9266, %v10427, 0.0
    %10616 = vadd.xlane.f32.xlu0 %v10615
    %v10617 = vpop.xlane.xlu0 %10616
    %v10618 = vsel %vm9270, %v10428, 0.0
    %10619 = vadd.xlane.f32.xlu0 %v10618
    %v10620 = vpop.xlane.xlu0 %10619
    %v10621 = vsel %vm5233, %v10434, 0.0
    %v10622 = vadd.f32 %v10431, %v10621
    %v10623 = vrot.slane %v10622, 4
    %v10624 = vadd.f32 %v10622, %v10623
    %v10625 = vrot.slane %v10624, 2
    %v10626 = vadd.f32 %v10624, %v10625
    %v10627 = vrot.slane %v10626, 1
    %v10628 = vadd.f32 %v10626, %v10627
    %v10629 = vsel %vm5233, %v10440, 0.0
    %v10630 = vadd.f32 %v10437, %v10629
    %v10631 = vrot.slane %v10630, 4
    %v10632 = vadd.f32 %v10630, %v10631
    %v10633 = vrot.slane %v10632, 2
    %v10634 = vadd.f32 %v10632, %v10633
    %v10635 = vrot.slane %v10634, 1
    %v10636 = vadd.f32 %v10634, %v10635
    %v10637 = vsel %vm5233, %v10446, 0.0
    %v10638 = vadd.f32 %v10443, %v10637
    %v10639 = vrot.slane %v10638, 4
    %v10640 = vadd.f32 %v10638, %v10639
    %v10641 = vrot.slane %v10640, 2
    %v10642 = vadd.f32 %v10640, %v10641
    %v10643 = vrot.slane %v10642, 1
    %v10644 = vadd.f32 %v10642, %v10643
    %v10645 = vsel %vm5233, %v10452, 0.0
    %v10646 = vadd.f32 %v10449, %v10645
    %v10647 = vrot.slane %v10646, 4
    %v10648 = vadd.f32 %v10646, %v10647
    %v10649 = vrot.slane %v10648, 2
    %v10650 = vadd.f32 %v10648, %v10649
    %v10651 = vrot.slane %v10650, 1
    %v10652 = vadd.f32 %v10650, %v10651
    %v10653 = vsel %vm5233, %v10458, 0.0
    %v10654 = vadd.f32 %v10455, %v10653
    %v10655 = vrot.slane %v10654, 4
    %v10656 = vadd.f32 %v10654, %v10655
    %v10657 = vrot.slane %v10656, 2
    %v10658 = vadd.f32 %v10656, %v10657
    %v10659 = vrot.slane %v10658, 1
    %v10660 = vadd.f32 %v10658, %v10659
    %v10661 = vsel %vm5233, %v10464, 0.0
    %v10662 = vadd.f32 %v10461, %v10661
    %v10663 = vrot.slane %v10662, 4
    %v10664 = vadd.f32 %v10662, %v10663
    %v10665 = vrot.slane %v10664, 2
    %v10666 = vadd.f32 %v10664, %v10665
    %v10667 = vrot.slane %v10666, 1
    %v10668 = vadd.f32 %v10666, %v10667
    %v10669 = vsel %vm5233, %v10470, 0.0
    %v10670 = vadd.f32 %v10467, %v10669
    %v10671 = vrot.slane %v10670, 4
    %v10672 = vadd.f32 %v10670, %v10671
    %v10673 = vrot.slane %v10672, 2
    %v10674 = vadd.f32 %v10672, %v10673
    %v10675 = vrot.slane %v10674, 1
    %v10676 = vadd.f32 %v10674, %v10675
    %v10677 = vsel %vm5233, %v10476, 0.0
    %v10678 = vadd.f32 %v10473, %v10677
    %v10679 = vrot.slane %v10678, 4
    %v10680 = vadd.f32 %v10678, %v10679
    %v10681 = vrot.slane %v10680, 2
    %v10682 = vadd.f32 %v10680, %v10681
    %v10683 = vrot.slane %v10682, 1
    %v10684 = vadd.f32 %v10682, %v10683
    %v10685 = vsel %vm5233, %v10482, 0.0
    %v10686 = vadd.f32 %v10479, %v10685
    %v10687 = vrot.slane %v10686, 4
    %v10688 = vadd.f32 %v10686, %v10687
    %v10689 = vrot.slane %v10688, 2
    %v10690 = vadd.f32 %v10688, %v10689
    %v10691 = vrot.slane %v10690, 1
    %v10692 = vadd.f32 %v10690, %v10691
    %v10693 = vsel %vm5233, %v10488, 0.0
    %v10694 = vadd.f32 %v10485, %v10693
    %v10695 = vrot.slane %v10694, 4
    %v10696 = vadd.f32 %v10694, %v10695
    %v10697 = vrot.slane %v10696, 2
    %v10698 = vadd.f32 %v10696, %v10697
    %v10699 = vrot.slane %v10698, 1
    %v10700 = vadd.f32 %v10698, %v10699
    %v10701 = vsel %vm5233, %v10494, 0.0
    %v10702 = vadd.f32 %v10491, %v10701
    %v10703 = vrot.slane %v10702, 4
    %v10704 = vadd.f32 %v10702, %v10703
    %v10705 = vrot.slane %v10704, 2
    %v10706 = vadd.f32 %v10704, %v10705
    %v10707 = vrot.slane %v10706, 1
    %v10708 = vadd.f32 %v10706, %v10707
    %v10709 = vsel %vm5233, %v10500, 0.0
    %v10710 = vadd.f32 %v10497, %v10709
    %v10711 = vrot.slane %v10710, 4
    %v10712 = vadd.f32 %v10710, %v10711
    %v10713 = vrot.slane %v10712, 2
    %v10714 = vadd.f32 %v10712, %v10713
    %v10715 = vrot.slane %v10714, 1
    %v10716 = vadd.f32 %v10714, %v10715
    %v10717 = vsel %vm5233, %v10506, 0.0
    %v10718 = vadd.f32 %v10503, %v10717
    %v10719 = vrot.slane %v10718, 4
    %v10720 = vadd.f32 %v10718, %v10719
    %v10721 = vrot.slane %v10720, 2
    %v10722 = vadd.f32 %v10720, %v10721
    %v10723 = vrot.slane %v10722, 1
    %v10724 = vadd.f32 %v10722, %v10723
    %v10725 = vsel %vm5233, %v10512, 0.0
    %v10726 = vadd.f32 %v10509, %v10725
    %v10727 = vrot.slane %v10726, 4
    %v10728 = vadd.f32 %v10726, %v10727
    %v10729 = vrot.slane %v10728, 2
    %v10730 = vadd.f32 %v10728, %v10729
    %v10731 = vrot.slane %v10730, 1
    %v10732 = vadd.f32 %v10730, %v10731
    %v10733 = vsel %vm5233, %v10518, 0.0
    %v10734 = vadd.f32 %v10515, %v10733
    %v10735 = vrot.slane %v10734, 4
    %v10736 = vadd.f32 %v10734, %v10735
    %v10737 = vrot.slane %v10736, 2
    %v10738 = vadd.f32 %v10736, %v10737
    %v10739 = vrot.slane %v10738, 1
    %v10740 = vadd.f32 %v10738, %v10739
    %v10741 = vsel %vm5233, %v10524, 0.0
    %v10742 = vadd.f32 %v10521, %v10741
    %v10743 = vrot.slane %v10742, 4
    %v10744 = vadd.f32 %v10742, %v10743
    %v10745 = vrot.slane %v10744, 2
    %v10746 = vadd.f32 %v10744, %v10745
    %v10747 = vrot.slane %v10746, 1
    %v10748 = vadd.f32 %v10746, %v10747
    %v10749 = vsel %vm5233, %v10530, 0.0
    %v10750 = vadd.f32 %v10527, %v10749
    %v10751 = vrot.slane %v10750, 4
    %v10752 = vadd.f32 %v10750, %v10751
    %v10753 = vrot.slane %v10752, 2
    %v10754 = vadd.f32 %v10752, %v10753
    %v10755 = vrot.slane %v10754, 1
    %v10756 = vadd.f32 %v10754, %v10755
    %v10757 = vsel %vm5233, %v10536, 0.0
    %v10758 = vadd.f32 %v10533, %v10757
    %v10759 = vrot.slane %v10758, 4
    %v10760 = vadd.f32 %v10758, %v10759
    %v10761 = vrot.slane %v10760, 2
    %v10762 = vadd.f32 %v10760, %v10761
    %v10763 = vrot.slane %v10762, 1
    %v10764 = vadd.f32 %v10762, %v10763
    %v10765 = vsel %vm5233, %v10542, 0.0
    %v10766 = vadd.f32 %v10539, %v10765
    %v10767 = vrot.slane %v10766, 4
    %v10768 = vadd.f32 %v10766, %v10767
    %v10769 = vrot.slane %v10768, 2
    %v10770 = vadd.f32 %v10768, %v10769
    %v10771 = vrot.slane %v10770, 1
    %v10772 = vadd.f32 %v10770, %v10771
    %v10773 = vsel %vm5233, %v10548, 0.0
    %v10774 = vadd.f32 %v10545, %v10773
    %v10775 = vrot.slane %v10774, 4
    %v10776 = vadd.f32 %v10774, %v10775
    %v10777 = vrot.slane %v10776, 2
    %v10778 = vadd.f32 %v10776, %v10777
    %v10779 = vrot.slane %v10778, 1
    %v10780 = vadd.f32 %v10778, %v10779
    %v10781 = vsel %vm5233, %v10554, 0.0
    %v10782 = vadd.f32 %v10551, %v10781
    %v10783 = vrot.slane %v10782, 4
    %v10784 = vadd.f32 %v10782, %v10783
    %v10785 = vrot.slane %v10784, 2
    %v10786 = vadd.f32 %v10784, %v10785
    %v10787 = vrot.slane %v10786, 1
    %v10788 = vadd.f32 %v10786, %v10787
    %v10789 = vsel %vm5233, %v10560, 0.0
    %v10790 = vadd.f32 %v10557, %v10789
    %v10791 = vrot.slane %v10790, 4
    %v10792 = vadd.f32 %v10790, %v10791
    %v10793 = vrot.slane %v10792, 2
    %v10794 = vadd.f32 %v10792, %v10793
    %v10795 = vrot.slane %v10794, 1
    %v10796 = vadd.f32 %v10794, %v10795
    %v10797 = vsel %vm5233, %v10566, 0.0
    %v10798 = vadd.f32 %v10563, %v10797
    %v10799 = vrot.slane %v10798, 4
    %v10800 = vadd.f32 %v10798, %v10799
    %v10801 = vrot.slane %v10800, 2
    %v10802 = vadd.f32 %v10800, %v10801
    %v10803 = vrot.slane %v10802, 1
    %v10804 = vadd.f32 %v10802, %v10803
    %v10805 = vsel %vm5233, %v10572, 0.0
    %v10806 = vadd.f32 %v10569, %v10805
    %v10807 = vrot.slane %v10806, 4
    %v10808 = vadd.f32 %v10806, %v10807
    %v10809 = vrot.slane %v10808, 2
    %v10810 = vadd.f32 %v10808, %v10809
    %v10811 = vrot.slane %v10810, 1
    %v10812 = vadd.f32 %v10810, %v10811
    %v10813 = vsel %vm5233, %v10578, 0.0
    %v10814 = vadd.f32 %v10575, %v10813
    %v10815 = vrot.slane %v10814, 4
    %v10816 = vadd.f32 %v10814, %v10815
    %v10817 = vrot.slane %v10816, 2
    %v10818 = vadd.f32 %v10816, %v10817
    %v10819 = vrot.slane %v10818, 1
    %v10820 = vadd.f32 %v10818, %v10819
    %v10821 = vsel %vm5233, %v10584, 0.0
    %v10822 = vadd.f32 %v10581, %v10821
    %v10823 = vrot.slane %v10822, 4
    %v10824 = vadd.f32 %v10822, %v10823
    %v10825 = vrot.slane %v10824, 2
    %v10826 = vadd.f32 %v10824, %v10825
    %v10827 = vrot.slane %v10826, 1
    %v10828 = vadd.f32 %v10826, %v10827
    %v10829 = vsel %vm5233, %v10590, 0.0
    %v10830 = vadd.f32 %v10587, %v10829
    %v10831 = vrot.slane %v10830, 4
    %v10832 = vadd.f32 %v10830, %v10831
    %v10833 = vrot.slane %v10832, 2
    %v10834 = vadd.f32 %v10832, %v10833
    %v10835 = vrot.slane %v10834, 1
    %v10836 = vadd.f32 %v10834, %v10835
    %v10837 = vsel %vm5233, %v10596, 0.0
    %v10838 = vadd.f32 %v10593, %v10837
    %v10839 = vrot.slane %v10838, 4
    %v10840 = vadd.f32 %v10838, %v10839
    %v10841 = vrot.slane %v10840, 2
    %v10842 = vadd.f32 %v10840, %v10841
    %v10843 = vrot.slane %v10842, 1
    %v10844 = vadd.f32 %v10842, %v10843
    %v10845 = vsel %vm5233, %v10602, 0.0
    %v10846 = vadd.f32 %v10599, %v10845
    %v10847 = vrot.slane %v10846, 4
    %v10848 = vadd.f32 %v10846, %v10847
    %v10849 = vrot.slane %v10848, 2
    %v10850 = vadd.f32 %v10848, %v10849
    %v10851 = vrot.slane %v10850, 1
    %v10852 = vadd.f32 %v10850, %v10851
    %v10853 = vsel %vm5233, %v10608, 0.0
    %v10854 = vadd.f32 %v10605, %v10853
    %v10855 = vrot.slane %v10854, 4
    %v10856 = vadd.f32 %v10854, %v10855
    %v10857 = vrot.slane %v10856, 2
    %v10858 = vadd.f32 %v10856, %v10857
    %v10859 = vrot.slane %v10858, 1
    %v10860 = vadd.f32 %v10858, %v10859
    %v10861 = vsel %vm5233, %v10614, 0.0
    %v10862 = vadd.f32 %v10611, %v10861
    %v10863 = vrot.slane %v10862, 4
    %v10864 = vadd.f32 %v10862, %v10863
    %v10865 = vrot.slane %v10864, 2
    %v10866 = vadd.f32 %v10864, %v10865
    %v10867 = vrot.slane %v10866, 1
    %v10868 = vadd.f32 %v10866, %v10867
    %v10869 = vsel %vm5233, %v10620, 0.0
    %v10870 = vadd.f32 %v10617, %v10869
    %v10871 = vrot.slane %v10870, 4
    %v10872 = vadd.f32 %v10870, %v10871
    %v10873 = vrot.slane %v10872, 2
    %v10874 = vadd.f32 %v10872, %v10873
    %v10875 = vrot.slane %v10874, 1
    %v10876 = vadd.f32 %v10874, %v10875
    %v10877 = vadd.f32 %v10628, %v10636
    %v10878 = vadd.f32 %v10877, %v10644
    %v10879 = vadd.f32 %v10878, %v10652
    %v10880 = vadd.f32 %v10879, %v10660
    %v10881 = vadd.f32 %v10880, %v10668
    %v10882 = vadd.f32 %v10881, %v10676
    %v10883 = vadd.f32 %v10882, %v10684
    %v10884 = vadd.f32 %v10883, %v10692
    %v10885 = vadd.f32 %v10884, %v10700
    %v10886 = vadd.f32 %v10885, %v10708
    %v10887 = vadd.f32 %v10886, %v10716
    %v10888 = vadd.f32 %v10887, %v10724
    %v10889 = vadd.f32 %v10888, %v10732
    %v10890 = vadd.f32 %v10889, %v10740
    %v10891 = vadd.f32 %v10890, %v10748
    %v10892 = vadd.f32 %v10891, %v10756
    %v10893 = vadd.f32 %v10892, %v10764
    %v10894 = vadd.f32 %v10893, %v10772
    %v10895 = vadd.f32 %v10894, %v10780
    %v10896 = vadd.f32 %v10895, %v10788
    %v10897 = vadd.f32 %v10896, %v10796
    %v10898 = vadd.f32 %v10897, %v10804
    %v10899 = vadd.f32 %v10898, %v10812
    %v10900 = vadd.f32 %v10899, %v10820
    %v10901 = vadd.f32 %v10900, %v10828
    %v10902 = vadd.f32 %v10901, %v10836
    %v10903 = vadd.f32 %v10902, %v10844
    %v10904 = vadd.f32 %v10903, %v10852
    %v10905 = vadd.f32 %v10904, %v10860
    %v10906 = vadd.f32 %v10905, %v10868
    %v10907 = vadd.f32 %v10906, %v10876
    %v10908 = vmul.f32 %v9074, %v10301
    %v10909 = vmul.f32 %v9075, %v10302
    %v10910 = vmul.f32 %v9076, %v10303
    %v10911 = vmul.f32 %v9077, %v10304
    %v10912 = vmul.f32 %v9078, %v10305
    %v10913 = vmul.f32 %v9079, %v10306
    %v10914 = vmul.f32 %v9080, %v10307
    %v10915 = vmul.f32 %v9081, %v10308
    %v10916 = vmul.f32 %v9082, %v10309
    %v10917 = vmul.f32 %v9083, %v10310
    %v10918 = vmul.f32 %v9084, %v10311
    %v10919 = vmul.f32 %v9085, %v10312
    %v10920 = vmul.f32 %v9086, %v10313
    %v10921 = vmul.f32 %v9087, %v10314
    %v10922 = vmul.f32 %v9088, %v10315
    %v10923 = vmul.f32 %v9089, %v10316
    %v10924 = vmul.f32 %v9090, %v10317
    %v10925 = vmul.f32 %v9091, %v10318
    %v10926 = vmul.f32 %v9092, %v10319
    %v10927 = vmul.f32 %v9093, %v10320
    %v10928 = vmul.f32 %v9094, %v10321
    %v10929 = vmul.f32 %v9095, %v10322
    %v10930 = vmul.f32 %v9096, %v10323
    %v10931 = vmul.f32 %v9097, %v10324
    %v10932 = vmul.f32 %v9098, %v10325
    %v10933 = vmul.f32 %v9099, %v10326
    %v10934 = vmul.f32 %v9100, %v10327
    %v10935 = vmul.f32 %v9101, %v10328
    %v10936 = vmul.f32 %v9102, %v10329
    %v10937 = vmul.f32 %v9103, %v10330
    %v10938 = vmul.f32 %v9104, %v10331
    %v10939 = vmul.f32 %v9105, %v10332
    %v10940 = vmul.f32 %v9106, %v10333
    %v10941 = vmul.f32 %v9107, %v10334
    %v10942 = vmul.f32 %v9108, %v10335
    %v10943 = vmul.f32 %v9109, %v10336
    %v10944 = vmul.f32 %v9110, %v10337
    %v10945 = vmul.f32 %v9111, %v10338
    %v10946 = vmul.f32 %v9112, %v10339
    %v10947 = vmul.f32 %v9113, %v10340
    %v10948 = vmul.f32 %v9114, %v10341
    %v10949 = vmul.f32 %v9115, %v10342
    %v10950 = vmul.f32 %v9116, %v10343
    %v10951 = vmul.f32 %v9117, %v10344
    %v10952 = vmul.f32 %v9118, %v10345
    %v10953 = vmul.f32 %v9119, %v10346
    %v10954 = vmul.f32 %v9120, %v10347
    %v10955 = vmul.f32 %v9121, %v10348
    %v10956 = vmul.f32 %v9122, %v10349
    %v10957 = vmul.f32 %v9123, %v10350
    %v10958 = vmul.f32 %v9124, %v10351
    %v10959 = vmul.f32 %v9125, %v10352
    %v10960 = vmul.f32 %v9126, %v10353
    %v10961 = vmul.f32 %v9127, %v10354
    %v10962 = vmul.f32 %v9128, %v10355
    %v10963 = vmul.f32 %v9129, %v10356
    %v10964 = vmul.f32 %v9130, %v10357
    %v10965 = vmul.f32 %v9131, %v10358
    %v10966 = vmul.f32 %v9132, %v10359
    %v10967 = vmul.f32 %v9133, %v10360
    %v10968 = vmul.f32 %v9134, %v10361
    %v10969 = vmul.f32 %v9135, %v10362
    %v10970 = vmul.f32 %v9136, %v10363
    %v10971 = vmul.f32 %v9137, %v10364
    %v10972 = vsel %vm9266, %v10908, 0.0
    %10973 = vadd.xlane.f32.xlu0 %v10972
    %v10974 = vpop.xlane.xlu0 %10973
    %v10975 = vsel %vm9270, %v10909, 0.0
    %10976 = vadd.xlane.f32.xlu0 %v10975
    %v10977 = vpop.xlane.xlu0 %10976
    %v10978 = vsel %vm9266, %v10910, 0.0
    %10979 = vadd.xlane.f32.xlu0 %v10978
    %v10980 = vpop.xlane.xlu0 %10979
    %v10981 = vsel %vm9270, %v10911, 0.0
    %10982 = vadd.xlane.f32.xlu0 %v10981
    %v10983 = vpop.xlane.xlu0 %10982
    %v10984 = vsel %vm9266, %v10912, 0.0
    %10985 = vadd.xlane.f32.xlu0 %v10984
    %v10986 = vpop.xlane.xlu0 %10985
    %v10987 = vsel %vm9270, %v10913, 0.0
    %10988 = vadd.xlane.f32.xlu0 %v10987
    %v10989 = vpop.xlane.xlu0 %10988
    %v10990 = vsel %vm9266, %v10914, 0.0
    %10991 = vadd.xlane.f32.xlu0 %v10990
    %v10992 = vpop.xlane.xlu0 %10991
    %v10993 = vsel %vm9270, %v10915, 0.0
    %10994 = vadd.xlane.f32.xlu0 %v10993
    %v10995 = vpop.xlane.xlu0 %10994
    %v10996 = vsel %vm9266, %v10916, 0.0
    %10997 = vadd.xlane.f32.xlu0 %v10996
    %v10998 = vpop.xlane.xlu0 %10997
    %v10999 = vsel %vm9270, %v10917, 0.0
    %11000 = vadd.xlane.f32.xlu0 %v10999
    %v11001 = vpop.xlane.xlu0 %11000
    %v11002 = vsel %vm9266, %v10918, 0.0
    %11003 = vadd.xlane.f32.xlu0 %v11002
    %v11004 = vpop.xlane.xlu0 %11003
    %v11005 = vsel %vm9270, %v10919, 0.0
    %11006 = vadd.xlane.f32.xlu0 %v11005
    %v11007 = vpop.xlane.xlu0 %11006
    %v11008 = vsel %vm9266, %v10920, 0.0
    %11009 = vadd.xlane.f32.xlu0 %v11008
    %v11010 = vpop.xlane.xlu0 %11009
    %v11011 = vsel %vm9270, %v10921, 0.0
    %11012 = vadd.xlane.f32.xlu0 %v11011
    %v11013 = vpop.xlane.xlu0 %11012
    %v11014 = vsel %vm9266, %v10922, 0.0
    %11015 = vadd.xlane.f32.xlu0 %v11014
    %v11016 = vpop.xlane.xlu0 %11015
    %v11017 = vsel %vm9270, %v10923, 0.0
    %11018 = vadd.xlane.f32.xlu0 %v11017
    %v11019 = vpop.xlane.xlu0 %11018
    %v11020 = vsel %vm9266, %v10924, 0.0
    %11021 = vadd.xlane.f32.xlu0 %v11020
    %v11022 = vpop.xlane.xlu0 %11021
    %v11023 = vsel %vm9270, %v10925, 0.0
    %11024 = vadd.xlane.f32.xlu0 %v11023
    %v11025 = vpop.xlane.xlu0 %11024
    %v11026 = vsel %vm9266, %v10926, 0.0
    %11027 = vadd.xlane.f32.xlu0 %v11026
    %v11028 = vpop.xlane.xlu0 %11027
    %v11029 = vsel %vm9270, %v10927, 0.0
    %11030 = vadd.xlane.f32.xlu0 %v11029
    %v11031 = vpop.xlane.xlu0 %11030
    %v11032 = vsel %vm9266, %v10928, 0.0
    %11033 = vadd.xlane.f32.xlu0 %v11032
    %v11034 = vpop.xlane.xlu0 %11033
    %v11035 = vsel %vm9270, %v10929, 0.0
    %11036 = vadd.xlane.f32.xlu0 %v11035
    %v11037 = vpop.xlane.xlu0 %11036
    %v11038 = vsel %vm9266, %v10930, 0.0
    %11039 = vadd.xlane.f32.xlu0 %v11038
    %v11040 = vpop.xlane.xlu0 %11039
    %v11041 = vsel %vm9270, %v10931, 0.0
    %11042 = vadd.xlane.f32.xlu0 %v11041
    %v11043 = vpop.xlane.xlu0 %11042
    %v11044 = vsel %vm9266, %v10932, 0.0
    %11045 = vadd.xlane.f32.xlu0 %v11044
    %v11046 = vpop.xlane.xlu0 %11045
    %v11047 = vsel %vm9270, %v10933, 0.0
    %11048 = vadd.xlane.f32.xlu0 %v11047
    %v11049 = vpop.xlane.xlu0 %11048
    %v11050 = vsel %vm9266, %v10934, 0.0
    %11051 = vadd.xlane.f32.xlu0 %v11050
    %v11052 = vpop.xlane.xlu0 %11051
    %v11053 = vsel %vm9270, %v10935, 0.0
    %11054 = vadd.xlane.f32.xlu0 %v11053
    %v11055 = vpop.xlane.xlu0 %11054
    %v11056 = vsel %vm9266, %v10936, 0.0
    %11057 = vadd.xlane.f32.xlu0 %v11056
    %v11058 = vpop.xlane.xlu0 %11057
    %v11059 = vsel %vm9270, %v10937, 0.0
    %11060 = vadd.xlane.f32.xlu0 %v11059
    %v11061 = vpop.xlane.xlu0 %11060
    %v11062 = vsel %vm9266, %v10938, 0.0
    %11063 = vadd.xlane.f32.xlu0 %v11062
    %v11064 = vpop.xlane.xlu0 %11063
    %v11065 = vsel %vm9270, %v10939, 0.0
    %11066 = vadd.xlane.f32.xlu0 %v11065
    %v11067 = vpop.xlane.xlu0 %11066
    %v11068 = vsel %vm9266, %v10940, 0.0
    %11069 = vadd.xlane.f32.xlu0 %v11068
    %v11070 = vpop.xlane.xlu0 %11069
    %v11071 = vsel %vm9270, %v10941, 0.0
    %11072 = vadd.xlane.f32.xlu0 %v11071
    %v11073 = vpop.xlane.xlu0 %11072
    %v11074 = vsel %vm9266, %v10942, 0.0
    %11075 = vadd.xlane.f32.xlu0 %v11074
    %v11076 = vpop.xlane.xlu0 %11075
    %v11077 = vsel %vm9270, %v10943, 0.0
    %11078 = vadd.xlane.f32.xlu0 %v11077
    %v11079 = vpop.xlane.xlu0 %11078
    %v11080 = vsel %vm9266, %v10944, 0.0
    %11081 = vadd.xlane.f32.xlu0 %v11080
    %v11082 = vpop.xlane.xlu0 %11081
    %v11083 = vsel %vm9270, %v10945, 0.0
    %11084 = vadd.xlane.f32.xlu0 %v11083
    %v11085 = vpop.xlane.xlu0 %11084
    %v11086 = vsel %vm9266, %v10946, 0.0
    %11087 = vadd.xlane.f32.xlu0 %v11086
    %v11088 = vpop.xlane.xlu0 %11087
    %v11089 = vsel %vm9270, %v10947, 0.0
    %11090 = vadd.xlane.f32.xlu0 %v11089
    %v11091 = vpop.xlane.xlu0 %11090
    %v11092 = vsel %vm9266, %v10948, 0.0
    %11093 = vadd.xlane.f32.xlu0 %v11092
    %v11094 = vpop.xlane.xlu0 %11093
    %v11095 = vsel %vm9270, %v10949, 0.0
    %11096 = vadd.xlane.f32.xlu0 %v11095
    %v11097 = vpop.xlane.xlu0 %11096
    %v11098 = vsel %vm9266, %v10950, 0.0
    %11099 = vadd.xlane.f32.xlu0 %v11098
    %v11100 = vpop.xlane.xlu0 %11099
    %v11101 = vsel %vm9270, %v10951, 0.0
    %11102 = vadd.xlane.f32.xlu0 %v11101
    %v11103 = vpop.xlane.xlu0 %11102
    %v11104 = vsel %vm9266, %v10952, 0.0
    %11105 = vadd.xlane.f32.xlu0 %v11104
    %v11106 = vpop.xlane.xlu0 %11105
    %v11107 = vsel %vm9270, %v10953, 0.0
    %11108 = vadd.xlane.f32.xlu0 %v11107
    %v11109 = vpop.xlane.xlu0 %11108
    %v11110 = vsel %vm9266, %v10954, 0.0
    %11111 = vadd.xlane.f32.xlu0 %v11110
    %v11112 = vpop.xlane.xlu0 %11111
    %v11113 = vsel %vm9270, %v10955, 0.0
    %11114 = vadd.xlane.f32.xlu0 %v11113
    %v11115 = vpop.xlane.xlu0 %11114
    %v11116 = vsel %vm9266, %v10956, 0.0
    %11117 = vadd.xlane.f32.xlu0 %v11116
    %v11118 = vpop.xlane.xlu0 %11117
    %v11119 = vsel %vm9270, %v10957, 0.0
    %11120 = vadd.xlane.f32.xlu0 %v11119
    %v11121 = vpop.xlane.xlu0 %11120
    %v11122 = vsel %vm9266, %v10958, 0.0
    %11123 = vadd.xlane.f32.xlu0 %v11122
    %v11124 = vpop.xlane.xlu0 %11123
    %v11125 = vsel %vm9270, %v10959, 0.0
    %11126 = vadd.xlane.f32.xlu0 %v11125
    %v11127 = vpop.xlane.xlu0 %11126
    %v11128 = vsel %vm9266, %v10960, 0.0
    %11129 = vadd.xlane.f32.xlu0 %v11128
    %v11130 = vpop.xlane.xlu0 %11129
    %v11131 = vsel %vm9270, %v10961, 0.0
    %11132 = vadd.xlane.f32.xlu0 %v11131
    %v11133 = vpop.xlane.xlu0 %11132
    %v11134 = vsel %vm9266, %v10962, 0.0
    %11135 = vadd.xlane.f32.xlu0 %v11134
    %v11136 = vpop.xlane.xlu0 %11135
    %v11137 = vsel %vm9270, %v10963, 0.0
    %11138 = vadd.xlane.f32.xlu0 %v11137
    %v11139 = vpop.xlane.xlu0 %11138
    %v11140 = vsel %vm9266, %v10964, 0.0
    %11141 = vadd.xlane.f32.xlu0 %v11140
    %v11142 = vpop.xlane.xlu0 %11141
    %v11143 = vsel %vm9270, %v10965, 0.0
    %11144 = vadd.xlane.f32.xlu0 %v11143
    %v11145 = vpop.xlane.xlu0 %11144
    %v11146 = vsel %vm9266, %v10966, 0.0
    %11147 = vadd.xlane.f32.xlu0 %v11146
    %v11148 = vpop.xlane.xlu0 %11147
    %v11149 = vsel %vm9270, %v10967, 0.0
    %11150 = vadd.xlane.f32.xlu0 %v11149
    %v11151 = vpop.xlane.xlu0 %11150
    %v11152 = vsel %vm9266, %v10968, 0.0
    %11153 = vadd.xlane.f32.xlu0 %v11152
    %v11154 = vpop.xlane.xlu0 %11153
    %v11155 = vsel %vm9270, %v10969, 0.0
    %11156 = vadd.xlane.f32.xlu0 %v11155
    %v11157 = vpop.xlane.xlu0 %11156
    %v11158 = vsel %vm9266, %v10970, 0.0
    %11159 = vadd.xlane.f32.xlu0 %v11158
    %v11160 = vpop.xlane.xlu0 %11159
    %v11161 = vsel %vm9270, %v10971, 0.0
    %11162 = vadd.xlane.f32.xlu0 %v11161
    %v11163 = vpop.xlane.xlu0 %11162
    %v11164 = vsel %vm5233, %v10977, 0.0
    %v11165 = vadd.f32 %v10974, %v11164
    %v11166 = vrot.slane %v11165, 4
    %v11167 = vadd.f32 %v11165, %v11166
    %v11168 = vrot.slane %v11167, 2
    %v11169 = vadd.f32 %v11167, %v11168
    %v11170 = vrot.slane %v11169, 1
    %v11171 = vadd.f32 %v11169, %v11170
    %v11172 = vsel %vm5233, %v10983, 0.0
    %v11173 = vadd.f32 %v10980, %v11172
    %v11174 = vrot.slane %v11173, 4
    %v11175 = vadd.f32 %v11173, %v11174
    %v11176 = vrot.slane %v11175, 2
    %v11177 = vadd.f32 %v11175, %v11176
    %v11178 = vrot.slane %v11177, 1
    %v11179 = vadd.f32 %v11177, %v11178
    %v11180 = vsel %vm5233, %v10989, 0.0
    %v11181 = vadd.f32 %v10986, %v11180
    %v11182 = vrot.slane %v11181, 4
    %v11183 = vadd.f32 %v11181, %v11182
    %v11184 = vrot.slane %v11183, 2
    %v11185 = vadd.f32 %v11183, %v11184
    %v11186 = vrot.slane %v11185, 1
    %v11187 = vadd.f32 %v11185, %v11186
    %v11188 = vsel %vm5233, %v10995, 0.0
    %v11189 = vadd.f32 %v10992, %v11188
    %v11190 = vrot.slane %v11189, 4
    %v11191 = vadd.f32 %v11189, %v11190
    %v11192 = vrot.slane %v11191, 2
    %v11193 = vadd.f32 %v11191, %v11192
    %v11194 = vrot.slane %v11193, 1
    %v11195 = vadd.f32 %v11193, %v11194
    %v11196 = vsel %vm5233, %v11001, 0.0
    %v11197 = vadd.f32 %v10998, %v11196
    %v11198 = vrot.slane %v11197, 4
    %v11199 = vadd.f32 %v11197, %v11198
    %v11200 = vrot.slane %v11199, 2
    %v11201 = vadd.f32 %v11199, %v11200
    %v11202 = vrot.slane %v11201, 1
    %v11203 = vadd.f32 %v11201, %v11202
    %v11204 = vsel %vm5233, %v11007, 0.0
    %v11205 = vadd.f32 %v11004, %v11204
    %v11206 = vrot.slane %v11205, 4
    %v11207 = vadd.f32 %v11205, %v11206
    %v11208 = vrot.slane %v11207, 2
    %v11209 = vadd.f32 %v11207, %v11208
    %v11210 = vrot.slane %v11209, 1
    %v11211 = vadd.f32 %v11209, %v11210
    %v11212 = vsel %vm5233, %v11013, 0.0
    %v11213 = vadd.f32 %v11010, %v11212
    %v11214 = vrot.slane %v11213, 4
    %v11215 = vadd.f32 %v11213, %v11214
    %v11216 = vrot.slane %v11215, 2
    %v11217 = vadd.f32 %v11215, %v11216
    %v11218 = vrot.slane %v11217, 1
    %v11219 = vadd.f32 %v11217, %v11218
    %v11220 = vsel %vm5233, %v11019, 0.0
    %v11221 = vadd.f32 %v11016, %v11220
    %v11222 = vrot.slane %v11221, 4
    %v11223 = vadd.f32 %v11221, %v11222
    %v11224 = vrot.slane %v11223, 2
    %v11225 = vadd.f32 %v11223, %v11224
    %v11226 = vrot.slane %v11225, 1
    %v11227 = vadd.f32 %v11225, %v11226
    %v11228 = vsel %vm5233, %v11025, 0.0
    %v11229 = vadd.f32 %v11022, %v11228
    %v11230 = vrot.slane %v11229, 4
    %v11231 = vadd.f32 %v11229, %v11230
    %v11232 = vrot.slane %v11231, 2
    %v11233 = vadd.f32 %v11231, %v11232
    %v11234 = vrot.slane %v11233, 1
    %v11235 = vadd.f32 %v11233, %v11234
    %v11236 = vsel %vm5233, %v11031, 0.0
    %v11237 = vadd.f32 %v11028, %v11236
    %v11238 = vrot.slane %v11237, 4
    %v11239 = vadd.f32 %v11237, %v11238
    %v11240 = vrot.slane %v11239, 2
    %v11241 = vadd.f32 %v11239, %v11240
    %v11242 = vrot.slane %v11241, 1
    %v11243 = vadd.f32 %v11241, %v11242
    %v11244 = vsel %vm5233, %v11037, 0.0
    %v11245 = vadd.f32 %v11034, %v11244
    %v11246 = vrot.slane %v11245, 4
    %v11247 = vadd.f32 %v11245, %v11246
    %v11248 = vrot.slane %v11247, 2
    %v11249 = vadd.f32 %v11247, %v11248
    %v11250 = vrot.slane %v11249, 1
    %v11251 = vadd.f32 %v11249, %v11250
    %v11252 = vsel %vm5233, %v11043, 0.0
    %v11253 = vadd.f32 %v11040, %v11252
    %v11254 = vrot.slane %v11253, 4
    %v11255 = vadd.f32 %v11253, %v11254
    %v11256 = vrot.slane %v11255, 2
    %v11257 = vadd.f32 %v11255, %v11256
    %v11258 = vrot.slane %v11257, 1
    %v11259 = vadd.f32 %v11257, %v11258
    %v11260 = vsel %vm5233, %v11049, 0.0
    %v11261 = vadd.f32 %v11046, %v11260
    %v11262 = vrot.slane %v11261, 4
    %v11263 = vadd.f32 %v11261, %v11262
    %v11264 = vrot.slane %v11263, 2
    %v11265 = vadd.f32 %v11263, %v11264
    %v11266 = vrot.slane %v11265, 1
    %v11267 = vadd.f32 %v11265, %v11266
    %v11268 = vsel %vm5233, %v11055, 0.0
    %v11269 = vadd.f32 %v11052, %v11268
    %v11270 = vrot.slane %v11269, 4
    %v11271 = vadd.f32 %v11269, %v11270
    %v11272 = vrot.slane %v11271, 2
    %v11273 = vadd.f32 %v11271, %v11272
    %v11274 = vrot.slane %v11273, 1
    %v11275 = vadd.f32 %v11273, %v11274
    %v11276 = vsel %vm5233, %v11061, 0.0
    %v11277 = vadd.f32 %v11058, %v11276
    %v11278 = vrot.slane %v11277, 4
    %v11279 = vadd.f32 %v11277, %v11278
    %v11280 = vrot.slane %v11279, 2
    %v11281 = vadd.f32 %v11279, %v11280
    %v11282 = vrot.slane %v11281, 1
    %v11283 = vadd.f32 %v11281, %v11282
    %v11284 = vsel %vm5233, %v11067, 0.0
    %v11285 = vadd.f32 %v11064, %v11284
    %v11286 = vrot.slane %v11285, 4
    %v11287 = vadd.f32 %v11285, %v11286
    %v11288 = vrot.slane %v11287, 2
    %v11289 = vadd.f32 %v11287, %v11288
    %v11290 = vrot.slane %v11289, 1
    %v11291 = vadd.f32 %v11289, %v11290
    %v11292 = vsel %vm5233, %v11073, 0.0
    %v11293 = vadd.f32 %v11070, %v11292
    %v11294 = vrot.slane %v11293, 4
    %v11295 = vadd.f32 %v11293, %v11294
    %v11296 = vrot.slane %v11295, 2
    %v11297 = vadd.f32 %v11295, %v11296
    %v11298 = vrot.slane %v11297, 1
    %v11299 = vadd.f32 %v11297, %v11298
    %v11300 = vsel %vm5233, %v11079, 0.0
    %v11301 = vadd.f32 %v11076, %v11300
    %v11302 = vrot.slane %v11301, 4
    %v11303 = vadd.f32 %v11301, %v11302
    %v11304 = vrot.slane %v11303, 2
    %v11305 = vadd.f32 %v11303, %v11304
    %v11306 = vrot.slane %v11305, 1
    %v11307 = vadd.f32 %v11305, %v11306
    %v11308 = vsel %vm5233, %v11085, 0.0
    %v11309 = vadd.f32 %v11082, %v11308
    %v11310 = vrot.slane %v11309, 4
    %v11311 = vadd.f32 %v11309, %v11310
    %v11312 = vrot.slane %v11311, 2
    %v11313 = vadd.f32 %v11311, %v11312
    %v11314 = vrot.slane %v11313, 1
    %v11315 = vadd.f32 %v11313, %v11314
    %v11316 = vsel %vm5233, %v11091, 0.0
    %v11317 = vadd.f32 %v11088, %v11316
    %v11318 = vrot.slane %v11317, 4
    %v11319 = vadd.f32 %v11317, %v11318
    %v11320 = vrot.slane %v11319, 2
    %v11321 = vadd.f32 %v11319, %v11320
    %v11322 = vrot.slane %v11321, 1
    %v11323 = vadd.f32 %v11321, %v11322
    %v11324 = vsel %vm5233, %v11097, 0.0
    %v11325 = vadd.f32 %v11094, %v11324
    %v11326 = vrot.slane %v11325, 4
    %v11327 = vadd.f32 %v11325, %v11326
    %v11328 = vrot.slane %v11327, 2
    %v11329 = vadd.f32 %v11327, %v11328
    %v11330 = vrot.slane %v11329, 1
    %v11331 = vadd.f32 %v11329, %v11330
    %v11332 = vsel %vm5233, %v11103, 0.0
    %v11333 = vadd.f32 %v11100, %v11332
    %v11334 = vrot.slane %v11333, 4
    %v11335 = vadd.f32 %v11333, %v11334
    %v11336 = vrot.slane %v11335, 2
    %v11337 = vadd.f32 %v11335, %v11336
    %v11338 = vrot.slane %v11337, 1
    %v11339 = vadd.f32 %v11337, %v11338
    %v11340 = vsel %vm5233, %v11109, 0.0
    %v11341 = vadd.f32 %v11106, %v11340
    %v11342 = vrot.slane %v11341, 4
    %v11343 = vadd.f32 %v11341, %v11342
    %v11344 = vrot.slane %v11343, 2
    %v11345 = vadd.f32 %v11343, %v11344
    %v11346 = vrot.slane %v11345, 1
    %v11347 = vadd.f32 %v11345, %v11346
    %v11348 = vsel %vm5233, %v11115, 0.0
    %v11349 = vadd.f32 %v11112, %v11348
    %v11350 = vrot.slane %v11349, 4
    %v11351 = vadd.f32 %v11349, %v11350
    %v11352 = vrot.slane %v11351, 2
    %v11353 = vadd.f32 %v11351, %v11352
    %v11354 = vrot.slane %v11353, 1
    %v11355 = vadd.f32 %v11353, %v11354
    %v11356 = vsel %vm5233, %v11121, 0.0
    %v11357 = vadd.f32 %v11118, %v11356
    %v11358 = vrot.slane %v11357, 4
    %v11359 = vadd.f32 %v11357, %v11358
    %v11360 = vrot.slane %v11359, 2
    %v11361 = vadd.f32 %v11359, %v11360
    %v11362 = vrot.slane %v11361, 1
    %v11363 = vadd.f32 %v11361, %v11362
    %v11364 = vsel %vm5233, %v11127, 0.0
    %v11365 = vadd.f32 %v11124, %v11364
    %v11366 = vrot.slane %v11365, 4
    %v11367 = vadd.f32 %v11365, %v11366
    %v11368 = vrot.slane %v11367, 2
    %v11369 = vadd.f32 %v11367, %v11368
    %v11370 = vrot.slane %v11369, 1
    %v11371 = vadd.f32 %v11369, %v11370
    %v11372 = vsel %vm5233, %v11133, 0.0
    %v11373 = vadd.f32 %v11130, %v11372
    %v11374 = vrot.slane %v11373, 4
    %v11375 = vadd.f32 %v11373, %v11374
    %v11376 = vrot.slane %v11375, 2
    %v11377 = vadd.f32 %v11375, %v11376
    %v11378 = vrot.slane %v11377, 1
    %v11379 = vadd.f32 %v11377, %v11378
    %v11380 = vsel %vm5233, %v11139, 0.0
    %v11381 = vadd.f32 %v11136, %v11380
    %v11382 = vrot.slane %v11381, 4
    %v11383 = vadd.f32 %v11381, %v11382
    %v11384 = vrot.slane %v11383, 2
    %v11385 = vadd.f32 %v11383, %v11384
    %v11386 = vrot.slane %v11385, 1
    %v11387 = vadd.f32 %v11385, %v11386
    %v11388 = vsel %vm5233, %v11145, 0.0
    %v11389 = vadd.f32 %v11142, %v11388
    %v11390 = vrot.slane %v11389, 4
    %v11391 = vadd.f32 %v11389, %v11390
    %v11392 = vrot.slane %v11391, 2
    %v11393 = vadd.f32 %v11391, %v11392
    %v11394 = vrot.slane %v11393, 1
    %v11395 = vadd.f32 %v11393, %v11394
    %v11396 = vsel %vm5233, %v11151, 0.0
    %v11397 = vadd.f32 %v11148, %v11396
    %v11398 = vrot.slane %v11397, 4
    %v11399 = vadd.f32 %v11397, %v11398
    %v11400 = vrot.slane %v11399, 2
    %v11401 = vadd.f32 %v11399, %v11400
    %v11402 = vrot.slane %v11401, 1
    %v11403 = vadd.f32 %v11401, %v11402
    %v11404 = vsel %vm5233, %v11157, 0.0
    %v11405 = vadd.f32 %v11154, %v11404
    %v11406 = vrot.slane %v11405, 4
    %v11407 = vadd.f32 %v11405, %v11406
    %v11408 = vrot.slane %v11407, 2
    %v11409 = vadd.f32 %v11407, %v11408
    %v11410 = vrot.slane %v11409, 1
    %v11411 = vadd.f32 %v11409, %v11410
    %v11412 = vsel %vm5233, %v11163, 0.0
    %v11413 = vadd.f32 %v11160, %v11412
    %v11414 = vrot.slane %v11413, 4
    %v11415 = vadd.f32 %v11413, %v11414
    %v11416 = vrot.slane %v11415, 2
    %v11417 = vadd.f32 %v11415, %v11416
    %v11418 = vrot.slane %v11417, 1
    %v11419 = vadd.f32 %v11417, %v11418
    %v11420 = vadd.f32 %v11171, %v11179
    %v11421 = vadd.f32 %v11420, %v11187
    %v11422 = vadd.f32 %v11421, %v11195
    %v11423 = vadd.f32 %v11422, %v11203
    %v11424 = vadd.f32 %v11423, %v11211
    %v11425 = vadd.f32 %v11424, %v11219
    %v11426 = vadd.f32 %v11425, %v11227
    %v11427 = vadd.f32 %v11426, %v11235
    %v11428 = vadd.f32 %v11427, %v11243
    %v11429 = vadd.f32 %v11428, %v11251
    %v11430 = vadd.f32 %v11429, %v11259
    %v11431 = vadd.f32 %v11430, %v11267
    %v11432 = vadd.f32 %v11431, %v11275
    %v11433 = vadd.f32 %v11432, %v11283
    %v11434 = vadd.f32 %v11433, %v11291
    %v11435 = vadd.f32 %v11434, %v11299
    %v11436 = vadd.f32 %v11435, %v11307
    %v11437 = vadd.f32 %v11436, %v11315
    %v11438 = vadd.f32 %v11437, %v11323
    %v11439 = vadd.f32 %v11438, %v11331
    %v11440 = vadd.f32 %v11439, %v11339
    %v11441 = vadd.f32 %v11440, %v11347
    %v11442 = vadd.f32 %v11441, %v11355
    %v11443 = vadd.f32 %v11442, %v11363
    %v11444 = vadd.f32 %v11443, %v11371
    %v11445 = vadd.f32 %v11444, %v11379
    %v11446 = vadd.f32 %v11445, %v11387
    %v11447 = vadd.f32 %v11446, %v11395
    %v11448 = vadd.f32 %v11447, %v11403
    %v11449 = vadd.f32 %v11448, %v11411
    %v11450 = vadd.f32 %v11449, %v11419
    %v11451 = vsel %vm5233, %v10907, %v11450
    %v11452 = vlaneseq
    %v11453 = vshrl.u32 %v11452, 7
    %v11454 = vsub.s32 1, %v11453
    %v11455 = vrot.slane %v15, %v11454
    %11457 = vrot.lane.b32.xlu0 %v11455, 114
    %v11458 = vpop.permute.xlu0 %11457
    %v11460 = vadd.f32 %v11451, %v11458
    %s11461 = scalar_lea.vmem %s2, 1024
    %v11462 = vld [vmem:[%s11461] sm:$0xff]
    %v11463 = vld [vmem:[%s11461 + $0x8] sm:$0x1]
    %v11464 = vld [vmem:[%s11461 + $0x10] sm:$0xff]
    %v11465 = vld [vmem:[%s11461 + $0x18] sm:$0x1]
    %v11466 = vld [vmem:[%s11461 + $0x20] sm:$0xff]
    %v11467 = vld [vmem:[%s11461 + $0x28] sm:$0x1]
    %v11468 = vld [vmem:[%s11461 + $0x30] sm:$0xff]
    %v11469 = vld [vmem:[%s11461 + $0x38] sm:$0x1]
    %v11470 = vld [vmem:[%s11461 + $0x40] sm:$0xff]
    %v11471 = vld [vmem:[%s11461 + $0x48] sm:$0x1]
    %v11472 = vld [vmem:[%s11461 + $0x50] sm:$0xff]
    %v11473 = vld [vmem:[%s11461 + $0x58] sm:$0x1]
    %v11474 = vld [vmem:[%s11461 + $0x60] sm:$0xff]
    %v11475 = vld [vmem:[%s11461 + $0x68] sm:$0x1]
    %v11476 = vld [vmem:[%s11461 + $0x70] sm:$0xff]
    %v11477 = vld [vmem:[%s11461 + $0x78] sm:$0x1]
    %v11478 = vld [vmem:[%s11461 + $0x80] sm:$0xff]
    %v11479 = vld [vmem:[%s11461 + $0x88] sm:$0x1]
    %v11480 = vld [vmem:[%s11461 + $0x90] sm:$0xff]
    %v11481 = vld [vmem:[%s11461 + $0x98] sm:$0x1]
    %v11482 = vld [vmem:[%s11461 + $0xa0] sm:$0xff]
    %v11483 = vld [vmem:[%s11461 + $0xa8] sm:$0x1]
    %v11484 = vld [vmem:[%s11461 + $0xb0] sm:$0xff]
    %v11485 = vld [vmem:[%s11461 + $0xb8] sm:$0x1]
    %v11486 = vld [vmem:[%s11461 + $0xc0] sm:$0xff]
    %v11487 = vld [vmem:[%s11461 + $0xc8] sm:$0x1]
    %v11488 = vld [vmem:[%s11461 + $0xd0] sm:$0xff]
    %v11489 = vld [vmem:[%s11461 + $0xd8] sm:$0x1]
    %v11490 = vld [vmem:[%s11461 + $0xe0] sm:$0xff]
    %v11491 = vld [vmem:[%s11461 + $0xe8] sm:$0x1]
    %v11492 = vld [vmem:[%s11461 + $0xf0] sm:$0xff]
    %v11493 = vld [vmem:[%s11461 + $0xf8] sm:$0x1]
    %v11494 = vld [vmem:[%s11461 + $0x100] sm:$0xff]
    %v11495 = vld [vmem:[%s11461 + $0x108] sm:$0x1]
    %v11496 = vld [vmem:[%s11461 + $0x110] sm:$0xff]
    %v11497 = vld [vmem:[%s11461 + $0x118] sm:$0x1]
    %v11498 = vld [vmem:[%s11461 + $0x120] sm:$0xff]
    %v11499 = vld [vmem:[%s11461 + $0x128] sm:$0x1]
    %v11500 = vld [vmem:[%s11461 + $0x130] sm:$0xff]
    %v11501 = vld [vmem:[%s11461 + $0x138] sm:$0x1]
    %v11502 = vld [vmem:[%s11461 + $0x140] sm:$0xff]
    %v11503 = vld [vmem:[%s11461 + $0x148] sm:$0x1]
    %v11504 = vld [vmem:[%s11461 + $0x150] sm:$0xff]
    %v11505 = vld [vmem:[%s11461 + $0x158] sm:$0x1]
    %v11506 = vld [vmem:[%s11461 + $0x160] sm:$0xff]
    %v11507 = vld [vmem:[%s11461 + $0x168] sm:$0x1]
    %v11508 = vld [vmem:[%s11461 + $0x170] sm:$0xff]
    %v11509 = vld [vmem:[%s11461 + $0x178] sm:$0x1]
    %v11510 = vld [vmem:[%s11461 + $0x180] sm:$0xff]
    %v11511 = vld [vmem:[%s11461 + $0x188] sm:$0x1]
    %v11512 = vld [vmem:[%s11461 + $0x190] sm:$0xff]
    %v11513 = vld [vmem:[%s11461 + $0x198] sm:$0x1]
    %v11514 = vld [vmem:[%s11461 + $0x1a0] sm:$0xff]
    %v11515 = vld [vmem:[%s11461 + $0x1a8] sm:$0x1]
    %v11516 = vld [vmem:[%s11461 + $0x1b0] sm:$0xff]
    %v11517 = vld [vmem:[%s11461 + $0x1b8] sm:$0x1]
    %v11518 = vld [vmem:[%s11461 + $0x1c0] sm:$0xff]
    %v11519 = vld [vmem:[%s11461 + $0x1c8] sm:$0x1]
    %v11520 = vld [vmem:[%s11461 + $0x1d0] sm:$0xff]
    %v11521 = vld [vmem:[%s11461 + $0x1d8] sm:$0x1]
    %v11522 = vld [vmem:[%s11461 + $0x1e0] sm:$0xff]
    %v11523 = vld [vmem:[%s11461 + $0x1e8] sm:$0x1]
    %v11524 = vld [vmem:[%s11461 + $0x1f0] sm:$0xff]
    %v11525 = vld [vmem:[%s11461 + $0x1f8] sm:$0x1]
    %v11526 = vmul.f32 %v5586, %v11462
    %v11527 = vmul.f32 %v5587, %v11463
    %v11528 = vmul.f32 %v5588, %v11464
    %v11529 = vmul.f32 %v5589, %v11465
    %v11530 = vmul.f32 %v5590, %v11466
    %v11531 = vmul.f32 %v5591, %v11467
    %v11532 = vmul.f32 %v5592, %v11468
    %v11533 = vmul.f32 %v5593, %v11469
    %v11534 = vmul.f32 %v5594, %v11470
    %v11535 = vmul.f32 %v5595, %v11471
    %v11536 = vmul.f32 %v5596, %v11472
    %v11537 = vmul.f32 %v5597, %v11473
    %v11538 = vmul.f32 %v5598, %v11474
    %v11539 = vmul.f32 %v5599, %v11475
    %v11540 = vmul.f32 %v5600, %v11476
    %v11541 = vmul.f32 %v5601, %v11477
    %v11542 = vmul.f32 %v5602, %v11478
    %v11543 = vmul.f32 %v5603, %v11479
    %v11544 = vmul.f32 %v5604, %v11480
    %v11545 = vmul.f32 %v5605, %v11481
    %v11546 = vmul.f32 %v5606, %v11482
    %v11547 = vmul.f32 %v5607, %v11483
    %v11548 = vmul.f32 %v5608, %v11484
    %v11549 = vmul.f32 %v5609, %v11485
    %v11550 = vmul.f32 %v5610, %v11486
    %v11551 = vmul.f32 %v5611, %v11487
    %v11552 = vmul.f32 %v5612, %v11488
    %v11553 = vmul.f32 %v5613, %v11489
    %v11554 = vmul.f32 %v5614, %v11490
    %v11555 = vmul.f32 %v5615, %v11491
    %v11556 = vmul.f32 %v5616, %v11492
    %v11557 = vmul.f32 %v5617, %v11493
    %v11558 = vmul.f32 %v5618, %v11494
    %v11559 = vmul.f32 %v5619, %v11495
    %v11560 = vmul.f32 %v5620, %v11496
    %v11561 = vmul.f32 %v5621, %v11497
    %v11562 = vmul.f32 %v5622, %v11498
    %v11563 = vmul.f32 %v5623, %v11499
    %v11564 = vmul.f32 %v5624, %v11500
    %v11565 = vmul.f32 %v5625, %v11501
    %v11566 = vmul.f32 %v5626, %v11502
    %v11567 = vmul.f32 %v5627, %v11503
    %v11568 = vmul.f32 %v5628, %v11504
    %v11569 = vmul.f32 %v5629, %v11505
    %v11570 = vmul.f32 %v5630, %v11506
    %v11571 = vmul.f32 %v5631, %v11507
    %v11572 = vmul.f32 %v5632, %v11508
    %v11573 = vmul.f32 %v5633, %v11509
    %v11574 = vmul.f32 %v5634, %v11510
    %v11575 = vmul.f32 %v5635, %v11511
    %v11576 = vmul.f32 %v5636, %v11512
    %v11577 = vmul.f32 %v5637, %v11513
    %v11578 = vmul.f32 %v5638, %v11514
    %v11579 = vmul.f32 %v5639, %v11515
    %v11580 = vmul.f32 %v5640, %v11516
    %v11581 = vmul.f32 %v5641, %v11517
    %v11582 = vmul.f32 %v5642, %v11518
    %v11583 = vmul.f32 %v5643, %v11519
    %v11584 = vmul.f32 %v5644, %v11520
    %v11585 = vmul.f32 %v5645, %v11521
    %v11586 = vmul.f32 %v5646, %v11522
    %v11587 = vmul.f32 %v5647, %v11523
    %v11588 = vmul.f32 %v5648, %v11524
    %v11589 = vmul.f32 %v5649, %v11525
    %v11590 = vsel %vm9266, %v11526, 0.0
    %11591 = vadd.xlane.f32.xlu0 %v11590
    %v11592 = vpop.xlane.xlu0 %11591
    %v11593 = vsel %vm9270, %v11527, 0.0
    %11594 = vadd.xlane.f32.xlu0 %v11593
    %v11595 = vpop.xlane.xlu0 %11594
    %v11596 = vsel %vm9266, %v11528, 0.0
    %11597 = vadd.xlane.f32.xlu0 %v11596
    %v11598 = vpop.xlane.xlu0 %11597
    %v11599 = vsel %vm9270, %v11529, 0.0
    %11600 = vadd.xlane.f32.xlu0 %v11599
    %v11601 = vpop.xlane.xlu0 %11600
    %v11602 = vsel %vm9266, %v11530, 0.0
    %11603 = vadd.xlane.f32.xlu0 %v11602
    %v11604 = vpop.xlane.xlu0 %11603
    %v11605 = vsel %vm9270, %v11531, 0.0
    %11606 = vadd.xlane.f32.xlu0 %v11605
    %v11607 = vpop.xlane.xlu0 %11606
    %v11608 = vsel %vm9266, %v11532, 0.0
    %11609 = vadd.xlane.f32.xlu0 %v11608
    %v11610 = vpop.xlane.xlu0 %11609
    %v11611 = vsel %vm9270, %v11533, 0.0
    %11612 = vadd.xlane.f32.xlu0 %v11611
    %v11613 = vpop.xlane.xlu0 %11612
    %v11614 = vsel %vm9266, %v11534, 0.0
    %11615 = vadd.xlane.f32.xlu0 %v11614
    %v11616 = vpop.xlane.xlu0 %11615
    %v11617 = vsel %vm9270, %v11535, 0.0
    %11618 = vadd.xlane.f32.xlu0 %v11617
    %v11619 = vpop.xlane.xlu0 %11618
    %v11620 = vsel %vm9266, %v11536, 0.0
    %11621 = vadd.xlane.f32.xlu0 %v11620
    %v11622 = vpop.xlane.xlu0 %11621
    %v11623 = vsel %vm9270, %v11537, 0.0
    %11624 = vadd.xlane.f32.xlu0 %v11623
    %v11625 = vpop.xlane.xlu0 %11624
    %v11626 = vsel %vm9266, %v11538, 0.0
    %11627 = vadd.xlane.f32.xlu0 %v11626
    %v11628 = vpop.xlane.xlu0 %11627
    %v11629 = vsel %vm9270, %v11539, 0.0
    %11630 = vadd.xlane.f32.xlu0 %v11629
    %v11631 = vpop.xlane.xlu0 %11630
    %v11632 = vsel %vm9266, %v11540, 0.0
    %11633 = vadd.xlane.f32.xlu0 %v11632
    %v11634 = vpop.xlane.xlu0 %11633
    %v11635 = vsel %vm9270, %v11541, 0.0
    %11636 = vadd.xlane.f32.xlu0 %v11635
    %v11637 = vpop.xlane.xlu0 %11636
    %v11638 = vsel %vm9266, %v11542, 0.0
    %11639 = vadd.xlane.f32.xlu0 %v11638
    %v11640 = vpop.xlane.xlu0 %11639
    %v11641 = vsel %vm9270, %v11543, 0.0
    %11642 = vadd.xlane.f32.xlu0 %v11641
    %v11643 = vpop.xlane.xlu0 %11642
    %v11644 = vsel %vm9266, %v11544, 0.0
    %11645 = vadd.xlane.f32.xlu0 %v11644
    %v11646 = vpop.xlane.xlu0 %11645
    %v11647 = vsel %vm9270, %v11545, 0.0
    %11648 = vadd.xlane.f32.xlu0 %v11647
    %v11649 = vpop.xlane.xlu0 %11648
    %v11650 = vsel %vm9266, %v11546, 0.0
    %11651 = vadd.xlane.f32.xlu0 %v11650
    %v11652 = vpop.xlane.xlu0 %11651
    %v11653 = vsel %vm9270, %v11547, 0.0
    %11654 = vadd.xlane.f32.xlu0 %v11653
    %v11655 = vpop.xlane.xlu0 %11654
    %v11656 = vsel %vm9266, %v11548, 0.0
    %11657 = vadd.xlane.f32.xlu0 %v11656
    %v11658 = vpop.xlane.xlu0 %11657
    %v11659 = vsel %vm9270, %v11549, 0.0
    %11660 = vadd.xlane.f32.xlu0 %v11659
    %v11661 = vpop.xlane.xlu0 %11660
    %v11662 = vsel %vm9266, %v11550, 0.0
    %11663 = vadd.xlane.f32.xlu0 %v11662
    %v11664 = vpop.xlane.xlu0 %11663
    %v11665 = vsel %vm9270, %v11551, 0.0
    %11666 = vadd.xlane.f32.xlu0 %v11665
    %v11667 = vpop.xlane.xlu0 %11666
    %v11668 = vsel %vm9266, %v11552, 0.0
    %11669 = vadd.xlane.f32.xlu0 %v11668
    %v11670 = vpop.xlane.xlu0 %11669
    %v11671 = vsel %vm9270, %v11553, 0.0
    %11672 = vadd.xlane.f32.xlu0 %v11671
    %v11673 = vpop.xlane.xlu0 %11672
    %v11674 = vsel %vm9266, %v11554, 0.0
    %11675 = vadd.xlane.f32.xlu0 %v11674
    %v11676 = vpop.xlane.xlu0 %11675
    %v11677 = vsel %vm9270, %v11555, 0.0
    %11678 = vadd.xlane.f32.xlu0 %v11677
    %v11679 = vpop.xlane.xlu0 %11678
    %v11680 = vsel %vm9266, %v11556, 0.0
    %11681 = vadd.xlane.f32.xlu0 %v11680
    %v11682 = vpop.xlane.xlu0 %11681
    %v11683 = vsel %vm9270, %v11557, 0.0
    %11684 = vadd.xlane.f32.xlu0 %v11683
    %v11685 = vpop.xlane.xlu0 %11684
    %v11686 = vsel %vm9266, %v11558, 0.0
    %11687 = vadd.xlane.f32.xlu0 %v11686
    %v11688 = vpop.xlane.xlu0 %11687
    %v11689 = vsel %vm9270, %v11559, 0.0
    %11690 = vadd.xlane.f32.xlu0 %v11689
    %v11691 = vpop.xlane.xlu0 %11690
    %v11692 = vsel %vm9266, %v11560, 0.0
    %11693 = vadd.xlane.f32.xlu0 %v11692
    %v11694 = vpop.xlane.xlu0 %11693
    %v11695 = vsel %vm9270, %v11561, 0.0
    %11696 = vadd.xlane.f32.xlu0 %v11695
    %v11697 = vpop.xlane.xlu0 %11696
    %v11698 = vsel %vm9266, %v11562, 0.0
    %11699 = vadd.xlane.f32.xlu0 %v11698
    %v11700 = vpop.xlane.xlu0 %11699
    %v11701 = vsel %vm9270, %v11563, 0.0
    %11702 = vadd.xlane.f32.xlu0 %v11701
    %v11703 = vpop.xlane.xlu0 %11702
    %v11704 = vsel %vm9266, %v11564, 0.0
    %11705 = vadd.xlane.f32.xlu0 %v11704
    %v11706 = vpop.xlane.xlu0 %11705
    %v11707 = vsel %vm9270, %v11565, 0.0
    %11708 = vadd.xlane.f32.xlu0 %v11707
    %v11709 = vpop.xlane.xlu0 %11708
    %v11710 = vsel %vm9266, %v11566, 0.0
    %11711 = vadd.xlane.f32.xlu0 %v11710
    %v11712 = vpop.xlane.xlu0 %11711
    %v11713 = vsel %vm9270, %v11567, 0.0
    %11714 = vadd.xlane.f32.xlu0 %v11713
    %v11715 = vpop.xlane.xlu0 %11714
    %v11716 = vsel %vm9266, %v11568, 0.0
    %11717 = vadd.xlane.f32.xlu0 %v11716
    %v11718 = vpop.xlane.xlu0 %11717
    %v11719 = vsel %vm9270, %v11569, 0.0
    %11720 = vadd.xlane.f32.xlu0 %v11719
    %v11721 = vpop.xlane.xlu0 %11720
    %v11722 = vsel %vm9266, %v11570, 0.0
    %11723 = vadd.xlane.f32.xlu0 %v11722
    %v11724 = vpop.xlane.xlu0 %11723
    %v11725 = vsel %vm9270, %v11571, 0.0
    %11726 = vadd.xlane.f32.xlu0 %v11725
    %v11727 = vpop.xlane.xlu0 %11726
    %v11728 = vsel %vm9266, %v11572, 0.0
    %11729 = vadd.xlane.f32.xlu0 %v11728
    %v11730 = vpop.xlane.xlu0 %11729
    %v11731 = vsel %vm9270, %v11573, 0.0
    %11732 = vadd.xlane.f32.xlu0 %v11731
    %v11733 = vpop.xlane.xlu0 %11732
    %v11734 = vsel %vm9266, %v11574, 0.0
    %11735 = vadd.xlane.f32.xlu0 %v11734
    %v11736 = vpop.xlane.xlu0 %11735
    %v11737 = vsel %vm9270, %v11575, 0.0
    %11738 = vadd.xlane.f32.xlu0 %v11737
    %v11739 = vpop.xlane.xlu0 %11738
    %v11740 = vsel %vm9266, %v11576, 0.0
    %11741 = vadd.xlane.f32.xlu0 %v11740
    %v11742 = vpop.xlane.xlu0 %11741
    %v11743 = vsel %vm9270, %v11577, 0.0
    %11744 = vadd.xlane.f32.xlu0 %v11743
    %v11745 = vpop.xlane.xlu0 %11744
    %v11746 = vsel %vm9266, %v11578, 0.0
    %11747 = vadd.xlane.f32.xlu0 %v11746
    %v11748 = vpop.xlane.xlu0 %11747
    %v11749 = vsel %vm9270, %v11579, 0.0
    %11750 = vadd.xlane.f32.xlu0 %v11749
    %v11751 = vpop.xlane.xlu0 %11750
    %v11752 = vsel %vm9266, %v11580, 0.0
    %11753 = vadd.xlane.f32.xlu0 %v11752
    %v11754 = vpop.xlane.xlu0 %11753
    %v11755 = vsel %vm9270, %v11581, 0.0
    %11756 = vadd.xlane.f32.xlu0 %v11755
    %v11757 = vpop.xlane.xlu0 %11756
    %v11758 = vsel %vm9266, %v11582, 0.0
    %11759 = vadd.xlane.f32.xlu0 %v11758
    %v11760 = vpop.xlane.xlu0 %11759
    %v11761 = vsel %vm9270, %v11583, 0.0
    %11762 = vadd.xlane.f32.xlu0 %v11761
    %v11763 = vpop.xlane.xlu0 %11762
    %v11764 = vsel %vm9266, %v11584, 0.0
    %11765 = vadd.xlane.f32.xlu0 %v11764
    %v11766 = vpop.xlane.xlu0 %11765
    %v11767 = vsel %vm9270, %v11585, 0.0
    %11768 = vadd.xlane.f32.xlu0 %v11767
    %v11769 = vpop.xlane.xlu0 %11768
    %v11770 = vsel %vm9266, %v11586, 0.0
    %11771 = vadd.xlane.f32.xlu0 %v11770
    %v11772 = vpop.xlane.xlu0 %11771
    %v11773 = vsel %vm9270, %v11587, 0.0
    %11774 = vadd.xlane.f32.xlu0 %v11773
    %v11775 = vpop.xlane.xlu0 %11774
    %v11776 = vsel %vm9266, %v11588, 0.0
    %11777 = vadd.xlane.f32.xlu0 %v11776
    %v11778 = vpop.xlane.xlu0 %11777
    %v11779 = vsel %vm9270, %v11589, 0.0
    %11780 = vadd.xlane.f32.xlu0 %v11779
    %v11781 = vpop.xlane.xlu0 %11780
    %v11782 = vsel %vm5233, %v11595, 0.0
    %v11783 = vadd.f32 %v11592, %v11782
    %v11784 = vrot.slane %v11783, 4
    %v11785 = vadd.f32 %v11783, %v11784
    %v11786 = vrot.slane %v11785, 2
    %v11787 = vadd.f32 %v11785, %v11786
    %v11788 = vrot.slane %v11787, 1
    %v11789 = vadd.f32 %v11787, %v11788
    %v11790 = vsel %vm5233, %v11601, 0.0
    %v11791 = vadd.f32 %v11598, %v11790
    %v11792 = vrot.slane %v11791, 4
    %v11793 = vadd.f32 %v11791, %v11792
    %v11794 = vrot.slane %v11793, 2
    %v11795 = vadd.f32 %v11793, %v11794
    %v11796 = vrot.slane %v11795, 1
    %v11797 = vadd.f32 %v11795, %v11796
    %v11798 = vsel %vm5233, %v11607, 0.0
    %v11799 = vadd.f32 %v11604, %v11798
    %v11800 = vrot.slane %v11799, 4
    %v11801 = vadd.f32 %v11799, %v11800
    %v11802 = vrot.slane %v11801, 2
    %v11803 = vadd.f32 %v11801, %v11802
    %v11804 = vrot.slane %v11803, 1
    %v11805 = vadd.f32 %v11803, %v11804
    %v11806 = vsel %vm5233, %v11613, 0.0
    %v11807 = vadd.f32 %v11610, %v11806
    %v11808 = vrot.slane %v11807, 4
    %v11809 = vadd.f32 %v11807, %v11808
    %v11810 = vrot.slane %v11809, 2
    %v11811 = vadd.f32 %v11809, %v11810
    %v11812 = vrot.slane %v11811, 1
    %v11813 = vadd.f32 %v11811, %v11812
    %v11814 = vsel %vm5233, %v11619, 0.0
    %v11815 = vadd.f32 %v11616, %v11814
    %v11816 = vrot.slane %v11815, 4
    %v11817 = vadd.f32 %v11815, %v11816
    %v11818 = vrot.slane %v11817, 2
    %v11819 = vadd.f32 %v11817, %v11818
    %v11820 = vrot.slane %v11819, 1
    %v11821 = vadd.f32 %v11819, %v11820
    %v11822 = vsel %vm5233, %v11625, 0.0
    %v11823 = vadd.f32 %v11622, %v11822
    %v11824 = vrot.slane %v11823, 4
    %v11825 = vadd.f32 %v11823, %v11824
    %v11826 = vrot.slane %v11825, 2
    %v11827 = vadd.f32 %v11825, %v11826
    %v11828 = vrot.slane %v11827, 1
    %v11829 = vadd.f32 %v11827, %v11828
    %v11830 = vsel %vm5233, %v11631, 0.0
    %v11831 = vadd.f32 %v11628, %v11830
    %v11832 = vrot.slane %v11831, 4
    %v11833 = vadd.f32 %v11831, %v11832
    %v11834 = vrot.slane %v11833, 2
    %v11835 = vadd.f32 %v11833, %v11834
    %v11836 = vrot.slane %v11835, 1
    %v11837 = vadd.f32 %v11835, %v11836
    %v11838 = vsel %vm5233, %v11637, 0.0
    %v11839 = vadd.f32 %v11634, %v11838
    %v11840 = vrot.slane %v11839, 4
    %v11841 = vadd.f32 %v11839, %v11840
    %v11842 = vrot.slane %v11841, 2
    %v11843 = vadd.f32 %v11841, %v11842
    %v11844 = vrot.slane %v11843, 1
    %v11845 = vadd.f32 %v11843, %v11844
    %v11846 = vsel %vm5233, %v11643, 0.0
    %v11847 = vadd.f32 %v11640, %v11846
    %v11848 = vrot.slane %v11847, 4
    %v11849 = vadd.f32 %v11847, %v11848
    %v11850 = vrot.slane %v11849, 2
    %v11851 = vadd.f32 %v11849, %v11850
    %v11852 = vrot.slane %v11851, 1
    %v11853 = vadd.f32 %v11851, %v11852
    %v11854 = vsel %vm5233, %v11649, 0.0
    %v11855 = vadd.f32 %v11646, %v11854
    %v11856 = vrot.slane %v11855, 4
    %v11857 = vadd.f32 %v11855, %v11856
    %v11858 = vrot.slane %v11857, 2
    %v11859 = vadd.f32 %v11857, %v11858
    %v11860 = vrot.slane %v11859, 1
    %v11861 = vadd.f32 %v11859, %v11860
    %v11862 = vsel %vm5233, %v11655, 0.0
    %v11863 = vadd.f32 %v11652, %v11862
    %v11864 = vrot.slane %v11863, 4
    %v11865 = vadd.f32 %v11863, %v11864
    %v11866 = vrot.slane %v11865, 2
    %v11867 = vadd.f32 %v11865, %v11866
    %v11868 = vrot.slane %v11867, 1
    %v11869 = vadd.f32 %v11867, %v11868
    %v11870 = vsel %vm5233, %v11661, 0.0
    %v11871 = vadd.f32 %v11658, %v11870
    %v11872 = vrot.slane %v11871, 4
    %v11873 = vadd.f32 %v11871, %v11872
    %v11874 = vrot.slane %v11873, 2
    %v11875 = vadd.f32 %v11873, %v11874
    %v11876 = vrot.slane %v11875, 1
    %v11877 = vadd.f32 %v11875, %v11876
    %v11878 = vsel %vm5233, %v11667, 0.0
    %v11879 = vadd.f32 %v11664, %v11878
    %v11880 = vrot.slane %v11879, 4
    %v11881 = vadd.f32 %v11879, %v11880
    %v11882 = vrot.slane %v11881, 2
    %v11883 = vadd.f32 %v11881, %v11882
    %v11884 = vrot.slane %v11883, 1
    %v11885 = vadd.f32 %v11883, %v11884
    %v11886 = vsel %vm5233, %v11673, 0.0
    %v11887 = vadd.f32 %v11670, %v11886
    %v11888 = vrot.slane %v11887, 4
    %v11889 = vadd.f32 %v11887, %v11888
    %v11890 = vrot.slane %v11889, 2
    %v11891 = vadd.f32 %v11889, %v11890
    %v11892 = vrot.slane %v11891, 1
    %v11893 = vadd.f32 %v11891, %v11892
    %v11894 = vsel %vm5233, %v11679, 0.0
    %v11895 = vadd.f32 %v11676, %v11894
    %v11896 = vrot.slane %v11895, 4
    %v11897 = vadd.f32 %v11895, %v11896
    %v11898 = vrot.slane %v11897, 2
    %v11899 = vadd.f32 %v11897, %v11898
    %v11900 = vrot.slane %v11899, 1
    %v11901 = vadd.f32 %v11899, %v11900
    %v11902 = vsel %vm5233, %v11685, 0.0
    %v11903 = vadd.f32 %v11682, %v11902
    %v11904 = vrot.slane %v11903, 4
    %v11905 = vadd.f32 %v11903, %v11904
    %v11906 = vrot.slane %v11905, 2
    %v11907 = vadd.f32 %v11905, %v11906
    %v11908 = vrot.slane %v11907, 1
    %v11909 = vadd.f32 %v11907, %v11908
    %v11910 = vsel %vm5233, %v11691, 0.0
    %v11911 = vadd.f32 %v11688, %v11910
    %v11912 = vrot.slane %v11911, 4
    %v11913 = vadd.f32 %v11911, %v11912
    %v11914 = vrot.slane %v11913, 2
    %v11915 = vadd.f32 %v11913, %v11914
    %v11916 = vrot.slane %v11915, 1
    %v11917 = vadd.f32 %v11915, %v11916
    %v11918 = vsel %vm5233, %v11697, 0.0
    %v11919 = vadd.f32 %v11694, %v11918
    %v11920 = vrot.slane %v11919, 4
    %v11921 = vadd.f32 %v11919, %v11920
    %v11922 = vrot.slane %v11921, 2
    %v11923 = vadd.f32 %v11921, %v11922
    %v11924 = vrot.slane %v11923, 1
    %v11925 = vadd.f32 %v11923, %v11924
    %v11926 = vsel %vm5233, %v11703, 0.0
    %v11927 = vadd.f32 %v11700, %v11926
    %v11928 = vrot.slane %v11927, 4
    %v11929 = vadd.f32 %v11927, %v11928
    %v11930 = vrot.slane %v11929, 2
    %v11931 = vadd.f32 %v11929, %v11930
    %v11932 = vrot.slane %v11931, 1
    %v11933 = vadd.f32 %v11931, %v11932
    %v11934 = vsel %vm5233, %v11709, 0.0
    %v11935 = vadd.f32 %v11706, %v11934
    %v11936 = vrot.slane %v11935, 4
    %v11937 = vadd.f32 %v11935, %v11936
    %v11938 = vrot.slane %v11937, 2
    %v11939 = vadd.f32 %v11937, %v11938
    %v11940 = vrot.slane %v11939, 1
    %v11941 = vadd.f32 %v11939, %v11940
    %v11942 = vsel %vm5233, %v11715, 0.0
    %v11943 = vadd.f32 %v11712, %v11942
    %v11944 = vrot.slane %v11943, 4
    %v11945 = vadd.f32 %v11943, %v11944
    %v11946 = vrot.slane %v11945, 2
    %v11947 = vadd.f32 %v11945, %v11946
    %v11948 = vrot.slane %v11947, 1
    %v11949 = vadd.f32 %v11947, %v11948
    %v11950 = vsel %vm5233, %v11721, 0.0
    %v11951 = vadd.f32 %v11718, %v11950
    %v11952 = vrot.slane %v11951, 4
    %v11953 = vadd.f32 %v11951, %v11952
    %v11954 = vrot.slane %v11953, 2
    %v11955 = vadd.f32 %v11953, %v11954
    %v11956 = vrot.slane %v11955, 1
    %v11957 = vadd.f32 %v11955, %v11956
    %v11958 = vsel %vm5233, %v11727, 0.0
    %v11959 = vadd.f32 %v11724, %v11958
    %v11960 = vrot.slane %v11959, 4
    %v11961 = vadd.f32 %v11959, %v11960
    %v11962 = vrot.slane %v11961, 2
    %v11963 = vadd.f32 %v11961, %v11962
    %v11964 = vrot.slane %v11963, 1
    %v11965 = vadd.f32 %v11963, %v11964
    %v11966 = vsel %vm5233, %v11733, 0.0
    %v11967 = vadd.f32 %v11730, %v11966
    %v11968 = vrot.slane %v11967, 4
    %v11969 = vadd.f32 %v11967, %v11968
    %v11970 = vrot.slane %v11969, 2
    %v11971 = vadd.f32 %v11969, %v11970
    %v11972 = vrot.slane %v11971, 1
    %v11973 = vadd.f32 %v11971, %v11972
    %v11974 = vsel %vm5233, %v11739, 0.0
    %v11975 = vadd.f32 %v11736, %v11974
    %v11976 = vrot.slane %v11975, 4
    %v11977 = vadd.f32 %v11975, %v11976
    %v11978 = vrot.slane %v11977, 2
    %v11979 = vadd.f32 %v11977, %v11978
    %v11980 = vrot.slane %v11979, 1
    %v11981 = vadd.f32 %v11979, %v11980
    %v11982 = vsel %vm5233, %v11745, 0.0
    %v11983 = vadd.f32 %v11742, %v11982
    %v11984 = vrot.slane %v11983, 4
    %v11985 = vadd.f32 %v11983, %v11984
    %v11986 = vrot.slane %v11985, 2
    %v11987 = vadd.f32 %v11985, %v11986
    %v11988 = vrot.slane %v11987, 1
    %v11989 = vadd.f32 %v11987, %v11988
    %v11990 = vsel %vm5233, %v11751, 0.0
    %v11991 = vadd.f32 %v11748, %v11990
    %v11992 = vrot.slane %v11991, 4
    %v11993 = vadd.f32 %v11991, %v11992
    %v11994 = vrot.slane %v11993, 2
    %v11995 = vadd.f32 %v11993, %v11994
    %v11996 = vrot.slane %v11995, 1
    %v11997 = vadd.f32 %v11995, %v11996
    %v11998 = vsel %vm5233, %v11757, 0.0
    %v11999 = vadd.f32 %v11754, %v11998
    %v12000 = vrot.slane %v11999, 4
    %v12001 = vadd.f32 %v11999, %v12000
    %v12002 = vrot.slane %v12001, 2
    %v12003 = vadd.f32 %v12001, %v12002
    %v12004 = vrot.slane %v12003, 1
    %v12005 = vadd.f32 %v12003, %v12004
    %v12006 = vsel %vm5233, %v11763, 0.0
    %v12007 = vadd.f32 %v11760, %v12006
    %v12008 = vrot.slane %v12007, 4
    %v12009 = vadd.f32 %v12007, %v12008
    %v12010 = vrot.slane %v12009, 2
    %v12011 = vadd.f32 %v12009, %v12010
    %v12012 = vrot.slane %v12011, 1
    %v12013 = vadd.f32 %v12011, %v12012
    %v12014 = vsel %vm5233, %v11769, 0.0
    %v12015 = vadd.f32 %v11766, %v12014
    %v12016 = vrot.slane %v12015, 4
    %v12017 = vadd.f32 %v12015, %v12016
    %v12018 = vrot.slane %v12017, 2
    %v12019 = vadd.f32 %v12017, %v12018
    %v12020 = vrot.slane %v12019, 1
    %v12021 = vadd.f32 %v12019, %v12020
    %v12022 = vsel %vm5233, %v11775, 0.0
    %v12023 = vadd.f32 %v11772, %v12022
    %v12024 = vrot.slane %v12023, 4
    %v12025 = vadd.f32 %v12023, %v12024
    %v12026 = vrot.slane %v12025, 2
    %v12027 = vadd.f32 %v12025, %v12026
    %v12028 = vrot.slane %v12027, 1
    %v12029 = vadd.f32 %v12027, %v12028
    %v12030 = vsel %vm5233, %v11781, 0.0
    %v12031 = vadd.f32 %v11778, %v12030
    %v12032 = vrot.slane %v12031, 4
    %v12033 = vadd.f32 %v12031, %v12032
    %v12034 = vrot.slane %v12033, 2
    %v12035 = vadd.f32 %v12033, %v12034
    %v12036 = vrot.slane %v12035, 1
    %v12037 = vadd.f32 %v12035, %v12036
    %v12038 = vadd.f32 %v11789, %v11797
    %v12039 = vadd.f32 %v12038, %v11805
    %v12040 = vadd.f32 %v12039, %v11813
    %v12041 = vadd.f32 %v12040, %v11821
    %v12042 = vadd.f32 %v12041, %v11829
    %v12043 = vadd.f32 %v12042, %v11837
    %v12044 = vadd.f32 %v12043, %v11845
    %v12045 = vadd.f32 %v12044, %v11853
    %v12046 = vadd.f32 %v12045, %v11861
    %v12047 = vadd.f32 %v12046, %v11869
    %v12048 = vadd.f32 %v12047, %v11877
    %v12049 = vadd.f32 %v12048, %v11885
    %v12050 = vadd.f32 %v12049, %v11893
    %v12051 = vadd.f32 %v12050, %v11901
    %v12052 = vadd.f32 %v12051, %v11909
    %v12053 = vadd.f32 %v12052, %v11917
    %v12054 = vadd.f32 %v12053, %v11925
    %v12055 = vadd.f32 %v12054, %v11933
    %v12056 = vadd.f32 %v12055, %v11941
    %v12057 = vadd.f32 %v12056, %v11949
    %v12058 = vadd.f32 %v12057, %v11957
    %v12059 = vadd.f32 %v12058, %v11965
    %v12060 = vadd.f32 %v12059, %v11973
    %v12061 = vadd.f32 %v12060, %v11981
    %v12062 = vadd.f32 %v12061, %v11989
    %v12063 = vadd.f32 %v12062, %v11997
    %v12064 = vadd.f32 %v12063, %v12005
    %v12065 = vadd.f32 %v12064, %v12013
    %v12066 = vadd.f32 %v12065, %v12021
    %v12067 = vadd.f32 %v12066, %v12029
    %v12068 = vadd.f32 %v12067, %v12037
    %v12069 = vmul.f32 %v9074, %v11462
    %v12070 = vmul.f32 %v9075, %v11463
    %v12071 = vmul.f32 %v9076, %v11464
    %v12072 = vmul.f32 %v9077, %v11465
    %v12073 = vmul.f32 %v9078, %v11466
    %v12074 = vmul.f32 %v9079, %v11467
    %v12075 = vmul.f32 %v9080, %v11468
    %v12076 = vmul.f32 %v9081, %v11469
    %v12077 = vmul.f32 %v9082, %v11470
    %v12078 = vmul.f32 %v9083, %v11471
    %v12079 = vmul.f32 %v9084, %v11472
    %v12080 = vmul.f32 %v9085, %v11473
    %v12081 = vmul.f32 %v9086, %v11474
    %v12082 = vmul.f32 %v9087, %v11475
    %v12083 = vmul.f32 %v9088, %v11476
    %v12084 = vmul.f32 %v9089, %v11477
    %v12085 = vmul.f32 %v9090, %v11478
    %v12086 = vmul.f32 %v9091, %v11479
    %v12087 = vmul.f32 %v9092, %v11480
    %v12088 = vmul.f32 %v9093, %v11481
    %v12089 = vmul.f32 %v9094, %v11482
    %v12090 = vmul.f32 %v9095, %v11483
    %v12091 = vmul.f32 %v9096, %v11484
    %v12092 = vmul.f32 %v9097, %v11485
    %v12093 = vmul.f32 %v9098, %v11486
    %v12094 = vmul.f32 %v9099, %v11487
    %v12095 = vmul.f32 %v9100, %v11488
    %v12096 = vmul.f32 %v9101, %v11489
    %v12097 = vmul.f32 %v9102, %v11490
    %v12098 = vmul.f32 %v9103, %v11491
    %v12099 = vmul.f32 %v9104, %v11492
    %v12100 = vmul.f32 %v9105, %v11493
    %v12101 = vmul.f32 %v9106, %v11494
    %v12102 = vmul.f32 %v9107, %v11495
    %v12103 = vmul.f32 %v9108, %v11496
    %v12104 = vmul.f32 %v9109, %v11497
    %v12105 = vmul.f32 %v9110, %v11498
    %v12106 = vmul.f32 %v9111, %v11499
    %v12107 = vmul.f32 %v9112, %v11500
    %v12108 = vmul.f32 %v9113, %v11501
    %v12109 = vmul.f32 %v9114, %v11502
    %v12110 = vmul.f32 %v9115, %v11503
    %v12111 = vmul.f32 %v9116, %v11504
    %v12112 = vmul.f32 %v9117, %v11505
    %v12113 = vmul.f32 %v9118, %v11506
    %v12114 = vmul.f32 %v9119, %v11507
    %v12115 = vmul.f32 %v9120, %v11508
    %v12116 = vmul.f32 %v9121, %v11509
    %v12117 = vmul.f32 %v9122, %v11510
    %v12118 = vmul.f32 %v9123, %v11511
    %v12119 = vmul.f32 %v9124, %v11512
    %v12120 = vmul.f32 %v9125, %v11513
    %v12121 = vmul.f32 %v9126, %v11514
    %v12122 = vmul.f32 %v9127, %v11515
    %v12123 = vmul.f32 %v9128, %v11516
    %v12124 = vmul.f32 %v9129, %v11517
    %v12125 = vmul.f32 %v9130, %v11518
    %v12126 = vmul.f32 %v9131, %v11519
    %v12127 = vmul.f32 %v9132, %v11520
    %v12128 = vmul.f32 %v9133, %v11521
    %v12129 = vmul.f32 %v9134, %v11522
    %v12130 = vmul.f32 %v9135, %v11523
    %v12131 = vmul.f32 %v9136, %v11524
    %v12132 = vmul.f32 %v9137, %v11525
    %v12133 = vsel %vm9266, %v12069, 0.0
    %12134 = vadd.xlane.f32.xlu0 %v12133
    %v12135 = vpop.xlane.xlu0 %12134
    %v12136 = vsel %vm9270, %v12070, 0.0
    %12137 = vadd.xlane.f32.xlu0 %v12136
    %v12138 = vpop.xlane.xlu0 %12137
    %v12139 = vsel %vm9266, %v12071, 0.0
    %12140 = vadd.xlane.f32.xlu0 %v12139
    %v12141 = vpop.xlane.xlu0 %12140
    %v12142 = vsel %vm9270, %v12072, 0.0
    %12143 = vadd.xlane.f32.xlu0 %v12142
    %v12144 = vpop.xlane.xlu0 %12143
    %v12145 = vsel %vm9266, %v12073, 0.0
    %12146 = vadd.xlane.f32.xlu0 %v12145
    %v12147 = vpop.xlane.xlu0 %12146
    %v12148 = vsel %vm9270, %v12074, 0.0
    %12149 = vadd.xlane.f32.xlu0 %v12148
    %v12150 = vpop.xlane.xlu0 %12149
    %v12151 = vsel %vm9266, %v12075, 0.0
    %12152 = vadd.xlane.f32.xlu0 %v12151
    %v12153 = vpop.xlane.xlu0 %12152
    %v12154 = vsel %vm9270, %v12076, 0.0
    %12155 = vadd.xlane.f32.xlu0 %v12154
    %v12156 = vpop.xlane.xlu0 %12155
    %v12157 = vsel %vm9266, %v12077, 0.0
    %12158 = vadd.xlane.f32.xlu0 %v12157
    %v12159 = vpop.xlane.xlu0 %12158
    %v12160 = vsel %vm9270, %v12078, 0.0
    %12161 = vadd.xlane.f32.xlu0 %v12160
    %v12162 = vpop.xlane.xlu0 %12161
    %v12163 = vsel %vm9266, %v12079, 0.0
    %12164 = vadd.xlane.f32.xlu0 %v12163
    %v12165 = vpop.xlane.xlu0 %12164
    %v12166 = vsel %vm9270, %v12080, 0.0
    %12167 = vadd.xlane.f32.xlu0 %v12166
    %v12168 = vpop.xlane.xlu0 %12167
    %v12169 = vsel %vm9266, %v12081, 0.0
    %12170 = vadd.xlane.f32.xlu0 %v12169
    %v12171 = vpop.xlane.xlu0 %12170
    %v12172 = vsel %vm9270, %v12082, 0.0
    %12173 = vadd.xlane.f32.xlu0 %v12172
    %v12174 = vpop.xlane.xlu0 %12173
    %v12175 = vsel %vm9266, %v12083, 0.0
    %12176 = vadd.xlane.f32.xlu0 %v12175
    %v12177 = vpop.xlane.xlu0 %12176
    %v12178 = vsel %vm9270, %v12084, 0.0
    %12179 = vadd.xlane.f32.xlu0 %v12178
    %v12180 = vpop.xlane.xlu0 %12179
    %v12181 = vsel %vm9266, %v12085, 0.0
    %12182 = vadd.xlane.f32.xlu0 %v12181
    %v12183 = vpop.xlane.xlu0 %12182
    %v12184 = vsel %vm9270, %v12086, 0.0
    %12185 = vadd.xlane.f32.xlu0 %v12184
    %v12186 = vpop.xlane.xlu0 %12185
    %v12187 = vsel %vm9266, %v12087, 0.0
    %12188 = vadd.xlane.f32.xlu0 %v12187
    %v12189 = vpop.xlane.xlu0 %12188
    %v12190 = vsel %vm9270, %v12088, 0.0
    %12191 = vadd.xlane.f32.xlu0 %v12190
    %v12192 = vpop.xlane.xlu0 %12191
    %v12193 = vsel %vm9266, %v12089, 0.0
    %12194 = vadd.xlane.f32.xlu0 %v12193
    %v12195 = vpop.xlane.xlu0 %12194
    %v12196 = vsel %vm9270, %v12090, 0.0
    %12197 = vadd.xlane.f32.xlu0 %v12196
    %v12198 = vpop.xlane.xlu0 %12197
    %v12199 = vsel %vm9266, %v12091, 0.0
    %12200 = vadd.xlane.f32.xlu0 %v12199
    %v12201 = vpop.xlane.xlu0 %12200
    %v12202 = vsel %vm9270, %v12092, 0.0
    %12203 = vadd.xlane.f32.xlu0 %v12202
    %v12204 = vpop.xlane.xlu0 %12203
    %v12205 = vsel %vm9266, %v12093, 0.0
    %12206 = vadd.xlane.f32.xlu0 %v12205
    %v12207 = vpop.xlane.xlu0 %12206
    %v12208 = vsel %vm9270, %v12094, 0.0
    %12209 = vadd.xlane.f32.xlu0 %v12208
    %v12210 = vpop.xlane.xlu0 %12209
    %v12211 = vsel %vm9266, %v12095, 0.0
    %12212 = vadd.xlane.f32.xlu0 %v12211
    %v12213 = vpop.xlane.xlu0 %12212
    %v12214 = vsel %vm9270, %v12096, 0.0
    %12215 = vadd.xlane.f32.xlu0 %v12214
    %v12216 = vpop.xlane.xlu0 %12215
    %v12217 = vsel %vm9266, %v12097, 0.0
    %12218 = vadd.xlane.f32.xlu0 %v12217
    %v12219 = vpop.xlane.xlu0 %12218
    %v12220 = vsel %vm9270, %v12098, 0.0
    %12221 = vadd.xlane.f32.xlu0 %v12220
    %v12222 = vpop.xlane.xlu0 %12221
    %v12223 = vsel %vm9266, %v12099, 0.0
    %12224 = vadd.xlane.f32.xlu0 %v12223
    %v12225 = vpop.xlane.xlu0 %12224
    %v12226 = vsel %vm9270, %v12100, 0.0
    %12227 = vadd.xlane.f32.xlu0 %v12226
    %v12228 = vpop.xlane.xlu0 %12227
    %v12229 = vsel %vm9266, %v12101, 0.0
    %12230 = vadd.xlane.f32.xlu0 %v12229
    %v12231 = vpop.xlane.xlu0 %12230
    %v12232 = vsel %vm9270, %v12102, 0.0
    %12233 = vadd.xlane.f32.xlu0 %v12232
    %v12234 = vpop.xlane.xlu0 %12233
    %v12235 = vsel %vm9266, %v12103, 0.0
    %12236 = vadd.xlane.f32.xlu0 %v12235
    %v12237 = vpop.xlane.xlu0 %12236
    %v12238 = vsel %vm9270, %v12104, 0.0
    %12239 = vadd.xlane.f32.xlu0 %v12238
    %v12240 = vpop.xlane.xlu0 %12239
    %v12241 = vsel %vm9266, %v12105, 0.0
    %12242 = vadd.xlane.f32.xlu0 %v12241
    %v12243 = vpop.xlane.xlu0 %12242
    %v12244 = vsel %vm9270, %v12106, 0.0
    %12245 = vadd.xlane.f32.xlu0 %v12244
    %v12246 = vpop.xlane.xlu0 %12245
    %v12247 = vsel %vm9266, %v12107, 0.0
    %12248 = vadd.xlane.f32.xlu0 %v12247
    %v12249 = vpop.xlane.xlu0 %12248
    %v12250 = vsel %vm9270, %v12108, 0.0
    %12251 = vadd.xlane.f32.xlu0 %v12250
    %v12252 = vpop.xlane.xlu0 %12251
    %v12253 = vsel %vm9266, %v12109, 0.0
    %12254 = vadd.xlane.f32.xlu0 %v12253
    %v12255 = vpop.xlane.xlu0 %12254
    %v12256 = vsel %vm9270, %v12110, 0.0
    %12257 = vadd.xlane.f32.xlu0 %v12256
    %v12258 = vpop.xlane.xlu0 %12257
    %v12259 = vsel %vm9266, %v12111, 0.0
    %12260 = vadd.xlane.f32.xlu0 %v12259
    %v12261 = vpop.xlane.xlu0 %12260
    %v12262 = vsel %vm9270, %v12112, 0.0
    %12263 = vadd.xlane.f32.xlu0 %v12262
    %v12264 = vpop.xlane.xlu0 %12263
    %v12265 = vsel %vm9266, %v12113, 0.0
    %12266 = vadd.xlane.f32.xlu0 %v12265
    %v12267 = vpop.xlane.xlu0 %12266
    %v12268 = vsel %vm9270, %v12114, 0.0
    %12269 = vadd.xlane.f32.xlu0 %v12268
    %v12270 = vpop.xlane.xlu0 %12269
    %v12271 = vsel %vm9266, %v12115, 0.0
    %12272 = vadd.xlane.f32.xlu0 %v12271
    %v12273 = vpop.xlane.xlu0 %12272
    %v12274 = vsel %vm9270, %v12116, 0.0
    %12275 = vadd.xlane.f32.xlu0 %v12274
    %v12276 = vpop.xlane.xlu0 %12275
    %v12277 = vsel %vm9266, %v12117, 0.0
    %12278 = vadd.xlane.f32.xlu0 %v12277
    %v12279 = vpop.xlane.xlu0 %12278
    %v12280 = vsel %vm9270, %v12118, 0.0
    %12281 = vadd.xlane.f32.xlu0 %v12280
    %v12282 = vpop.xlane.xlu0 %12281
    %v12283 = vsel %vm9266, %v12119, 0.0
    %12284 = vadd.xlane.f32.xlu0 %v12283
    %v12285 = vpop.xlane.xlu0 %12284
    %v12286 = vsel %vm9270, %v12120, 0.0
    %12287 = vadd.xlane.f32.xlu0 %v12286
    %v12288 = vpop.xlane.xlu0 %12287
    %v12289 = vsel %vm9266, %v12121, 0.0
    %12290 = vadd.xlane.f32.xlu0 %v12289
    %v12291 = vpop.xlane.xlu0 %12290
    %v12292 = vsel %vm9270, %v12122, 0.0
    %12293 = vadd.xlane.f32.xlu0 %v12292
    %v12294 = vpop.xlane.xlu0 %12293
    %v12295 = vsel %vm9266, %v12123, 0.0
    %12296 = vadd.xlane.f32.xlu0 %v12295
    %v12297 = vpop.xlane.xlu0 %12296
    %v12298 = vsel %vm9270, %v12124, 0.0
    %12299 = vadd.xlane.f32.xlu0 %v12298
    %v12300 = vpop.xlane.xlu0 %12299
    %v12301 = vsel %vm9266, %v12125, 0.0
    %12302 = vadd.xlane.f32.xlu0 %v12301
    %v12303 = vpop.xlane.xlu0 %12302
    %v12304 = vsel %vm9270, %v12126, 0.0
    %12305 = vadd.xlane.f32.xlu0 %v12304
    %v12306 = vpop.xlane.xlu0 %12305
    %v12307 = vsel %vm9266, %v12127, 0.0
    %12308 = vadd.xlane.f32.xlu0 %v12307
    %v12309 = vpop.xlane.xlu0 %12308
    %v12310 = vsel %vm9270, %v12128, 0.0
    %12311 = vadd.xlane.f32.xlu0 %v12310
    %v12312 = vpop.xlane.xlu0 %12311
    %v12313 = vsel %vm9266, %v12129, 0.0
    %12314 = vadd.xlane.f32.xlu0 %v12313
    %v12315 = vpop.xlane.xlu0 %12314
    %v12316 = vsel %vm9270, %v12130, 0.0
    %12317 = vadd.xlane.f32.xlu0 %v12316
    %v12318 = vpop.xlane.xlu0 %12317
    %v12319 = vsel %vm9266, %v12131, 0.0
    %12320 = vadd.xlane.f32.xlu0 %v12319
    %v12321 = vpop.xlane.xlu0 %12320
    %v12322 = vsel %vm9270, %v12132, 0.0
    %12323 = vadd.xlane.f32.xlu0 %v12322
    %v12324 = vpop.xlane.xlu0 %12323
    %v12325 = vsel %vm5233, %v12138, 0.0
    %v12326 = vadd.f32 %v12135, %v12325
    %v12327 = vrot.slane %v12326, 4
    %v12328 = vadd.f32 %v12326, %v12327
    %v12329 = vrot.slane %v12328, 2
    %v12330 = vadd.f32 %v12328, %v12329
    %v12331 = vrot.slane %v12330, 1
    %v12332 = vadd.f32 %v12330, %v12331
    %v12333 = vsel %vm5233, %v12144, 0.0
    %v12334 = vadd.f32 %v12141, %v12333
    %v12335 = vrot.slane %v12334, 4
    %v12336 = vadd.f32 %v12334, %v12335
    %v12337 = vrot.slane %v12336, 2
    %v12338 = vadd.f32 %v12336, %v12337
    %v12339 = vrot.slane %v12338, 1
    %v12340 = vadd.f32 %v12338, %v12339
    %v12341 = vsel %vm5233, %v12150, 0.0
    %v12342 = vadd.f32 %v12147, %v12341
    %v12343 = vrot.slane %v12342, 4
    %v12344 = vadd.f32 %v12342, %v12343
    %v12345 = vrot.slane %v12344, 2
    %v12346 = vadd.f32 %v12344, %v12345
    %v12347 = vrot.slane %v12346, 1
    %v12348 = vadd.f32 %v12346, %v12347
    %v12349 = vsel %vm5233, %v12156, 0.0
    %v12350 = vadd.f32 %v12153, %v12349
    %v12351 = vrot.slane %v12350, 4
    %v12352 = vadd.f32 %v12350, %v12351
    %v12353 = vrot.slane %v12352, 2
    %v12354 = vadd.f32 %v12352, %v12353
    %v12355 = vrot.slane %v12354, 1
    %v12356 = vadd.f32 %v12354, %v12355
    %v12357 = vsel %vm5233, %v12162, 0.0
    %v12358 = vadd.f32 %v12159, %v12357
    %v12359 = vrot.slane %v12358, 4
    %v12360 = vadd.f32 %v12358, %v12359
    %v12361 = vrot.slane %v12360, 2
    %v12362 = vadd.f32 %v12360, %v12361
    %v12363 = vrot.slane %v12362, 1
    %v12364 = vadd.f32 %v12362, %v12363
    %v12365 = vsel %vm5233, %v12168, 0.0
    %v12366 = vadd.f32 %v12165, %v12365
    %v12367 = vrot.slane %v12366, 4
    %v12368 = vadd.f32 %v12366, %v12367
    %v12369 = vrot.slane %v12368, 2
    %v12370 = vadd.f32 %v12368, %v12369
    %v12371 = vrot.slane %v12370, 1
    %v12372 = vadd.f32 %v12370, %v12371
    %v12373 = vsel %vm5233, %v12174, 0.0
    %v12374 = vadd.f32 %v12171, %v12373
    %v12375 = vrot.slane %v12374, 4
    %v12376 = vadd.f32 %v12374, %v12375
    %v12377 = vrot.slane %v12376, 2
    %v12378 = vadd.f32 %v12376, %v12377
    %v12379 = vrot.slane %v12378, 1
    %v12380 = vadd.f32 %v12378, %v12379
    %v12381 = vsel %vm5233, %v12180, 0.0
    %v12382 = vadd.f32 %v12177, %v12381
    %v12383 = vrot.slane %v12382, 4
    %v12384 = vadd.f32 %v12382, %v12383
    %v12385 = vrot.slane %v12384, 2
    %v12386 = vadd.f32 %v12384, %v12385
    %v12387 = vrot.slane %v12386, 1
    %v12388 = vadd.f32 %v12386, %v12387
    %v12389 = vsel %vm5233, %v12186, 0.0
    %v12390 = vadd.f32 %v12183, %v12389
    %v12391 = vrot.slane %v12390, 4
    %v12392 = vadd.f32 %v12390, %v12391
    %v12393 = vrot.slane %v12392, 2
    %v12394 = vadd.f32 %v12392, %v12393
    %v12395 = vrot.slane %v12394, 1
    %v12396 = vadd.f32 %v12394, %v12395
    %v12397 = vsel %vm5233, %v12192, 0.0
    %v12398 = vadd.f32 %v12189, %v12397
    %v12399 = vrot.slane %v12398, 4
    %v12400 = vadd.f32 %v12398, %v12399
    %v12401 = vrot.slane %v12400, 2
    %v12402 = vadd.f32 %v12400, %v12401
    %v12403 = vrot.slane %v12402, 1
    %v12404 = vadd.f32 %v12402, %v12403
    %v12405 = vsel %vm5233, %v12198, 0.0
    %v12406 = vadd.f32 %v12195, %v12405
    %v12407 = vrot.slane %v12406, 4
    %v12408 = vadd.f32 %v12406, %v12407
    %v12409 = vrot.slane %v12408, 2
    %v12410 = vadd.f32 %v12408, %v12409
    %v12411 = vrot.slane %v12410, 1
    %v12412 = vadd.f32 %v12410, %v12411
    %v12413 = vsel %vm5233, %v12204, 0.0
    %v12414 = vadd.f32 %v12201, %v12413
    %v12415 = vrot.slane %v12414, 4
    %v12416 = vadd.f32 %v12414, %v12415
    %v12417 = vrot.slane %v12416, 2
    %v12418 = vadd.f32 %v12416, %v12417
    %v12419 = vrot.slane %v12418, 1
    %v12420 = vadd.f32 %v12418, %v12419
    %v12421 = vsel %vm5233, %v12210, 0.0
    %v12422 = vadd.f32 %v12207, %v12421
    %v12423 = vrot.slane %v12422, 4
    %v12424 = vadd.f32 %v12422, %v12423
    %v12425 = vrot.slane %v12424, 2
    %v12426 = vadd.f32 %v12424, %v12425
    %v12427 = vrot.slane %v12426, 1
    %v12428 = vadd.f32 %v12426, %v12427
    %v12429 = vsel %vm5233, %v12216, 0.0
    %v12430 = vadd.f32 %v12213, %v12429
    %v12431 = vrot.slane %v12430, 4
    %v12432 = vadd.f32 %v12430, %v12431
    %v12433 = vrot.slane %v12432, 2
    %v12434 = vadd.f32 %v12432, %v12433
    %v12435 = vrot.slane %v12434, 1
    %v12436 = vadd.f32 %v12434, %v12435
    %v12437 = vsel %vm5233, %v12222, 0.0
    %v12438 = vadd.f32 %v12219, %v12437
    %v12439 = vrot.slane %v12438, 4
    %v12440 = vadd.f32 %v12438, %v12439
    %v12441 = vrot.slane %v12440, 2
    %v12442 = vadd.f32 %v12440, %v12441
    %v12443 = vrot.slane %v12442, 1
    %v12444 = vadd.f32 %v12442, %v12443
    %v12445 = vsel %vm5233, %v12228, 0.0
    %v12446 = vadd.f32 %v12225, %v12445
    %v12447 = vrot.slane %v12446, 4
    %v12448 = vadd.f32 %v12446, %v12447
    %v12449 = vrot.slane %v12448, 2
    %v12450 = vadd.f32 %v12448, %v12449
    %v12451 = vrot.slane %v12450, 1
    %v12452 = vadd.f32 %v12450, %v12451
    %v12453 = vsel %vm5233, %v12234, 0.0
    %v12454 = vadd.f32 %v12231, %v12453
    %v12455 = vrot.slane %v12454, 4
    %v12456 = vadd.f32 %v12454, %v12455
    %v12457 = vrot.slane %v12456, 2
    %v12458 = vadd.f32 %v12456, %v12457
    %v12459 = vrot.slane %v12458, 1
    %v12460 = vadd.f32 %v12458, %v12459
    %v12461 = vsel %vm5233, %v12240, 0.0
    %v12462 = vadd.f32 %v12237, %v12461
    %v12463 = vrot.slane %v12462, 4
    %v12464 = vadd.f32 %v12462, %v12463
    %v12465 = vrot.slane %v12464, 2
    %v12466 = vadd.f32 %v12464, %v12465
    %v12467 = vrot.slane %v12466, 1
    %v12468 = vadd.f32 %v12466, %v12467
    %v12469 = vsel %vm5233, %v12246, 0.0
    %v12470 = vadd.f32 %v12243, %v12469
    %v12471 = vrot.slane %v12470, 4
    %v12472 = vadd.f32 %v12470, %v12471
    %v12473 = vrot.slane %v12472, 2
    %v12474 = vadd.f32 %v12472, %v12473
    %v12475 = vrot.slane %v12474, 1
    %v12476 = vadd.f32 %v12474, %v12475
    %v12477 = vsel %vm5233, %v12252, 0.0
    %v12478 = vadd.f32 %v12249, %v12477
    %v12479 = vrot.slane %v12478, 4
    %v12480 = vadd.f32 %v12478, %v12479
    %v12481 = vrot.slane %v12480, 2
    %v12482 = vadd.f32 %v12480, %v12481
    %v12483 = vrot.slane %v12482, 1
    %v12484 = vadd.f32 %v12482, %v12483
    %v12485 = vsel %vm5233, %v12258, 0.0
    %v12486 = vadd.f32 %v12255, %v12485
    %v12487 = vrot.slane %v12486, 4
    %v12488 = vadd.f32 %v12486, %v12487
    %v12489 = vrot.slane %v12488, 2
    %v12490 = vadd.f32 %v12488, %v12489
    %v12491 = vrot.slane %v12490, 1
    %v12492 = vadd.f32 %v12490, %v12491
    %v12493 = vsel %vm5233, %v12264, 0.0
    %v12494 = vadd.f32 %v12261, %v12493
    %v12495 = vrot.slane %v12494, 4
    %v12496 = vadd.f32 %v12494, %v12495
    %v12497 = vrot.slane %v12496, 2
    %v12498 = vadd.f32 %v12496, %v12497
    %v12499 = vrot.slane %v12498, 1
    %v12500 = vadd.f32 %v12498, %v12499
    %v12501 = vsel %vm5233, %v12270, 0.0
    %v12502 = vadd.f32 %v12267, %v12501
    %v12503 = vrot.slane %v12502, 4
    %v12504 = vadd.f32 %v12502, %v12503
    %v12505 = vrot.slane %v12504, 2
    %v12506 = vadd.f32 %v12504, %v12505
    %v12507 = vrot.slane %v12506, 1
    %v12508 = vadd.f32 %v12506, %v12507
    %v12509 = vsel %vm5233, %v12276, 0.0
    %v12510 = vadd.f32 %v12273, %v12509
    %v12511 = vrot.slane %v12510, 4
    %v12512 = vadd.f32 %v12510, %v12511
    %v12513 = vrot.slane %v12512, 2
    %v12514 = vadd.f32 %v12512, %v12513
    %v12515 = vrot.slane %v12514, 1
    %v12516 = vadd.f32 %v12514, %v12515
    %v12517 = vsel %vm5233, %v12282, 0.0
    %v12518 = vadd.f32 %v12279, %v12517
    %v12519 = vrot.slane %v12518, 4
    %v12520 = vadd.f32 %v12518, %v12519
    %v12521 = vrot.slane %v12520, 2
    %v12522 = vadd.f32 %v12520, %v12521
    %v12523 = vrot.slane %v12522, 1
    %v12524 = vadd.f32 %v12522, %v12523
    %v12525 = vsel %vm5233, %v12288, 0.0
    %v12526 = vadd.f32 %v12285, %v12525
    %v12527 = vrot.slane %v12526, 4
    %v12528 = vadd.f32 %v12526, %v12527
    %v12529 = vrot.slane %v12528, 2
    %v12530 = vadd.f32 %v12528, %v12529
    %v12531 = vrot.slane %v12530, 1
    %v12532 = vadd.f32 %v12530, %v12531
    %v12533 = vsel %vm5233, %v12294, 0.0
    %v12534 = vadd.f32 %v12291, %v12533
    %v12535 = vrot.slane %v12534, 4
    %v12536 = vadd.f32 %v12534, %v12535
    %v12537 = vrot.slane %v12536, 2
    %v12538 = vadd.f32 %v12536, %v12537
    %v12539 = vrot.slane %v12538, 1
    %v12540 = vadd.f32 %v12538, %v12539
    %v12541 = vsel %vm5233, %v12300, 0.0
    %v12542 = vadd.f32 %v12297, %v12541
    %v12543 = vrot.slane %v12542, 4
    %v12544 = vadd.f32 %v12542, %v12543
    %v12545 = vrot.slane %v12544, 2
    %v12546 = vadd.f32 %v12544, %v12545
    %v12547 = vrot.slane %v12546, 1
    %v12548 = vadd.f32 %v12546, %v12547
    %v12549 = vsel %vm5233, %v12306, 0.0
    %v12550 = vadd.f32 %v12303, %v12549
    %v12551 = vrot.slane %v12550, 4
    %v12552 = vadd.f32 %v12550, %v12551
    %v12553 = vrot.slane %v12552, 2
    %v12554 = vadd.f32 %v12552, %v12553
    %v12555 = vrot.slane %v12554, 1
    %v12556 = vadd.f32 %v12554, %v12555
    %v12557 = vsel %vm5233, %v12312, 0.0
    %v12558 = vadd.f32 %v12309, %v12557
    %v12559 = vrot.slane %v12558, 4
    %v12560 = vadd.f32 %v12558, %v12559
    %v12561 = vrot.slane %v12560, 2
    %v12562 = vadd.f32 %v12560, %v12561
    %v12563 = vrot.slane %v12562, 1
    %v12564 = vadd.f32 %v12562, %v12563
    %v12565 = vsel %vm5233, %v12318, 0.0
    %v12566 = vadd.f32 %v12315, %v12565
    %v12567 = vrot.slane %v12566, 4
    %v12568 = vadd.f32 %v12566, %v12567
    %v12569 = vrot.slane %v12568, 2
    %v12570 = vadd.f32 %v12568, %v12569
    %v12571 = vrot.slane %v12570, 1
    %v12572 = vadd.f32 %v12570, %v12571
    %v12573 = vsel %vm5233, %v12324, 0.0
    %v12574 = vadd.f32 %v12321, %v12573
    %v12575 = vrot.slane %v12574, 4
    %v12576 = vadd.f32 %v12574, %v12575
    %v12577 = vrot.slane %v12576, 2
    %v12578 = vadd.f32 %v12576, %v12577
    %v12579 = vrot.slane %v12578, 1
    %v12580 = vadd.f32 %v12578, %v12579
    %v12581 = vadd.f32 %v12332, %v12340
    %v12582 = vadd.f32 %v12581, %v12348
    %v12583 = vadd.f32 %v12582, %v12356
    %v12584 = vadd.f32 %v12583, %v12364
    %v12585 = vadd.f32 %v12584, %v12372
    %v12586 = vadd.f32 %v12585, %v12380
    %v12587 = vadd.f32 %v12586, %v12388
    %v12588 = vadd.f32 %v12587, %v12396
    %v12589 = vadd.f32 %v12588, %v12404
    %v12590 = vadd.f32 %v12589, %v12412
    %v12591 = vadd.f32 %v12590, %v12420
    %v12592 = vadd.f32 %v12591, %v12428
    %v12593 = vadd.f32 %v12592, %v12436
    %v12594 = vadd.f32 %v12593, %v12444
    %v12595 = vadd.f32 %v12594, %v12452
    %v12596 = vadd.f32 %v12595, %v12460
    %v12597 = vadd.f32 %v12596, %v12468
    %v12598 = vadd.f32 %v12597, %v12476
    %v12599 = vadd.f32 %v12598, %v12484
    %v12600 = vadd.f32 %v12599, %v12492
    %v12601 = vadd.f32 %v12600, %v12500
    %v12602 = vadd.f32 %v12601, %v12508
    %v12603 = vadd.f32 %v12602, %v12516
    %v12604 = vadd.f32 %v12603, %v12524
    %v12605 = vadd.f32 %v12604, %v12532
    %v12606 = vadd.f32 %v12605, %v12540
    %v12607 = vadd.f32 %v12606, %v12548
    %v12608 = vadd.f32 %v12607, %v12556
    %v12609 = vadd.f32 %v12608, %v12564
    %v12610 = vadd.f32 %v12609, %v12572
    %v12611 = vadd.f32 %v12610, %v12580
    %v12612 = vsel %vm5233, %v12068, %v12611
    %v12613 = vlaneseq
    %v12614 = vshrl.u32 %v12613, 7
    %v12615 = vsub.s32 2, %v12614
    %v12616 = vrot.slane %v15, %v12615
    %12618 = vrot.lane.b32.xlu0 %v12616, 114
    %v12619 = vpop.permute.xlu0 %12618
    %v12621 = vadd.f32 %v12612, %v12619
    %s12622 = scalar_lea.vmem %s2, 1536
    %v12623 = vld [vmem:[%s12622] sm:$0xff]
    %v12624 = vld [vmem:[%s12622 + $0x8] sm:$0x1]
    %v12625 = vld [vmem:[%s12622 + $0x10] sm:$0xff]
    %v12626 = vld [vmem:[%s12622 + $0x18] sm:$0x1]
    %v12627 = vld [vmem:[%s12622 + $0x20] sm:$0xff]
    %v12628 = vld [vmem:[%s12622 + $0x28] sm:$0x1]
    %v12629 = vld [vmem:[%s12622 + $0x30] sm:$0xff]
    %v12630 = vld [vmem:[%s12622 + $0x38] sm:$0x1]
    %v12631 = vld [vmem:[%s12622 + $0x40] sm:$0xff]
    %v12632 = vld [vmem:[%s12622 + $0x48] sm:$0x1]
    %v12633 = vld [vmem:[%s12622 + $0x50] sm:$0xff]
    %v12634 = vld [vmem:[%s12622 + $0x58] sm:$0x1]
    %v12635 = vld [vmem:[%s12622 + $0x60] sm:$0xff]
    %v12636 = vld [vmem:[%s12622 + $0x68] sm:$0x1]
    %v12637 = vld [vmem:[%s12622 + $0x70] sm:$0xff]
    %v12638 = vld [vmem:[%s12622 + $0x78] sm:$0x1]
    %v12639 = vld [vmem:[%s12622 + $0x80] sm:$0xff]
    %v12640 = vld [vmem:[%s12622 + $0x88] sm:$0x1]
    %v12641 = vld [vmem:[%s12622 + $0x90] sm:$0xff]
    %v12642 = vld [vmem:[%s12622 + $0x98] sm:$0x1]
    %v12643 = vld [vmem:[%s12622 + $0xa0] sm:$0xff]
    %v12644 = vld [vmem:[%s12622 + $0xa8] sm:$0x1]
    %v12645 = vld [vmem:[%s12622 + $0xb0] sm:$0xff]
    %v12646 = vld [vmem:[%s12622 + $0xb8] sm:$0x1]
    %v12647 = vld [vmem:[%s12622 + $0xc0] sm:$0xff]
    %v12648 = vld [vmem:[%s12622 + $0xc8] sm:$0x1]
    %v12649 = vld [vmem:[%s12622 + $0xd0] sm:$0xff]
    %v12650 = vld [vmem:[%s12622 + $0xd8] sm:$0x1]
    %v12651 = vld [vmem:[%s12622 + $0xe0] sm:$0xff]
    %v12652 = vld [vmem:[%s12622 + $0xe8] sm:$0x1]
    %v12653 = vld [vmem:[%s12622 + $0xf0] sm:$0xff]
    %v12654 = vld [vmem:[%s12622 + $0xf8] sm:$0x1]
    %v12655 = vld [vmem:[%s12622 + $0x100] sm:$0xff]
    %v12656 = vld [vmem:[%s12622 + $0x108] sm:$0x1]
    %v12657 = vld [vmem:[%s12622 + $0x110] sm:$0xff]
    %v12658 = vld [vmem:[%s12622 + $0x118] sm:$0x1]
    %v12659 = vld [vmem:[%s12622 + $0x120] sm:$0xff]
    %v12660 = vld [vmem:[%s12622 + $0x128] sm:$0x1]
    %v12661 = vld [vmem:[%s12622 + $0x130] sm:$0xff]
    %v12662 = vld [vmem:[%s12622 + $0x138] sm:$0x1]
    %v12663 = vld [vmem:[%s12622 + $0x140] sm:$0xff]
    %v12664 = vld [vmem:[%s12622 + $0x148] sm:$0x1]
    %v12665 = vld [vmem:[%s12622 + $0x150] sm:$0xff]
    %v12666 = vld [vmem:[%s12622 + $0x158] sm:$0x1]
    %v12667 = vld [vmem:[%s12622 + $0x160] sm:$0xff]
    %v12668 = vld [vmem:[%s12622 + $0x168] sm:$0x1]
    %v12669 = vld [vmem:[%s12622 + $0x170] sm:$0xff]
    %v12670 = vld [vmem:[%s12622 + $0x178] sm:$0x1]
    %v12671 = vld [vmem:[%s12622 + $0x180] sm:$0xff]
    %v12672 = vld [vmem:[%s12622 + $0x188] sm:$0x1]
    %v12673 = vld [vmem:[%s12622 + $0x190] sm:$0xff]
    %v12674 = vld [vmem:[%s12622 + $0x198] sm:$0x1]
    %v12675 = vld [vmem:[%s12622 + $0x1a0] sm:$0xff]
    %v12676 = vld [vmem:[%s12622 + $0x1a8] sm:$0x1]
    %v12677 = vld [vmem:[%s12622 + $0x1b0] sm:$0xff]
    %v12678 = vld [vmem:[%s12622 + $0x1b8] sm:$0x1]
    %v12679 = vld [vmem:[%s12622 + $0x1c0] sm:$0xff]
    %v12680 = vld [vmem:[%s12622 + $0x1c8] sm:$0x1]
    %v12681 = vld [vmem:[%s12622 + $0x1d0] sm:$0xff]
    %v12682 = vld [vmem:[%s12622 + $0x1d8] sm:$0x1]
    %v12683 = vld [vmem:[%s12622 + $0x1e0] sm:$0xff]
    %v12684 = vld [vmem:[%s12622 + $0x1e8] sm:$0x1]
    %v12685 = vld [vmem:[%s12622 + $0x1f0] sm:$0xff]
    %v12686 = vld [vmem:[%s12622 + $0x1f8] sm:$0x1]
    %v12687 = vmul.f32 %v5586, %v12623
    %v12688 = vmul.f32 %v5587, %v12624
    %v12689 = vmul.f32 %v5588, %v12625
    %v12690 = vmul.f32 %v5589, %v12626
    %v12691 = vmul.f32 %v5590, %v12627
    %v12692 = vmul.f32 %v5591, %v12628
    %v12693 = vmul.f32 %v5592, %v12629
    %v12694 = vmul.f32 %v5593, %v12630
    %v12695 = vmul.f32 %v5594, %v12631
    %v12696 = vmul.f32 %v5595, %v12632
    %v12697 = vmul.f32 %v5596, %v12633
    %v12698 = vmul.f32 %v5597, %v12634
    %v12699 = vmul.f32 %v5598, %v12635
    %v12700 = vmul.f32 %v5599, %v12636
    %v12701 = vmul.f32 %v5600, %v12637
    %v12702 = vmul.f32 %v5601, %v12638
    %v12703 = vmul.f32 %v5602, %v12639
    %v12704 = vmul.f32 %v5603, %v12640
    %v12705 = vmul.f32 %v5604, %v12641
    %v12706 = vmul.f32 %v5605, %v12642
    %v12707 = vmul.f32 %v5606, %v12643
    %v12708 = vmul.f32 %v5607, %v12644
    %v12709 = vmul.f32 %v5608, %v12645
    %v12710 = vmul.f32 %v5609, %v12646
    %v12711 = vmul.f32 %v5610, %v12647
    %v12712 = vmul.f32 %v5611, %v12648
    %v12713 = vmul.f32 %v5612, %v12649
    %v12714 = vmul.f32 %v5613, %v12650
    %v12715 = vmul.f32 %v5614, %v12651
    %v12716 = vmul.f32 %v5615, %v12652
    %v12717 = vmul.f32 %v5616, %v12653
    %v12718 = vmul.f32 %v5617, %v12654
    %v12719 = vmul.f32 %v5618, %v12655
    %v12720 = vmul.f32 %v5619, %v12656
    %v12721 = vmul.f32 %v5620, %v12657
    %v12722 = vmul.f32 %v5621, %v12658
    %v12723 = vmul.f32 %v5622, %v12659
    %v12724 = vmul.f32 %v5623, %v12660
    %v12725 = vmul.f32 %v5624, %v12661
    %v12726 = vmul.f32 %v5625, %v12662
    %v12727 = vmul.f32 %v5626, %v12663
    %v12728 = vmul.f32 %v5627, %v12664
    %v12729 = vmul.f32 %v5628, %v12665
    %v12730 = vmul.f32 %v5629, %v12666
    %v12731 = vmul.f32 %v5630, %v12667
    %v12732 = vmul.f32 %v5631, %v12668
    %v12733 = vmul.f32 %v5632, %v12669
    %v12734 = vmul.f32 %v5633, %v12670
    %v12735 = vmul.f32 %v5634, %v12671
    %v12736 = vmul.f32 %v5635, %v12672
    %v12737 = vmul.f32 %v5636, %v12673
    %v12738 = vmul.f32 %v5637, %v12674
    %v12739 = vmul.f32 %v5638, %v12675
    %v12740 = vmul.f32 %v5639, %v12676
    %v12741 = vmul.f32 %v5640, %v12677
    %v12742 = vmul.f32 %v5641, %v12678
    %v12743 = vmul.f32 %v5642, %v12679
    %v12744 = vmul.f32 %v5643, %v12680
    %v12745 = vmul.f32 %v5644, %v12681
    %v12746 = vmul.f32 %v5645, %v12682
    %v12747 = vmul.f32 %v5646, %v12683
    %v12748 = vmul.f32 %v5647, %v12684
    %v12749 = vmul.f32 %v5648, %v12685
    %v12750 = vmul.f32 %v5649, %v12686
    %v12751 = vsel %vm9266, %v12687, 0.0
    %12752 = vadd.xlane.f32.xlu0 %v12751
    %v12753 = vpop.xlane.xlu0 %12752
    %v12754 = vsel %vm9270, %v12688, 0.0
    %12755 = vadd.xlane.f32.xlu0 %v12754
    %v12756 = vpop.xlane.xlu0 %12755
    %v12757 = vsel %vm9266, %v12689, 0.0
    %12758 = vadd.xlane.f32.xlu0 %v12757
    %v12759 = vpop.xlane.xlu0 %12758
    %v12760 = vsel %vm9270, %v12690, 0.0
    %12761 = vadd.xlane.f32.xlu0 %v12760
    %v12762 = vpop.xlane.xlu0 %12761
    %v12763 = vsel %vm9266, %v12691, 0.0
    %12764 = vadd.xlane.f32.xlu0 %v12763
    %v12765 = vpop.xlane.xlu0 %12764
    %v12766 = vsel %vm9270, %v12692, 0.0
    %12767 = vadd.xlane.f32.xlu0 %v12766
    %v12768 = vpop.xlane.xlu0 %12767
    %v12769 = vsel %vm9266, %v12693, 0.0
    %12770 = vadd.xlane.f32.xlu0 %v12769
    %v12771 = vpop.xlane.xlu0 %12770
    %v12772 = vsel %vm9270, %v12694, 0.0
    %12773 = vadd.xlane.f32.xlu0 %v12772
    %v12774 = vpop.xlane.xlu0 %12773
    %v12775 = vsel %vm9266, %v12695, 0.0
    %12776 = vadd.xlane.f32.xlu0 %v12775
    %v12777 = vpop.xlane.xlu0 %12776
    %v12778 = vsel %vm9270, %v12696, 0.0
    %12779 = vadd.xlane.f32.xlu0 %v12778
    %v12780 = vpop.xlane.xlu0 %12779
    %v12781 = vsel %vm9266, %v12697, 0.0
    %12782 = vadd.xlane.f32.xlu0 %v12781
    %v12783 = vpop.xlane.xlu0 %12782
    %v12784 = vsel %vm9270, %v12698, 0.0
    %12785 = vadd.xlane.f32.xlu0 %v12784
    %v12786 = vpop.xlane.xlu0 %12785
    %v12787 = vsel %vm9266, %v12699, 0.0
    %12788 = vadd.xlane.f32.xlu0 %v12787
    %v12789 = vpop.xlane.xlu0 %12788
    %v12790 = vsel %vm9270, %v12700, 0.0
    %12791 = vadd.xlane.f32.xlu0 %v12790
    %v12792 = vpop.xlane.xlu0 %12791
    %v12793 = vsel %vm9266, %v12701, 0.0
    %12794 = vadd.xlane.f32.xlu0 %v12793
    %v12795 = vpop.xlane.xlu0 %12794
    %v12796 = vsel %vm9270, %v12702, 0.0
    %12797 = vadd.xlane.f32.xlu0 %v12796
    %v12798 = vpop.xlane.xlu0 %12797
    %v12799 = vsel %vm9266, %v12703, 0.0
    %12800 = vadd.xlane.f32.xlu0 %v12799
    %v12801 = vpop.xlane.xlu0 %12800
    %v12802 = vsel %vm9270, %v12704, 0.0
    %12803 = vadd.xlane.f32.xlu0 %v12802
    %v12804 = vpop.xlane.xlu0 %12803
    %v12805 = vsel %vm9266, %v12705, 0.0
    %12806 = vadd.xlane.f32.xlu0 %v12805
    %v12807 = vpop.xlane.xlu0 %12806
    %v12808 = vsel %vm9270, %v12706, 0.0
    %12809 = vadd.xlane.f32.xlu0 %v12808
    %v12810 = vpop.xlane.xlu0 %12809
    %v12811 = vsel %vm9266, %v12707, 0.0
    %12812 = vadd.xlane.f32.xlu0 %v12811
    %v12813 = vpop.xlane.xlu0 %12812
    %v12814 = vsel %vm9270, %v12708, 0.0
    %12815 = vadd.xlane.f32.xlu0 %v12814
    %v12816 = vpop.xlane.xlu0 %12815
    %v12817 = vsel %vm9266, %v12709, 0.0
    %12818 = vadd.xlane.f32.xlu0 %v12817
    %v12819 = vpop.xlane.xlu0 %12818
    %v12820 = vsel %vm9270, %v12710, 0.0
    %12821 = vadd.xlane.f32.xlu0 %v12820
    %v12822 = vpop.xlane.xlu0 %12821
    %v12823 = vsel %vm9266, %v12711, 0.0
    %12824 = vadd.xlane.f32.xlu0 %v12823
    %v12825 = vpop.xlane.xlu0 %12824
    %v12826 = vsel %vm9270, %v12712, 0.0
    %12827 = vadd.xlane.f32.xlu0 %v12826
    %v12828 = vpop.xlane.xlu0 %12827
    %v12829 = vsel %vm9266, %v12713, 0.0
    %12830 = vadd.xlane.f32.xlu0 %v12829
    %v12831 = vpop.xlane.xlu0 %12830
    %v12832 = vsel %vm9270, %v12714, 0.0
    %12833 = vadd.xlane.f32.xlu0 %v12832
    %v12834 = vpop.xlane.xlu0 %12833
    %v12835 = vsel %vm9266, %v12715, 0.0
    %12836 = vadd.xlane.f32.xlu0 %v12835
    %v12837 = vpop.xlane.xlu0 %12836
    %v12838 = vsel %vm9270, %v12716, 0.0
    %12839 = vadd.xlane.f32.xlu0 %v12838
    %v12840 = vpop.xlane.xlu0 %12839
    %v12841 = vsel %vm9266, %v12717, 0.0
    %12842 = vadd.xlane.f32.xlu0 %v12841
    %v12843 = vpop.xlane.xlu0 %12842
    %v12844 = vsel %vm9270, %v12718, 0.0
    %12845 = vadd.xlane.f32.xlu0 %v12844
    %v12846 = vpop.xlane.xlu0 %12845
    %v12847 = vsel %vm9266, %v12719, 0.0
    %12848 = vadd.xlane.f32.xlu0 %v12847
    %v12849 = vpop.xlane.xlu0 %12848
    %v12850 = vsel %vm9270, %v12720, 0.0
    %12851 = vadd.xlane.f32.xlu0 %v12850
    %v12852 = vpop.xlane.xlu0 %12851
    %v12853 = vsel %vm9266, %v12721, 0.0
    %12854 = vadd.xlane.f32.xlu0 %v12853
    %v12855 = vpop.xlane.xlu0 %12854
    %v12856 = vsel %vm9270, %v12722, 0.0
    %12857 = vadd.xlane.f32.xlu0 %v12856
    %v12858 = vpop.xlane.xlu0 %12857
    %v12859 = vsel %vm9266, %v12723, 0.0
    %12860 = vadd.xlane.f32.xlu0 %v12859
    %v12861 = vpop.xlane.xlu0 %12860
    %v12862 = vsel %vm9270, %v12724, 0.0
    %12863 = vadd.xlane.f32.xlu0 %v12862
    %v12864 = vpop.xlane.xlu0 %12863
    %v12865 = vsel %vm9266, %v12725, 0.0
    %12866 = vadd.xlane.f32.xlu0 %v12865
    %v12867 = vpop.xlane.xlu0 %12866
    %v12868 = vsel %vm9270, %v12726, 0.0
    %12869 = vadd.xlane.f32.xlu0 %v12868
    %v12870 = vpop.xlane.xlu0 %12869
    %v12871 = vsel %vm9266, %v12727, 0.0
    %12872 = vadd.xlane.f32.xlu0 %v12871
    %v12873 = vpop.xlane.xlu0 %12872
    %v12874 = vsel %vm9270, %v12728, 0.0
    %12875 = vadd.xlane.f32.xlu0 %v12874
    %v12876 = vpop.xlane.xlu0 %12875
    %v12877 = vsel %vm9266, %v12729, 0.0
    %12878 = vadd.xlane.f32.xlu0 %v12877
    %v12879 = vpop.xlane.xlu0 %12878
    %v12880 = vsel %vm9270, %v12730, 0.0
    %12881 = vadd.xlane.f32.xlu0 %v12880
    %v12882 = vpop.xlane.xlu0 %12881
    %v12883 = vsel %vm9266, %v12731, 0.0
    %12884 = vadd.xlane.f32.xlu0 %v12883
    %v12885 = vpop.xlane.xlu0 %12884
    %v12886 = vsel %vm9270, %v12732, 0.0
    %12887 = vadd.xlane.f32.xlu0 %v12886
    %v12888 = vpop.xlane.xlu0 %12887
    %v12889 = vsel %vm9266, %v12733, 0.0
    %12890 = vadd.xlane.f32.xlu0 %v12889
    %v12891 = vpop.xlane.xlu0 %12890
    %v12892 = vsel %vm9270, %v12734, 0.0
    %12893 = vadd.xlane.f32.xlu0 %v12892
    %v12894 = vpop.xlane.xlu0 %12893
    %v12895 = vsel %vm9266, %v12735, 0.0
    %12896 = vadd.xlane.f32.xlu0 %v12895
    %v12897 = vpop.xlane.xlu0 %12896
    %v12898 = vsel %vm9270, %v12736, 0.0
    %12899 = vadd.xlane.f32.xlu0 %v12898
    %v12900 = vpop.xlane.xlu0 %12899
    %v12901 = vsel %vm9266, %v12737, 0.0
    %12902 = vadd.xlane.f32.xlu0 %v12901
    %v12903 = vpop.xlane.xlu0 %12902
    %v12904 = vsel %vm9270, %v12738, 0.0
    %12905 = vadd.xlane.f32.xlu0 %v12904
    %v12906 = vpop.xlane.xlu0 %12905
    %v12907 = vsel %vm9266, %v12739, 0.0
    %12908 = vadd.xlane.f32.xlu0 %v12907
    %v12909 = vpop.xlane.xlu0 %12908
    %v12910 = vsel %vm9270, %v12740, 0.0
    %12911 = vadd.xlane.f32.xlu0 %v12910
    %v12912 = vpop.xlane.xlu0 %12911
    %v12913 = vsel %vm9266, %v12741, 0.0
    %12914 = vadd.xlane.f32.xlu0 %v12913
    %v12915 = vpop.xlane.xlu0 %12914
    %v12916 = vsel %vm9270, %v12742, 0.0
    %12917 = vadd.xlane.f32.xlu0 %v12916
    %v12918 = vpop.xlane.xlu0 %12917
    %v12919 = vsel %vm9266, %v12743, 0.0
    %12920 = vadd.xlane.f32.xlu0 %v12919
    %v12921 = vpop.xlane.xlu0 %12920
    %v12922 = vsel %vm9270, %v12744, 0.0
    %12923 = vadd.xlane.f32.xlu0 %v12922
    %v12924 = vpop.xlane.xlu0 %12923
    %v12925 = vsel %vm9266, %v12745, 0.0
    %12926 = vadd.xlane.f32.xlu0 %v12925
    %v12927 = vpop.xlane.xlu0 %12926
    %v12928 = vsel %vm9270, %v12746, 0.0
    %12929 = vadd.xlane.f32.xlu0 %v12928
    %v12930 = vpop.xlane.xlu0 %12929
    %v12931 = vsel %vm9266, %v12747, 0.0
    %12932 = vadd.xlane.f32.xlu0 %v12931
    %v12933 = vpop.xlane.xlu0 %12932
    %v12934 = vsel %vm9270, %v12748, 0.0
    %12935 = vadd.xlane.f32.xlu0 %v12934
    %v12936 = vpop.xlane.xlu0 %12935
    %v12937 = vsel %vm9266, %v12749, 0.0
    %12938 = vadd.xlane.f32.xlu0 %v12937
    %v12939 = vpop.xlane.xlu0 %12938
    %v12940 = vsel %vm9270, %v12750, 0.0
    %12941 = vadd.xlane.f32.xlu0 %v12940
    %v12942 = vpop.xlane.xlu0 %12941
    %v12943 = vsel %vm5233, %v12756, 0.0
    %v12944 = vadd.f32 %v12753, %v12943
    %v12945 = vrot.slane %v12944, 4
    %v12946 = vadd.f32 %v12944, %v12945
    %v12947 = vrot.slane %v12946, 2
    %v12948 = vadd.f32 %v12946, %v12947
    %v12949 = vrot.slane %v12948, 1
    %v12950 = vadd.f32 %v12948, %v12949
    %v12951 = vsel %vm5233, %v12762, 0.0
    %v12952 = vadd.f32 %v12759, %v12951
    %v12953 = vrot.slane %v12952, 4
    %v12954 = vadd.f32 %v12952, %v12953
    %v12955 = vrot.slane %v12954, 2
    %v12956 = vadd.f32 %v12954, %v12955
    %v12957 = vrot.slane %v12956, 1
    %v12958 = vadd.f32 %v12956, %v12957
    %v12959 = vsel %vm5233, %v12768, 0.0
    %v12960 = vadd.f32 %v12765, %v12959
    %v12961 = vrot.slane %v12960, 4
    %v12962 = vadd.f32 %v12960, %v12961
    %v12963 = vrot.slane %v12962, 2
    %v12964 = vadd.f32 %v12962, %v12963
    %v12965 = vrot.slane %v12964, 1
    %v12966 = vadd.f32 %v12964, %v12965
    %v12967 = vsel %vm5233, %v12774, 0.0
    %v12968 = vadd.f32 %v12771, %v12967
    %v12969 = vrot.slane %v12968, 4
    %v12970 = vadd.f32 %v12968, %v12969
    %v12971 = vrot.slane %v12970, 2
    %v12972 = vadd.f32 %v12970, %v12971
    %v12973 = vrot.slane %v12972, 1
    %v12974 = vadd.f32 %v12972, %v12973
    %v12975 = vsel %vm5233, %v12780, 0.0
    %v12976 = vadd.f32 %v12777, %v12975
    %v12977 = vrot.slane %v12976, 4
    %v12978 = vadd.f32 %v12976, %v12977
    %v12979 = vrot.slane %v12978, 2
    %v12980 = vadd.f32 %v12978, %v12979
    %v12981 = vrot.slane %v12980, 1
    %v12982 = vadd.f32 %v12980, %v12981
    %v12983 = vsel %vm5233, %v12786, 0.0
    %v12984 = vadd.f32 %v12783, %v12983
    %v12985 = vrot.slane %v12984, 4
    %v12986 = vadd.f32 %v12984, %v12985
    %v12987 = vrot.slane %v12986, 2
    %v12988 = vadd.f32 %v12986, %v12987
    %v12989 = vrot.slane %v12988, 1
    %v12990 = vadd.f32 %v12988, %v12989
    %v12991 = vsel %vm5233, %v12792, 0.0
    %v12992 = vadd.f32 %v12789, %v12991
    %v12993 = vrot.slane %v12992, 4
    %v12994 = vadd.f32 %v12992, %v12993
    %v12995 = vrot.slane %v12994, 2
    %v12996 = vadd.f32 %v12994, %v12995
    %v12997 = vrot.slane %v12996, 1
    %v12998 = vadd.f32 %v12996, %v12997
    %v12999 = vsel %vm5233, %v12798, 0.0
    %v13000 = vadd.f32 %v12795, %v12999
    %v13001 = vrot.slane %v13000, 4
    %v13002 = vadd.f32 %v13000, %v13001
    %v13003 = vrot.slane %v13002, 2
    %v13004 = vadd.f32 %v13002, %v13003
    %v13005 = vrot.slane %v13004, 1
    %v13006 = vadd.f32 %v13004, %v13005
    %v13007 = vsel %vm5233, %v12804, 0.0
    %v13008 = vadd.f32 %v12801, %v13007
    %v13009 = vrot.slane %v13008, 4
    %v13010 = vadd.f32 %v13008, %v13009
    %v13011 = vrot.slane %v13010, 2
    %v13012 = vadd.f32 %v13010, %v13011
    %v13013 = vrot.slane %v13012, 1
    %v13014 = vadd.f32 %v13012, %v13013
    %v13015 = vsel %vm5233, %v12810, 0.0
    %v13016 = vadd.f32 %v12807, %v13015
    %v13017 = vrot.slane %v13016, 4
    %v13018 = vadd.f32 %v13016, %v13017
    %v13019 = vrot.slane %v13018, 2
    %v13020 = vadd.f32 %v13018, %v13019
    %v13021 = vrot.slane %v13020, 1
    %v13022 = vadd.f32 %v13020, %v13021
    %v13023 = vsel %vm5233, %v12816, 0.0
    %v13024 = vadd.f32 %v12813, %v13023
    %v13025 = vrot.slane %v13024, 4
    %v13026 = vadd.f32 %v13024, %v13025
    %v13027 = vrot.slane %v13026, 2
    %v13028 = vadd.f32 %v13026, %v13027
    %v13029 = vrot.slane %v13028, 1
    %v13030 = vadd.f32 %v13028, %v13029
    %v13031 = vsel %vm5233, %v12822, 0.0
    %v13032 = vadd.f32 %v12819, %v13031
    %v13033 = vrot.slane %v13032, 4
    %v13034 = vadd.f32 %v13032, %v13033
    %v13035 = vrot.slane %v13034, 2
    %v13036 = vadd.f32 %v13034, %v13035
    %v13037 = vrot.slane %v13036, 1
    %v13038 = vadd.f32 %v13036, %v13037
    %v13039 = vsel %vm5233, %v12828, 0.0
    %v13040 = vadd.f32 %v12825, %v13039
    %v13041 = vrot.slane %v13040, 4
    %v13042 = vadd.f32 %v13040, %v13041
    %v13043 = vrot.slane %v13042, 2
    %v13044 = vadd.f32 %v13042, %v13043
    %v13045 = vrot.slane %v13044, 1
    %v13046 = vadd.f32 %v13044, %v13045
    %v13047 = vsel %vm5233, %v12834, 0.0
    %v13048 = vadd.f32 %v12831, %v13047
    %v13049 = vrot.slane %v13048, 4
    %v13050 = vadd.f32 %v13048, %v13049
    %v13051 = vrot.slane %v13050, 2
    %v13052 = vadd.f32 %v13050, %v13051
    %v13053 = vrot.slane %v13052, 1
    %v13054 = vadd.f32 %v13052, %v13053
    %v13055 = vsel %vm5233, %v12840, 0.0
    %v13056 = vadd.f32 %v12837, %v13055
    %v13057 = vrot.slane %v13056, 4
    %v13058 = vadd.f32 %v13056, %v13057
    %v13059 = vrot.slane %v13058, 2
    %v13060 = vadd.f32 %v13058, %v13059
    %v13061 = vrot.slane %v13060, 1
    %v13062 = vadd.f32 %v13060, %v13061
    %v13063 = vsel %vm5233, %v12846, 0.0
    %v13064 = vadd.f32 %v12843, %v13063
    %v13065 = vrot.slane %v13064, 4
    %v13066 = vadd.f32 %v13064, %v13065
    %v13067 = vrot.slane %v13066, 2
    %v13068 = vadd.f32 %v13066, %v13067
    %v13069 = vrot.slane %v13068, 1
    %v13070 = vadd.f32 %v13068, %v13069
    %v13071 = vsel %vm5233, %v12852, 0.0
    %v13072 = vadd.f32 %v12849, %v13071
    %v13073 = vrot.slane %v13072, 4
    %v13074 = vadd.f32 %v13072, %v13073
    %v13075 = vrot.slane %v13074, 2
    %v13076 = vadd.f32 %v13074, %v13075
    %v13077 = vrot.slane %v13076, 1
    %v13078 = vadd.f32 %v13076, %v13077
    %v13079 = vsel %vm5233, %v12858, 0.0
    %v13080 = vadd.f32 %v12855, %v13079
    %v13081 = vrot.slane %v13080, 4
    %v13082 = vadd.f32 %v13080, %v13081
    %v13083 = vrot.slane %v13082, 2
    %v13084 = vadd.f32 %v13082, %v13083
    %v13085 = vrot.slane %v13084, 1
    %v13086 = vadd.f32 %v13084, %v13085
    %v13087 = vsel %vm5233, %v12864, 0.0
    %v13088 = vadd.f32 %v12861, %v13087
    %v13089 = vrot.slane %v13088, 4
    %v13090 = vadd.f32 %v13088, %v13089
    %v13091 = vrot.slane %v13090, 2
    %v13092 = vadd.f32 %v13090, %v13091
    %v13093 = vrot.slane %v13092, 1
    %v13094 = vadd.f32 %v13092, %v13093
    %v13095 = vsel %vm5233, %v12870, 0.0
    %v13096 = vadd.f32 %v12867, %v13095
    %v13097 = vrot.slane %v13096, 4
    %v13098 = vadd.f32 %v13096, %v13097
    %v13099 = vrot.slane %v13098, 2
    %v13100 = vadd.f32 %v13098, %v13099
    %v13101 = vrot.slane %v13100, 1
    %v13102 = vadd.f32 %v13100, %v13101
    %v13103 = vsel %vm5233, %v12876, 0.0
    %v13104 = vadd.f32 %v12873, %v13103
    %v13105 = vrot.slane %v13104, 4
    %v13106 = vadd.f32 %v13104, %v13105
    %v13107 = vrot.slane %v13106, 2
    %v13108 = vadd.f32 %v13106, %v13107
    %v13109 = vrot.slane %v13108, 1
    %v13110 = vadd.f32 %v13108, %v13109
    %v13111 = vsel %vm5233, %v12882, 0.0
    %v13112 = vadd.f32 %v12879, %v13111
    %v13113 = vrot.slane %v13112, 4
    %v13114 = vadd.f32 %v13112, %v13113
    %v13115 = vrot.slane %v13114, 2
    %v13116 = vadd.f32 %v13114, %v13115
    %v13117 = vrot.slane %v13116, 1
    %v13118 = vadd.f32 %v13116, %v13117
    %v13119 = vsel %vm5233, %v12888, 0.0
    %v13120 = vadd.f32 %v12885, %v13119
    %v13121 = vrot.slane %v13120, 4
    %v13122 = vadd.f32 %v13120, %v13121
    %v13123 = vrot.slane %v13122, 2
    %v13124 = vadd.f32 %v13122, %v13123
    %v13125 = vrot.slane %v13124, 1
    %v13126 = vadd.f32 %v13124, %v13125
    %v13127 = vsel %vm5233, %v12894, 0.0
    %v13128 = vadd.f32 %v12891, %v13127
    %v13129 = vrot.slane %v13128, 4
    %v13130 = vadd.f32 %v13128, %v13129
    %v13131 = vrot.slane %v13130, 2
    %v13132 = vadd.f32 %v13130, %v13131
    %v13133 = vrot.slane %v13132, 1
    %v13134 = vadd.f32 %v13132, %v13133
    %v13135 = vsel %vm5233, %v12900, 0.0
    %v13136 = vadd.f32 %v12897, %v13135
    %v13137 = vrot.slane %v13136, 4
    %v13138 = vadd.f32 %v13136, %v13137
    %v13139 = vrot.slane %v13138, 2
    %v13140 = vadd.f32 %v13138, %v13139
    %v13141 = vrot.slane %v13140, 1
    %v13142 = vadd.f32 %v13140, %v13141
    %v13143 = vsel %vm5233, %v12906, 0.0
    %v13144 = vadd.f32 %v12903, %v13143
    %v13145 = vrot.slane %v13144, 4
    %v13146 = vadd.f32 %v13144, %v13145
    %v13147 = vrot.slane %v13146, 2
    %v13148 = vadd.f32 %v13146, %v13147
    %v13149 = vrot.slane %v13148, 1
    %v13150 = vadd.f32 %v13148, %v13149
    %v13151 = vsel %vm5233, %v12912, 0.0
    %v13152 = vadd.f32 %v12909, %v13151
    %v13153 = vrot.slane %v13152, 4
    %v13154 = vadd.f32 %v13152, %v13153
    %v13155 = vrot.slane %v13154, 2
    %v13156 = vadd.f32 %v13154, %v13155
    %v13157 = vrot.slane %v13156, 1
    %v13158 = vadd.f32 %v13156, %v13157
    %v13159 = vsel %vm5233, %v12918, 0.0
    %v13160 = vadd.f32 %v12915, %v13159
    %v13161 = vrot.slane %v13160, 4
    %v13162 = vadd.f32 %v13160, %v13161
    %v13163 = vrot.slane %v13162, 2
    %v13164 = vadd.f32 %v13162, %v13163
    %v13165 = vrot.slane %v13164, 1
    %v13166 = vadd.f32 %v13164, %v13165
    %v13167 = vsel %vm5233, %v12924, 0.0
    %v13168 = vadd.f32 %v12921, %v13167
    %v13169 = vrot.slane %v13168, 4
    %v13170 = vadd.f32 %v13168, %v13169
    %v13171 = vrot.slane %v13170, 2
    %v13172 = vadd.f32 %v13170, %v13171
    %v13173 = vrot.slane %v13172, 1
    %v13174 = vadd.f32 %v13172, %v13173
    %v13175 = vsel %vm5233, %v12930, 0.0
    %v13176 = vadd.f32 %v12927, %v13175
    %v13177 = vrot.slane %v13176, 4
    %v13178 = vadd.f32 %v13176, %v13177
    %v13179 = vrot.slane %v13178, 2
    %v13180 = vadd.f32 %v13178, %v13179
    %v13181 = vrot.slane %v13180, 1
    %v13182 = vadd.f32 %v13180, %v13181
    %v13183 = vsel %vm5233, %v12936, 0.0
    %v13184 = vadd.f32 %v12933, %v13183
    %v13185 = vrot.slane %v13184, 4
    %v13186 = vadd.f32 %v13184, %v13185
    %v13187 = vrot.slane %v13186, 2
    %v13188 = vadd.f32 %v13186, %v13187
    %v13189 = vrot.slane %v13188, 1
    %v13190 = vadd.f32 %v13188, %v13189
    %v13191 = vsel %vm5233, %v12942, 0.0
    %v13192 = vadd.f32 %v12939, %v13191
    %v13193 = vrot.slane %v13192, 4
    %v13194 = vadd.f32 %v13192, %v13193
    %v13195 = vrot.slane %v13194, 2
    %v13196 = vadd.f32 %v13194, %v13195
    %v13197 = vrot.slane %v13196, 1
    %v13198 = vadd.f32 %v13196, %v13197
    %v13199 = vadd.f32 %v12950, %v12958
    %v13200 = vadd.f32 %v13199, %v12966
    %v13201 = vadd.f32 %v13200, %v12974
    %v13202 = vadd.f32 %v13201, %v12982
    %v13203 = vadd.f32 %v13202, %v12990
    %v13204 = vadd.f32 %v13203, %v12998
    %v13205 = vadd.f32 %v13204, %v13006
    %v13206 = vadd.f32 %v13205, %v13014
    %v13207 = vadd.f32 %v13206, %v13022
    %v13208 = vadd.f32 %v13207, %v13030
    %v13209 = vadd.f32 %v13208, %v13038
    %v13210 = vadd.f32 %v13209, %v13046
    %v13211 = vadd.f32 %v13210, %v13054
    %v13212 = vadd.f32 %v13211, %v13062
    %v13213 = vadd.f32 %v13212, %v13070
    %v13214 = vadd.f32 %v13213, %v13078
    %v13215 = vadd.f32 %v13214, %v13086
    %v13216 = vadd.f32 %v13215, %v13094
    %v13217 = vadd.f32 %v13216, %v13102
    %v13218 = vadd.f32 %v13217, %v13110
    %v13219 = vadd.f32 %v13218, %v13118
    %v13220 = vadd.f32 %v13219, %v13126
    %v13221 = vadd.f32 %v13220, %v13134
    %v13222 = vadd.f32 %v13221, %v13142
    %v13223 = vadd.f32 %v13222, %v13150
    %v13224 = vadd.f32 %v13223, %v13158
    %v13225 = vadd.f32 %v13224, %v13166
    %v13226 = vadd.f32 %v13225, %v13174
    %v13227 = vadd.f32 %v13226, %v13182
    %v13228 = vadd.f32 %v13227, %v13190
    %v13229 = vadd.f32 %v13228, %v13198
    %v13230 = vmul.f32 %v9074, %v12623
    %v13231 = vmul.f32 %v9075, %v12624
    %v13232 = vmul.f32 %v9076, %v12625
    %v13233 = vmul.f32 %v9077, %v12626
    %v13234 = vmul.f32 %v9078, %v12627
    %v13235 = vmul.f32 %v9079, %v12628
    %v13236 = vmul.f32 %v9080, %v12629
    %v13237 = vmul.f32 %v9081, %v12630
    %v13238 = vmul.f32 %v9082, %v12631
    %v13239 = vmul.f32 %v9083, %v12632
    %v13240 = vmul.f32 %v9084, %v12633
    %v13241 = vmul.f32 %v9085, %v12634
    %v13242 = vmul.f32 %v9086, %v12635
    %v13243 = vmul.f32 %v9087, %v12636
    %v13244 = vmul.f32 %v9088, %v12637
    %v13245 = vmul.f32 %v9089, %v12638
    %v13246 = vmul.f32 %v9090, %v12639
    %v13247 = vmul.f32 %v9091, %v12640
    %v13248 = vmul.f32 %v9092, %v12641
    %v13249 = vmul.f32 %v9093, %v12642
    %v13250 = vmul.f32 %v9094, %v12643
    %v13251 = vmul.f32 %v9095, %v12644
    %v13252 = vmul.f32 %v9096, %v12645
    %v13253 = vmul.f32 %v9097, %v12646
    %v13254 = vmul.f32 %v9098, %v12647
    %v13255 = vmul.f32 %v9099, %v12648
    %v13256 = vmul.f32 %v9100, %v12649
    %v13257 = vmul.f32 %v9101, %v12650
    %v13258 = vmul.f32 %v9102, %v12651
    %v13259 = vmul.f32 %v9103, %v12652
    %v13260 = vmul.f32 %v9104, %v12653
    %v13261 = vmul.f32 %v9105, %v12654
    %v13262 = vmul.f32 %v9106, %v12655
    %v13263 = vmul.f32 %v9107, %v12656
    %v13264 = vmul.f32 %v9108, %v12657
    %v13265 = vmul.f32 %v9109, %v12658
    %v13266 = vmul.f32 %v9110, %v12659
    %v13267 = vmul.f32 %v9111, %v12660
    %v13268 = vmul.f32 %v9112, %v12661
    %v13269 = vmul.f32 %v9113, %v12662
    %v13270 = vmul.f32 %v9114, %v12663
    %v13271 = vmul.f32 %v9115, %v12664
    %v13272 = vmul.f32 %v9116, %v12665
    %v13273 = vmul.f32 %v9117, %v12666
    %v13274 = vmul.f32 %v9118, %v12667
    %v13275 = vmul.f32 %v9119, %v12668
    %v13276 = vmul.f32 %v9120, %v12669
    %v13277 = vmul.f32 %v9121, %v12670
    %v13278 = vmul.f32 %v9122, %v12671
    %v13279 = vmul.f32 %v9123, %v12672
    %v13280 = vmul.f32 %v9124, %v12673
    %v13281 = vmul.f32 %v9125, %v12674
    %v13282 = vmul.f32 %v9126, %v12675
    %v13283 = vmul.f32 %v9127, %v12676
    %v13284 = vmul.f32 %v9128, %v12677
    %v13285 = vmul.f32 %v9129, %v12678
    %v13286 = vmul.f32 %v9130, %v12679
    %v13287 = vmul.f32 %v9131, %v12680
    %v13288 = vmul.f32 %v9132, %v12681
    %v13289 = vmul.f32 %v9133, %v12682
    %v13290 = vmul.f32 %v9134, %v12683
    %v13291 = vmul.f32 %v9135, %v12684
    %v13292 = vmul.f32 %v9136, %v12685
    %v13293 = vmul.f32 %v9137, %v12686
    %v13294 = vsel %vm9266, %v13230, 0.0
    %13295 = vadd.xlane.f32.xlu0 %v13294
    %v13296 = vpop.xlane.xlu0 %13295
    %v13297 = vsel %vm9270, %v13231, 0.0
    %13298 = vadd.xlane.f32.xlu0 %v13297
    %v13299 = vpop.xlane.xlu0 %13298
    %v13300 = vsel %vm9266, %v13232, 0.0
    %13301 = vadd.xlane.f32.xlu0 %v13300
    %v13302 = vpop.xlane.xlu0 %13301
    %v13303 = vsel %vm9270, %v13233, 0.0
    %13304 = vadd.xlane.f32.xlu0 %v13303
    %v13305 = vpop.xlane.xlu0 %13304
    %v13306 = vsel %vm9266, %v13234, 0.0
    %13307 = vadd.xlane.f32.xlu0 %v13306
    %v13308 = vpop.xlane.xlu0 %13307
    %v13309 = vsel %vm9270, %v13235, 0.0
    %13310 = vadd.xlane.f32.xlu0 %v13309
    %v13311 = vpop.xlane.xlu0 %13310
    %v13312 = vsel %vm9266, %v13236, 0.0
    %13313 = vadd.xlane.f32.xlu0 %v13312
    %v13314 = vpop.xlane.xlu0 %13313
    %v13315 = vsel %vm9270, %v13237, 0.0
    %13316 = vadd.xlane.f32.xlu0 %v13315
    %v13317 = vpop.xlane.xlu0 %13316
    %v13318 = vsel %vm9266, %v13238, 0.0
    %13319 = vadd.xlane.f32.xlu0 %v13318
    %v13320 = vpop.xlane.xlu0 %13319
    %v13321 = vsel %vm9270, %v13239, 0.0
    %13322 = vadd.xlane.f32.xlu0 %v13321
    %v13323 = vpop.xlane.xlu0 %13322
    %v13324 = vsel %vm9266, %v13240, 0.0
    %13325 = vadd.xlane.f32.xlu0 %v13324
    %v13326 = vpop.xlane.xlu0 %13325
    %v13327 = vsel %vm9270, %v13241, 0.0
    %13328 = vadd.xlane.f32.xlu0 %v13327
    %v13329 = vpop.xlane.xlu0 %13328
    %v13330 = vsel %vm9266, %v13242, 0.0
    %13331 = vadd.xlane.f32.xlu0 %v13330
    %v13332 = vpop.xlane.xlu0 %13331
    %v13333 = vsel %vm9270, %v13243, 0.0
    %13334 = vadd.xlane.f32.xlu0 %v13333
    %v13335 = vpop.xlane.xlu0 %13334
    %v13336 = vsel %vm9266, %v13244, 0.0
    %13337 = vadd.xlane.f32.xlu0 %v13336
    %v13338 = vpop.xlane.xlu0 %13337
    %v13339 = vsel %vm9270, %v13245, 0.0
    %13340 = vadd.xlane.f32.xlu0 %v13339
    %v13341 = vpop.xlane.xlu0 %13340
    %v13342 = vsel %vm9266, %v13246, 0.0
    %13343 = vadd.xlane.f32.xlu0 %v13342
    %v13344 = vpop.xlane.xlu0 %13343
    %v13345 = vsel %vm9270, %v13247, 0.0
    %13346 = vadd.xlane.f32.xlu0 %v13345
    %v13347 = vpop.xlane.xlu0 %13346
    %v13348 = vsel %vm9266, %v13248, 0.0
    %13349 = vadd.xlane.f32.xlu0 %v13348
    %v13350 = vpop.xlane.xlu0 %13349
    %v13351 = vsel %vm9270, %v13249, 0.0
    %13352 = vadd.xlane.f32.xlu0 %v13351
    %v13353 = vpop.xlane.xlu0 %13352
    %v13354 = vsel %vm9266, %v13250, 0.0
    %13355 = vadd.xlane.f32.xlu0 %v13354
    %v13356 = vpop.xlane.xlu0 %13355
    %v13357 = vsel %vm9270, %v13251, 0.0
    %13358 = vadd.xlane.f32.xlu0 %v13357
    %v13359 = vpop.xlane.xlu0 %13358
    %v13360 = vsel %vm9266, %v13252, 0.0
    %13361 = vadd.xlane.f32.xlu0 %v13360
    %v13362 = vpop.xlane.xlu0 %13361
    %v13363 = vsel %vm9270, %v13253, 0.0
    %13364 = vadd.xlane.f32.xlu0 %v13363
    %v13365 = vpop.xlane.xlu0 %13364
    %v13366 = vsel %vm9266, %v13254, 0.0
    %13367 = vadd.xlane.f32.xlu0 %v13366
    %v13368 = vpop.xlane.xlu0 %13367
    %v13369 = vsel %vm9270, %v13255, 0.0
    %13370 = vadd.xlane.f32.xlu0 %v13369
    %v13371 = vpop.xlane.xlu0 %13370
    %v13372 = vsel %vm9266, %v13256, 0.0
    %13373 = vadd.xlane.f32.xlu0 %v13372
    %v13374 = vpop.xlane.xlu0 %13373
    %v13375 = vsel %vm9270, %v13257, 0.0
    %13376 = vadd.xlane.f32.xlu0 %v13375
    %v13377 = vpop.xlane.xlu0 %13376
    %v13378 = vsel %vm9266, %v13258, 0.0
    %13379 = vadd.xlane.f32.xlu0 %v13378
    %v13380 = vpop.xlane.xlu0 %13379
    %v13381 = vsel %vm9270, %v13259, 0.0
    %13382 = vadd.xlane.f32.xlu0 %v13381
    %v13383 = vpop.xlane.xlu0 %13382
    %v13384 = vsel %vm9266, %v13260, 0.0
    %13385 = vadd.xlane.f32.xlu0 %v13384
    %v13386 = vpop.xlane.xlu0 %13385
    %v13387 = vsel %vm9270, %v13261, 0.0
    %13388 = vadd.xlane.f32.xlu0 %v13387
    %v13389 = vpop.xlane.xlu0 %13388
    %v13390 = vsel %vm9266, %v13262, 0.0
    %13391 = vadd.xlane.f32.xlu0 %v13390
    %v13392 = vpop.xlane.xlu0 %13391
    %v13393 = vsel %vm9270, %v13263, 0.0
    %13394 = vadd.xlane.f32.xlu0 %v13393
    %v13395 = vpop.xlane.xlu0 %13394
    %v13396 = vsel %vm9266, %v13264, 0.0
    %13397 = vadd.xlane.f32.xlu0 %v13396
    %v13398 = vpop.xlane.xlu0 %13397
    %v13399 = vsel %vm9270, %v13265, 0.0
    %13400 = vadd.xlane.f32.xlu0 %v13399
    %v13401 = vpop.xlane.xlu0 %13400
    %v13402 = vsel %vm9266, %v13266, 0.0
    %13403 = vadd.xlane.f32.xlu0 %v13402
    %v13404 = vpop.xlane.xlu0 %13403
    %v13405 = vsel %vm9270, %v13267, 0.0
    %13406 = vadd.xlane.f32.xlu0 %v13405
    %v13407 = vpop.xlane.xlu0 %13406
    %v13408 = vsel %vm9266, %v13268, 0.0
    %13409 = vadd.xlane.f32.xlu0 %v13408
    %v13410 = vpop.xlane.xlu0 %13409
    %v13411 = vsel %vm9270, %v13269, 0.0
    %13412 = vadd.xlane.f32.xlu0 %v13411
    %v13413 = vpop.xlane.xlu0 %13412
    %v13414 = vsel %vm9266, %v13270, 0.0
    %13415 = vadd.xlane.f32.xlu0 %v13414
    %v13416 = vpop.xlane.xlu0 %13415
    %v13417 = vsel %vm9270, %v13271, 0.0
    %13418 = vadd.xlane.f32.xlu0 %v13417
    %v13419 = vpop.xlane.xlu0 %13418
    %v13420 = vsel %vm9266, %v13272, 0.0
    %13421 = vadd.xlane.f32.xlu0 %v13420
    %v13422 = vpop.xlane.xlu0 %13421
    %v13423 = vsel %vm9270, %v13273, 0.0
    %13424 = vadd.xlane.f32.xlu0 %v13423
    %v13425 = vpop.xlane.xlu0 %13424
    %v13426 = vsel %vm9266, %v13274, 0.0
    %13427 = vadd.xlane.f32.xlu0 %v13426
    %v13428 = vpop.xlane.xlu0 %13427
    %v13429 = vsel %vm9270, %v13275, 0.0
    %13430 = vadd.xlane.f32.xlu0 %v13429
    %v13431 = vpop.xlane.xlu0 %13430
    %v13432 = vsel %vm9266, %v13276, 0.0
    %13433 = vadd.xlane.f32.xlu0 %v13432
    %v13434 = vpop.xlane.xlu0 %13433
    %v13435 = vsel %vm9270, %v13277, 0.0
    %13436 = vadd.xlane.f32.xlu0 %v13435
    %v13437 = vpop.xlane.xlu0 %13436
    %v13438 = vsel %vm9266, %v13278, 0.0
    %13439 = vadd.xlane.f32.xlu0 %v13438
    %v13440 = vpop.xlane.xlu0 %13439
    %v13441 = vsel %vm9270, %v13279, 0.0
    %13442 = vadd.xlane.f32.xlu0 %v13441
    %v13443 = vpop.xlane.xlu0 %13442
    %v13444 = vsel %vm9266, %v13280, 0.0
    %13445 = vadd.xlane.f32.xlu0 %v13444
    %v13446 = vpop.xlane.xlu0 %13445
    %v13447 = vsel %vm9270, %v13281, 0.0
    %13448 = vadd.xlane.f32.xlu0 %v13447
    %v13449 = vpop.xlane.xlu0 %13448
    %v13450 = vsel %vm9266, %v13282, 0.0
    %13451 = vadd.xlane.f32.xlu0 %v13450
    %v13452 = vpop.xlane.xlu0 %13451
    %v13453 = vsel %vm9270, %v13283, 0.0
    %13454 = vadd.xlane.f32.xlu0 %v13453
    %v13455 = vpop.xlane.xlu0 %13454
    %v13456 = vsel %vm9266, %v13284, 0.0
    %13457 = vadd.xlane.f32.xlu0 %v13456
    %v13458 = vpop.xlane.xlu0 %13457
    %v13459 = vsel %vm9270, %v13285, 0.0
    %13460 = vadd.xlane.f32.xlu0 %v13459
    %v13461 = vpop.xlane.xlu0 %13460
    %v13462 = vsel %vm9266, %v13286, 0.0
    %13463 = vadd.xlane.f32.xlu0 %v13462
    %v13464 = vpop.xlane.xlu0 %13463
    %v13465 = vsel %vm9270, %v13287, 0.0
    %13466 = vadd.xlane.f32.xlu0 %v13465
    %v13467 = vpop.xlane.xlu0 %13466
    %v13468 = vsel %vm9266, %v13288, 0.0
    %13469 = vadd.xlane.f32.xlu0 %v13468
    %v13470 = vpop.xlane.xlu0 %13469
    %v13471 = vsel %vm9270, %v13289, 0.0
    %13472 = vadd.xlane.f32.xlu0 %v13471
    %v13473 = vpop.xlane.xlu0 %13472
    %v13474 = vsel %vm9266, %v13290, 0.0
    %13475 = vadd.xlane.f32.xlu0 %v13474
    %v13476 = vpop.xlane.xlu0 %13475
    %v13477 = vsel %vm9270, %v13291, 0.0
    %13478 = vadd.xlane.f32.xlu0 %v13477
    %v13479 = vpop.xlane.xlu0 %13478
    %v13480 = vsel %vm9266, %v13292, 0.0
    %13481 = vadd.xlane.f32.xlu0 %v13480
    %v13482 = vpop.xlane.xlu0 %13481
    %v13483 = vsel %vm9270, %v13293, 0.0
    %13484 = vadd.xlane.f32.xlu0 %v13483
    %v13485 = vpop.xlane.xlu0 %13484
    %v13486 = vsel %vm5233, %v13299, 0.0
    %v13487 = vadd.f32 %v13296, %v13486
    %v13488 = vrot.slane %v13487, 4
    %v13489 = vadd.f32 %v13487, %v13488
    %v13490 = vrot.slane %v13489, 2
    %v13491 = vadd.f32 %v13489, %v13490
    %v13492 = vrot.slane %v13491, 1
    %v13493 = vadd.f32 %v13491, %v13492
    %v13494 = vsel %vm5233, %v13305, 0.0
    %v13495 = vadd.f32 %v13302, %v13494
    %v13496 = vrot.slane %v13495, 4
    %v13497 = vadd.f32 %v13495, %v13496
    %v13498 = vrot.slane %v13497, 2
    %v13499 = vadd.f32 %v13497, %v13498
    %v13500 = vrot.slane %v13499, 1
    %v13501 = vadd.f32 %v13499, %v13500
    %v13502 = vsel %vm5233, %v13311, 0.0
    %v13503 = vadd.f32 %v13308, %v13502
    %v13504 = vrot.slane %v13503, 4
    %v13505 = vadd.f32 %v13503, %v13504
    %v13506 = vrot.slane %v13505, 2
    %v13507 = vadd.f32 %v13505, %v13506
    %v13508 = vrot.slane %v13507, 1
    %v13509 = vadd.f32 %v13507, %v13508
    %v13510 = vsel %vm5233, %v13317, 0.0
    %v13511 = vadd.f32 %v13314, %v13510
    %v13512 = vrot.slane %v13511, 4
    %v13513 = vadd.f32 %v13511, %v13512
    %v13514 = vrot.slane %v13513, 2
    %v13515 = vadd.f32 %v13513, %v13514
    %v13516 = vrot.slane %v13515, 1
    %v13517 = vadd.f32 %v13515, %v13516
    %v13518 = vsel %vm5233, %v13323, 0.0
    %v13519 = vadd.f32 %v13320, %v13518
    %v13520 = vrot.slane %v13519, 4
    %v13521 = vadd.f32 %v13519, %v13520
    %v13522 = vrot.slane %v13521, 2
    %v13523 = vadd.f32 %v13521, %v13522
    %v13524 = vrot.slane %v13523, 1
    %v13525 = vadd.f32 %v13523, %v13524
    %v13526 = vsel %vm5233, %v13329, 0.0
    %v13527 = vadd.f32 %v13326, %v13526
    %v13528 = vrot.slane %v13527, 4
    %v13529 = vadd.f32 %v13527, %v13528
    %v13530 = vrot.slane %v13529, 2
    %v13531 = vadd.f32 %v13529, %v13530
    %v13532 = vrot.slane %v13531, 1
    %v13533 = vadd.f32 %v13531, %v13532
    %v13534 = vsel %vm5233, %v13335, 0.0
    %v13535 = vadd.f32 %v13332, %v13534
    %v13536 = vrot.slane %v13535, 4
    %v13537 = vadd.f32 %v13535, %v13536
    %v13538 = vrot.slane %v13537, 2
    %v13539 = vadd.f32 %v13537, %v13538
    %v13540 = vrot.slane %v13539, 1
    %v13541 = vadd.f32 %v13539, %v13540
    %v13542 = vsel %vm5233, %v13341, 0.0
    %v13543 = vadd.f32 %v13338, %v13542
    %v13544 = vrot.slane %v13543, 4
    %v13545 = vadd.f32 %v13543, %v13544
    %v13546 = vrot.slane %v13545, 2
    %v13547 = vadd.f32 %v13545, %v13546
    %v13548 = vrot.slane %v13547, 1
    %v13549 = vadd.f32 %v13547, %v13548
    %v13550 = vsel %vm5233, %v13347, 0.0
    %v13551 = vadd.f32 %v13344, %v13550
    %v13552 = vrot.slane %v13551, 4
    %v13553 = vadd.f32 %v13551, %v13552
    %v13554 = vrot.slane %v13553, 2
    %v13555 = vadd.f32 %v13553, %v13554
    %v13556 = vrot.slane %v13555, 1
    %v13557 = vadd.f32 %v13555, %v13556
    %v13558 = vsel %vm5233, %v13353, 0.0
    %v13559 = vadd.f32 %v13350, %v13558
    %v13560 = vrot.slane %v13559, 4
    %v13561 = vadd.f32 %v13559, %v13560
    %v13562 = vrot.slane %v13561, 2
    %v13563 = vadd.f32 %v13561, %v13562
    %v13564 = vrot.slane %v13563, 1
    %v13565 = vadd.f32 %v13563, %v13564
    %v13566 = vsel %vm5233, %v13359, 0.0
    %v13567 = vadd.f32 %v13356, %v13566
    %v13568 = vrot.slane %v13567, 4
    %v13569 = vadd.f32 %v13567, %v13568
    %v13570 = vrot.slane %v13569, 2
    %v13571 = vadd.f32 %v13569, %v13570
    %v13572 = vrot.slane %v13571, 1
    %v13573 = vadd.f32 %v13571, %v13572
    %v13574 = vsel %vm5233, %v13365, 0.0
    %v13575 = vadd.f32 %v13362, %v13574
    %v13576 = vrot.slane %v13575, 4
    %v13577 = vadd.f32 %v13575, %v13576
    %v13578 = vrot.slane %v13577, 2
    %v13579 = vadd.f32 %v13577, %v13578
    %v13580 = vrot.slane %v13579, 1
    %v13581 = vadd.f32 %v13579, %v13580
    %v13582 = vsel %vm5233, %v13371, 0.0
    %v13583 = vadd.f32 %v13368, %v13582
    %v13584 = vrot.slane %v13583, 4
    %v13585 = vadd.f32 %v13583, %v13584
    %v13586 = vrot.slane %v13585, 2
    %v13587 = vadd.f32 %v13585, %v13586
    %v13588 = vrot.slane %v13587, 1
    %v13589 = vadd.f32 %v13587, %v13588
    %v13590 = vsel %vm5233, %v13377, 0.0
    %v13591 = vadd.f32 %v13374, %v13590
    %v13592 = vrot.slane %v13591, 4
    %v13593 = vadd.f32 %v13591, %v13592
    %v13594 = vrot.slane %v13593, 2
    %v13595 = vadd.f32 %v13593, %v13594
    %v13596 = vrot.slane %v13595, 1
    %v13597 = vadd.f32 %v13595, %v13596
    %v13598 = vsel %vm5233, %v13383, 0.0
    %v13599 = vadd.f32 %v13380, %v13598
    %v13600 = vrot.slane %v13599, 4
    %v13601 = vadd.f32 %v13599, %v13600
    %v13602 = vrot.slane %v13601, 2
    %v13603 = vadd.f32 %v13601, %v13602
    %v13604 = vrot.slane %v13603, 1
    %v13605 = vadd.f32 %v13603, %v13604
    %v13606 = vsel %vm5233, %v13389, 0.0
    %v13607 = vadd.f32 %v13386, %v13606
    %v13608 = vrot.slane %v13607, 4
    %v13609 = vadd.f32 %v13607, %v13608
    %v13610 = vrot.slane %v13609, 2
    %v13611 = vadd.f32 %v13609, %v13610
    %v13612 = vrot.slane %v13611, 1
    %v13613 = vadd.f32 %v13611, %v13612
    %v13614 = vsel %vm5233, %v13395, 0.0
    %v13615 = vadd.f32 %v13392, %v13614
    %v13616 = vrot.slane %v13615, 4
    %v13617 = vadd.f32 %v13615, %v13616
    %v13618 = vrot.slane %v13617, 2
    %v13619 = vadd.f32 %v13617, %v13618
    %v13620 = vrot.slane %v13619, 1
    %v13621 = vadd.f32 %v13619, %v13620
    %v13622 = vsel %vm5233, %v13401, 0.0
    %v13623 = vadd.f32 %v13398, %v13622
    %v13624 = vrot.slane %v13623, 4
    %v13625 = vadd.f32 %v13623, %v13624
    %v13626 = vrot.slane %v13625, 2
    %v13627 = vadd.f32 %v13625, %v13626
    %v13628 = vrot.slane %v13627, 1
    %v13629 = vadd.f32 %v13627, %v13628
    %v13630 = vsel %vm5233, %v13407, 0.0
    %v13631 = vadd.f32 %v13404, %v13630
    %v13632 = vrot.slane %v13631, 4
    %v13633 = vadd.f32 %v13631, %v13632
    %v13634 = vrot.slane %v13633, 2
    %v13635 = vadd.f32 %v13633, %v13634
    %v13636 = vrot.slane %v13635, 1
    %v13637 = vadd.f32 %v13635, %v13636
    %v13638 = vsel %vm5233, %v13413, 0.0
    %v13639 = vadd.f32 %v13410, %v13638
    %v13640 = vrot.slane %v13639, 4
    %v13641 = vadd.f32 %v13639, %v13640
    %v13642 = vrot.slane %v13641, 2
    %v13643 = vadd.f32 %v13641, %v13642
    %v13644 = vrot.slane %v13643, 1
    %v13645 = vadd.f32 %v13643, %v13644
    %v13646 = vsel %vm5233, %v13419, 0.0
    %v13647 = vadd.f32 %v13416, %v13646
    %v13648 = vrot.slane %v13647, 4
    %v13649 = vadd.f32 %v13647, %v13648
    %v13650 = vrot.slane %v13649, 2
    %v13651 = vadd.f32 %v13649, %v13650
    %v13652 = vrot.slane %v13651, 1
    %v13653 = vadd.f32 %v13651, %v13652
    %v13654 = vsel %vm5233, %v13425, 0.0
    %v13655 = vadd.f32 %v13422, %v13654
    %v13656 = vrot.slane %v13655, 4
    %v13657 = vadd.f32 %v13655, %v13656
    %v13658 = vrot.slane %v13657, 2
    %v13659 = vadd.f32 %v13657, %v13658
    %v13660 = vrot.slane %v13659, 1
    %v13661 = vadd.f32 %v13659, %v13660
    %v13662 = vsel %vm5233, %v13431, 0.0
    %v13663 = vadd.f32 %v13428, %v13662
    %v13664 = vrot.slane %v13663, 4
    %v13665 = vadd.f32 %v13663, %v13664
    %v13666 = vrot.slane %v13665, 2
    %v13667 = vadd.f32 %v13665, %v13666
    %v13668 = vrot.slane %v13667, 1
    %v13669 = vadd.f32 %v13667, %v13668
    %v13670 = vsel %vm5233, %v13437, 0.0
    %v13671 = vadd.f32 %v13434, %v13670
    %v13672 = vrot.slane %v13671, 4
    %v13673 = vadd.f32 %v13671, %v13672
    %v13674 = vrot.slane %v13673, 2
    %v13675 = vadd.f32 %v13673, %v13674
    %v13676 = vrot.slane %v13675, 1
    %v13677 = vadd.f32 %v13675, %v13676
    %v13678 = vsel %vm5233, %v13443, 0.0
    %v13679 = vadd.f32 %v13440, %v13678
    %v13680 = vrot.slane %v13679, 4
    %v13681 = vadd.f32 %v13679, %v13680
    %v13682 = vrot.slane %v13681, 2
    %v13683 = vadd.f32 %v13681, %v13682
    %v13684 = vrot.slane %v13683, 1
    %v13685 = vadd.f32 %v13683, %v13684
    %v13686 = vsel %vm5233, %v13449, 0.0
    %v13687 = vadd.f32 %v13446, %v13686
    %v13688 = vrot.slane %v13687, 4
    %v13689 = vadd.f32 %v13687, %v13688
    %v13690 = vrot.slane %v13689, 2
    %v13691 = vadd.f32 %v13689, %v13690
    %v13692 = vrot.slane %v13691, 1
    %v13693 = vadd.f32 %v13691, %v13692
    %v13694 = vsel %vm5233, %v13455, 0.0
    %v13695 = vadd.f32 %v13452, %v13694
    %v13696 = vrot.slane %v13695, 4
    %v13697 = vadd.f32 %v13695, %v13696
    %v13698 = vrot.slane %v13697, 2
    %v13699 = vadd.f32 %v13697, %v13698
    %v13700 = vrot.slane %v13699, 1
    %v13701 = vadd.f32 %v13699, %v13700
    %v13702 = vsel %vm5233, %v13461, 0.0
    %v13703 = vadd.f32 %v13458, %v13702
    %v13704 = vrot.slane %v13703, 4
    %v13705 = vadd.f32 %v13703, %v13704
    %v13706 = vrot.slane %v13705, 2
    %v13707 = vadd.f32 %v13705, %v13706
    %v13708 = vrot.slane %v13707, 1
    %v13709 = vadd.f32 %v13707, %v13708
    %v13710 = vsel %vm5233, %v13467, 0.0
    %v13711 = vadd.f32 %v13464, %v13710
    %v13712 = vrot.slane %v13711, 4
    %v13713 = vadd.f32 %v13711, %v13712
    %v13714 = vrot.slane %v13713, 2
    %v13715 = vadd.f32 %v13713, %v13714
    %v13716 = vrot.slane %v13715, 1
    %v13717 = vadd.f32 %v13715, %v13716
    %v13718 = vsel %vm5233, %v13473, 0.0
    %v13719 = vadd.f32 %v13470, %v13718
    %v13720 = vrot.slane %v13719, 4
    %v13721 = vadd.f32 %v13719, %v13720
    %v13722 = vrot.slane %v13721, 2
    %v13723 = vadd.f32 %v13721, %v13722
    %v13724 = vrot.slane %v13723, 1
    %v13725 = vadd.f32 %v13723, %v13724
    %v13726 = vsel %vm5233, %v13479, 0.0
    %v13727 = vadd.f32 %v13476, %v13726
    %v13728 = vrot.slane %v13727, 4
    %v13729 = vadd.f32 %v13727, %v13728
    %v13730 = vrot.slane %v13729, 2
    %v13731 = vadd.f32 %v13729, %v13730
    %v13732 = vrot.slane %v13731, 1
    %v13733 = vadd.f32 %v13731, %v13732
    %v13734 = vsel %vm5233, %v13485, 0.0
    %v13735 = vadd.f32 %v13482, %v13734
    %v13736 = vrot.slane %v13735, 4
    %v13737 = vadd.f32 %v13735, %v13736
    %v13738 = vrot.slane %v13737, 2
    %v13739 = vadd.f32 %v13737, %v13738
    %v13740 = vrot.slane %v13739, 1
    %v13741 = vadd.f32 %v13739, %v13740
    %v13742 = vadd.f32 %v13493, %v13501
    %v13743 = vadd.f32 %v13742, %v13509
    %v13744 = vadd.f32 %v13743, %v13517
    %v13745 = vadd.f32 %v13744, %v13525
    %v13746 = vadd.f32 %v13745, %v13533
    %v13747 = vadd.f32 %v13746, %v13541
    %v13748 = vadd.f32 %v13747, %v13549
    %v13749 = vadd.f32 %v13748, %v13557
    %v13750 = vadd.f32 %v13749, %v13565
    %v13751 = vadd.f32 %v13750, %v13573
    %v13752 = vadd.f32 %v13751, %v13581
    %v13753 = vadd.f32 %v13752, %v13589
    %v13754 = vadd.f32 %v13753, %v13597
    %v13755 = vadd.f32 %v13754, %v13605
    %v13756 = vadd.f32 %v13755, %v13613
    %v13757 = vadd.f32 %v13756, %v13621
    %v13758 = vadd.f32 %v13757, %v13629
    %v13759 = vadd.f32 %v13758, %v13637
    %v13760 = vadd.f32 %v13759, %v13645
    %v13761 = vadd.f32 %v13760, %v13653
    %v13762 = vadd.f32 %v13761, %v13661
    %v13763 = vadd.f32 %v13762, %v13669
    %v13764 = vadd.f32 %v13763, %v13677
    %v13765 = vadd.f32 %v13764, %v13685
    %v13766 = vadd.f32 %v13765, %v13693
    %v13767 = vadd.f32 %v13766, %v13701
    %v13768 = vadd.f32 %v13767, %v13709
    %v13769 = vadd.f32 %v13768, %v13717
    %v13770 = vadd.f32 %v13769, %v13725
    %v13771 = vadd.f32 %v13770, %v13733
    %v13772 = vadd.f32 %v13771, %v13741
    %v13773 = vsel %vm5233, %v13229, %v13772
    %v13774 = vlaneseq
    %v13775 = vshrl.u32 %v13774, 7
    %v13776 = vsub.s32 3, %v13775
    %v13777 = vrot.slane %v15, %v13776
    %13779 = vrot.lane.b32.xlu0 %v13777, 114
    %v13780 = vpop.permute.xlu0 %13779
    %v13782 = vadd.f32 %v13773, %v13780
    %13784 = vrot.lane.b32.xlu0 %v11460, 1
    %v13785 = vpop.permute.xlu0 %13784
    %13788 = vrot.lane.b32.xlu0 %v12621, 2
    %v13789 = vpop.permute.xlu0 %13788
    %13792 = vrot.lane.b32.xlu0 %v13782, 3
    %v13793 = vpop.permute.xlu0 %13792
    %vm13795 = vcmask 7168
    %v13796 = vsel %vm13795, %v10299, %v13785
    %v13797 = vsel %vm29, %v13796, %v13789
    %vm13798 = vcmask 23552
    %v13799 = vsel %vm13798, %v13797, %v13793
    %vm13800 = vcmask 25600
    %v13801 = vsel %vm13800, %v13799, -inf
    %13802 = vmax.xlane.f32.xlu0 %v13801
    %v13803 = vpop.xlane.xlu0 %13802
    %v13804 = vsub.f32 %v13799, %v13803
    %v13805 = vmul.f32 %v13804, 1.442695
    %v13806 = vpow.pop %v13805
    %v13807 = vsel %vm13800, %v13806, 0.0
    %13808 = vadd.xlane.f32.xlu0 %v13807
    %v13809 = vpop.xlane.xlu0 %13808
    %v13810 = vlog2.pop %v13809
    %v13811 = vmul.f32 %v13810, 0.6931472
    %v13812 = vsub.f32 %v13804, %v13811
    %13813 = vst.msk [vmem:[#allocation2] sm:$0x3] %vm13800, %v13812
    // Predicated region
    $region14: #{simple_eeg_forward.1} parent=1 // pred_check
      _
    $region15: #{simple_eeg_forward.1} parent=1 // pred_check_branch
      %13815 = sbr.rel (0) target = $region17
    $region16: #{simple_eeg_forward.1} parent=1 // pred_region
      %s13817 = ssub.s32 32, 32
      %13818 = vsyncadd [#allocation3], %s13817
      %s13820 = sshll.u32 [#allocation2], 4
      %s13821 = int_to_ptr.vmem [resolvable:$true] %s13820
      %13823 = dma.vmem_to_hbm [thread:$0]  %s13821, 32, %s3, [#allocation3]
    $region17: #{simple_eeg_forward.1} parent=1 // pred_fallthru
      _
    // Predicated region
    $region18: #{simple_eeg_forward.1} parent=1 // pred_check
      _
    $region19: #{simple_eeg_forward.1} parent=1 // pred_check_branch
      %13825 = sbr.rel (0) target = $region21
    $region20: #{simple_eeg_forward.1} parent=1 // pred_region
      %13826 = dma.done [#allocation3], 32
    $region21: #{simple_eeg_forward.1} parent=1 // pred_fallthru
      _
    %13827 = vsyncpa [#allocation3], 1

</llo_original>
